<compile_context>
chip_gen: v5e
topology: v5e:2x2
jax: 0.10.0
libtpu: 0.0.40
codegen_flags: <defaults>
</compile_context>

<pallas_src>
import jax
import jax.numpy as jnp
from jax import lax
from jax.experimental import pallas as pl
from jax.experimental.pallas import tpu as pltpu

F32 = jnp.float32

N_NODES = 16
HIDDEN = 32
SE_DIM = 8
CLASS_NUM = 7
HEADS = 4
N_EDGES = 24
N_TRAIN_EDGES = 8


def _dot_nt(a, b):
    # a: [M, D], b: [N, D] -> [M, N] (contract last dims; avoids explicit .T)
    return lax.dot_general(a, b, (((1,), (1,)), ((), ())),
                           preferred_element_type=F32)


def _mm(a, b):
    return jnp.dot(a, b, preferred_element_type=F32)


# --------------------------------------------------------------------------
# Single fused MESM kernel: 7 encoder chains + gather + classifier
# --------------------------------------------------------------------------

def _mesm_kernel(
        xse_ref, x_ref, a_sym_ref, a_mean2_ref, mask_ref, g1_ref, g2_ref,
        gcn_w_ref, gcn_b_ref,
        wq_ref, wk_ref, wv_ref, wo_ref, bo_ref,
        bn1_g_ref, bn1_b_ref, bn2_g_ref, bn2_b_ref, bn3_g_ref, bn3_b_ref,
        mlp_w1_ref, mlp_b1_ref, mlp_w2_ref, mlp_b2_ref,
        se_w_ref, se_b_ref,
        gat_w_ref, gat_asrc_ref, gat_adst_ref, gat_b_ref,
        sub_w_ref, sub_b_ref, glob_w_ref, glob_b_ref,
        bn_g_ref, bn_b_ref,
        cw0, cb0, cw1, cb1, cw2, cb2, cw3, cb3, cw4, cb4, cw5, cb5,
        o_ref):
    K = xse_ref.shape[0]
    c = xse_ref.shape[-1]
    dh = c // HEADS
    scale = 1.0 / float(dh) ** 0.5

    # Per-head lane masks (hoisted; computed once per kernel invocation).
    lane = lax.broadcasted_iota(jnp.int32, (1, c), 1)
    head_masks = [((lane >= h * dh) & (lane < (h + 1) * dh)).astype(F32)
                  for h in range(HEADS)]

    # x_full slab pieces: lanes 0:H are the raw node features.
    slabs = [x_ref[...]]

    # Static unroll over the 7 independent class chains (interleaved by LLO).
    for k in range(K):
        tmp = xse_ref[k]                       # [N, C]  (x || se[k], pre-concat)
        a_sym = a_sym_ref[k]                   # [N, N]  GCN sym-normalized adj
        a_mean2 = a_mean2_ref[k]               # [N, N]  2-hop mean-normalized adj
        msk = mask_ref[k]                      # [N, N]  0/1 edge mask

        # ---- GPSConv local branch: GCNConv + residual + BN1 (eval mode) ----
        xw = _mm(tmp, gcn_w_ref[k])
        h_local = _mm(a_sym, xw) + gcn_b_ref[k]
        h_local = (h_local + tmp) * bn1_g_ref[k] + bn1_b_ref[k]

        # ---- GPSConv global branch: MHA (masked full-width) + res + BN2 ----
        q = _mm(tmp, wq_ref[k])                # [N, C]
        kq = _mm(tmp, wk_ref[k])
        v = _mm(tmp, wv_ref[k])
        ctx = jnp.zeros_like(q)
        for hm in head_masks:
            s = _dot_nt(q * hm, kq) * scale    # only head lanes contribute
            s = s - jnp.max(s, axis=-1, keepdims=True)
            p = jnp.exp(s)
            p = p * pl.reciprocal(jnp.sum(p, axis=-1, keepdims=True), approx=True)
            ctx = ctx + _mm(p, v * hm)         # context lands in head lanes
        h_attn = _mm(ctx, wo_ref[k]) + bo_ref[k]
        h_attn = (h_attn + tmp) * bn2_g_ref[k] + bn2_b_ref[k]

        # ---- GPSConv MLP + residual + BN3 ----
        s2 = h_local + h_attn
        hmid = _mm(s2, mlp_w1_ref[k]) + mlp_b1_ref[k]
        hmid = jnp.maximum(hmid, 0.0)
        hmid = _mm(hmid, mlp_w2_ref[k]) + mlp_b2_ref[k]
        tmp = (s2 + hmid) * bn3_g_ref[k] + bn3_b_ref[k]

        # ---- se_blocks[k][1]: Linear(C -> hidden) ----
        tmp = _mm(tmp, se_w_ref[k]) + se_b_ref[k]

        # ---- Graph_Neural_Network_blocks[k][0]: GAT (1 head, dense-masked) ----
        hg = _mm(tmp, gat_w_ref[k])                                   # [N, H]
        s_dst = jnp.sum(hg * gat_adst_ref[k], axis=-1, keepdims=True)  # [N, 1]
        s_src = _dot_nt(gat_asrc_ref[k], hg)                           # [1, N]
        e = s_dst + s_src                                              # [N, N]
        e = jnp.where(e > 0, e, 0.2 * e)                               # LeakyReLU
        e = jnp.where(msk > 0, e, -1e30)
        e = e - jnp.max(e, axis=-1, keepdims=True)
        p = jnp.exp(e)
        p = p * pl.reciprocal(jnp.sum(p, axis=-1, keepdims=True), approx=True)
        tmp = _mm(p, hg) + gat_b_ref[k]

        # ---- subgraph_blocks[k]: SubgraphGCN + global GCNConv + add + BN ----
        # TODO(synk): SubgraphGCN is a custom module not defined in the
        # reference source; approximated as a 2-hop mean-normalized GCN.
        sub = _mm(a_mean2, _mm(tmp, sub_w_ref[k])) + sub_b_ref[k]
        glob = _mm(a_sym, _mm(tmp, glob_w_ref[k])) + glob_b_ref[k]
        slabs.append((glob + sub) * bn_g_ref[k] + bn_b_ref[k])

    # x_full = cat([x, out_0, ..., out_{K-1}], axis=1)  -> [N, (K+1)*H] = [16,256]
    xf = jnp.concatenate(slabs, axis=-1)

    # ppi_generator: edge-endpoint gather via one-hot matmuls, then multiply.
    x1 = _mm(g1_ref[...], xf)                  # [E, (K+1)*H]
    x2 = _mm(g2_ref[...], xf)
    h = x1 * x2

    # 6-layer classifier (no inter-layer activations, matching the reference).
    for w_ref, b_ref in ((cw0, cb0), (cw1, cb1), (cw2, cb2),
                         (cw3, cb3), (cw4, cb4), (cw5, cb5)):
        h = _mm(h, w_ref[...]) + b_ref[...]
    o_ref[...] = h


def _mesm_call(xse, x, a_sym, a_mean2, mask, g1, g2, pb, cls_w, cls_b):
    args = [xse, x, a_sym, a_mean2, mask, g1, g2,
            pb["gps_gcn_w"], pb["gps_gcn_b"],
            pb["wq"], pb["wk"], pb["wv"], pb["wo"], pb["bo"],
            pb["gps_bn1_g"], pb["gps_bn1_b"], pb["gps_bn2_g"], pb["gps_bn2_b"],
            pb["gps_bn3_g"], pb["gps_bn3_b"],
            pb["mlp_w1"], pb["mlp_b1"], pb["mlp_w2"], pb["mlp_b2"],
            pb["se_lin_w"], pb["se_lin_b"],
            pb["gat_w"], pb["gat_asrc"], pb["gat_adst"], pb["gat_b"],
            pb["sub_w"], pb["sub_b"], pb["glob_w"], pb["glob_b"],
            pb["bn_g"], pb["bn_b"]]
    for w, b in zip(cls_w, cls_b):
        args += [w, b]

    E = g1.shape[0]
    vmem = pl.BlockSpec(memory_space=pltpu.MemorySpace.VMEM)
    return pl.pallas_call(
        _mesm_kernel,
        out_shape=jax.ShapeDtypeStruct((E, CLASS_NUM), F32),
        in_specs=[vmem] * len(args),
        out_specs=vmem,
    )(*args)


# --------------------------------------------------------------------------
# Parameters
# --------------------------------------------------------------------------

def init_params(key, hidden=HIDDEN, se_dim=SE_DIM, class_num=CLASS_NUM,
                heads=HEADS):
    c = hidden + se_dim
    K = class_num
    keys = iter(jax.random.split(key, 64))

    def w(shape, scale=0.1):
        return jax.random.normal(next(keys), shape, F32) * scale

    def zeros(shape):
        return jnp.zeros(shape, F32)

    bn_scale = 1.0 / (1.0 + 1e-5) ** 0.5  # eval BN with running_mean=0, var=1
    bn_g_h = jnp.full((K, 1, hidden), bn_scale, F32)
    bn_g_c = jnp.full((K, 1, c), bn_scale, F32)

    blocks = dict(
        gps_gcn_w=w((K, c, c)), gps_gcn_b=zeros((K, 1, c)),
        # fused head projections: column block h*dh:(h+1)*dh == head h
        wq=w((K, c, c)), wk=w((K, c, c)), wv=w((K, c, c)), wo=w((K, c, c)),
        bo=zeros((K, 1, c)),
        gps_bn1_g=bn_g_c, gps_bn1_b=zeros((K, 1, c)),
        gps_bn2_g=bn_g_c, gps_bn2_b=zeros((K, 1, c)),
        gps_bn3_g=bn_g_c, gps_bn3_b=zeros((K, 1, c)),
        mlp_w1=w((K, c, 2 * c)), mlp_b1=zeros((K, 1, 2 * c)),
        mlp_w2=w((K, 2 * c, c)), mlp_b2=zeros((K, 1, c)),
        se_lin_w=w((K, c, hidden)), se_lin_b=zeros((K, 1, hidden)),
        gat_w=w((K, hidden, hidden)),
        gat_asrc=w((K, 1, hidden)), gat_adst=w((K, 1, hidden)),
        gat_b=zeros((K, 1, hidden)),
        sub_w=w((K, hidden, hidden)), sub_b=zeros((K, 1, hidden)),
        glob_w=w((K, hidden, hidden)), glob_b=zeros((K, 1, hidden)),
        bn_g=bn_g_h, bn_b=zeros((K, 1, hidden)),
    )

    cls_w, cls_b = [], []
    for i in range(6):
        din = int(hidden * (class_num + 1) / 2 ** i)
        dout = class_num if i == 5 else int(hidden * (class_num + 1) / 2 ** (i + 1))
        cls_w.append(w((din, dout)))
        cls_b.append(zeros((1, dout)))
    return dict(blocks=blocks, cls_w=cls_w, cls_b=cls_b)


# --------------------------------------------------------------------------
# Graph construction (dense adjacency per class)
# --------------------------------------------------------------------------

def make_adj(key, n, e):
    k1, k2 = jax.random.split(key)
    src = jax.random.randint(k1, (e,), 0, n)
    dst = jax.random.randint(k2, (e,), 0, n)
    a = jnp.zeros((n, n), F32).at[dst, src].set(1.0)
    a = jnp.maximum(a, a.T)                                 # undirected
    a = jnp.minimum(a + jnp.eye(n, dtype=F32), 1.0)         # self loops
    deg = a.sum(1)
    dinv_sqrt = 1.0 / jnp.sqrt(deg)
    a_sym = a * dinv_sqrt[:, None] * dinv_sqrt[None, :]     # GCN sym-norm
    a_mean = a / deg[:, None]                               # mean aggregation
    mask = (a > 0).astype(F32)
    return a_sym, a_mean, mask


# --------------------------------------------------------------------------
# MESM forward
# --------------------------------------------------------------------------

@jax.jit
def mesm_forward(params, graph, train_edge_id):
    x = graph["x"]                                          # [N, hidden]
    n = x.shape[0]
    pb = params["blocks"]

    # Wrapper-side precompute (tiny): per-class x||se concat and one-hot
    # edge-endpoint gather matrices.  Everything else is one fused kernel.
    xse = jnp.concatenate(
        [jnp.broadcast_to(x[None], (CLASS_NUM,) + x.shape), graph["se"]],
        axis=-1)                                            # [K, N, C]
    node_id = graph["edge_index"][:, train_edge_id]         # [2, E] int32
    g1 = jax.nn.one_hot(node_id[0], n, dtype=F32)           # [E, N]
    g2 = jax.nn.one_hot(node_id[1], n, dtype=F32)

    return _mesm_call(xse, x, graph["a_sym"], graph["a_mean2"], graph["mask"],
                      g1, g2, pb, params["cls_w"], params["cls_b"])


# --------------------------------------------------------------------------
# Main
# --------------------------------------------------------------------------

if __name__ == "__main__":
    key = jax.random.PRNGKey(0)
    k_param, k_x, k_se, k_e1, k_e2, k_g = jax.random.split(key, 6)

    params = init_params(k_param)

    x = jax.random.normal(k_x, (N_NODES, HIDDEN), F32)
    se = jax.random.normal(k_se, (CLASS_NUM, N_NODES, SE_DIM), F32)
    edge_index = jnp.stack([
        jax.random.randint(k_e1, (N_EDGES,), 0, N_NODES),
        jax.random.randint(k_e2, (N_EDGES,), 0, N_NODES),
    ]).astype(jnp.int32)

    a_sym_l, a_mean2_l, mask_l = [], [], []
    for gk in jax.random.split(k_g, CLASS_NUM):
        a_sym, a_mean, mask = make_adj(gk, N_NODES, N_EDGES)
        a_sym_l.append(a_sym)
        a_mean2_l.append(a_mean @ a_mean)   # 2-hop mean aggregation
        mask_l.append(mask)

    graph = dict(
        x=x, se=se, edge_index=edge_index,
        a_sym=jnp.stack(a_sym_l),
        a_mean2=jnp.stack(a_mean2_l),
        mask=jnp.stack(mask_l),
    )
    train_edge_id = jnp.arange(N_TRAIN_EDGES)

    out = mesm_forward(params, graph, train_edge_id)
    out = jax.block_until_ready(out)
    assert out.shape == (N_TRAIN_EDGES, CLASS_NUM), out.shape
    assert bool(jnp.all(jnp.isfinite(out)))
    print("KERNEL_OK")
</pallas_src>

<mosaic_0001>
module attributes {stable_mosaic.version = 11 : i64} {
  func.func @_mesm_kernel(%arg0: memref<7x16x40xf32, #tpu.memory_space<vmem>>, %arg1: memref<16x32xf32, #tpu.memory_space<vmem>>, %arg2: memref<7x16x16xf32, #tpu.memory_space<vmem>>, %arg3: memref<7x16x16xf32, #tpu.memory_space<vmem>>, %arg4: memref<7x16x16xf32, #tpu.memory_space<vmem>>, %arg5: memref<8x16xf32, #tpu.memory_space<vmem>>, %arg6: memref<8x16xf32, #tpu.memory_space<vmem>>, %arg7: memref<7x40x40xf32, #tpu.memory_space<vmem>>, %arg8: memref<7x1x40xf32, #tpu.memory_space<vmem>>, %arg9: memref<7x40x40xf32, #tpu.memory_space<vmem>>, %arg10: memref<7x40x40xf32, #tpu.memory_space<vmem>>, %arg11: memref<7x40x40xf32, #tpu.memory_space<vmem>>, %arg12: memref<7x40x40xf32, #tpu.memory_space<vmem>>, %arg13: memref<7x1x40xf32, #tpu.memory_space<vmem>>, %arg14: memref<7x1x40xf32, #tpu.memory_space<vmem>>, %arg15: memref<7x1x40xf32, #tpu.memory_space<vmem>>, %arg16: memref<7x1x40xf32, #tpu.memory_space<vmem>>, %arg17: memref<7x1x40xf32, #tpu.memory_space<vmem>>, %arg18: memref<7x1x40xf32, #tpu.memory_space<vmem>>, %arg19: memref<7x1x40xf32, #tpu.memory_space<vmem>>, %arg20: memref<7x40x80xf32, #tpu.memory_space<vmem>>, %arg21: memref<7x1x80xf32, #tpu.memory_space<vmem>>, %arg22: memref<7x80x40xf32, #tpu.memory_space<vmem>>, %arg23: memref<7x1x40xf32, #tpu.memory_space<vmem>>, %arg24: memref<7x40x32xf32, #tpu.memory_space<vmem>>, %arg25: memref<7x1x32xf32, #tpu.memory_space<vmem>>, %arg26: memref<7x32x32xf32, #tpu.memory_space<vmem>>, %arg27: memref<7x1x32xf32, #tpu.memory_space<vmem>>, %arg28: memref<7x1x32xf32, #tpu.memory_space<vmem>>, %arg29: memref<7x1x32xf32, #tpu.memory_space<vmem>>, %arg30: memref<7x32x32xf32, #tpu.memory_space<vmem>>, %arg31: memref<7x1x32xf32, #tpu.memory_space<vmem>>, %arg32: memref<7x32x32xf32, #tpu.memory_space<vmem>>, %arg33: memref<7x1x32xf32, #tpu.memory_space<vmem>>, %arg34: memref<7x1x32xf32, #tpu.memory_space<vmem>>, %arg35: memref<7x1x32xf32, #tpu.memory_space<vmem>>, %arg36: memref<256x128xf32, #tpu.memory_space<vmem>>, %arg37: memref<1x128xf32, #tpu.memory_space<vmem>>, %arg38: memref<128x64xf32, #tpu.memory_space<vmem>>, %arg39: memref<1x64xf32, #tpu.memory_space<vmem>>, %arg40: memref<64x32xf32, #tpu.memory_space<vmem>>, %arg41: memref<1x32xf32, #tpu.memory_space<vmem>>, %arg42: memref<32x16xf32, #tpu.memory_space<vmem>>, %arg43: memref<1x16xf32, #tpu.memory_space<vmem>>, %arg44: memref<16x8xf32, #tpu.memory_space<vmem>>, %arg45: memref<1x8xf32, #tpu.memory_space<vmem>>, %arg46: memref<8x7xf32, #tpu.memory_space<vmem>>, %arg47: memref<1x7xf32, #tpu.memory_space<vmem>>, %arg48: memref<8x7xf32, #tpu.memory_space<vmem>>) attributes {dimension_semantics = [], scalar_prefetch = 0 : i64, scratch_operands = 0 : i64, tpu.core_type = #tpu.core_type<tc>} {
    %0 = tpu.iota {dimensions = array<i32: 1>} : vector<1x40xi32>
    %c0_i32 = arith.constant 0 : i32
    %1 = vector.broadcast %c0_i32 : i32 to vector<1x40xi32>
    %2 = arith.cmpi sge, %0, %1 : vector<1x40xi32>
    %c10_i32 = arith.constant 10 : i32
    %3 = vector.broadcast %c10_i32 : i32 to vector<1x40xi32>
    %4 = arith.cmpi slt, %0, %3 : vector<1x40xi32>
    %5 = arith.andi %2, %4 : vector<1x40xi1>
    %6 = arith.extui %5 : vector<1x40xi1> to vector<1x40xi32>
    %7 = arith.sitofp %6 : vector<1x40xi32> to vector<1x40xf32>
    %c10_i32_0 = arith.constant 10 : i32
    %8 = vector.broadcast %c10_i32_0 : i32 to vector<1x40xi32>
    %9 = arith.cmpi sge, %0, %8 : vector<1x40xi32>
    %c20_i32 = arith.constant 20 : i32
    %10 = vector.broadcast %c20_i32 : i32 to vector<1x40xi32>
    %11 = arith.cmpi slt, %0, %10 : vector<1x40xi32>
    %12 = arith.andi %9, %11 : vector<1x40xi1>
    %13 = arith.extui %12 : vector<1x40xi1> to vector<1x40xi32>
    %14 = arith.sitofp %13 : vector<1x40xi32> to vector<1x40xf32>
    %c20_i32_1 = arith.constant 20 : i32
    %15 = vector.broadcast %c20_i32_1 : i32 to vector<1x40xi32>
    %16 = arith.cmpi sge, %0, %15 : vector<1x40xi32>
    %c30_i32 = arith.constant 30 : i32
    %17 = vector.broadcast %c30_i32 : i32 to vector<1x40xi32>
    %18 = arith.cmpi slt, %0, %17 : vector<1x40xi32>
    %19 = arith.andi %16, %18 : vector<1x40xi1>
    %20 = arith.extui %19 : vector<1x40xi1> to vector<1x40xi32>
    %21 = arith.sitofp %20 : vector<1x40xi32> to vector<1x40xf32>
    %c30_i32_2 = arith.constant 30 : i32
    %22 = vector.broadcast %c30_i32_2 : i32 to vector<1x40xi32>
    %23 = arith.cmpi sge, %0, %22 : vector<1x40xi32>
    %c40_i32 = arith.constant 40 : i32
    %24 = vector.broadcast %c40_i32 : i32 to vector<1x40xi32>
    %25 = arith.cmpi slt, %0, %24 : vector<1x40xi32>
    %26 = arith.andi %23, %25 : vector<1x40xi1>
    %27 = arith.extui %26 : vector<1x40xi1> to vector<1x40xi32>
    %28 = arith.sitofp %27 : vector<1x40xi32> to vector<1x40xf32>
    %c0 = arith.constant 0 : index
    %c0_3 = arith.constant 0 : index
    %29 = vector.load %arg1[%c0, %c0_3] : memref<16x32xf32, #tpu.memory_space<vmem>>, vector<16x32xf32>
    %c0_4 = arith.constant 0 : index
    %c0_5 = arith.constant 0 : index
    %c0_6 = arith.constant 0 : index
    %30 = vector.load %arg0[%c0_4, %c0_5, %c0_6] : memref<7x16x40xf32, #tpu.memory_space<vmem>>, vector<1x16x40xf32>
    %31 = vector.shape_cast %30 : vector<1x16x40xf32> to vector<16x40xf32>
    %c0_7 = arith.constant 0 : index
    %c0_8 = arith.constant 0 : index
    %c0_9 = arith.constant 0 : index
    %32 = vector.load %arg2[%c0_7, %c0_8, %c0_9] : memref<7x16x16xf32, #tpu.memory_space<vmem>>, vector<1x16x16xf32>
    %33 = vector.shape_cast %32 : vector<1x16x16xf32> to vector<16x16xf32>
    %c0_10 = arith.constant 0 : index
    %c0_11 = arith.constant 0 : index
    %c0_12 = arith.constant 0 : index
    %34 = vector.load %arg3[%c0_10, %c0_11, %c0_12] : memref<7x16x16xf32, #tpu.memory_space<vmem>>, vector<1x16x16xf32>
    %35 = vector.shape_cast %34 : vector<1x16x16xf32> to vector<16x16xf32>
    %c0_13 = arith.constant 0 : index
    %c0_14 = arith.constant 0 : index
    %c0_15 = arith.constant 0 : index
    %36 = vector.load %arg4[%c0_13, %c0_14, %c0_15] : memref<7x16x16xf32, #tpu.memory_space<vmem>>, vector<1x16x16xf32>
    %37 = vector.shape_cast %36 : vector<1x16x16xf32> to vector<16x16xf32>
    %c0_16 = arith.constant 0 : index
    %c0_17 = arith.constant 0 : index
    %c0_18 = arith.constant 0 : index
    %38 = vector.load %arg7[%c0_16, %c0_17, %c0_18] : memref<7x40x40xf32, #tpu.memory_space<vmem>>, vector<1x40x40xf32>
    %39 = vector.shape_cast %38 : vector<1x40x40xf32> to vector<40x40xf32>
    %cst = arith.constant dense<0.000000e+00> : vector<16x40xf32>
    %40 = tpu.matmul %31, %39, %cst {dimension_numbers = #tpu.dot_dimension_numbers<[1], [0], [0], [1], [0, 0, 1, 1], [], []>} : vector<16x40xf32>, vector<40x40xf32>, vector<16x40xf32> -> vector<16x40xf32>
    %cst_19 = arith.constant dense<0.000000e+00> : vector<16x40xf32>
    %41 = tpu.matmul %33, %40, %cst_19 {dimension_numbers = #tpu.dot_dimension_numbers<[1], [0], [0], [1], [0, 0, 1, 1], [], []>} : vector<16x16xf32>, vector<16x40xf32>, vector<16x40xf32> -> vector<16x40xf32>
    %c0_20 = arith.constant 0 : index
    %c0_21 = arith.constant 0 : index
    %c0_22 = arith.constant 0 : index
    %42 = vector.load %arg8[%c0_20, %c0_21, %c0_22] : memref<7x1x40xf32, #tpu.memory_space<vmem>>, vector<1x1x40xf32>
    %43 = vector.shape_cast %42 : vector<1x1x40xf32> to vector<1x40xf32>
    %44 = vector.broadcast %43 : vector<1x40xf32> to vector<16x40xf32>
    %45 = arith.addf %41, %44 : vector<16x40xf32>
    %46 = arith.addf %45, %31 : vector<16x40xf32>
    %c0_23 = arith.constant 0 : index
    %c0_24 = arith.constant 0 : index
    %c0_25 = arith.constant 0 : index
    %47 = vector.load %arg14[%c0_23, %c0_24, %c0_25] : memref<7x1x40xf32, #tpu.memory_space<vmem>>, vector<1x1x40xf32>
    %48 = vector.shape_cast %47 : vector<1x1x40xf32> to vector<1x40xf32>
    %49 = vector.broadcast %48 : vector<1x40xf32> to vector<16x40xf32>
    %50 = arith.mulf %46, %49 : vector<16x40xf32>
    %c0_26 = arith.constant 0 : index
    %c0_27 = arith.constant 0 : index
    %c0_28 = arith.constant 0 : index
    %51 = vector.load %arg15[%c0_26, %c0_27, %c0_28] : memref<7x1x40xf32, #tpu.memory_space<vmem>>, vector<1x1x40xf32>
    %52 = vector.shape_cast %51 : vector<1x1x40xf32> to vector<1x40xf32>
    %53 = vector.broadcast %52 : vector<1x40xf32> to vector<16x40xf32>
    %54 = arith.addf %50, %53 : vector<16x40xf32>
    %c0_29 = arith.constant 0 : index
    %c0_30 = arith.constant 0 : index
    %c0_31 = arith.constant 0 : index
    %55 = vector.load %arg9[%c0_29, %c0_30, %c0_31] : memref<7x40x40xf32, #tpu.memory_space<vmem>>, vector<1x40x40xf32>
    %56 = vector.shape_cast %55 : vector<1x40x40xf32> to vector<40x40xf32>
    %cst_32 = arith.constant dense<0.000000e+00> : vector<16x40xf32>
    %57 = tpu.matmul %31, %56, %cst_32 {dimension_numbers = #tpu.dot_dimension_numbers<[1], [0], [0], [1], [0, 0, 1, 1], [], []>} : vector<16x40xf32>, vector<40x40xf32>, vector<16x40xf32> -> vector<16x40xf32>
    %c0_33 = arith.constant 0 : index
    %c0_34 = arith.constant 0 : index
    %c0_35 = arith.constant 0 : index
    %58 = vector.load %arg10[%c0_33, %c0_34, %c0_35] : memref<7x40x40xf32, #tpu.memory_space<vmem>>, vector<1x40x40xf32>
    %59 = vector.shape_cast %58 : vector<1x40x40xf32> to vector<40x40xf32>
    %cst_36 = arith.constant dense<0.000000e+00> : vector<16x40xf32>
    %60 = tpu.matmul %31, %59, %cst_36 {dimension_numbers = #tpu.dot_dimension_numbers<[1], [0], [0], [1], [0, 0, 1, 1], [], []>} : vector<16x40xf32>, vector<40x40xf32>, vector<16x40xf32> -> vector<16x40xf32>
    %c0_37 = arith.constant 0 : index
    %c0_38 = arith.constant 0 : index
    %c0_39 = arith.constant 0 : index
    %61 = vector.load %arg11[%c0_37, %c0_38, %c0_39] : memref<7x40x40xf32, #tpu.memory_space<vmem>>, vector<1x40x40xf32>
    %62 = vector.shape_cast %61 : vector<1x40x40xf32> to vector<40x40xf32>
    %cst_40 = arith.constant dense<0.000000e+00> : vector<16x40xf32>
    %63 = tpu.matmul %31, %62, %cst_40 {dimension_numbers = #tpu.dot_dimension_numbers<[1], [0], [0], [1], [0, 0, 1, 1], [], []>} : vector<16x40xf32>, vector<40x40xf32>, vector<16x40xf32> -> vector<16x40xf32>
    %cst_41 = arith.constant 0.000000e+00 : f32
    %64 = vector.broadcast %cst_41 : f32 to vector<16x40xf32>
    %65 = vector.broadcast %7 : vector<1x40xf32> to vector<16x40xf32>
    %66 = arith.mulf %57, %65 : vector<16x40xf32>
    %cst_42 = arith.constant dense<0.000000e+00> : vector<16x16xf32>
    %67 = tpu.matmul %66, %60, %cst_42 {dimension_numbers = #tpu.dot_dimension_numbers<[1], [1], [0], [0], [0, 0, 1, 0], [], []>} : vector<16x40xf32>, vector<16x40xf32>, vector<16x16xf32> -> vector<16x16xf32>
    %cst_43 = arith.constant 0.316227764 : f32
    %68 = vector.broadcast %cst_43 : f32 to vector<16x16xf32>
    %69 = arith.mulf %67, %68 : vector<16x16xf32>
    %cst_44 = arith.constant dense<0xFF800000> : vector<16xf32>
    %70 = vector.multi_reduction <maximumf>, %69, %cst_44 [1] : vector<16x16xf32> to vector<16xf32>
    %71 = vector.shape_cast %70 : vector<16xf32> to vector<16x1xf32>
    %72 = vector.broadcast %71 : vector<16x1xf32> to vector<16x16xf32>
    %73 = arith.subf %69, %72 : vector<16x16xf32>
    %74 = math.exp %73 : vector<16x16xf32>
    %cst_45 = arith.constant dense<0.000000e+00> : vector<16xf32>
    %75 = vector.multi_reduction <add>, %74, %cst_45 [1] : vector<16x16xf32> to vector<16xf32>
    %76 = vector.shape_cast %75 : vector<16xf32> to vector<16x1xf32>
    %77 = tpu.reciprocal %76 {approx = true} : vector<16x1xf32> -> vector<16x1xf32>
    %78 = vector.broadcast %77 : vector<16x1xf32> to vector<16x16xf32>
    %79 = arith.mulf %74, %78 : vector<16x16xf32>
    %80 = vector.broadcast %7 : vector<1x40xf32> to vector<16x40xf32>
    %81 = arith.mulf %63, %80 : vector<16x40xf32>
    %cst_46 = arith.constant dense<0.000000e+00> : vector<16x40xf32>
    %82 = tpu.matmul %79, %81, %cst_46 {dimension_numbers = #tpu.dot_dimension_numbers<[1], [0], [0], [1], [0, 0, 1, 1], [], []>} : vector<16x16xf32>, vector<16x40xf32>, vector<16x40xf32> -> vector<16x40xf32>
    %83 = arith.addf %64, %82 : vector<16x40xf32>
    %84 = vector.broadcast %14 : vector<1x40xf32> to vector<16x40xf32>
    %85 = arith.mulf %57, %84 : vector<16x40xf32>
    %cst_47 = arith.constant dense<0.000000e+00> : vector<16x16xf32>
    %86 = tpu.matmul %85, %60, %cst_47 {dimension_numbers = #tpu.dot_dimension_numbers<[1], [1], [0], [0], [0, 0, 1, 0], [], []>} : vector<16x40xf32>, vector<16x40xf32>, vector<16x16xf32> -> vector<16x16xf32>
    %cst_48 = arith.constant 0.316227764 : f32
    %87 = vector.broadcast %cst_48 : f32 to vector<16x16xf32>
    %88 = arith.mulf %86, %87 : vector<16x16xf32>
    %cst_49 = arith.constant dense<0xFF800000> : vector<16xf32>
    %89 = vector.multi_reduction <maximumf>, %88, %cst_49 [1] : vector<16x16xf32> to vector<16xf32>
    %90 = vector.shape_cast %89 : vector<16xf32> to vector<16x1xf32>
    %91 = vector.broadcast %90 : vector<16x1xf32> to vector<16x16xf32>
    %92 = arith.subf %88, %91 : vector<16x16xf32>
    %93 = math.exp %92 : vector<16x16xf32>
    %cst_50 = arith.constant dense<0.000000e+00> : vector<16xf32>
    %94 = vector.multi_reduction <add>, %93, %cst_50 [1] : vector<16x16xf32> to vector<16xf32>
    %95 = vector.shape_cast %94 : vector<16xf32> to vector<16x1xf32>
    %96 = tpu.reciprocal %95 {approx = true} : vector<16x1xf32> -> vector<16x1xf32>
    %97 = vector.broadcast %96 : vector<16x1xf32> to vector<16x16xf32>
    %98 = arith.mulf %93, %97 : vector<16x16xf32>
    %99 = vector.broadcast %14 : vector<1x40xf32> to vector<16x40xf32>
    %100 = arith.mulf %63, %99 : vector<16x40xf32>
    %cst_51 = arith.constant dense<0.000000e+00> : vector<16x40xf32>
    %101 = tpu.matmul %98, %100, %cst_51 {dimension_numbers = #tpu.dot_dimension_numbers<[1], [0], [0], [1], [0, 0, 1, 1], [], []>} : vector<16x16xf32>, vector<16x40xf32>, vector<16x40xf32> -> vector<16x40xf32>
    %102 = arith.addf %83, %101 : vector<16x40xf32>
    %103 = vector.broadcast %21 : vector<1x40xf32> to vector<16x40xf32>
    %104 = arith.mulf %57, %103 : vector<16x40xf32>
    %cst_52 = arith.constant dense<0.000000e+00> : vector<16x16xf32>
    %105 = tpu.matmul %104, %60, %cst_52 {dimension_numbers = #tpu.dot_dimension_numbers<[1], [1], [0], [0], [0, 0, 1, 0], [], []>} : vector<16x40xf32>, vector<16x40xf32>, vector<16x16xf32> -> vector<16x16xf32>
    %cst_53 = arith.constant 0.316227764 : f32
    %106 = vector.broadcast %cst_53 : f32 to vector<16x16xf32>
    %107 = arith.mulf %105, %106 : vector<16x16xf32>
    %cst_54 = arith.constant dense<0xFF800000> : vector<16xf32>
    %108 = vector.multi_reduction <maximumf>, %107, %cst_54 [1] : vector<16x16xf32> to vector<16xf32>
    %109 = vector.shape_cast %108 : vector<16xf32> to vector<16x1xf32>
    %110 = vector.broadcast %109 : vector<16x1xf32> to vector<16x16xf32>
    %111 = arith.subf %107, %110 : vector<16x16xf32>
    %112 = math.exp %111 : vector<16x16xf32>
    %cst_55 = arith.constant dense<0.000000e+00> : vector<16xf32>
    %113 = vector.multi_reduction <add>, %112, %cst_55 [1] : vector<16x16xf32> to vector<16xf32>
    %114 = vector.shape_cast %113 : vector<16xf32> to vector<16x1xf32>
    %115 = tpu.reciprocal %114 {approx = true} : vector<16x1xf32> -> vector<16x1xf32>
    %116 = vector.broadcast %115 : vector<16x1xf32> to vector<16x16xf32>
    %117 = arith.mulf %112, %116 : vector<16x16xf32>
    %118 = vector.broadcast %21 : vector<1x40xf32> to vector<16x40xf32>
    %119 = arith.mulf %63, %118 : vector<16x40xf32>
    %cst_56 = arith.constant dense<0.000000e+00> : vector<16x40xf32>
    %120 = tpu.matmul %117, %119, %cst_56 {dimension_numbers = #tpu.dot_dimension_numbers<[1], [0], [0], [1], [0, 0, 1, 1], [], []>} : vector<16x16xf32>, vector<16x40xf32>, vector<16x40xf32> -> vector<16x40xf32>
    %121 = arith.addf %102, %120 : vector<16x40xf32>
    %122 = vector.broadcast %28 : vector<1x40xf32> to vector<16x40xf32>
    %123 = arith.mulf %57, %122 : vector<16x40xf32>
    %cst_57 = arith.constant dense<0.000000e+00> : vector<16x16xf32>
    %124 = tpu.matmul %123, %60, %cst_57 {dimension_numbers = #tpu.dot_dimension_numbers<[1], [1], [0], [0], [0, 0, 1, 0], [], []>} : vector<16x40xf32>, vector<16x40xf32>, vector<16x16xf32> -> vector<16x16xf32>
    %cst_58 = arith.constant 0.316227764 : f32
    %125 = vector.broadcast %cst_58 : f32 to vector<16x16xf32>
    %126 = arith.mulf %124, %125 : vector<16x16xf32>
    %cst_59 = arith.constant dense<0xFF800000> : vector<16xf32>
    %127 = vector.multi_reduction <maximumf>, %126, %cst_59 [1] : vector<16x16xf32> to vector<16xf32>
    %128 = vector.shape_cast %127 : vector<16xf32> to vector<16x1xf32>
    %129 = vector.broadcast %128 : vector<16x1xf32> to vector<16x16xf32>
    %130 = arith.subf %126, %129 : vector<16x16xf32>
    %131 = math.exp %130 : vector<16x16xf32>
    %cst_60 = arith.constant dense<0.000000e+00> : vector<16xf32>
    %132 = vector.multi_reduction <add>, %131, %cst_60 [1] : vector<16x16xf32> to vector<16xf32>
    %133 = vector.shape_cast %132 : vector<16xf32> to vector<16x1xf32>
    %134 = tpu.reciprocal %133 {approx = true} : vector<16x1xf32> -> vector<16x1xf32>
    %135 = vector.broadcast %134 : vector<16x1xf32> to vector<16x16xf32>
    %136 = arith.mulf %131, %135 : vector<16x16xf32>
    %137 = vector.broadcast %28 : vector<1x40xf32> to vector<16x40xf32>
    %138 = arith.mulf %63, %137 : vector<16x40xf32>
    %cst_61 = arith.constant dense<0.000000e+00> : vector<16x40xf32>
    %139 = tpu.matmul %136, %138, %cst_61 {dimension_numbers = #tpu.dot_dimension_numbers<[1], [0], [0], [1], [0, 0, 1, 1], [], []>} : vector<16x16xf32>, vector<16x40xf32>, vector<16x40xf32> -> vector<16x40xf32>
    %140 = arith.addf %121, %139 : vector<16x40xf32>
    %c0_62 = arith.constant 0 : index
    %c0_63 = arith.constant 0 : index
    %c0_64 = arith.constant 0 : index
    %141 = vector.load %arg12[%c0_62, %c0_63, %c0_64] : memref<7x40x40xf32, #tpu.memory_space<vmem>>, vector<1x40x40xf32>
    %142 = vector.shape_cast %141 : vector<1x40x40xf32> to vector<40x40xf32>
    %cst_65 = arith.constant dense<0.000000e+00> : vector<16x40xf32>
    %143 = tpu.matmul %140, %142, %cst_65 {dimension_numbers = #tpu.dot_dimension_numbers<[1], [0], [0], [1], [0, 0, 1, 1], [], []>} : vector<16x40xf32>, vector<40x40xf32>, vector<16x40xf32> -> vector<16x40xf32>
    %c0_66 = arith.constant 0 : index
    %c0_67 = arith.constant 0 : index
    %c0_68 = arith.constant 0 : index
    %144 = vector.load %arg13[%c0_66, %c0_67, %c0_68] : memref<7x1x40xf32, #tpu.memory_space<vmem>>, vector<1x1x40xf32>
    %145 = vector.shape_cast %144 : vector<1x1x40xf32> to vector<1x40xf32>
    %146 = vector.broadcast %145 : vector<1x40xf32> to vector<16x40xf32>
    %147 = arith.addf %143, %146 : vector<16x40xf32>
    %148 = arith.addf %147, %31 : vector<16x40xf32>
    %c0_69 = arith.constant 0 : index
    %c0_70 = arith.constant 0 : index
    %c0_71 = arith.constant 0 : index
    %149 = vector.load %arg16[%c0_69, %c0_70, %c0_71] : memref<7x1x40xf32, #tpu.memory_space<vmem>>, vector<1x1x40xf32>
    %150 = vector.shape_cast %149 : vector<1x1x40xf32> to vector<1x40xf32>
    %151 = vector.broadcast %150 : vector<1x40xf32> to vector<16x40xf32>
    %152 = arith.mulf %148, %151 : vector<16x40xf32>
    %c0_72 = arith.constant 0 : index
    %c0_73 = arith.constant 0 : index
    %c0_74 = arith.constant 0 : index
    %153 = vector.load %arg17[%c0_72, %c0_73, %c0_74] : memref<7x1x40xf32, #tpu.memory_space<vmem>>, vector<1x1x40xf32>
    %154 = vector.shape_cast %153 : vector<1x1x40xf32> to vector<1x40xf32>
    %155 = vector.broadcast %154 : vector<1x40xf32> to vector<16x40xf32>
    %156 = arith.addf %152, %155 : vector<16x40xf32>
    %157 = arith.addf %54, %156 : vector<16x40xf32>
    %c0_75 = arith.constant 0 : index
    %c0_76 = arith.constant 0 : index
    %c0_77 = arith.constant 0 : index
    %158 = vector.load %arg20[%c0_75, %c0_76, %c0_77] : memref<7x40x80xf32, #tpu.memory_space<vmem>>, vector<1x40x80xf32>
    %159 = vector.shape_cast %158 : vector<1x40x80xf32> to vector<40x80xf32>
    %cst_78 = arith.constant dense<0.000000e+00> : vector<16x80xf32>
    %160 = tpu.matmul %157, %159, %cst_78 {dimension_numbers = #tpu.dot_dimension_numbers<[1], [0], [0], [1], [0, 0, 1, 1], [], []>} : vector<16x40xf32>, vector<40x80xf32>, vector<16x80xf32> -> vector<16x80xf32>
    %c0_79 = arith.constant 0 : index
    %c0_80 = arith.constant 0 : index
    %c0_81 = arith.constant 0 : index
    %161 = vector.load %arg21[%c0_79, %c0_80, %c0_81] : memref<7x1x80xf32, #tpu.memory_space<vmem>>, vector<1x1x80xf32>
    %162 = vector.shape_cast %161 : vector<1x1x80xf32> to vector<1x80xf32>
    %163 = vector.broadcast %162 : vector<1x80xf32> to vector<16x80xf32>
    %164 = arith.addf %160, %163 : vector<16x80xf32>
    %cst_82 = arith.constant 0.000000e+00 : f32
    %165 = vector.broadcast %cst_82 : f32 to vector<16x80xf32>
    %166 = arith.maximumf %164, %165 : vector<16x80xf32>
    %c0_83 = arith.constant 0 : index
    %c0_84 = arith.constant 0 : index
    %c0_85 = arith.constant 0 : index
    %167 = vector.load %arg22[%c0_83, %c0_84, %c0_85] : memref<7x80x40xf32, #tpu.memory_space<vmem>>, vector<1x80x40xf32>
    %168 = vector.shape_cast %167 : vector<1x80x40xf32> to vector<80x40xf32>
    %cst_86 = arith.constant dense<0.000000e+00> : vector<16x40xf32>
    %169 = tpu.matmul %166, %168, %cst_86 {dimension_numbers = #tpu.dot_dimension_numbers<[1], [0], [0], [1], [0, 0, 1, 1], [], []>} : vector<16x80xf32>, vector<80x40xf32>, vector<16x40xf32> -> vector<16x40xf32>
    %c0_87 = arith.constant 0 : index
    %c0_88 = arith.constant 0 : index
    %c0_89 = arith.constant 0 : index
    %170 = vector.load %arg23[%c0_87, %c0_88, %c0_89] : memref<7x1x40xf32, #tpu.memory_space<vmem>>, vector<1x1x40xf32>
    %171 = vector.shape_cast %170 : vector<1x1x40xf32> to vector<1x40xf32>
    %172 = vector.broadcast %171 : vector<1x40xf32> to vector<16x40xf32>
    %173 = arith.addf %169, %172 : vector<16x40xf32>
    %174 = arith.addf %157, %173 : vector<16x40xf32>
    %c0_90 = arith.constant 0 : index
    %c0_91 = arith.constant 0 : index
    %c0_92 = arith.constant 0 : index
    %175 = vector.load %arg18[%c0_90, %c0_91, %c0_92] : memref<7x1x40xf32, #tpu.memory_space<vmem>>, vector<1x1x40xf32>
    %176 = vector.shape_cast %175 : vector<1x1x40xf32> to vector<1x40xf32>
    %177 = vector.broadcast %176 : vector<1x40xf32> to vector<16x40xf32>
    %178 = arith.mulf %174, %177 : vector<16x40xf32>
    %c0_93 = arith.constant 0 : index
    %c0_94 = arith.constant 0 : index
    %c0_95 = arith.constant 0 : index
    %179 = vector.load %arg19[%c0_93, %c0_94, %c0_95] : memref<7x1x40xf32, #tpu.memory_space<vmem>>, vector<1x1x40xf32>
    %180 = vector.shape_cast %179 : vector<1x1x40xf32> to vector<1x40xf32>
    %181 = vector.broadcast %180 : vector<1x40xf32> to vector<16x40xf32>
    %182 = arith.addf %178, %181 : vector<16x40xf32>
    %c0_96 = arith.constant 0 : index
    %c0_97 = arith.constant 0 : index
    %c0_98 = arith.constant 0 : index
    %183 = vector.load %arg24[%c0_96, %c0_97, %c0_98] : memref<7x40x32xf32, #tpu.memory_space<vmem>>, vector<1x40x32xf32>
    %184 = vector.shape_cast %183 : vector<1x40x32xf32> to vector<40x32xf32>
    %cst_99 = arith.constant dense<0.000000e+00> : vector<16x32xf32>
    %185 = tpu.matmul %182, %184, %cst_99 {dimension_numbers = #tpu.dot_dimension_numbers<[1], [0], [0], [1], [0, 0, 1, 1], [], []>} : vector<16x40xf32>, vector<40x32xf32>, vector<16x32xf32> -> vector<16x32xf32>
    %c0_100 = arith.constant 0 : index
    %c0_101 = arith.constant 0 : index
    %c0_102 = arith.constant 0 : index
    %186 = vector.load %arg25[%c0_100, %c0_101, %c0_102] : memref<7x1x32xf32, #tpu.memory_space<vmem>>, vector<1x1x32xf32>
    %187 = vector.shape_cast %186 : vector<1x1x32xf32> to vector<1x32xf32>
    %188 = vector.broadcast %187 : vector<1x32xf32> to vector<16x32xf32>
    %189 = arith.addf %185, %188 : vector<16x32xf32>
    %c0_103 = arith.constant 0 : index
    %c0_104 = arith.constant 0 : index
    %c0_105 = arith.constant 0 : index
    %190 = vector.load %arg26[%c0_103, %c0_104, %c0_105] : memref<7x32x32xf32, #tpu.memory_space<vmem>>, vector<1x32x32xf32>
    %191 = vector.shape_cast %190 : vector<1x32x32xf32> to vector<32x32xf32>
    %cst_106 = arith.constant dense<0.000000e+00> : vector<16x32xf32>
    %192 = tpu.matmul %189, %191, %cst_106 {dimension_numbers = #tpu.dot_dimension_numbers<[1], [0], [0], [1], [0, 0, 1, 1], [], []>} : vector<16x32xf32>, vector<32x32xf32>, vector<16x32xf32> -> vector<16x32xf32>
    %c0_107 = arith.constant 0 : index
    %c0_108 = arith.constant 0 : index
    %c0_109 = arith.constant 0 : index
    %193 = vector.load %arg28[%c0_107, %c0_108, %c0_109] : memref<7x1x32xf32, #tpu.memory_space<vmem>>, vector<1x1x32xf32>
    %194 = vector.shape_cast %193 : vector<1x1x32xf32> to vector<1x32xf32>
    %195 = vector.broadcast %194 : vector<1x32xf32> to vector<16x32xf32>
    %196 = arith.mulf %192, %195 : vector<16x32xf32>
    %cst_110 = arith.constant dense<0.000000e+00> : vector<16xf32>
    %197 = vector.multi_reduction <add>, %196, %cst_110 [1] : vector<16x32xf32> to vector<16xf32>
    %198 = vector.shape_cast %197 : vector<16xf32> to vector<16x1xf32>
    %c0_111 = arith.constant 0 : index
    %c0_112 = arith.constant 0 : index
    %c0_113 = arith.constant 0 : index
    %199 = vector.load %arg27[%c0_111, %c0_112, %c0_113] : memref<7x1x32xf32, #tpu.memory_space<vmem>>, vector<1x1x32xf32>
    %200 = vector.shape_cast %199 : vector<1x1x32xf32> to vector<1x32xf32>
    %cst_114 = arith.constant dense<0.000000e+00> : vector<1x16xf32>
    %201 = tpu.matmul %200, %192, %cst_114 {dimension_numbers = #tpu.dot_dimension_numbers<[1], [1], [0], [0], [0, 0, 1, 0], [], []>} : vector<1x32xf32>, vector<16x32xf32>, vector<1x16xf32> -> vector<1x16xf32>
    %202 = vector.broadcast %198 : vector<16x1xf32> to vector<16x16xf32>
    %203 = vector.broadcast %201 : vector<1x16xf32> to vector<16x16xf32>
    %204 = arith.addf %202, %203 : vector<16x16xf32>
    %cst_115 = arith.constant 0.000000e+00 : f32
    %205 = vector.broadcast %cst_115 : f32 to vector<16x16xf32>
    %206 = arith.cmpf ogt, %204, %205 : vector<16x16xf32>
    %cst_116 = arith.constant 2.000000e-01 : f32
    %207 = vector.broadcast %cst_116 : f32 to vector<16x16xf32>
    %208 = arith.mulf %207, %204 : vector<16x16xf32>
    %209 = arith.select %206, %204, %208 : vector<16x16xi1>, vector<16x16xf32>
    %cst_117 = arith.constant 0.000000e+00 : f32
    %210 = vector.broadcast %cst_117 : f32 to vector<16x16xf32>
    %211 = arith.cmpf ogt, %37, %210 : vector<16x16xf32>
    %cst_118 = arith.constant -1.000000e+30 : f32
    %212 = vector.broadcast %cst_118 : f32 to vector<16x16xf32>
    %213 = arith.select %211, %209, %212 : vector<16x16xi1>, vector<16x16xf32>
    %cst_119 = arith.constant dense<0xFF800000> : vector<16xf32>
    %214 = vector.multi_reduction <maximumf>, %213, %cst_119 [1] : vector<16x16xf32> to vector<16xf32>
    %215 = vector.shape_cast %214 : vector<16xf32> to vector<16x1xf32>
    %216 = vector.broadcast %215 : vector<16x1xf32> to vector<16x16xf32>
    %217 = arith.subf %213, %216 : vector<16x16xf32>
    %218 = math.exp %217 : vector<16x16xf32>
    %cst_120 = arith.constant dense<0.000000e+00> : vector<16xf32>
    %219 = vector.multi_reduction <add>, %218, %cst_120 [1] : vector<16x16xf32> to vector<16xf32>
    %220 = vector.shape_cast %219 : vector<16xf32> to vector<16x1xf32>
    %221 = tpu.reciprocal %220 {approx = true} : vector<16x1xf32> -> vector<16x1xf32>
    %222 = vector.broadcast %221 : vector<16x1xf32> to vector<16x16xf32>
    %223 = arith.mulf %218, %222 : vector<16x16xf32>
    %cst_121 = arith.constant dense<0.000000e+00> : vector<16x32xf32>
    %224 = tpu.matmul %223, %192, %cst_121 {dimension_numbers = #tpu.dot_dimension_numbers<[1], [0], [0], [1], [0, 0, 1, 1], [], []>} : vector<16x16xf32>, vector<16x32xf32>, vector<16x32xf32> -> vector<16x32xf32>
    %c0_122 = arith.constant 0 : index
    %c0_123 = arith.constant 0 : index
    %c0_124 = arith.constant 0 : index
    %225 = vector.load %arg29[%c0_122, %c0_123, %c0_124] : memref<7x1x32xf32, #tpu.memory_space<vmem>>, vector<1x1x32xf32>
    %226 = vector.shape_cast %225 : vector<1x1x32xf32> to vector<1x32xf32>
    %227 = vector.broadcast %226 : vector<1x32xf32> to vector<16x32xf32>
    %228 = arith.addf %224, %227 : vector<16x32xf32>
    %c0_125 = arith.constant 0 : index
    %c0_126 = arith.constant 0 : index
    %c0_127 = arith.constant 0 : index
    %229 = vector.load %arg30[%c0_125, %c0_126, %c0_127] : memref<7x32x32xf32, #tpu.memory_space<vmem>>, vector<1x32x32xf32>
    %230 = vector.shape_cast %229 : vector<1x32x32xf32> to vector<32x32xf32>
    %cst_128 = arith.constant dense<0.000000e+00> : vector<16x32xf32>
    %231 = tpu.matmul %228, %230, %cst_128 {dimension_numbers = #tpu.dot_dimension_numbers<[1], [0], [0], [1], [0, 0, 1, 1], [], []>} : vector<16x32xf32>, vector<32x32xf32>, vector<16x32xf32> -> vector<16x32xf32>
    %cst_129 = arith.constant dense<0.000000e+00> : vector<16x32xf32>
    %232 = tpu.matmul %35, %231, %cst_129 {dimension_numbers = #tpu.dot_dimension_numbers<[1], [0], [0], [1], [0, 0, 1, 1], [], []>} : vector<16x16xf32>, vector<16x32xf32>, vector<16x32xf32> -> vector<16x32xf32>
    %c0_130 = arith.constant 0 : index
    %c0_131 = arith.constant 0 : index
    %c0_132 = arith.constant 0 : index
    %233 = vector.load %arg31[%c0_130, %c0_131, %c0_132] : memref<7x1x32xf32, #tpu.memory_space<vmem>>, vector<1x1x32xf32>
    %234 = vector.shape_cast %233 : vector<1x1x32xf32> to vector<1x32xf32>
    %235 = vector.broadcast %234 : vector<1x32xf32> to vector<16x32xf32>
    %236 = arith.addf %232, %235 : vector<16x32xf32>
    %c0_133 = arith.constant 0 : index
    %c0_134 = arith.constant 0 : index
    %c0_135 = arith.constant 0 : index
    %237 = vector.load %arg32[%c0_133, %c0_134, %c0_135] : memref<7x32x32xf32, #tpu.memory_space<vmem>>, vector<1x32x32xf32>
    %238 = vector.shape_cast %237 : vector<1x32x32xf32> to vector<32x32xf32>
    %cst_136 = arith.constant dense<0.000000e+00> : vector<16x32xf32>
    %239 = tpu.matmul %228, %238, %cst_136 {dimension_numbers = #tpu.dot_dimension_numbers<[1], [0], [0], [1], [0, 0, 1, 1], [], []>} : vector<16x32xf32>, vector<32x32xf32>, vector<16x32xf32> -> vector<16x32xf32>
    %cst_137 = arith.constant dense<0.000000e+00> : vector<16x32xf32>
    %240 = tpu.matmul %33, %239, %cst_137 {dimension_numbers = #tpu.dot_dimension_numbers<[1], [0], [0], [1], [0, 0, 1, 1], [], []>} : vector<16x16xf32>, vector<16x32xf32>, vector<16x32xf32> -> vector<16x32xf32>
    %c0_138 = arith.constant 0 : index
    %c0_139 = arith.constant 0 : index
    %c0_140 = arith.constant 0 : index
    %241 = vector.load %arg33[%c0_138, %c0_139, %c0_140] : memref<7x1x32xf32, #tpu.memory_space<vmem>>, vector<1x1x32xf32>
    %242 = vector.shape_cast %241 : vector<1x1x32xf32> to vector<1x32xf32>
    %243 = vector.broadcast %242 : vector<1x32xf32> to vector<16x32xf32>
    %244 = arith.addf %240, %243 : vector<16x32xf32>
    %245 = arith.addf %244, %236 : vector<16x32xf32>
    %c0_141 = arith.constant 0 : index
    %c0_142 = arith.constant 0 : index
    %c0_143 = arith.constant 0 : index
    %246 = vector.load %arg34[%c0_141, %c0_142, %c0_143] : memref<7x1x32xf32, #tpu.memory_space<vmem>>, vector<1x1x32xf32>
    %247 = vector.shape_cast %246 : vector<1x1x32xf32> to vector<1x32xf32>
    %248 = vector.broadcast %247 : vector<1x32xf32> to vector<16x32xf32>
    %249 = arith.mulf %245, %248 : vector<16x32xf32>
    %c0_144 = arith.constant 0 : index
    %c0_145 = arith.constant 0 : index
    %c0_146 = arith.constant 0 : index
    %250 = vector.load %arg35[%c0_144, %c0_145, %c0_146] : memref<7x1x32xf32, #tpu.memory_space<vmem>>, vector<1x1x32xf32>
    %251 = vector.shape_cast %250 : vector<1x1x32xf32> to vector<1x32xf32>
    %252 = vector.broadcast %251 : vector<1x32xf32> to vector<16x32xf32>
    %253 = arith.addf %249, %252 : vector<16x32xf32>
    %c1 = arith.constant 1 : index
    %c0_147 = arith.constant 0 : index
    %c0_148 = arith.constant 0 : index
    %254 = vector.load %arg0[%c1, %c0_147, %c0_148] : memref<7x16x40xf32, #tpu.memory_space<vmem>>, vector<1x16x40xf32>
    %255 = vector.shape_cast %254 : vector<1x16x40xf32> to vector<16x40xf32>
    %c1_149 = arith.constant 1 : index
    %c0_150 = arith.constant 0 : index
    %c0_151 = arith.constant 0 : index
    %256 = vector.load %arg2[%c1_149, %c0_150, %c0_151] : memref<7x16x16xf32, #tpu.memory_space<vmem>>, vector<1x16x16xf32>
    %257 = vector.shape_cast %256 : vector<1x16x16xf32> to vector<16x16xf32>
    %c1_152 = arith.constant 1 : index
    %c0_153 = arith.constant 0 : index
    %c0_154 = arith.constant 0 : index
    %258 = vector.load %arg3[%c1_152, %c0_153, %c0_154] : memref<7x16x16xf32, #tpu.memory_space<vmem>>, vector<1x16x16xf32>
    %259 = vector.shape_cast %258 : vector<1x16x16xf32> to vector<16x16xf32>
    %c1_155 = arith.constant 1 : index
    %c0_156 = arith.constant 0 : index
    %c0_157 = arith.constant 0 : index
    %260 = vector.load %arg4[%c1_155, %c0_156, %c0_157] : memref<7x16x16xf32, #tpu.memory_space<vmem>>, vector<1x16x16xf32>
    %261 = vector.shape_cast %260 : vector<1x16x16xf32> to vector<16x16xf32>
    %c1_158 = arith.constant 1 : index
    %c0_159 = arith.constant 0 : index
    %c0_160 = arith.constant 0 : index
    %262 = vector.load %arg7[%c1_158, %c0_159, %c0_160] : memref<7x40x40xf32, #tpu.memory_space<vmem>>, vector<1x40x40xf32>
    %263 = vector.shape_cast %262 : vector<1x40x40xf32> to vector<40x40xf32>
    %cst_161 = arith.constant dense<0.000000e+00> : vector<16x40xf32>
    %264 = tpu.matmul %255, %263, %cst_161 {dimension_numbers = #tpu.dot_dimension_numbers<[1], [0], [0], [1], [0, 0, 1, 1], [], []>} : vector<16x40xf32>, vector<40x40xf32>, vector<16x40xf32> -> vector<16x40xf32>
    %cst_162 = arith.constant dense<0.000000e+00> : vector<16x40xf32>
    %265 = tpu.matmul %257, %264, %cst_162 {dimension_numbers = #tpu.dot_dimension_numbers<[1], [0], [0], [1], [0, 0, 1, 1], [], []>} : vector<16x16xf32>, vector<16x40xf32>, vector<16x40xf32> -> vector<16x40xf32>
    %c1_163 = arith.constant 1 : index
    %c0_164 = arith.constant 0 : index
    %c0_165 = arith.constant 0 : index
    %266 = vector.load %arg8[%c1_163, %c0_164, %c0_165] : memref<7x1x40xf32, #tpu.memory_space<vmem>>, vector<1x1x40xf32>
    %267 = vector.shape_cast %266 : vector<1x1x40xf32> to vector<1x40xf32>
    %268 = vector.broadcast %267 : vector<1x40xf32> to vector<16x40xf32>
    %269 = arith.addf %265, %268 : vector<16x40xf32>
    %270 = arith.addf %269, %255 : vector<16x40xf32>
    %c1_166 = arith.constant 1 : index
    %c0_167 = arith.constant 0 : index
    %c0_168 = arith.constant 0 : index
    %271 = vector.load %arg14[%c1_166, %c0_167, %c0_168] : memref<7x1x40xf32, #tpu.memory_space<vmem>>, vector<1x1x40xf32>
    %272 = vector.shape_cast %271 : vector<1x1x40xf32> to vector<1x40xf32>
    %273 = vector.broadcast %272 : vector<1x40xf32> to vector<16x40xf32>
    %274 = arith.mulf %270, %273 : vector<16x40xf32>
    %c1_169 = arith.constant 1 : index
    %c0_170 = arith.constant 0 : index
    %c0_171 = arith.constant 0 : index
    %275 = vector.load %arg15[%c1_169, %c0_170, %c0_171] : memref<7x1x40xf32, #tpu.memory_space<vmem>>, vector<1x1x40xf32>
    %276 = vector.shape_cast %275 : vector<1x1x40xf32> to vector<1x40xf32>
    %277 = vector.broadcast %276 : vector<1x40xf32> to vector<16x40xf32>
    %278 = arith.addf %274, %277 : vector<16x40xf32>
    %c1_172 = arith.constant 1 : index
    %c0_173 = arith.constant 0 : index
    %c0_174 = arith.constant 0 : index
    %279 = vector.load %arg9[%c1_172, %c0_173, %c0_174] : memref<7x40x40xf32, #tpu.memory_space<vmem>>, vector<1x40x40xf32>
    %280 = vector.shape_cast %279 : vector<1x40x40xf32> to vector<40x40xf32>
    %cst_175 = arith.constant dense<0.000000e+00> : vector<16x40xf32>
    %281 = tpu.matmul %255, %280, %cst_175 {dimension_numbers = #tpu.dot_dimension_numbers<[1], [0], [0], [1], [0, 0, 1, 1], [], []>} : vector<16x40xf32>, vector<40x40xf32>, vector<16x40xf32> -> vector<16x40xf32>
    %c1_176 = arith.constant 1 : index
    %c0_177 = arith.constant 0 : index
    %c0_178 = arith.constant 0 : index
    %282 = vector.load %arg10[%c1_176, %c0_177, %c0_178] : memref<7x40x40xf32, #tpu.memory_space<vmem>>, vector<1x40x40xf32>
    %283 = vector.shape_cast %282 : vector<1x40x40xf32> to vector<40x40xf32>
    %cst_179 = arith.constant dense<0.000000e+00> : vector<16x40xf32>
    %284 = tpu.matmul %255, %283, %cst_179 {dimension_numbers = #tpu.dot_dimension_numbers<[1], [0], [0], [1], [0, 0, 1, 1], [], []>} : vector<16x40xf32>, vector<40x40xf32>, vector<16x40xf32> -> vector<16x40xf32>
    %c1_180 = arith.constant 1 : index
    %c0_181 = arith.constant 0 : index
    %c0_182 = arith.constant 0 : index
    %285 = vector.load %arg11[%c1_180, %c0_181, %c0_182] : memref<7x40x40xf32, #tpu.memory_space<vmem>>, vector<1x40x40xf32>
    %286 = vector.shape_cast %285 : vector<1x40x40xf32> to vector<40x40xf32>
    %cst_183 = arith.constant dense<0.000000e+00> : vector<16x40xf32>
    %287 = tpu.matmul %255, %286, %cst_183 {dimension_numbers = #tpu.dot_dimension_numbers<[1], [0], [0], [1], [0, 0, 1, 1], [], []>} : vector<16x40xf32>, vector<40x40xf32>, vector<16x40xf32> -> vector<16x40xf32>
    %cst_184 = arith.constant 0.000000e+00 : f32
    %288 = vector.broadcast %cst_184 : f32 to vector<16x40xf32>
    %289 = vector.broadcast %7 : vector<1x40xf32> to vector<16x40xf32>
    %290 = arith.mulf %281, %289 : vector<16x40xf32>
    %cst_185 = arith.constant dense<0.000000e+00> : vector<16x16xf32>
    %291 = tpu.matmul %290, %284, %cst_185 {dimension_numbers = #tpu.dot_dimension_numbers<[1], [1], [0], [0], [0, 0, 1, 0], [], []>} : vector<16x40xf32>, vector<16x40xf32>, vector<16x16xf32> -> vector<16x16xf32>
    %cst_186 = arith.constant 0.316227764 : f32
    %292 = vector.broadcast %cst_186 : f32 to vector<16x16xf32>
    %293 = arith.mulf %291, %292 : vector<16x16xf32>
    %cst_187 = arith.constant dense<0xFF800000> : vector<16xf32>
    %294 = vector.multi_reduction <maximumf>, %293, %cst_187 [1] : vector<16x16xf32> to vector<16xf32>
    %295 = vector.shape_cast %294 : vector<16xf32> to vector<16x1xf32>
    %296 = vector.broadcast %295 : vector<16x1xf32> to vector<16x16xf32>
    %297 = arith.subf %293, %296 : vector<16x16xf32>
    %298 = math.exp %297 : vector<16x16xf32>
    %cst_188 = arith.constant dense<0.000000e+00> : vector<16xf32>
    %299 = vector.multi_reduction <add>, %298, %cst_188 [1] : vector<16x16xf32> to vector<16xf32>
    %300 = vector.shape_cast %299 : vector<16xf32> to vector<16x1xf32>
    %301 = tpu.reciprocal %300 {approx = true} : vector<16x1xf32> -> vector<16x1xf32>
    %302 = vector.broadcast %301 : vector<16x1xf32> to vector<16x16xf32>
    %303 = arith.mulf %298, %302 : vector<16x16xf32>
    %304 = vector.broadcast %7 : vector<1x40xf32> to vector<16x40xf32>
    %305 = arith.mulf %287, %304 : vector<16x40xf32>
    %cst_189 = arith.constant dense<0.000000e+00> : vector<16x40xf32>
    %306 = tpu.matmul %303, %305, %cst_189 {dimension_numbers = #tpu.dot_dimension_numbers<[1], [0], [0], [1], [0, 0, 1, 1], [], []>} : vector<16x16xf32>, vector<16x40xf32>, vector<16x40xf32> -> vector<16x40xf32>
    %307 = arith.addf %288, %306 : vector<16x40xf32>
    %308 = vector.broadcast %14 : vector<1x40xf32> to vector<16x40xf32>
    %309 = arith.mulf %281, %308 : vector<16x40xf32>
    %cst_190 = arith.constant dense<0.000000e+00> : vector<16x16xf32>
    %310 = tpu.matmul %309, %284, %cst_190 {dimension_numbers = #tpu.dot_dimension_numbers<[1], [1], [0], [0], [0, 0, 1, 0], [], []>} : vector<16x40xf32>, vector<16x40xf32>, vector<16x16xf32> -> vector<16x16xf32>
    %cst_191 = arith.constant 0.316227764 : f32
    %311 = vector.broadcast %cst_191 : f32 to vector<16x16xf32>
    %312 = arith.mulf %310, %311 : vector<16x16xf32>
    %cst_192 = arith.constant dense<0xFF800000> : vector<16xf32>
    %313 = vector.multi_reduction <maximumf>, %312, %cst_192 [1] : vector<16x16xf32> to vector<16xf32>
    %314 = vector.shape_cast %313 : vector<16xf32> to vector<16x1xf32>
    %315 = vector.broadcast %314 : vector<16x1xf32> to vector<16x16xf32>
    %316 = arith.subf %312, %315 : vector<16x16xf32>
    %317 = math.exp %316 : vector<16x16xf32>
    %cst_193 = arith.constant dense<0.000000e+00> : vector<16xf32>
    %318 = vector.multi_reduction <add>, %317, %cst_193 [1] : vector<16x16xf32> to vector<16xf32>
    %319 = vector.shape_cast %318 : vector<16xf32> to vector<16x1xf32>
    %320 = tpu.reciprocal %319 {approx = true} : vector<16x1xf32> -> vector<16x1xf32>
    %321 = vector.broadcast %320 : vector<16x1xf32> to vector<16x16xf32>
    %322 = arith.mulf %317, %321 : vector<16x16xf32>
    %323 = vector.broadcast %14 : vector<1x40xf32> to vector<16x40xf32>
    %324 = arith.mulf %287, %323 : vector<16x40xf32>
    %cst_194 = arith.constant dense<0.000000e+00> : vector<16x40xf32>
    %325 = tpu.matmul %322, %324, %cst_194 {dimension_numbers = #tpu.dot_dimension_numbers<[1], [0], [0], [1], [0, 0, 1, 1], [], []>} : vector<16x16xf32>, vector<16x40xf32>, vector<16x40xf32> -> vector<16x40xf32>
    %326 = arith.addf %307, %325 : vector<16x40xf32>
    %327 = vector.broadcast %21 : vector<1x40xf32> to vector<16x40xf32>
    %328 = arith.mulf %281, %327 : vector<16x40xf32>
    %cst_195 = arith.constant dense<0.000000e+00> : vector<16x16xf32>
    %329 = tpu.matmul %328, %284, %cst_195 {dimension_numbers = #tpu.dot_dimension_numbers<[1], [1], [0], [0], [0, 0, 1, 0], [], []>} : vector<16x40xf32>, vector<16x40xf32>, vector<16x16xf32> -> vector<16x16xf32>
    %cst_196 = arith.constant 0.316227764 : f32
    %330 = vector.broadcast %cst_196 : f32 to vector<16x16xf32>
    %331 = arith.mulf %329, %330 : vector<16x16xf32>
    %cst_197 = arith.constant dense<0xFF800000> : vector<16xf32>
    %332 = vector.multi_reduction <maximumf>, %331, %cst_197 [1] : vector<16x16xf32> to vector<16xf32>
    %333 = vector.shape_cast %332 : vector<16xf32> to vector<16x1xf32>
    %334 = vector.broadcast %333 : vector<16x1xf32> to vector<16x16xf32>
    %335 = arith.subf %331, %334 : vector<16x16xf32>
    %336 = math.exp %335 : vector<16x16xf32>
    %cst_198 = arith.constant dense<0.000000e+00> : vector<16xf32>
    %337 = vector.multi_reduction <add>, %336, %cst_198 [1] : vector<16x16xf32> to vector<16xf32>
    %338 = vector.shape_cast %337 : vector<16xf32> to vector<16x1xf32>
    %339 = tpu.reciprocal %338 {approx = true} : vector<16x1xf32> -> vector<16x1xf32>
    %340 = vector.broadcast %339 : vector<16x1xf32> to vector<16x16xf32>
    %341 = arith.mulf %336, %340 : vector<16x16xf32>
    %342 = vector.broadcast %21 : vector<1x40xf32> to vector<16x40xf32>
    %343 = arith.mulf %287, %342 : vector<16x40xf32>
    %cst_199 = arith.constant dense<0.000000e+00> : vector<16x40xf32>
    %344 = tpu.matmul %341, %343, %cst_199 {dimension_numbers = #tpu.dot_dimension_numbers<[1], [0], [0], [1], [0, 0, 1, 1], [], []>} : vector<16x16xf32>, vector<16x40xf32>, vector<16x40xf32> -> vector<16x40xf32>
    %345 = arith.addf %326, %344 : vector<16x40xf32>
    %346 = vector.broadcast %28 : vector<1x40xf32> to vector<16x40xf32>
    %347 = arith.mulf %281, %346 : vector<16x40xf32>
    %cst_200 = arith.constant dense<0.000000e+00> : vector<16x16xf32>
    %348 = tpu.matmul %347, %284, %cst_200 {dimension_numbers = #tpu.dot_dimension_numbers<[1], [1], [0], [0], [0, 0, 1, 0], [], []>} : vector<16x40xf32>, vector<16x40xf32>, vector<16x16xf32> -> vector<16x16xf32>
    %cst_201 = arith.constant 0.316227764 : f32
    %349 = vector.broadcast %cst_201 : f32 to vector<16x16xf32>
    %350 = arith.mulf %348, %349 : vector<16x16xf32>
    %cst_202 = arith.constant dense<0xFF800000> : vector<16xf32>
    %351 = vector.multi_reduction <maximumf>, %350, %cst_202 [1] : vector<16x16xf32> to vector<16xf32>
    %352 = vector.shape_cast %351 : vector<16xf32> to vector<16x1xf32>
    %353 = vector.broadcast %352 : vector<16x1xf32> to vector<16x16xf32>
    %354 = arith.subf %350, %353 : vector<16x16xf32>
    %355 = math.exp %354 : vector<16x16xf32>
    %cst_203 = arith.constant dense<0.000000e+00> : vector<16xf32>
    %356 = vector.multi_reduction <add>, %355, %cst_203 [1] : vector<16x16xf32> to vector<16xf32>
    %357 = vector.shape_cast %356 : vector<16xf32> to vector<16x1xf32>
    %358 = tpu.reciprocal %357 {approx = true} : vector<16x1xf32> -> vector<16x1xf32>
    %359 = vector.broadcast %358 : vector<16x1xf32> to vector<16x16xf32>
    %360 = arith.mulf %355, %359 : vector<16x16xf32>
    %361 = vector.broadcast %28 : vector<1x40xf32> to vector<16x40xf32>
    %362 = arith.mulf %287, %361 : vector<16x40xf32>
    %cst_204 = arith.constant dense<0.000000e+00> : vector<16x40xf32>
    %363 = tpu.matmul %360, %362, %cst_204 {dimension_numbers = #tpu.dot_dimension_numbers<[1], [0], [0], [1], [0, 0, 1, 1], [], []>} : vector<16x16xf32>, vector<16x40xf32>, vector<16x40xf32> -> vector<16x40xf32>
    %364 = arith.addf %345, %363 : vector<16x40xf32>
    %c1_205 = arith.constant 1 : index
    %c0_206 = arith.constant 0 : index
    %c0_207 = arith.constant 0 : index
    %365 = vector.load %arg12[%c1_205, %c0_206, %c0_207] : memref<7x40x40xf32, #tpu.memory_space<vmem>>, vector<1x40x40xf32>
    %366 = vector.shape_cast %365 : vector<1x40x40xf32> to vector<40x40xf32>
    %cst_208 = arith.constant dense<0.000000e+00> : vector<16x40xf32>
    %367 = tpu.matmul %364, %366, %cst_208 {dimension_numbers = #tpu.dot_dimension_numbers<[1], [0], [0], [1], [0, 0, 1, 1], [], []>} : vector<16x40xf32>, vector<40x40xf32>, vector<16x40xf32> -> vector<16x40xf32>
    %c1_209 = arith.constant 1 : index
    %c0_210 = arith.constant 0 : index
    %c0_211 = arith.constant 0 : index
    %368 = vector.load %arg13[%c1_209, %c0_210, %c0_211] : memref<7x1x40xf32, #tpu.memory_space<vmem>>, vector<1x1x40xf32>
    %369 = vector.shape_cast %368 : vector<1x1x40xf32> to vector<1x40xf32>
    %370 = vector.broadcast %369 : vector<1x40xf32> to vector<16x40xf32>
    %371 = arith.addf %367, %370 : vector<16x40xf32>
    %372 = arith.addf %371, %255 : vector<16x40xf32>
    %c1_212 = arith.constant 1 : index
    %c0_213 = arith.constant 0 : index
    %c0_214 = arith.constant 0 : index
    %373 = vector.load %arg16[%c1_212, %c0_213, %c0_214] : memref<7x1x40xf32, #tpu.memory_space<vmem>>, vector<1x1x40xf32>
    %374 = vector.shape_cast %373 : vector<1x1x40xf32> to vector<1x40xf32>
    %375 = vector.broadcast %374 : vector<1x40xf32> to vector<16x40xf32>
    %376 = arith.mulf %372, %375 : vector<16x40xf32>
    %c1_215 = arith.constant 1 : index
    %c0_216 = arith.constant 0 : index
    %c0_217 = arith.constant 0 : index
    %377 = vector.load %arg17[%c1_215, %c0_216, %c0_217] : memref<7x1x40xf32, #tpu.memory_space<vmem>>, vector<1x1x40xf32>
    %378 = vector.shape_cast %377 : vector<1x1x40xf32> to vector<1x40xf32>
    %379 = vector.broadcast %378 : vector<1x40xf32> to vector<16x40xf32>
    %380 = arith.addf %376, %379 : vector<16x40xf32>
    %381 = arith.addf %278, %380 : vector<16x40xf32>
    %c1_218 = arith.constant 1 : index
    %c0_219 = arith.constant 0 : index
    %c0_220 = arith.constant 0 : index
    %382 = vector.load %arg20[%c1_218, %c0_219, %c0_220] : memref<7x40x80xf32, #tpu.memory_space<vmem>>, vector<1x40x80xf32>
    %383 = vector.shape_cast %382 : vector<1x40x80xf32> to vector<40x80xf32>
    %cst_221 = arith.constant dense<0.000000e+00> : vector<16x80xf32>
    %384 = tpu.matmul %381, %383, %cst_221 {dimension_numbers = #tpu.dot_dimension_numbers<[1], [0], [0], [1], [0, 0, 1, 1], [], []>} : vector<16x40xf32>, vector<40x80xf32>, vector<16x80xf32> -> vector<16x80xf32>
    %c1_222 = arith.constant 1 : index
    %c0_223 = arith.constant 0 : index
    %c0_224 = arith.constant 0 : index
    %385 = vector.load %arg21[%c1_222, %c0_223, %c0_224] : memref<7x1x80xf32, #tpu.memory_space<vmem>>, vector<1x1x80xf32>
    %386 = vector.shape_cast %385 : vector<1x1x80xf32> to vector<1x80xf32>
    %387 = vector.broadcast %386 : vector<1x80xf32> to vector<16x80xf32>
    %388 = arith.addf %384, %387 : vector<16x80xf32>
    %cst_225 = arith.constant 0.000000e+00 : f32
    %389 = vector.broadcast %cst_225 : f32 to vector<16x80xf32>
    %390 = arith.maximumf %388, %389 : vector<16x80xf32>
    %c1_226 = arith.constant 1 : index
    %c0_227 = arith.constant 0 : index
    %c0_228 = arith.constant 0 : index
    %391 = vector.load %arg22[%c1_226, %c0_227, %c0_228] : memref<7x80x40xf32, #tpu.memory_space<vmem>>, vector<1x80x40xf32>
    %392 = vector.shape_cast %391 : vector<1x80x40xf32> to vector<80x40xf32>
    %cst_229 = arith.constant dense<0.000000e+00> : vector<16x40xf32>
    %393 = tpu.matmul %390, %392, %cst_229 {dimension_numbers = #tpu.dot_dimension_numbers<[1], [0], [0], [1], [0, 0, 1, 1], [], []>} : vector<16x80xf32>, vector<80x40xf32>, vector<16x40xf32> -> vector<16x40xf32>
    %c1_230 = arith.constant 1 : index
    %c0_231 = arith.constant 0 : index
    %c0_232 = arith.constant 0 : index
    %394 = vector.load %arg23[%c1_230, %c0_231, %c0_232] : memref<7x1x40xf32, #tpu.memory_space<vmem>>, vector<1x1x40xf32>
    %395 = vector.shape_cast %394 : vector<1x1x40xf32> to vector<1x40xf32>
    %396 = vector.broadcast %395 : vector<1x40xf32> to vector<16x40xf32>
    %397 = arith.addf %393, %396 : vector<16x40xf32>
    %398 = arith.addf %381, %397 : vector<16x40xf32>
    %c1_233 = arith.constant 1 : index
    %c0_234 = arith.constant 0 : index
    %c0_235 = arith.constant 0 : index
    %399 = vector.load %arg18[%c1_233, %c0_234, %c0_235] : memref<7x1x40xf32, #tpu.memory_space<vmem>>, vector<1x1x40xf32>
    %400 = vector.shape_cast %399 : vector<1x1x40xf32> to vector<1x40xf32>
    %401 = vector.broadcast %400 : vector<1x40xf32> to vector<16x40xf32>
    %402 = arith.mulf %398, %401 : vector<16x40xf32>
    %c1_236 = arith.constant 1 : index
    %c0_237 = arith.constant 0 : index
    %c0_238 = arith.constant 0 : index
    %403 = vector.load %arg19[%c1_236, %c0_237, %c0_238] : memref<7x1x40xf32, #tpu.memory_space<vmem>>, vector<1x1x40xf32>
    %404 = vector.shape_cast %403 : vector<1x1x40xf32> to vector<1x40xf32>
    %405 = vector.broadcast %404 : vector<1x40xf32> to vector<16x40xf32>
    %406 = arith.addf %402, %405 : vector<16x40xf32>
    %c1_239 = arith.constant 1 : index
    %c0_240 = arith.constant 0 : index
    %c0_241 = arith.constant 0 : index
    %407 = vector.load %arg24[%c1_239, %c0_240, %c0_241] : memref<7x40x32xf32, #tpu.memory_space<vmem>>, vector<1x40x32xf32>
    %408 = vector.shape_cast %407 : vector<1x40x32xf32> to vector<40x32xf32>
    %cst_242 = arith.constant dense<0.000000e+00> : vector<16x32xf32>
    %409 = tpu.matmul %406, %408, %cst_242 {dimension_numbers = #tpu.dot_dimension_numbers<[1], [0], [0], [1], [0, 0, 1, 1], [], []>} : vector<16x40xf32>, vector<40x32xf32>, vector<16x32xf32> -> vector<16x32xf32>
    %c1_243 = arith.constant 1 : index
    %c0_244 = arith.constant 0 : index
    %c0_245 = arith.constant 0 : index
    %410 = vector.load %arg25[%c1_243, %c0_244, %c0_245] : memref<7x1x32xf32, #tpu.memory_space<vmem>>, vector<1x1x32xf32>
    %411 = vector.shape_cast %410 : vector<1x1x32xf32> to vector<1x32xf32>
    %412 = vector.broadcast %411 : vector<1x32xf32> to vector<16x32xf32>
    %413 = arith.addf %409, %412 : vector<16x32xf32>
    %c1_246 = arith.constant 1 : index
    %c0_247 = arith.constant 0 : index
    %c0_248 = arith.constant 0 : index
    %414 = vector.load %arg26[%c1_246, %c0_247, %c0_248] : memref<7x32x32xf32, #tpu.memory_space<vmem>>, vector<1x32x32xf32>
    %415 = vector.shape_cast %414 : vector<1x32x32xf32> to vector<32x32xf32>
    %cst_249 = arith.constant dense<0.000000e+00> : vector<16x32xf32>
    %416 = tpu.matmul %413, %415, %cst_249 {dimension_numbers = #tpu.dot_dimension_numbers<[1], [0], [0], [1], [0, 0, 1, 1], [], []>} : vector<16x32xf32>, vector<32x32xf32>, vector<16x32xf32> -> vector<16x32xf32>
    %c1_250 = arith.constant 1 : index
    %c0_251 = arith.constant 0 : index
    %c0_252 = arith.constant 0 : index
    %417 = vector.load %arg28[%c1_250, %c0_251, %c0_252] : memref<7x1x32xf32, #tpu.memory_space<vmem>>, vector<1x1x32xf32>
    %418 = vector.shape_cast %417 : vector<1x1x32xf32> to vector<1x32xf32>
    %419 = vector.broadcast %418 : vector<1x32xf32> to vector<16x32xf32>
    %420 = arith.mulf %416, %419 : vector<16x32xf32>
    %cst_253 = arith.constant dense<0.000000e+00> : vector<16xf32>
    %421 = vector.multi_reduction <add>, %420, %cst_253 [1] : vector<16x32xf32> to vector<16xf32>
    %422 = vector.shape_cast %421 : vector<16xf32> to vector<16x1xf32>
    %c1_254 = arith.constant 1 : index
    %c0_255 = arith.constant 0 : index
    %c0_256 = arith.constant 0 : index
    %423 = vector.load %arg27[%c1_254, %c0_255, %c0_256] : memref<7x1x32xf32, #tpu.memory_space<vmem>>, vector<1x1x32xf32>
    %424 = vector.shape_cast %423 : vector<1x1x32xf32> to vector<1x32xf32>
    %cst_257 = arith.constant dense<0.000000e+00> : vector<1x16xf32>
    %425 = tpu.matmul %424, %416, %cst_257 {dimension_numbers = #tpu.dot_dimension_numbers<[1], [1], [0], [0], [0, 0, 1, 0], [], []>} : vector<1x32xf32>, vector<16x32xf32>, vector<1x16xf32> -> vector<1x16xf32>
    %426 = vector.broadcast %422 : vector<16x1xf32> to vector<16x16xf32>
    %427 = vector.broadcast %425 : vector<1x16xf32> to vector<16x16xf32>
    %428 = arith.addf %426, %427 : vector<16x16xf32>
    %cst_258 = arith.constant 0.000000e+00 : f32
    %429 = vector.broadcast %cst_258 : f32 to vector<16x16xf32>
    %430 = arith.cmpf ogt, %428, %429 : vector<16x16xf32>
    %cst_259 = arith.constant 2.000000e-01 : f32
    %431 = vector.broadcast %cst_259 : f32 to vector<16x16xf32>
    %432 = arith.mulf %431, %428 : vector<16x16xf32>
    %433 = arith.select %430, %428, %432 : vector<16x16xi1>, vector<16x16xf32>
    %cst_260 = arith.constant 0.000000e+00 : f32
    %434 = vector.broadcast %cst_260 : f32 to vector<16x16xf32>
    %435 = arith.cmpf ogt, %261, %434 : vector<16x16xf32>
    %cst_261 = arith.constant -1.000000e+30 : f32
    %436 = vector.broadcast %cst_261 : f32 to vector<16x16xf32>
    %437 = arith.select %435, %433, %436 : vector<16x16xi1>, vector<16x16xf32>
    %cst_262 = arith.constant dense<0xFF800000> : vector<16xf32>
    %438 = vector.multi_reduction <maximumf>, %437, %cst_262 [1] : vector<16x16xf32> to vector<16xf32>
    %439 = vector.shape_cast %438 : vector<16xf32> to vector<16x1xf32>
    %440 = vector.broadcast %439 : vector<16x1xf32> to vector<16x16xf32>
    %441 = arith.subf %437, %440 : vector<16x16xf32>
    %442 = math.exp %441 : vector<16x16xf32>
    %cst_263 = arith.constant dense<0.000000e+00> : vector<16xf32>
    %443 = vector.multi_reduction <add>, %442, %cst_263 [1] : vector<16x16xf32> to vector<16xf32>
    %444 = vector.shape_cast %443 : vector<16xf32> to vector<16x1xf32>
    %445 = tpu.reciprocal %444 {approx = true} : vector<16x1xf32> -> vector<16x1xf32>
    %446 = vector.broadcast %445 : vector<16x1xf32> to vector<16x16xf32>
    %447 = arith.mulf %442, %446 : vector<16x16xf32>
    %cst_264 = arith.constant dense<0.000000e+00> : vector<16x32xf32>
    %448 = tpu.matmul %447, %416, %cst_264 {dimension_numbers = #tpu.dot_dimension_numbers<[1], [0], [0], [1], [0, 0, 1, 1], [], []>} : vector<16x16xf32>, vector<16x32xf32>, vector<16x32xf32> -> vector<16x32xf32>
    %c1_265 = arith.constant 1 : index
    %c0_266 = arith.constant 0 : index
    %c0_267 = arith.constant 0 : index
    %449 = vector.load %arg29[%c1_265, %c0_266, %c0_267] : memref<7x1x32xf32, #tpu.memory_space<vmem>>, vector<1x1x32xf32>
    %450 = vector.shape_cast %449 : vector<1x1x32xf32> to vector<1x32xf32>
    %451 = vector.broadcast %450 : vector<1x32xf32> to vector<16x32xf32>
    %452 = arith.addf %448, %451 : vector<16x32xf32>
    %c1_268 = arith.constant 1 : index
    %c0_269 = arith.constant 0 : index
    %c0_270 = arith.constant 0 : index
    %453 = vector.load %arg30[%c1_268, %c0_269, %c0_270] : memref<7x32x32xf32, #tpu.memory_space<vmem>>, vector<1x32x32xf32>
    %454 = vector.shape_cast %453 : vector<1x32x32xf32> to vector<32x32xf32>
    %cst_271 = arith.constant dense<0.000000e+00> : vector<16x32xf32>
    %455 = tpu.matmul %452, %454, %cst_271 {dimension_numbers = #tpu.dot_dimension_numbers<[1], [0], [0], [1], [0, 0, 1, 1], [], []>} : vector<16x32xf32>, vector<32x32xf32>, vector<16x32xf32> -> vector<16x32xf32>
    %cst_272 = arith.constant dense<0.000000e+00> : vector<16x32xf32>
    %456 = tpu.matmul %259, %455, %cst_272 {dimension_numbers = #tpu.dot_dimension_numbers<[1], [0], [0], [1], [0, 0, 1, 1], [], []>} : vector<16x16xf32>, vector<16x32xf32>, vector<16x32xf32> -> vector<16x32xf32>
    %c1_273 = arith.constant 1 : index
    %c0_274 = arith.constant 0 : index
    %c0_275 = arith.constant 0 : index
    %457 = vector.load %arg31[%c1_273, %c0_274, %c0_275] : memref<7x1x32xf32, #tpu.memory_space<vmem>>, vector<1x1x32xf32>
    %458 = vector.shape_cast %457 : vector<1x1x32xf32> to vector<1x32xf32>
    %459 = vector.broadcast %458 : vector<1x32xf32> to vector<16x32xf32>
    %460 = arith.addf %456, %459 : vector<16x32xf32>
    %c1_276 = arith.constant 1 : index
    %c0_277 = arith.constant 0 : index
    %c0_278 = arith.constant 0 : index
    %461 = vector.load %arg32[%c1_276, %c0_277, %c0_278] : memref<7x32x32xf32, #tpu.memory_space<vmem>>, vector<1x32x32xf32>
    %462 = vector.shape_cast %461 : vector<1x32x32xf32> to vector<32x32xf32>
    %cst_279 = arith.constant dense<0.000000e+00> : vector<16x32xf32>
    %463 = tpu.matmul %452, %462, %cst_279 {dimension_numbers = #tpu.dot_dimension_numbers<[1], [0], [0], [1], [0, 0, 1, 1], [], []>} : vector<16x32xf32>, vector<32x32xf32>, vector<16x32xf32> -> vector<16x32xf32>
    %cst_280 = arith.constant dense<0.000000e+00> : vector<16x32xf32>
    %464 = tpu.matmul %257, %463, %cst_280 {dimension_numbers = #tpu.dot_dimension_numbers<[1], [0], [0], [1], [0, 0, 1, 1], [], []>} : vector<16x16xf32>, vector<16x32xf32>, vector<16x32xf32> -> vector<16x32xf32>
    %c1_281 = arith.constant 1 : index
    %c0_282 = arith.constant 0 : index
    %c0_283 = arith.constant 0 : index
    %465 = vector.load %arg33[%c1_281, %c0_282, %c0_283] : memref<7x1x32xf32, #tpu.memory_space<vmem>>, vector<1x1x32xf32>
    %466 = vector.shape_cast %465 : vector<1x1x32xf32> to vector<1x32xf32>
    %467 = vector.broadcast %466 : vector<1x32xf32> to vector<16x32xf32>
    %468 = arith.addf %464, %467 : vector<16x32xf32>
    %469 = arith.addf %468, %460 : vector<16x32xf32>
    %c1_284 = arith.constant 1 : index
    %c0_285 = arith.constant 0 : index
    %c0_286 = arith.constant 0 : index
    %470 = vector.load %arg34[%c1_284, %c0_285, %c0_286] : memref<7x1x32xf32, #tpu.memory_space<vmem>>, vector<1x1x32xf32>
    %471 = vector.shape_cast %470 : vector<1x1x32xf32> to vector<1x32xf32>
    %472 = vector.broadcast %471 : vector<1x32xf32> to vector<16x32xf32>
    %473 = arith.mulf %469, %472 : vector<16x32xf32>
    %c1_287 = arith.constant 1 : index
    %c0_288 = arith.constant 0 : index
    %c0_289 = arith.constant 0 : index
    %474 = vector.load %arg35[%c1_287, %c0_288, %c0_289] : memref<7x1x32xf32, #tpu.memory_space<vmem>>, vector<1x1x32xf32>
    %475 = vector.shape_cast %474 : vector<1x1x32xf32> to vector<1x32xf32>
    %476 = vector.broadcast %475 : vector<1x32xf32> to vector<16x32xf32>
    %477 = arith.addf %473, %476 : vector<16x32xf32>
    %c2 = arith.constant 2 : index
    %c0_290 = arith.constant 0 : index
    %c0_291 = arith.constant 0 : index
    %478 = vector.load %arg0[%c2, %c0_290, %c0_291] : memref<7x16x40xf32, #tpu.memory_space<vmem>>, vector<1x16x40xf32>
    %479 = vector.shape_cast %478 : vector<1x16x40xf32> to vector<16x40xf32>
    %c2_292 = arith.constant 2 : index
    %c0_293 = arith.constant 0 : index
    %c0_294 = arith.constant 0 : index
    %480 = vector.load %arg2[%c2_292, %c0_293, %c0_294] : memref<7x16x16xf32, #tpu.memory_space<vmem>>, vector<1x16x16xf32>
    %481 = vector.shape_cast %480 : vector<1x16x16xf32> to vector<16x16xf32>
    %c2_295 = arith.constant 2 : index
    %c0_296 = arith.constant 0 : index
    %c0_297 = arith.constant 0 : index
    %482 = vector.load %arg3[%c2_295, %c0_296, %c0_297] : memref<7x16x16xf32, #tpu.memory_space<vmem>>, vector<1x16x16xf32>
    %483 = vector.shape_cast %482 : vector<1x16x16xf32> to vector<16x16xf32>
    %c2_298 = arith.constant 2 : index
    %c0_299 = arith.constant 0 : index
    %c0_300 = arith.constant 0 : index
    %484 = vector.load %arg4[%c2_298, %c0_299, %c0_300] : memref<7x16x16xf32, #tpu.memory_space<vmem>>, vector<1x16x16xf32>
    %485 = vector.shape_cast %484 : vector<1x16x16xf32> to vector<16x16xf32>
    %c2_301 = arith.constant 2 : index
    %c0_302 = arith.constant 0 : index
    %c0_303 = arith.constant 0 : index
    %486 = vector.load %arg7[%c2_301, %c0_302, %c0_303] : memref<7x40x40xf32, #tpu.memory_space<vmem>>, vector<1x40x40xf32>
    %487 = vector.shape_cast %486 : vector<1x40x40xf32> to vector<40x40xf32>
    %cst_304 = arith.constant dense<0.000000e+00> : vector<16x40xf32>
    %488 = tpu.matmul %479, %487, %cst_304 {dimension_numbers = #tpu.dot_dimension_numbers<[1], [0], [0], [1], [0, 0, 1, 1], [], []>} : vector<16x40xf32>, vector<40x40xf32>, vector<16x40xf32> -> vector<16x40xf32>
    %cst_305 = arith.constant dense<0.000000e+00> : vector<16x40xf32>
    %489 = tpu.matmul %481, %488, %cst_305 {dimension_numbers = #tpu.dot_dimension_numbers<[1], [0], [0], [1], [0, 0, 1, 1], [], []>} : vector<16x16xf32>, vector<16x40xf32>, vector<16x40xf32> -> vector<16x40xf32>
    %c2_306 = arith.constant 2 : index
    %c0_307 = arith.constant 0 : index
    %c0_308 = arith.constant 0 : index
    %490 = vector.load %arg8[%c2_306, %c0_307, %c0_308] : memref<7x1x40xf32, #tpu.memory_space<vmem>>, vector<1x1x40xf32>
    %491 = vector.shape_cast %490 : vector<1x1x40xf32> to vector<1x40xf32>
    %492 = vector.broadcast %491 : vector<1x40xf32> to vector<16x40xf32>
    %493 = arith.addf %489, %492 : vector<16x40xf32>
    %494 = arith.addf %493, %479 : vector<16x40xf32>
    %c2_309 = arith.constant 2 : index
    %c0_310 = arith.constant 0 : index
    %c0_311 = arith.constant 0 : index
    %495 = vector.load %arg14[%c2_309, %c0_310, %c0_311] : memref<7x1x40xf32, #tpu.memory_space<vmem>>, vector<1x1x40xf32>
    %496 = vector.shape_cast %495 : vector<1x1x40xf32> to vector<1x40xf32>
    %497 = vector.broadcast %496 : vector<1x40xf32> to vector<16x40xf32>
    %498 = arith.mulf %494, %497 : vector<16x40xf32>
    %c2_312 = arith.constant 2 : index
    %c0_313 = arith.constant 0 : index
    %c0_314 = arith.constant 0 : index
    %499 = vector.load %arg15[%c2_312, %c0_313, %c0_314] : memref<7x1x40xf32, #tpu.memory_space<vmem>>, vector<1x1x40xf32>
    %500 = vector.shape_cast %499 : vector<1x1x40xf32> to vector<1x40xf32>
    %501 = vector.broadcast %500 : vector<1x40xf32> to vector<16x40xf32>
    %502 = arith.addf %498, %501 : vector<16x40xf32>
    %c2_315 = arith.constant 2 : index
    %c0_316 = arith.constant 0 : index
    %c0_317 = arith.constant 0 : index
    %503 = vector.load %arg9[%c2_315, %c0_316, %c0_317] : memref<7x40x40xf32, #tpu.memory_space<vmem>>, vector<1x40x40xf32>
    %504 = vector.shape_cast %503 : vector<1x40x40xf32> to vector<40x40xf32>
    %cst_318 = arith.constant dense<0.000000e+00> : vector<16x40xf32>
    %505 = tpu.matmul %479, %504, %cst_318 {dimension_numbers = #tpu.dot_dimension_numbers<[1], [0], [0], [1], [0, 0, 1, 1], [], []>} : vector<16x40xf32>, vector<40x40xf32>, vector<16x40xf32> -> vector<16x40xf32>
    %c2_319 = arith.constant 2 : index
    %c0_320 = arith.constant 0 : index
    %c0_321 = arith.constant 0 : index
    %506 = vector.load %arg10[%c2_319, %c0_320, %c0_321] : memref<7x40x40xf32, #tpu.memory_space<vmem>>, vector<1x40x40xf32>
    %507 = vector.shape_cast %506 : vector<1x40x40xf32> to vector<40x40xf32>
    %cst_322 = arith.constant dense<0.000000e+00> : vector<16x40xf32>
    %508 = tpu.matmul %479, %507, %cst_322 {dimension_numbers = #tpu.dot_dimension_numbers<[1], [0], [0], [1], [0, 0, 1, 1], [], []>} : vector<16x40xf32>, vector<40x40xf32>, vector<16x40xf32> -> vector<16x40xf32>
    %c2_323 = arith.constant 2 : index
    %c0_324 = arith.constant 0 : index
    %c0_325 = arith.constant 0 : index
    %509 = vector.load %arg11[%c2_323, %c0_324, %c0_325] : memref<7x40x40xf32, #tpu.memory_space<vmem>>, vector<1x40x40xf32>
    %510 = vector.shape_cast %509 : vector<1x40x40xf32> to vector<40x40xf32>
    %cst_326 = arith.constant dense<0.000000e+00> : vector<16x40xf32>
    %511 = tpu.matmul %479, %510, %cst_326 {dimension_numbers = #tpu.dot_dimension_numbers<[1], [0], [0], [1], [0, 0, 1, 1], [], []>} : vector<16x40xf32>, vector<40x40xf32>, vector<16x40xf32> -> vector<16x40xf32>
    %cst_327 = arith.constant 0.000000e+00 : f32
    %512 = vector.broadcast %cst_327 : f32 to vector<16x40xf32>
    %513 = vector.broadcast %7 : vector<1x40xf32> to vector<16x40xf32>
    %514 = arith.mulf %505, %513 : vector<16x40xf32>
    %cst_328 = arith.constant dense<0.000000e+00> : vector<16x16xf32>
    %515 = tpu.matmul %514, %508, %cst_328 {dimension_numbers = #tpu.dot_dimension_numbers<[1], [1], [0], [0], [0, 0, 1, 0], [], []>} : vector<16x40xf32>, vector<16x40xf32>, vector<16x16xf32> -> vector<16x16xf32>
    %cst_329 = arith.constant 0.316227764 : f32
    %516 = vector.broadcast %cst_329 : f32 to vector<16x16xf32>
    %517 = arith.mulf %515, %516 : vector<16x16xf32>
    %cst_330 = arith.constant dense<0xFF800000> : vector<16xf32>
    %518 = vector.multi_reduction <maximumf>, %517, %cst_330 [1] : vector<16x16xf32> to vector<16xf32>
    %519 = vector.shape_cast %518 : vector<16xf32> to vector<16x1xf32>
    %520 = vector.broadcast %519 : vector<16x1xf32> to vector<16x16xf32>
    %521 = arith.subf %517, %520 : vector<16x16xf32>
    %522 = math.exp %521 : vector<16x16xf32>
    %cst_331 = arith.constant dense<0.000000e+00> : vector<16xf32>
    %523 = vector.multi_reduction <add>, %522, %cst_331 [1] : vector<16x16xf32> to vector<16xf32>
    %524 = vector.shape_cast %523 : vector<16xf32> to vector<16x1xf32>
    %525 = tpu.reciprocal %524 {approx = true} : vector<16x1xf32> -> vector<16x1xf32>
    %526 = vector.broadcast %525 : vector<16x1xf32> to vector<16x16xf32>
    %527 = arith.mulf %522, %526 : vector<16x16xf32>
    %528 = vector.broadcast %7 : vector<1x40xf32> to vector<16x40xf32>
    %529 = arith.mulf %511, %528 : vector<16x40xf32>
    %cst_332 = arith.constant dense<0.000000e+00> : vector<16x40xf32>
    %530 = tpu.matmul %527, %529, %cst_332 {dimension_numbers = #tpu.dot_dimension_numbers<[1], [0], [0], [1], [0, 0, 1, 1], [], []>} : vector<16x16xf32>, vector<16x40xf32>, vector<16x40xf32> -> vector<16x40xf32>
    %531 = arith.addf %512, %530 : vector<16x40xf32>
    %532 = vector.broadcast %14 : vector<1x40xf32> to vector<16x40xf32>
    %533 = arith.mulf %505, %532 : vector<16x40xf32>
    %cst_333 = arith.constant dense<0.000000e+00> : vector<16x16xf32>
    %534 = tpu.matmul %533, %508, %cst_333 {dimension_numbers = #tpu.dot_dimension_numbers<[1], [1], [0], [0], [0, 0, 1, 0], [], []>} : vector<16x40xf32>, vector<16x40xf32>, vector<16x16xf32> -> vector<16x16xf32>
    %cst_334 = arith.constant 0.316227764 : f32
    %535 = vector.broadcast %cst_334 : f32 to vector<16x16xf32>
    %536 = arith.mulf %534, %535 : vector<16x16xf32>
    %cst_335 = arith.constant dense<0xFF800000> : vector<16xf32>
    %537 = vector.multi_reduction <maximumf>, %536, %cst_335 [1] : vector<16x16xf32> to vector<16xf32>
    %538 = vector.shape_cast %537 : vector<16xf32> to vector<16x1xf32>
    %539 = vector.broadcast %538 : vector<16x1xf32> to vector<16x16xf32>
    %540 = arith.subf %536, %539 : vector<16x16xf32>
    %541 = math.exp %540 : vector<16x16xf32>
    %cst_336 = arith.constant dense<0.000000e+00> : vector<16xf32>
    %542 = vector.multi_reduction <add>, %541, %cst_336 [1] : vector<16x16xf32> to vector<16xf32>
    %543 = vector.shape_cast %542 : vector<16xf32> to vector<16x1xf32>
    %544 = tpu.reciprocal %543 {approx = true} : vector<16x1xf32> -> vector<16x1xf32>
    %545 = vector.broadcast %544 : vector<16x1xf32> to vector<16x16xf32>
    %546 = arith.mulf %541, %545 : vector<16x16xf32>
    %547 = vector.broadcast %14 : vector<1x40xf32> to vector<16x40xf32>
    %548 = arith.mulf %511, %547 : vector<16x40xf32>
    %cst_337 = arith.constant dense<0.000000e+00> : vector<16x40xf32>
    %549 = tpu.matmul %546, %548, %cst_337 {dimension_numbers = #tpu.dot_dimension_numbers<[1], [0], [0], [1], [0, 0, 1, 1], [], []>} : vector<16x16xf32>, vector<16x40xf32>, vector<16x40xf32> -> vector<16x40xf32>
    %550 = arith.addf %531, %549 : vector<16x40xf32>
    %551 = vector.broadcast %21 : vector<1x40xf32> to vector<16x40xf32>
    %552 = arith.mulf %505, %551 : vector<16x40xf32>
    %cst_338 = arith.constant dense<0.000000e+00> : vector<16x16xf32>
    %553 = tpu.matmul %552, %508, %cst_338 {dimension_numbers = #tpu.dot_dimension_numbers<[1], [1], [0], [0], [0, 0, 1, 0], [], []>} : vector<16x40xf32>, vector<16x40xf32>, vector<16x16xf32> -> vector<16x16xf32>
    %cst_339 = arith.constant 0.316227764 : f32
    %554 = vector.broadcast %cst_339 : f32 to vector<16x16xf32>
    %555 = arith.mulf %553, %554 : vector<16x16xf32>
    %cst_340 = arith.constant dense<0xFF800000> : vector<16xf32>
    %556 = vector.multi_reduction <maximumf>, %555, %cst_340 [1] : vector<16x16xf32> to vector<16xf32>
    %557 = vector.shape_cast %556 : vector<16xf32> to vector<16x1xf32>
    %558 = vector.broadcast %557 : vector<16x1xf32> to vector<16x16xf32>
    %559 = arith.subf %555, %558 : vector<16x16xf32>
    %560 = math.exp %559 : vector<16x16xf32>
    %cst_341 = arith.constant dense<0.000000e+00> : vector<16xf32>
    %561 = vector.multi_reduction <add>, %560, %cst_341 [1] : vector<16x16xf32> to vector<16xf32>
    %562 = vector.shape_cast %561 : vector<16xf32> to vector<16x1xf32>
    %563 = tpu.reciprocal %562 {approx = true} : vector<16x1xf32> -> vector<16x1xf32>
    %564 = vector.broadcast %563 : vector<16x1xf32> to vector<16x16xf32>
    %565 = arith.mulf %560, %564 : vector<16x16xf32>
    %566 = vector.broadcast %21 : vector<1x40xf32> to vector<16x40xf32>
    %567 = arith.mulf %511, %566 : vector<16x40xf32>
    %cst_342 = arith.constant dense<0.000000e+00> : vector<16x40xf32>
    %568 = tpu.matmul %565, %567, %cst_342 {dimension_numbers = #tpu.dot_dimension_numbers<[1], [0], [0], [1], [0, 0, 1, 1], [], []>} : vector<16x16xf32>, vector<16x40xf32>, vector<16x40xf32> -> vector<16x40xf32>
    %569 = arith.addf %550, %568 : vector<16x40xf32>
    %570 = vector.broadcast %28 : vector<1x40xf32> to vector<16x40xf32>
    %571 = arith.mulf %505, %570 : vector<16x40xf32>
    %cst_343 = arith.constant dense<0.000000e+00> : vector<16x16xf32>
    %572 = tpu.matmul %571, %508, %cst_343 {dimension_numbers = #tpu.dot_dimension_numbers<[1], [1], [0], [0], [0, 0, 1, 0], [], []>} : vector<16x40xf32>, vector<16x40xf32>, vector<16x16xf32> -> vector<16x16xf32>
    %cst_344 = arith.constant 0.316227764 : f32
    %573 = vector.broadcast %cst_344 : f32 to vector<16x16xf32>
    %574 = arith.mulf %572, %573 : vector<16x16xf32>
    %cst_345 = arith.constant dense<0xFF800000> : vector<16xf32>
    %575 = vector.multi_reduction <maximumf>, %574, %cst_345 [1] : vector<16x16xf32> to vector<16xf32>
    %576 = vector.shape_cast %575 : vector<16xf32> to vector<16x1xf32>
    %577 = vector.broadcast %576 : vector<16x1xf32> to vector<16x16xf32>
    %578 = arith.subf %574, %577 : vector<16x16xf32>
    %579 = math.exp %578 : vector<16x16xf32>
    %cst_346 = arith.constant dense<0.000000e+00> : vector<16xf32>
    %580 = vector.multi_reduction <add>, %579, %cst_346 [1] : vector<16x16xf32> to vector<16xf32>
    %581 = vector.shape_cast %580 : vector<16xf32> to vector<16x1xf32>
    %582 = tpu.reciprocal %581 {approx = true} : vector<16x1xf32> -> vector<16x1xf32>
    %583 = vector.broadcast %582 : vector<16x1xf32> to vector<16x16xf32>
    %584 = arith.mulf %579, %583 : vector<16x16xf32>
    %585 = vector.broadcast %28 : vector<1x40xf32> to vector<16x40xf32>
    %586 = arith.mulf %511, %585 : vector<16x40xf32>
    %cst_347 = arith.constant dense<0.000000e+00> : vector<16x40xf32>
    %587 = tpu.matmul %584, %586, %cst_347 {dimension_numbers = #tpu.dot_dimension_numbers<[1], [0], [0], [1], [0, 0, 1, 1], [], []>} : vector<16x16xf32>, vector<16x40xf32>, vector<16x40xf32> -> vector<16x40xf32>
    %588 = arith.addf %569, %587 : vector<16x40xf32>
    %c2_348 = arith.constant 2 : index
    %c0_349 = arith.constant 0 : index
    %c0_350 = arith.constant 0 : index
    %589 = vector.load %arg12[%c2_348, %c0_349, %c0_350] : memref<7x40x40xf32, #tpu.memory_space<vmem>>, vector<1x40x40xf32>
    %590 = vector.shape_cast %589 : vector<1x40x40xf32> to vector<40x40xf32>
    %cst_351 = arith.constant dense<0.000000e+00> : vector<16x40xf32>
    %591 = tpu.matmul %588, %590, %cst_351 {dimension_numbers = #tpu.dot_dimension_numbers<[1], [0], [0], [1], [0, 0, 1, 1], [], []>} : vector<16x40xf32>, vector<40x40xf32>, vector<16x40xf32> -> vector<16x40xf32>
    %c2_352 = arith.constant 2 : index
    %c0_353 = arith.constant 0 : index
    %c0_354 = arith.constant 0 : index
    %592 = vector.load %arg13[%c2_352, %c0_353, %c0_354] : memref<7x1x40xf32, #tpu.memory_space<vmem>>, vector<1x1x40xf32>
    %593 = vector.shape_cast %592 : vector<1x1x40xf32> to vector<1x40xf32>
    %594 = vector.broadcast %593 : vector<1x40xf32> to vector<16x40xf32>
    %595 = arith.addf %591, %594 : vector<16x40xf32>
    %596 = arith.addf %595, %479 : vector<16x40xf32>
    %c2_355 = arith.constant 2 : index
    %c0_356 = arith.constant 0 : index
    %c0_357 = arith.constant 0 : index
    %597 = vector.load %arg16[%c2_355, %c0_356, %c0_357] : memref<7x1x40xf32, #tpu.memory_space<vmem>>, vector<1x1x40xf32>
    %598 = vector.shape_cast %597 : vector<1x1x40xf32> to vector<1x40xf32>
    %599 = vector.broadcast %598 : vector<1x40xf32> to vector<16x40xf32>
    %600 = arith.mulf %596, %599 : vector<16x40xf32>
    %c2_358 = arith.constant 2 : index
    %c0_359 = arith.constant 0 : index
    %c0_360 = arith.constant 0 : index
    %601 = vector.load %arg17[%c2_358, %c0_359, %c0_360] : memref<7x1x40xf32, #tpu.memory_space<vmem>>, vector<1x1x40xf32>
    %602 = vector.shape_cast %601 : vector<1x1x40xf32> to vector<1x40xf32>
    %603 = vector.broadcast %602 : vector<1x40xf32> to vector<16x40xf32>
    %604 = arith.addf %600, %603 : vector<16x40xf32>
    %605 = arith.addf %502, %604 : vector<16x40xf32>
    %c2_361 = arith.constant 2 : index
    %c0_362 = arith.constant 0 : index
    %c0_363 = arith.constant 0 : index
    %606 = vector.load %arg20[%c2_361, %c0_362, %c0_363] : memref<7x40x80xf32, #tpu.memory_space<vmem>>, vector<1x40x80xf32>
    %607 = vector.shape_cast %606 : vector<1x40x80xf32> to vector<40x80xf32>
    %cst_364 = arith.constant dense<0.000000e+00> : vector<16x80xf32>
    %608 = tpu.matmul %605, %607, %cst_364 {dimension_numbers = #tpu.dot_dimension_numbers<[1], [0], [0], [1], [0, 0, 1, 1], [], []>} : vector<16x40xf32>, vector<40x80xf32>, vector<16x80xf32> -> vector<16x80xf32>
    %c2_365 = arith.constant 2 : index
    %c0_366 = arith.constant 0 : index
    %c0_367 = arith.constant 0 : index
    %609 = vector.load %arg21[%c2_365, %c0_366, %c0_367] : memref<7x1x80xf32, #tpu.memory_space<vmem>>, vector<1x1x80xf32>
    %610 = vector.shape_cast %609 : vector<1x1x80xf32> to vector<1x80xf32>
    %611 = vector.broadcast %610 : vector<1x80xf32> to vector<16x80xf32>
    %612 = arith.addf %608, %611 : vector<16x80xf32>
    %cst_368 = arith.constant 0.000000e+00 : f32
    %613 = vector.broadcast %cst_368 : f32 to vector<16x80xf32>
    %614 = arith.maximumf %612, %613 : vector<16x80xf32>
    %c2_369 = arith.constant 2 : index
    %c0_370 = arith.constant 0 : index
    %c0_371 = arith.constant 0 : index
    %615 = vector.load %arg22[%c2_369, %c0_370, %c0_371] : memref<7x80x40xf32, #tpu.memory_space<vmem>>, vector<1x80x40xf32>
    %616 = vector.shape_cast %615 : vector<1x80x40xf32> to vector<80x40xf32>
    %cst_372 = arith.constant dense<0.000000e+00> : vector<16x40xf32>
    %617 = tpu.matmul %614, %616, %cst_372 {dimension_numbers = #tpu.dot_dimension_numbers<[1], [0], [0], [1], [0, 0, 1, 1], [], []>} : vector<16x80xf32>, vector<80x40xf32>, vector<16x40xf32> -> vector<16x40xf32>
    %c2_373 = arith.constant 2 : index
    %c0_374 = arith.constant 0 : index
    %c0_375 = arith.constant 0 : index
    %618 = vector.load %arg23[%c2_373, %c0_374, %c0_375] : memref<7x1x40xf32, #tpu.memory_space<vmem>>, vector<1x1x40xf32>
    %619 = vector.shape_cast %618 : vector<1x1x40xf32> to vector<1x40xf32>
    %620 = vector.broadcast %619 : vector<1x40xf32> to vector<16x40xf32>
    %621 = arith.addf %617, %620 : vector<16x40xf32>
    %622 = arith.addf %605, %621 : vector<16x40xf32>
    %c2_376 = arith.constant 2 : index
    %c0_377 = arith.constant 0 : index
    %c0_378 = arith.constant 0 : index
    %623 = vector.load %arg18[%c2_376, %c0_377, %c0_378] : memref<7x1x40xf32, #tpu.memory_space<vmem>>, vector<1x1x40xf32>
    %624 = vector.shape_cast %623 : vector<1x1x40xf32> to vector<1x40xf32>
    %625 = vector.broadcast %624 : vector<1x40xf32> to vector<16x40xf32>
    %626 = arith.mulf %622, %625 : vector<16x40xf32>
    %c2_379 = arith.constant 2 : index
    %c0_380 = arith.constant 0 : index
    %c0_381 = arith.constant 0 : index
    %627 = vector.load %arg19[%c2_379, %c0_380, %c0_381] : memref<7x1x40xf32, #tpu.memory_space<vmem>>, vector<1x1x40xf32>
    %628 = vector.shape_cast %627 : vector<1x1x40xf32> to vector<1x40xf32>
    %629 = vector.broadcast %628 : vector<1x40xf32> to vector<16x40xf32>
    %630 = arith.addf %626, %629 : vector<16x40xf32>
    %c2_382 = arith.constant 2 : index
    %c0_383 = arith.constant 0 : index
    %c0_384 = arith.constant 0 : index
    %631 = vector.load %arg24[%c2_382, %c0_383, %c0_384] : memref<7x40x32xf32, #tpu.memory_space<vmem>>, vector<1x40x32xf32>
    %632 = vector.shape_cast %631 : vector<1x40x32xf32> to vector<40x32xf32>
    %cst_385 = arith.constant dense<0.000000e+00> : vector<16x32xf32>
    %633 = tpu.matmul %630, %632, %cst_385 {dimension_numbers = #tpu.dot_dimension_numbers<[1], [0], [0], [1], [0, 0, 1, 1], [], []>} : vector<16x40xf32>, vector<40x32xf32>, vector<16x32xf32> -> vector<16x32xf32>
    %c2_386 = arith.constant 2 : index
    %c0_387 = arith.constant 0 : index
    %c0_388 = arith.constant 0 : index
    %634 = vector.load %arg25[%c2_386, %c0_387, %c0_388] : memref<7x1x32xf32, #tpu.memory_space<vmem>>, vector<1x1x32xf32>
    %635 = vector.shape_cast %634 : vector<1x1x32xf32> to vector<1x32xf32>
    %636 = vector.broadcast %635 : vector<1x32xf32> to vector<16x32xf32>
    %637 = arith.addf %633, %636 : vector<16x32xf32>
    %c2_389 = arith.constant 2 : index
    %c0_390 = arith.constant 0 : index
    %c0_391 = arith.constant 0 : index
    %638 = vector.load %arg26[%c2_389, %c0_390, %c0_391] : memref<7x32x32xf32, #tpu.memory_space<vmem>>, vector<1x32x32xf32>
    %639 = vector.shape_cast %638 : vector<1x32x32xf32> to vector<32x32xf32>
    %cst_392 = arith.constant dense<0.000000e+00> : vector<16x32xf32>
    %640 = tpu.matmul %637, %639, %cst_392 {dimension_numbers = #tpu.dot_dimension_numbers<[1], [0], [0], [1], [0, 0, 1, 1], [], []>} : vector<16x32xf32>, vector<32x32xf32>, vector<16x32xf32> -> vector<16x32xf32>
    %c2_393 = arith.constant 2 : index
    %c0_394 = arith.constant 0 : index
    %c0_395 = arith.constant 0 : index
    %641 = vector.load %arg28[%c2_393, %c0_394, %c0_395] : memref<7x1x32xf32, #tpu.memory_space<vmem>>, vector<1x1x32xf32>
    %642 = vector.shape_cast %641 : vector<1x1x32xf32> to vector<1x32xf32>
    %643 = vector.broadcast %642 : vector<1x32xf32> to vector<16x32xf32>
    %644 = arith.mulf %640, %643 : vector<16x32xf32>
    %cst_396 = arith.constant dense<0.000000e+00> : vector<16xf32>
    %645 = vector.multi_reduction <add>, %644, %cst_396 [1] : vector<16x32xf32> to vector<16xf32>
    %646 = vector.shape_cast %645 : vector<16xf32> to vector<16x1xf32>
    %c2_397 = arith.constant 2 : index
    %c0_398 = arith.constant 0 : index
    %c0_399 = arith.constant 0 : index
    %647 = vector.load %arg27[%c2_397, %c0_398, %c0_399] : memref<7x1x32xf32, #tpu.memory_space<vmem>>, vector<1x1x32xf32>
    %648 = vector.shape_cast %647 : vector<1x1x32xf32> to vector<1x32xf32>
    %cst_400 = arith.constant dense<0.000000e+00> : vector<1x16xf32>
    %649 = tpu.matmul %648, %640, %cst_400 {dimension_numbers = #tpu.dot_dimension_numbers<[1], [1], [0], [0], [0, 0, 1, 0], [], []>} : vector<1x32xf32>, vector<16x32xf32>, vector<1x16xf32> -> vector<1x16xf32>
    %650 = vector.broadcast %646 : vector<16x1xf32> to vector<16x16xf32>
    %651 = vector.broadcast %649 : vector<1x16xf32> to vector<16x16xf32>
    %652 = arith.addf %650, %651 : vector<16x16xf32>
    %cst_401 = arith.constant 0.000000e+00 : f32
    %653 = vector.broadcast %cst_401 : f32 to vector<16x16xf32>
    %654 = arith.cmpf ogt, %652, %653 : vector<16x16xf32>
    %cst_402 = arith.constant 2.000000e-01 : f32
    %655 = vector.broadcast %cst_402 : f32 to vector<16x16xf32>
    %656 = arith.mulf %655, %652 : vector<16x16xf32>
    %657 = arith.select %654, %652, %656 : vector<16x16xi1>, vector<16x16xf32>
    %cst_403 = arith.constant 0.000000e+00 : f32
    %658 = vector.broadcast %cst_403 : f32 to vector<16x16xf32>
    %659 = arith.cmpf ogt, %485, %658 : vector<16x16xf32>
    %cst_404 = arith.constant -1.000000e+30 : f32
    %660 = vector.broadcast %cst_404 : f32 to vector<16x16xf32>
    %661 = arith.select %659, %657, %660 : vector<16x16xi1>, vector<16x16xf32>
    %cst_405 = arith.constant dense<0xFF800000> : vector<16xf32>
    %662 = vector.multi_reduction <maximumf>, %661, %cst_405 [1] : vector<16x16xf32> to vector<16xf32>
    %663 = vector.shape_cast %662 : vector<16xf32> to vector<16x1xf32>
    %664 = vector.broadcast %663 : vector<16x1xf32> to vector<16x16xf32>
    %665 = arith.subf %661, %664 : vector<16x16xf32>
    %666 = math.exp %665 : vector<16x16xf32>
    %cst_406 = arith.constant dense<0.000000e+00> : vector<16xf32>
    %667 = vector.multi_reduction <add>, %666, %cst_406 [1] : vector<16x16xf32> to vector<16xf32>
    %668 = vector.shape_cast %667 : vector<16xf32> to vector<16x1xf32>
    %669 = tpu.reciprocal %668 {approx = true} : vector<16x1xf32> -> vector<16x1xf32>
    %670 = vector.broadcast %669 : vector<16x1xf32> to vector<16x16xf32>
    %671 = arith.mulf %666, %670 : vector<16x16xf32>
    %cst_407 = arith.constant dense<0.000000e+00> : vector<16x32xf32>
    %672 = tpu.matmul %671, %640, %cst_407 {dimension_numbers = #tpu.dot_dimension_numbers<[1], [0], [0], [1], [0, 0, 1, 1], [], []>} : vector<16x16xf32>, vector<16x32xf32>, vector<16x32xf32> -> vector<16x32xf32>
    %c2_408 = arith.constant 2 : index
    %c0_409 = arith.constant 0 : index
    %c0_410 = arith.constant 0 : index
    %673 = vector.load %arg29[%c2_408, %c0_409, %c0_410] : memref<7x1x32xf32, #tpu.memory_space<vmem>>, vector<1x1x32xf32>
    %674 = vector.shape_cast %673 : vector<1x1x32xf32> to vector<1x32xf32>
    %675 = vector.broadcast %674 : vector<1x32xf32> to vector<16x32xf32>
    %676 = arith.addf %672, %675 : vector<16x32xf32>
    %c2_411 = arith.constant 2 : index
    %c0_412 = arith.constant 0 : index
    %c0_413 = arith.constant 0 : index
    %677 = vector.load %arg30[%c2_411, %c0_412, %c0_413] : memref<7x32x32xf32, #tpu.memory_space<vmem>>, vector<1x32x32xf32>
    %678 = vector.shape_cast %677 : vector<1x32x32xf32> to vector<32x32xf32>
    %cst_414 = arith.constant dense<0.000000e+00> : vector<16x32xf32>
    %679 = tpu.matmul %676, %678, %cst_414 {dimension_numbers = #tpu.dot_dimension_numbers<[1], [0], [0], [1], [0, 0, 1, 1], [], []>} : vector<16x32xf32>, vector<32x32xf32>, vector<16x32xf32> -> vector<16x32xf32>
    %cst_415 = arith.constant dense<0.000000e+00> : vector<16x32xf32>
    %680 = tpu.matmul %483, %679, %cst_415 {dimension_numbers = #tpu.dot_dimension_numbers<[1], [0], [0], [1], [0, 0, 1, 1], [], []>} : vector<16x16xf32>, vector<16x32xf32>, vector<16x32xf32> -> vector<16x32xf32>
    %c2_416 = arith.constant 2 : index
    %c0_417 = arith.constant 0 : index
    %c0_418 = arith.constant 0 : index
    %681 = vector.load %arg31[%c2_416, %c0_417, %c0_418] : memref<7x1x32xf32, #tpu.memory_space<vmem>>, vector<1x1x32xf32>
    %682 = vector.shape_cast %681 : vector<1x1x32xf32> to vector<1x32xf32>
    %683 = vector.broadcast %682 : vector<1x32xf32> to vector<16x32xf32>
    %684 = arith.addf %680, %683 : vector<16x32xf32>
    %c2_419 = arith.constant 2 : index
    %c0_420 = arith.constant 0 : index
    %c0_421 = arith.constant 0 : index
    %685 = vector.load %arg32[%c2_419, %c0_420, %c0_421] : memref<7x32x32xf32, #tpu.memory_space<vmem>>, vector<1x32x32xf32>
    %686 = vector.shape_cast %685 : vector<1x32x32xf32> to vector<32x32xf32>
    %cst_422 = arith.constant dense<0.000000e+00> : vector<16x32xf32>
    %687 = tpu.matmul %676, %686, %cst_422 {dimension_numbers = #tpu.dot_dimension_numbers<[1], [0], [0], [1], [0, 0, 1, 1], [], []>} : vector<16x32xf32>, vector<32x32xf32>, vector<16x32xf32> -> vector<16x32xf32>
    %cst_423 = arith.constant dense<0.000000e+00> : vector<16x32xf32>
    %688 = tpu.matmul %481, %687, %cst_423 {dimension_numbers = #tpu.dot_dimension_numbers<[1], [0], [0], [1], [0, 0, 1, 1], [], []>} : vector<16x16xf32>, vector<16x32xf32>, vector<16x32xf32> -> vector<16x32xf32>
    %c2_424 = arith.constant 2 : index
    %c0_425 = arith.constant 0 : index
    %c0_426 = arith.constant 0 : index
    %689 = vector.load %arg33[%c2_424, %c0_425, %c0_426] : memref<7x1x32xf32, #tpu.memory_space<vmem>>, vector<1x1x32xf32>
    %690 = vector.shape_cast %689 : vector<1x1x32xf32> to vector<1x32xf32>
    %691 = vector.broadcast %690 : vector<1x32xf32> to vector<16x32xf32>
    %692 = arith.addf %688, %691 : vector<16x32xf32>
    %693 = arith.addf %692, %684 : vector<16x32xf32>
    %c2_427 = arith.constant 2 : index
    %c0_428 = arith.constant 0 : index
    %c0_429 = arith.constant 0 : index
    %694 = vector.load %arg34[%c2_427, %c0_428, %c0_429] : memref<7x1x32xf32, #tpu.memory_space<vmem>>, vector<1x1x32xf32>
    %695 = vector.shape_cast %694 : vector<1x1x32xf32> to vector<1x32xf32>
    %696 = vector.broadcast %695 : vector<1x32xf32> to vector<16x32xf32>
    %697 = arith.mulf %693, %696 : vector<16x32xf32>
    %c2_430 = arith.constant 2 : index
    %c0_431 = arith.constant 0 : index
    %c0_432 = arith.constant 0 : index
    %698 = vector.load %arg35[%c2_430, %c0_431, %c0_432] : memref<7x1x32xf32, #tpu.memory_space<vmem>>, vector<1x1x32xf32>
    %699 = vector.shape_cast %698 : vector<1x1x32xf32> to vector<1x32xf32>
    %700 = vector.broadcast %699 : vector<1x32xf32> to vector<16x32xf32>
    %701 = arith.addf %697, %700 : vector<16x32xf32>
    %c3 = arith.constant 3 : index
    %c0_433 = arith.constant 0 : index
    %c0_434 = arith.constant 0 : index
    %702 = vector.load %arg0[%c3, %c0_433, %c0_434] : memref<7x16x40xf32, #tpu.memory_space<vmem>>, vector<1x16x40xf32>
    %703 = vector.shape_cast %702 : vector<1x16x40xf32> to vector<16x40xf32>
    %c3_435 = arith.constant 3 : index
    %c0_436 = arith.constant 0 : index
    %c0_437 = arith.constant 0 : index
    %704 = vector.load %arg2[%c3_435, %c0_436, %c0_437] : memref<7x16x16xf32, #tpu.memory_space<vmem>>, vector<1x16x16xf32>
    %705 = vector.shape_cast %704 : vector<1x16x16xf32> to vector<16x16xf32>
    %c3_438 = arith.constant 3 : index
    %c0_439 = arith.constant 0 : index
    %c0_440 = arith.constant 0 : index
    %706 = vector.load %arg3[%c3_438, %c0_439, %c0_440] : memref<7x16x16xf32, #tpu.memory_space<vmem>>, vector<1x16x16xf32>
    %707 = vector.shape_cast %706 : vector<1x16x16xf32> to vector<16x16xf32>
    %c3_441 = arith.constant 3 : index
    %c0_442 = arith.constant 0 : index
    %c0_443 = arith.constant 0 : index
    %708 = vector.load %arg4[%c3_441, %c0_442, %c0_443] : memref<7x16x16xf32, #tpu.memory_space<vmem>>, vector<1x16x16xf32>
    %709 = vector.shape_cast %708 : vector<1x16x16xf32> to vector<16x16xf32>
    %c3_444 = arith.constant 3 : index
    %c0_445 = arith.constant 0 : index
    %c0_446 = arith.constant 0 : index
    %710 = vector.load %arg7[%c3_444, %c0_445, %c0_446] : memref<7x40x40xf32, #tpu.memory_space<vmem>>, vector<1x40x40xf32>
    %711 = vector.shape_cast %710 : vector<1x40x40xf32> to vector<40x40xf32>
    %cst_447 = arith.constant dense<0.000000e+00> : vector<16x40xf32>
    %712 = tpu.matmul %703, %711, %cst_447 {dimension_numbers = #tpu.dot_dimension_numbers<[1], [0], [0], [1], [0, 0, 1, 1], [], []>} : vector<16x40xf32>, vector<40x40xf32>, vector<16x40xf32> -> vector<16x40xf32>
    %cst_448 = arith.constant dense<0.000000e+00> : vector<16x40xf32>
    %713 = tpu.matmul %705, %712, %cst_448 {dimension_numbers = #tpu.dot_dimension_numbers<[1], [0], [0], [1], [0, 0, 1, 1], [], []>} : vector<16x16xf32>, vector<16x40xf32>, vector<16x40xf32> -> vector<16x40xf32>
    %c3_449 = arith.constant 3 : index
    %c0_450 = arith.constant 0 : index
    %c0_451 = arith.constant 0 : index
    %714 = vector.load %arg8[%c3_449, %c0_450, %c0_451] : memref<7x1x40xf32, #tpu.memory_space<vmem>>, vector<1x1x40xf32>
    %715 = vector.shape_cast %714 : vector<1x1x40xf32> to vector<1x40xf32>
    %716 = vector.broadcast %715 : vector<1x40xf32> to vector<16x40xf32>
    %717 = arith.addf %713, %716 : vector<16x40xf32>
    %718 = arith.addf %717, %703 : vector<16x40xf32>
    %c3_452 = arith.constant 3 : index
    %c0_453 = arith.constant 0 : index
    %c0_454 = arith.constant 0 : index
    %719 = vector.load %arg14[%c3_452, %c0_453, %c0_454] : memref<7x1x40xf32, #tpu.memory_space<vmem>>, vector<1x1x40xf32>
    %720 = vector.shape_cast %719 : vector<1x1x40xf32> to vector<1x40xf32>
    %721 = vector.broadcast %720 : vector<1x40xf32> to vector<16x40xf32>
    %722 = arith.mulf %718, %721 : vector<16x40xf32>
    %c3_455 = arith.constant 3 : index
    %c0_456 = arith.constant 0 : index
    %c0_457 = arith.constant 0 : index
    %723 = vector.load %arg15[%c3_455, %c0_456, %c0_457] : memref<7x1x40xf32, #tpu.memory_space<vmem>>, vector<1x1x40xf32>
    %724 = vector.shape_cast %723 : vector<1x1x40xf32> to vector<1x40xf32>
    %725 = vector.broadcast %724 : vector<1x40xf32> to vector<16x40xf32>
    %726 = arith.addf %722, %725 : vector<16x40xf32>
    %c3_458 = arith.constant 3 : index
    %c0_459 = arith.constant 0 : index
    %c0_460 = arith.constant 0 : index
    %727 = vector.load %arg9[%c3_458, %c0_459, %c0_460] : memref<7x40x40xf32, #tpu.memory_space<vmem>>, vector<1x40x40xf32>
    %728 = vector.shape_cast %727 : vector<1x40x40xf32> to vector<40x40xf32>
    %cst_461 = arith.constant dense<0.000000e+00> : vector<16x40xf32>
    %729 = tpu.matmul %703, %728, %cst_461 {dimension_numbers = #tpu.dot_dimension_numbers<[1], [0], [0], [1], [0, 0, 1, 1], [], []>} : vector<16x40xf32>, vector<40x40xf32>, vector<16x40xf32> -> vector<16x40xf32>
    %c3_462 = arith.constant 3 : index
    %c0_463 = arith.constant 0 : index
    %c0_464 = arith.constant 0 : index
    %730 = vector.load %arg10[%c3_462, %c0_463, %c0_464] : memref<7x40x40xf32, #tpu.memory_space<vmem>>, vector<1x40x40xf32>
    %731 = vector.shape_cast %730 : vector<1x40x40xf32> to vector<40x40xf32>
    %cst_465 = arith.constant dense<0.000000e+00> : vector<16x40xf32>
    %732 = tpu.matmul %703, %731, %cst_465 {dimension_numbers = #tpu.dot_dimension_numbers<[1], [0], [0], [1], [0, 0, 1, 1], [], []>} : vector<16x40xf32>, vector<40x40xf32>, vector<16x40xf32> -> vector<16x40xf32>
    %c3_466 = arith.constant 3 : index
    %c0_467 = arith.constant 0 : index
    %c0_468 = arith.constant 0 : index
    %733 = vector.load %arg11[%c3_466, %c0_467, %c0_468] : memref<7x40x40xf32, #tpu.memory_space<vmem>>, vector<1x40x40xf32>
    %734 = vector.shape_cast %733 : vector<1x40x40xf32> to vector<40x40xf32>
    %cst_469 = arith.constant dense<0.000000e+00> : vector<16x40xf32>
    %735 = tpu.matmul %703, %734, %cst_469 {dimension_numbers = #tpu.dot_dimension_numbers<[1], [0], [0], [1], [0, 0, 1, 1], [], []>} : vector<16x40xf32>, vector<40x40xf32>, vector<16x40xf32> -> vector<16x40xf32>
    %cst_470 = arith.constant 0.000000e+00 : f32
    %736 = vector.broadcast %cst_470 : f32 to vector<16x40xf32>
    %737 = vector.broadcast %7 : vector<1x40xf32> to vector<16x40xf32>
    %738 = arith.mulf %729, %737 : vector<16x40xf32>
    %cst_471 = arith.constant dense<0.000000e+00> : vector<16x16xf32>
    %739 = tpu.matmul %738, %732, %cst_471 {dimension_numbers = #tpu.dot_dimension_numbers<[1], [1], [0], [0], [0, 0, 1, 0], [], []>} : vector<16x40xf32>, vector<16x40xf32>, vector<16x16xf32> -> vector<16x16xf32>
    %cst_472 = arith.constant 0.316227764 : f32
    %740 = vector.broadcast %cst_472 : f32 to vector<16x16xf32>
    %741 = arith.mulf %739, %740 : vector<16x16xf32>
    %cst_473 = arith.constant dense<0xFF800000> : vector<16xf32>
    %742 = vector.multi_reduction <maximumf>, %741, %cst_473 [1] : vector<16x16xf32> to vector<16xf32>
    %743 = vector.shape_cast %742 : vector<16xf32> to vector<16x1xf32>
    %744 = vector.broadcast %743 : vector<16x1xf32> to vector<16x16xf32>
    %745 = arith.subf %741, %744 : vector<16x16xf32>
    %746 = math.exp %745 : vector<16x16xf32>
    %cst_474 = arith.constant dense<0.000000e+00> : vector<16xf32>
    %747 = vector.multi_reduction <add>, %746, %cst_474 [1] : vector<16x16xf32> to vector<16xf32>
    %748 = vector.shape_cast %747 : vector<16xf32> to vector<16x1xf32>
    %749 = tpu.reciprocal %748 {approx = true} : vector<16x1xf32> -> vector<16x1xf32>
    %750 = vector.broadcast %749 : vector<16x1xf32> to vector<16x16xf32>
    %751 = arith.mulf %746, %750 : vector<16x16xf32>
    %752 = vector.broadcast %7 : vector<1x40xf32> to vector<16x40xf32>
    %753 = arith.mulf %735, %752 : vector<16x40xf32>
    %cst_475 = arith.constant dense<0.000000e+00> : vector<16x40xf32>
    %754 = tpu.matmul %751, %753, %cst_475 {dimension_numbers = #tpu.dot_dimension_numbers<[1], [0], [0], [1], [0, 0, 1, 1], [], []>} : vector<16x16xf32>, vector<16x40xf32>, vector<16x40xf32> -> vector<16x40xf32>
    %755 = arith.addf %736, %754 : vector<16x40xf32>
    %756 = vector.broadcast %14 : vector<1x40xf32> to vector<16x40xf32>
    %757 = arith.mulf %729, %756 : vector<16x40xf32>
    %cst_476 = arith.constant dense<0.000000e+00> : vector<16x16xf32>
    %758 = tpu.matmul %757, %732, %cst_476 {dimension_numbers = #tpu.dot_dimension_numbers<[1], [1], [0], [0], [0, 0, 1, 0], [], []>} : vector<16x40xf32>, vector<16x40xf32>, vector<16x16xf32> -> vector<16x16xf32>
    %cst_477 = arith.constant 0.316227764 : f32
    %759 = vector.broadcast %cst_477 : f32 to vector<16x16xf32>
    %760 = arith.mulf %758, %759 : vector<16x16xf32>
    %cst_478 = arith.constant dense<0xFF800000> : vector<16xf32>
    %761 = vector.multi_reduction <maximumf>, %760, %cst_478 [1] : vector<16x16xf32> to vector<16xf32>
    %762 = vector.shape_cast %761 : vector<16xf32> to vector<16x1xf32>
    %763 = vector.broadcast %762 : vector<16x1xf32> to vector<16x16xf32>
    %764 = arith.subf %760, %763 : vector<16x16xf32>
    %765 = math.exp %764 : vector<16x16xf32>
    %cst_479 = arith.constant dense<0.000000e+00> : vector<16xf32>
    %766 = vector.multi_reduction <add>, %765, %cst_479 [1] : vector<16x16xf32> to vector<16xf32>
    %767 = vector.shape_cast %766 : vector<16xf32> to vector<16x1xf32>
    %768 = tpu.reciprocal %767 {approx = true} : vector<16x1xf32> -> vector<16x1xf32>
    %769 = vector.broadcast %768 : vector<16x1xf32> to vector<16x16xf32>
    %770 = arith.mulf %765, %769 : vector<16x16xf32>
    %771 = vector.broadcast %14 : vector<1x40xf32> to vector<16x40xf32>
    %772 = arith.mulf %735, %771 : vector<16x40xf32>
    %cst_480 = arith.constant dense<0.000000e+00> : vector<16x40xf32>
    %773 = tpu.matmul %770, %772, %cst_480 {dimension_numbers = #tpu.dot_dimension_numbers<[1], [0], [0], [1], [0, 0, 1, 1], [], []>} : vector<16x16xf32>, vector<16x40xf32>, vector<16x40xf32> -> vector<16x40xf32>
    %774 = arith.addf %755, %773 : vector<16x40xf32>
    %775 = vector.broadcast %21 : vector<1x40xf32> to vector<16x40xf32>
    %776 = arith.mulf %729, %775 : vector<16x40xf32>
    %cst_481 = arith.constant dense<0.000000e+00> : vector<16x16xf32>
    %777 = tpu.matmul %776, %732, %cst_481 {dimension_numbers = #tpu.dot_dimension_numbers<[1], [1], [0], [0], [0, 0, 1, 0], [], []>} : vector<16x40xf32>, vector<16x40xf32>, vector<16x16xf32> -> vector<16x16xf32>
    %cst_482 = arith.constant 0.316227764 : f32
    %778 = vector.broadcast %cst_482 : f32 to vector<16x16xf32>
    %779 = arith.mulf %777, %778 : vector<16x16xf32>
    %cst_483 = arith.constant dense<0xFF800000> : vector<16xf32>
    %780 = vector.multi_reduction <maximumf>, %779, %cst_483 [1] : vector<16x16xf32> to vector<16xf32>
    %781 = vector.shape_cast %780 : vector<16xf32> to vector<16x1xf32>
    %782 = vector.broadcast %781 : vector<16x1xf32> to vector<16x16xf32>
    %783 = arith.subf %779, %782 : vector<16x16xf32>
    %784 = math.exp %783 : vector<16x16xf32>
    %cst_484 = arith.constant dense<0.000000e+00> : vector<16xf32>
    %785 = vector.multi_reduction <add>, %784, %cst_484 [1] : vector<16x16xf32> to vector<16xf32>
    %786 = vector.shape_cast %785 : vector<16xf32> to vector<16x1xf32>
    %787 = tpu.reciprocal %786 {approx = true} : vector<16x1xf32> -> vector<16x1xf32>
    %788 = vector.broadcast %787 : vector<16x1xf32> to vector<16x16xf32>
    %789 = arith.mulf %784, %788 : vector<16x16xf32>
    %790 = vector.broadcast %21 : vector<1x40xf32> to vector<16x40xf32>
    %791 = arith.mulf %735, %790 : vector<16x40xf32>
    %cst_485 = arith.constant dense<0.000000e+00> : vector<16x40xf32>
    %792 = tpu.matmul %789, %791, %cst_485 {dimension_numbers = #tpu.dot_dimension_numbers<[1], [0], [0], [1], [0, 0, 1, 1], [], []>} : vector<16x16xf32>, vector<16x40xf32>, vector<16x40xf32> -> vector<16x40xf32>
    %793 = arith.addf %774, %792 : vector<16x40xf32>
    %794 = vector.broadcast %28 : vector<1x40xf32> to vector<16x40xf32>
    %795 = arith.mulf %729, %794 : vector<16x40xf32>
    %cst_486 = arith.constant dense<0.000000e+00> : vector<16x16xf32>
    %796 = tpu.matmul %795, %732, %cst_486 {dimension_numbers = #tpu.dot_dimension_numbers<[1], [1], [0], [0], [0, 0, 1, 0], [], []>} : vector<16x40xf32>, vector<16x40xf32>, vector<16x16xf32> -> vector<16x16xf32>
    %cst_487 = arith.constant 0.316227764 : f32
    %797 = vector.broadcast %cst_487 : f32 to vector<16x16xf32>
    %798 = arith.mulf %796, %797 : vector<16x16xf32>
    %cst_488 = arith.constant dense<0xFF800000> : vector<16xf32>
    %799 = vector.multi_reduction <maximumf>, %798, %cst_488 [1] : vector<16x16xf32> to vector<16xf32>
    %800 = vector.shape_cast %799 : vector<16xf32> to vector<16x1xf32>
    %801 = vector.broadcast %800 : vector<16x1xf32> to vector<16x16xf32>
    %802 = arith.subf %798, %801 : vector<16x16xf32>
    %803 = math.exp %802 : vector<16x16xf32>
    %cst_489 = arith.constant dense<0.000000e+00> : vector<16xf32>
    %804 = vector.multi_reduction <add>, %803, %cst_489 [1] : vector<16x16xf32> to vector<16xf32>
    %805 = vector.shape_cast %804 : vector<16xf32> to vector<16x1xf32>
    %806 = tpu.reciprocal %805 {approx = true} : vector<16x1xf32> -> vector<16x1xf32>
    %807 = vector.broadcast %806 : vector<16x1xf32> to vector<16x16xf32>
    %808 = arith.mulf %803, %807 : vector<16x16xf32>
    %809 = vector.broadcast %28 : vector<1x40xf32> to vector<16x40xf32>
    %810 = arith.mulf %735, %809 : vector<16x40xf32>
    %cst_490 = arith.constant dense<0.000000e+00> : vector<16x40xf32>
    %811 = tpu.matmul %808, %810, %cst_490 {dimension_numbers = #tpu.dot_dimension_numbers<[1], [0], [0], [1], [0, 0, 1, 1], [], []>} : vector<16x16xf32>, vector<16x40xf32>, vector<16x40xf32> -> vector<16x40xf32>
    %812 = arith.addf %793, %811 : vector<16x40xf32>
    %c3_491 = arith.constant 3 : index
    %c0_492 = arith.constant 0 : index
    %c0_493 = arith.constant 0 : index
    %813 = vector.load %arg12[%c3_491, %c0_492, %c0_493] : memref<7x40x40xf32, #tpu.memory_space<vmem>>, vector<1x40x40xf32>
    %814 = vector.shape_cast %813 : vector<1x40x40xf32> to vector<40x40xf32>
    %cst_494 = arith.constant dense<0.000000e+00> : vector<16x40xf32>
    %815 = tpu.matmul %812, %814, %cst_494 {dimension_numbers = #tpu.dot_dimension_numbers<[1], [0], [0], [1], [0, 0, 1, 1], [], []>} : vector<16x40xf32>, vector<40x40xf32>, vector<16x40xf32> -> vector<16x40xf32>
    %c3_495 = arith.constant 3 : index
    %c0_496 = arith.constant 0 : index
    %c0_497 = arith.constant 0 : index
    %816 = vector.load %arg13[%c3_495, %c0_496, %c0_497] : memref<7x1x40xf32, #tpu.memory_space<vmem>>, vector<1x1x40xf32>
    %817 = vector.shape_cast %816 : vector<1x1x40xf32> to vector<1x40xf32>
    %818 = vector.broadcast %817 : vector<1x40xf32> to vector<16x40xf32>
    %819 = arith.addf %815, %818 : vector<16x40xf32>
    %820 = arith.addf %819, %703 : vector<16x40xf32>
    %c3_498 = arith.constant 3 : index
    %c0_499 = arith.constant 0 : index
    %c0_500 = arith.constant 0 : index
    %821 = vector.load %arg16[%c3_498, %c0_499, %c0_500] : memref<7x1x40xf32, #tpu.memory_space<vmem>>, vector<1x1x40xf32>
    %822 = vector.shape_cast %821 : vector<1x1x40xf32> to vector<1x40xf32>
    %823 = vector.broadcast %822 : vector<1x40xf32> to vector<16x40xf32>
    %824 = arith.mulf %820, %823 : vector<16x40xf32>
    %c3_501 = arith.constant 3 : index
    %c0_502 = arith.constant 0 : index
    %c0_503 = arith.constant 0 : index
    %825 = vector.load %arg17[%c3_501, %c0_502, %c0_503] : memref<7x1x40xf32, #tpu.memory_space<vmem>>, vector<1x1x40xf32>
    %826 = vector.shape_cast %825 : vector<1x1x40xf32> to vector<1x40xf32>
    %827 = vector.broadcast %826 : vector<1x40xf32> to vector<16x40xf32>
    %828 = arith.addf %824, %827 : vector<16x40xf32>
    %829 = arith.addf %726, %828 : vector<16x40xf32>
    %c3_504 = arith.constant 3 : index
    %c0_505 = arith.constant 0 : index
    %c0_506 = arith.constant 0 : index
    %830 = vector.load %arg20[%c3_504, %c0_505, %c0_506] : memref<7x40x80xf32, #tpu.memory_space<vmem>>, vector<1x40x80xf32>
    %831 = vector.shape_cast %830 : vector<1x40x80xf32> to vector<40x80xf32>
    %cst_507 = arith.constant dense<0.000000e+00> : vector<16x80xf32>
    %832 = tpu.matmul %829, %831, %cst_507 {dimension_numbers = #tpu.dot_dimension_numbers<[1], [0], [0], [1], [0, 0, 1, 1], [], []>} : vector<16x40xf32>, vector<40x80xf32>, vector<16x80xf32> -> vector<16x80xf32>
    %c3_508 = arith.constant 3 : index
    %c0_509 = arith.constant 0 : index
    %c0_510 = arith.constant 0 : index
    %833 = vector.load %arg21[%c3_508, %c0_509, %c0_510] : memref<7x1x80xf32, #tpu.memory_space<vmem>>, vector<1x1x80xf32>
    %834 = vector.shape_cast %833 : vector<1x1x80xf32> to vector<1x80xf32>
    %835 = vector.broadcast %834 : vector<1x80xf32> to vector<16x80xf32>
    %836 = arith.addf %832, %835 : vector<16x80xf32>
    %cst_511 = arith.constant 0.000000e+00 : f32
    %837 = vector.broadcast %cst_511 : f32 to vector<16x80xf32>
    %838 = arith.maximumf %836, %837 : vector<16x80xf32>
    %c3_512 = arith.constant 3 : index
    %c0_513 = arith.constant 0 : index
    %c0_514 = arith.constant 0 : index
    %839 = vector.load %arg22[%c3_512, %c0_513, %c0_514] : memref<7x80x40xf32, #tpu.memory_space<vmem>>, vector<1x80x40xf32>
    %840 = vector.shape_cast %839 : vector<1x80x40xf32> to vector<80x40xf32>
    %cst_515 = arith.constant dense<0.000000e+00> : vector<16x40xf32>
    %841 = tpu.matmul %838, %840, %cst_515 {dimension_numbers = #tpu.dot_dimension_numbers<[1], [0], [0], [1], [0, 0, 1, 1], [], []>} : vector<16x80xf32>, vector<80x40xf32>, vector<16x40xf32> -> vector<16x40xf32>
    %c3_516 = arith.constant 3 : index
    %c0_517 = arith.constant 0 : index
    %c0_518 = arith.constant 0 : index
    %842 = vector.load %arg23[%c3_516, %c0_517, %c0_518] : memref<7x1x40xf32, #tpu.memory_space<vmem>>, vector<1x1x40xf32>
    %843 = vector.shape_cast %842 : vector<1x1x40xf32> to vector<1x40xf32>
    %844 = vector.broadcast %843 : vector<1x40xf32> to vector<16x40xf32>
    %845 = arith.addf %841, %844 : vector<16x40xf32>
    %846 = arith.addf %829, %845 : vector<16x40xf32>
    %c3_519 = arith.constant 3 : index
    %c0_520 = arith.constant 0 : index
    %c0_521 = arith.constant 0 : index
    %847 = vector.load %arg18[%c3_519, %c0_520, %c0_521] : memref<7x1x40xf32, #tpu.memory_space<vmem>>, vector<1x1x40xf32>
    %848 = vector.shape_cast %847 : vector<1x1x40xf32> to vector<1x40xf32>
    %849 = vector.broadcast %848 : vector<1x40xf32> to vector<16x40xf32>
    %850 = arith.mulf %846, %849 : vector<16x40xf32>
    %c3_522 = arith.constant 3 : index
    %c0_523 = arith.constant 0 : index
    %c0_524 = arith.constant 0 : index
    %851 = vector.load %arg19[%c3_522, %c0_523, %c0_524] : memref<7x1x40xf32, #tpu.memory_space<vmem>>, vector<1x1x40xf32>
    %852 = vector.shape_cast %851 : vector<1x1x40xf32> to vector<1x40xf32>
    %853 = vector.broadcast %852 : vector<1x40xf32> to vector<16x40xf32>
    %854 = arith.addf %850, %853 : vector<16x40xf32>
    %c3_525 = arith.constant 3 : index
    %c0_526 = arith.constant 0 : index
    %c0_527 = arith.constant 0 : index
    %855 = vector.load %arg24[%c3_525, %c0_526, %c0_527] : memref<7x40x32xf32, #tpu.memory_space<vmem>>, vector<1x40x32xf32>
    %856 = vector.shape_cast %855 : vector<1x40x32xf32> to vector<40x32xf32>
    %cst_528 = arith.constant dense<0.000000e+00> : vector<16x32xf32>
    %857 = tpu.matmul %854, %856, %cst_528 {dimension_numbers = #tpu.dot_dimension_numbers<[1], [0], [0], [1], [0, 0, 1, 1], [], []>} : vector<16x40xf32>, vector<40x32xf32>, vector<16x32xf32> -> vector<16x32xf32>
    %c3_529 = arith.constant 3 : index
    %c0_530 = arith.constant 0 : index
    %c0_531 = arith.constant 0 : index
    %858 = vector.load %arg25[%c3_529, %c0_530, %c0_531] : memref<7x1x32xf32, #tpu.memory_space<vmem>>, vector<1x1x32xf32>
    %859 = vector.shape_cast %858 : vector<1x1x32xf32> to vector<1x32xf32>
    %860 = vector.broadcast %859 : vector<1x32xf32> to vector<16x32xf32>
    %861 = arith.addf %857, %860 : vector<16x32xf32>
    %c3_532 = arith.constant 3 : index
    %c0_533 = arith.constant 0 : index
    %c0_534 = arith.constant 0 : index
    %862 = vector.load %arg26[%c3_532, %c0_533, %c0_534] : memref<7x32x32xf32, #tpu.memory_space<vmem>>, vector<1x32x32xf32>
    %863 = vector.shape_cast %862 : vector<1x32x32xf32> to vector<32x32xf32>
    %cst_535 = arith.constant dense<0.000000e+00> : vector<16x32xf32>
    %864 = tpu.matmul %861, %863, %cst_535 {dimension_numbers = #tpu.dot_dimension_numbers<[1], [0], [0], [1], [0, 0, 1, 1], [], []>} : vector<16x32xf32>, vector<32x32xf32>, vector<16x32xf32> -> vector<16x32xf32>
    %c3_536 = arith.constant 3 : index
    %c0_537 = arith.constant 0 : index
    %c0_538 = arith.constant 0 : index
    %865 = vector.load %arg28[%c3_536, %c0_537, %c0_538] : memref<7x1x32xf32, #tpu.memory_space<vmem>>, vector<1x1x32xf32>
    %866 = vector.shape_cast %865 : vector<1x1x32xf32> to vector<1x32xf32>
    %867 = vector.broadcast %866 : vector<1x32xf32> to vector<16x32xf32>
    %868 = arith.mulf %864, %867 : vector<16x32xf32>
    %cst_539 = arith.constant dense<0.000000e+00> : vector<16xf32>
    %869 = vector.multi_reduction <add>, %868, %cst_539 [1] : vector<16x32xf32> to vector<16xf32>
    %870 = vector.shape_cast %869 : vector<16xf32> to vector<16x1xf32>
    %c3_540 = arith.constant 3 : index
    %c0_541 = arith.constant 0 : index
    %c0_542 = arith.constant 0 : index
    %871 = vector.load %arg27[%c3_540, %c0_541, %c0_542] : memref<7x1x32xf32, #tpu.memory_space<vmem>>, vector<1x1x32xf32>
    %872 = vector.shape_cast %871 : vector<1x1x32xf32> to vector<1x32xf32>
    %cst_543 = arith.constant dense<0.000000e+00> : vector<1x16xf32>
    %873 = tpu.matmul %872, %864, %cst_543 {dimension_numbers = #tpu.dot_dimension_numbers<[1], [1], [0], [0], [0, 0, 1, 0], [], []>} : vector<1x32xf32>, vector<16x32xf32>, vector<1x16xf32> -> vector<1x16xf32>
    %874 = vector.broadcast %870 : vector<16x1xf32> to vector<16x16xf32>
    %875 = vector.broadcast %873 : vector<1x16xf32> to vector<16x16xf32>
    %876 = arith.addf %874, %875 : vector<16x16xf32>
    %cst_544 = arith.constant 0.000000e+00 : f32
    %877 = vector.broadcast %cst_544 : f32 to vector<16x16xf32>
    %878 = arith.cmpf ogt, %876, %877 : vector<16x16xf32>
    %cst_545 = arith.constant 2.000000e-01 : f32
    %879 = vector.broadcast %cst_545 : f32 to vector<16x16xf32>
    %880 = arith.mulf %879, %876 : vector<16x16xf32>
    %881 = arith.select %878, %876, %880 : vector<16x16xi1>, vector<16x16xf32>
    %cst_546 = arith.constant 0.000000e+00 : f32
    %882 = vector.broadcast %cst_546 : f32 to vector<16x16xf32>
    %883 = arith.cmpf ogt, %709, %882 : vector<16x16xf32>
    %cst_547 = arith.constant -1.000000e+30 : f32
    %884 = vector.broadcast %cst_547 : f32 to vector<16x16xf32>
    %885 = arith.select %883, %881, %884 : vector<16x16xi1>, vector<16x16xf32>
    %cst_548 = arith.constant dense<0xFF800000> : vector<16xf32>
    %886 = vector.multi_reduction <maximumf>, %885, %cst_548 [1] : vector<16x16xf32> to vector<16xf32>
    %887 = vector.shape_cast %886 : vector<16xf32> to vector<16x1xf32>
    %888 = vector.broadcast %887 : vector<16x1xf32> to vector<16x16xf32>
    %889 = arith.subf %885, %888 : vector<16x16xf32>
    %890 = math.exp %889 : vector<16x16xf32>
    %cst_549 = arith.constant dense<0.000000e+00> : vector<16xf32>
    %891 = vector.multi_reduction <add>, %890, %cst_549 [1] : vector<16x16xf32> to vector<16xf32>
    %892 = vector.shape_cast %891 : vector<16xf32> to vector<16x1xf32>
    %893 = tpu.reciprocal %892 {approx = true} : vector<16x1xf32> -> vector<16x1xf32>
    %894 = vector.broadcast %893 : vector<16x1xf32> to vector<16x16xf32>
    %895 = arith.mulf %890, %894 : vector<16x16xf32>
    %cst_550 = arith.constant dense<0.000000e+00> : vector<16x32xf32>
    %896 = tpu.matmul %895, %864, %cst_550 {dimension_numbers = #tpu.dot_dimension_numbers<[1], [0], [0], [1], [0, 0, 1, 1], [], []>} : vector<16x16xf32>, vector<16x32xf32>, vector<16x32xf32> -> vector<16x32xf32>
    %c3_551 = arith.constant 3 : index
    %c0_552 = arith.constant 0 : index
    %c0_553 = arith.constant 0 : index
    %897 = vector.load %arg29[%c3_551, %c0_552, %c0_553] : memref<7x1x32xf32, #tpu.memory_space<vmem>>, vector<1x1x32xf32>
    %898 = vector.shape_cast %897 : vector<1x1x32xf32> to vector<1x32xf32>
    %899 = vector.broadcast %898 : vector<1x32xf32> to vector<16x32xf32>
    %900 = arith.addf %896, %899 : vector<16x32xf32>
    %c3_554 = arith.constant 3 : index
    %c0_555 = arith.constant 0 : index
    %c0_556 = arith.constant 0 : index
    %901 = vector.load %arg30[%c3_554, %c0_555, %c0_556] : memref<7x32x32xf32, #tpu.memory_space<vmem>>, vector<1x32x32xf32>
    %902 = vector.shape_cast %901 : vector<1x32x32xf32> to vector<32x32xf32>
    %cst_557 = arith.constant dense<0.000000e+00> : vector<16x32xf32>
    %903 = tpu.matmul %900, %902, %cst_557 {dimension_numbers = #tpu.dot_dimension_numbers<[1], [0], [0], [1], [0, 0, 1, 1], [], []>} : vector<16x32xf32>, vector<32x32xf32>, vector<16x32xf32> -> vector<16x32xf32>
    %cst_558 = arith.constant dense<0.000000e+00> : vector<16x32xf32>
    %904 = tpu.matmul %707, %903, %cst_558 {dimension_numbers = #tpu.dot_dimension_numbers<[1], [0], [0], [1], [0, 0, 1, 1], [], []>} : vector<16x16xf32>, vector<16x32xf32>, vector<16x32xf32> -> vector<16x32xf32>
    %c3_559 = arith.constant 3 : index
    %c0_560 = arith.constant 0 : index
    %c0_561 = arith.constant 0 : index
    %905 = vector.load %arg31[%c3_559, %c0_560, %c0_561] : memref<7x1x32xf32, #tpu.memory_space<vmem>>, vector<1x1x32xf32>
    %906 = vector.shape_cast %905 : vector<1x1x32xf32> to vector<1x32xf32>
    %907 = vector.broadcast %906 : vector<1x32xf32> to vector<16x32xf32>
    %908 = arith.addf %904, %907 : vector<16x32xf32>
    %c3_562 = arith.constant 3 : index
    %c0_563 = arith.constant 0 : index
    %c0_564 = arith.constant 0 : index
    %909 = vector.load %arg32[%c3_562, %c0_563, %c0_564] : memref<7x32x32xf32, #tpu.memory_space<vmem>>, vector<1x32x32xf32>
    %910 = vector.shape_cast %909 : vector<1x32x32xf32> to vector<32x32xf32>
    %cst_565 = arith.constant dense<0.000000e+00> : vector<16x32xf32>
    %911 = tpu.matmul %900, %910, %cst_565 {dimension_numbers = #tpu.dot_dimension_numbers<[1], [0], [0], [1], [0, 0, 1, 1], [], []>} : vector<16x32xf32>, vector<32x32xf32>, vector<16x32xf32> -> vector<16x32xf32>
    %cst_566 = arith.constant dense<0.000000e+00> : vector<16x32xf32>
    %912 = tpu.matmul %705, %911, %cst_566 {dimension_numbers = #tpu.dot_dimension_numbers<[1], [0], [0], [1], [0, 0, 1, 1], [], []>} : vector<16x16xf32>, vector<16x32xf32>, vector<16x32xf32> -> vector<16x32xf32>
    %c3_567 = arith.constant 3 : index
    %c0_568 = arith.constant 0 : index
    %c0_569 = arith.constant 0 : index
    %913 = vector.load %arg33[%c3_567, %c0_568, %c0_569] : memref<7x1x32xf32, #tpu.memory_space<vmem>>, vector<1x1x32xf32>
    %914 = vector.shape_cast %913 : vector<1x1x32xf32> to vector<1x32xf32>
    %915 = vector.broadcast %914 : vector<1x32xf32> to vector<16x32xf32>
    %916 = arith.addf %912, %915 : vector<16x32xf32>
    %917 = arith.addf %916, %908 : vector<16x32xf32>
    %c3_570 = arith.constant 3 : index
    %c0_571 = arith.constant 0 : index
    %c0_572 = arith.constant 0 : index
    %918 = vector.load %arg34[%c3_570, %c0_571, %c0_572] : memref<7x1x32xf32, #tpu.memory_space<vmem>>, vector<1x1x32xf32>
    %919 = vector.shape_cast %918 : vector<1x1x32xf32> to vector<1x32xf32>
    %920 = vector.broadcast %919 : vector<1x32xf32> to vector<16x32xf32>
    %921 = arith.mulf %917, %920 : vector<16x32xf32>
    %c3_573 = arith.constant 3 : index
    %c0_574 = arith.constant 0 : index
    %c0_575 = arith.constant 0 : index
    %922 = vector.load %arg35[%c3_573, %c0_574, %c0_575] : memref<7x1x32xf32, #tpu.memory_space<vmem>>, vector<1x1x32xf32>
    %923 = vector.shape_cast %922 : vector<1x1x32xf32> to vector<1x32xf32>
    %924 = vector.broadcast %923 : vector<1x32xf32> to vector<16x32xf32>
    %925 = arith.addf %921, %924 : vector<16x32xf32>
    %c4 = arith.constant 4 : index
    %c0_576 = arith.constant 0 : index
    %c0_577 = arith.constant 0 : index
    %926 = vector.load %arg0[%c4, %c0_576, %c0_577] : memref<7x16x40xf32, #tpu.memory_space<vmem>>, vector<1x16x40xf32>
    %927 = vector.shape_cast %926 : vector<1x16x40xf32> to vector<16x40xf32>
    %c4_578 = arith.constant 4 : index
    %c0_579 = arith.constant 0 : index
    %c0_580 = arith.constant 0 : index
    %928 = vector.load %arg2[%c4_578, %c0_579, %c0_580] : memref<7x16x16xf32, #tpu.memory_space<vmem>>, vector<1x16x16xf32>
    %929 = vector.shape_cast %928 : vector<1x16x16xf32> to vector<16x16xf32>
    %c4_581 = arith.constant 4 : index
    %c0_582 = arith.constant 0 : index
    %c0_583 = arith.constant 0 : index
    %930 = vector.load %arg3[%c4_581, %c0_582, %c0_583] : memref<7x16x16xf32, #tpu.memory_space<vmem>>, vector<1x16x16xf32>
    %931 = vector.shape_cast %930 : vector<1x16x16xf32> to vector<16x16xf32>
    %c4_584 = arith.constant 4 : index
    %c0_585 = arith.constant 0 : index
    %c0_586 = arith.constant 0 : index
    %932 = vector.load %arg4[%c4_584, %c0_585, %c0_586] : memref<7x16x16xf32, #tpu.memory_space<vmem>>, vector<1x16x16xf32>
    %933 = vector.shape_cast %932 : vector<1x16x16xf32> to vector<16x16xf32>
    %c4_587 = arith.constant 4 : index
    %c0_588 = arith.constant 0 : index
    %c0_589 = arith.constant 0 : index
    %934 = vector.load %arg7[%c4_587, %c0_588, %c0_589] : memref<7x40x40xf32, #tpu.memory_space<vmem>>, vector<1x40x40xf32>
    %935 = vector.shape_cast %934 : vector<1x40x40xf32> to vector<40x40xf32>
    %cst_590 = arith.constant dense<0.000000e+00> : vector<16x40xf32>
    %936 = tpu.matmul %927, %935, %cst_590 {dimension_numbers = #tpu.dot_dimension_numbers<[1], [0], [0], [1], [0, 0, 1, 1], [], []>} : vector<16x40xf32>, vector<40x40xf32>, vector<16x40xf32> -> vector<16x40xf32>
    %cst_591 = arith.constant dense<0.000000e+00> : vector<16x40xf32>
    %937 = tpu.matmul %929, %936, %cst_591 {dimension_numbers = #tpu.dot_dimension_numbers<[1], [0], [0], [1], [0, 0, 1, 1], [], []>} : vector<16x16xf32>, vector<16x40xf32>, vector<16x40xf32> -> vector<16x40xf32>
    %c4_592 = arith.constant 4 : index
    %c0_593 = arith.constant 0 : index
    %c0_594 = arith.constant 0 : index
    %938 = vector.load %arg8[%c4_592, %c0_593, %c0_594] : memref<7x1x40xf32, #tpu.memory_space<vmem>>, vector<1x1x40xf32>
    %939 = vector.shape_cast %938 : vector<1x1x40xf32> to vector<1x40xf32>
    %940 = vector.broadcast %939 : vector<1x40xf32> to vector<16x40xf32>
    %941 = arith.addf %937, %940 : vector<16x40xf32>
    %942 = arith.addf %941, %927 : vector<16x40xf32>
    %c4_595 = arith.constant 4 : index
    %c0_596 = arith.constant 0 : index
    %c0_597 = arith.constant 0 : index
    %943 = vector.load %arg14[%c4_595, %c0_596, %c0_597] : memref<7x1x40xf32, #tpu.memory_space<vmem>>, vector<1x1x40xf32>
    %944 = vector.shape_cast %943 : vector<1x1x40xf32> to vector<1x40xf32>
    %945 = vector.broadcast %944 : vector<1x40xf32> to vector<16x40xf32>
    %946 = arith.mulf %942, %945 : vector<16x40xf32>
    %c4_598 = arith.constant 4 : index
    %c0_599 = arith.constant 0 : index
    %c0_600 = arith.constant 0 : index
    %947 = vector.load %arg15[%c4_598, %c0_599, %c0_600] : memref<7x1x40xf32, #tpu.memory_space<vmem>>, vector<1x1x40xf32>
    %948 = vector.shape_cast %947 : vector<1x1x40xf32> to vector<1x40xf32>
    %949 = vector.broadcast %948 : vector<1x40xf32> to vector<16x40xf32>
    %950 = arith.addf %946, %949 : vector<16x40xf32>
    %c4_601 = arith.constant 4 : index
    %c0_602 = arith.constant 0 : index
    %c0_603 = arith.constant 0 : index
    %951 = vector.load %arg9[%c4_601, %c0_602, %c0_603] : memref<7x40x40xf32, #tpu.memory_space<vmem>>, vector<1x40x40xf32>
    %952 = vector.shape_cast %951 : vector<1x40x40xf32> to vector<40x40xf32>
    %cst_604 = arith.constant dense<0.000000e+00> : vector<16x40xf32>
    %953 = tpu.matmul %927, %952, %cst_604 {dimension_numbers = #tpu.dot_dimension_numbers<[1], [0], [0], [1], [0, 0, 1, 1], [], []>} : vector<16x40xf32>, vector<40x40xf32>, vector<16x40xf32> -> vector<16x40xf32>
    %c4_605 = arith.constant 4 : index
    %c0_606 = arith.constant 0 : index
    %c0_607 = arith.constant 0 : index
    %954 = vector.load %arg10[%c4_605, %c0_606, %c0_607] : memref<7x40x40xf32, #tpu.memory_space<vmem>>, vector<1x40x40xf32>
    %955 = vector.shape_cast %954 : vector<1x40x40xf32> to vector<40x40xf32>
    %cst_608 = arith.constant dense<0.000000e+00> : vector<16x40xf32>
    %956 = tpu.matmul %927, %955, %cst_608 {dimension_numbers = #tpu.dot_dimension_numbers<[1], [0], [0], [1], [0, 0, 1, 1], [], []>} : vector<16x40xf32>, vector<40x40xf32>, vector<16x40xf32> -> vector<16x40xf32>
    %c4_609 = arith.constant 4 : index
    %c0_610 = arith.constant 0 : index
    %c0_611 = arith.constant 0 : index
    %957 = vector.load %arg11[%c4_609, %c0_610, %c0_611] : memref<7x40x40xf32, #tpu.memory_space<vmem>>, vector<1x40x40xf32>
    %958 = vector.shape_cast %957 : vector<1x40x40xf32> to vector<40x40xf32>
    %cst_612 = arith.constant dense<0.000000e+00> : vector<16x40xf32>
    %959 = tpu.matmul %927, %958, %cst_612 {dimension_numbers = #tpu.dot_dimension_numbers<[1], [0], [0], [1], [0, 0, 1, 1], [], []>} : vector<16x40xf32>, vector<40x40xf32>, vector<16x40xf32> -> vector<16x40xf32>
    %cst_613 = arith.constant 0.000000e+00 : f32
    %960 = vector.broadcast %cst_613 : f32 to vector<16x40xf32>
    %961 = vector.broadcast %7 : vector<1x40xf32> to vector<16x40xf32>
    %962 = arith.mulf %953, %961 : vector<16x40xf32>
    %cst_614 = arith.constant dense<0.000000e+00> : vector<16x16xf32>
    %963 = tpu.matmul %962, %956, %cst_614 {dimension_numbers = #tpu.dot_dimension_numbers<[1], [1], [0], [0], [0, 0, 1, 0], [], []>} : vector<16x40xf32>, vector<16x40xf32>, vector<16x16xf32> -> vector<16x16xf32>
    %cst_615 = arith.constant 0.316227764 : f32
    %964 = vector.broadcast %cst_615 : f32 to vector<16x16xf32>
    %965 = arith.mulf %963, %964 : vector<16x16xf32>
    %cst_616 = arith.constant dense<0xFF800000> : vector<16xf32>
    %966 = vector.multi_reduction <maximumf>, %965, %cst_616 [1] : vector<16x16xf32> to vector<16xf32>
    %967 = vector.shape_cast %966 : vector<16xf32> to vector<16x1xf32>
    %968 = vector.broadcast %967 : vector<16x1xf32> to vector<16x16xf32>
    %969 = arith.subf %965, %968 : vector<16x16xf32>
    %970 = math.exp %969 : vector<16x16xf32>
    %cst_617 = arith.constant dense<0.000000e+00> : vector<16xf32>
    %971 = vector.multi_reduction <add>, %970, %cst_617 [1] : vector<16x16xf32> to vector<16xf32>
    %972 = vector.shape_cast %971 : vector<16xf32> to vector<16x1xf32>
    %973 = tpu.reciprocal %972 {approx = true} : vector<16x1xf32> -> vector<16x1xf32>
    %974 = vector.broadcast %973 : vector<16x1xf32> to vector<16x16xf32>
    %975 = arith.mulf %970, %974 : vector<16x16xf32>
    %976 = vector.broadcast %7 : vector<1x40xf32> to vector<16x40xf32>
    %977 = arith.mulf %959, %976 : vector<16x40xf32>
    %cst_618 = arith.constant dense<0.000000e+00> : vector<16x40xf32>
    %978 = tpu.matmul %975, %977, %cst_618 {dimension_numbers = #tpu.dot_dimension_numbers<[1], [0], [0], [1], [0, 0, 1, 1], [], []>} : vector<16x16xf32>, vector<16x40xf32>, vector<16x40xf32> -> vector<16x40xf32>
    %979 = arith.addf %960, %978 : vector<16x40xf32>
    %980 = vector.broadcast %14 : vector<1x40xf32> to vector<16x40xf32>
    %981 = arith.mulf %953, %980 : vector<16x40xf32>
    %cst_619 = arith.constant dense<0.000000e+00> : vector<16x16xf32>
    %982 = tpu.matmul %981, %956, %cst_619 {dimension_numbers = #tpu.dot_dimension_numbers<[1], [1], [0], [0], [0, 0, 1, 0], [], []>} : vector<16x40xf32>, vector<16x40xf32>, vector<16x16xf32> -> vector<16x16xf32>
    %cst_620 = arith.constant 0.316227764 : f32
    %983 = vector.broadcast %cst_620 : f32 to vector<16x16xf32>
    %984 = arith.mulf %982, %983 : vector<16x16xf32>
    %cst_621 = arith.constant dense<0xFF800000> : vector<16xf32>
    %985 = vector.multi_reduction <maximumf>, %984, %cst_621 [1] : vector<16x16xf32> to vector<16xf32>
    %986 = vector.shape_cast %985 : vector<16xf32> to vector<16x1xf32>
    %987 = vector.broadcast %986 : vector<16x1xf32> to vector<16x16xf32>
    %988 = arith.subf %984, %987 : vector<16x16xf32>
    %989 = math.exp %988 : vector<16x16xf32>
    %cst_622 = arith.constant dense<0.000000e+00> : vector<16xf32>
    %990 = vector.multi_reduction <add>, %989, %cst_622 [1] : vector<16x16xf32> to vector<16xf32>
    %991 = vector.shape_cast %990 : vector<16xf32> to vector<16x1xf32>
    %992 = tpu.reciprocal %991 {approx = true} : vector<16x1xf32> -> vector<16x1xf32>
    %993 = vector.broadcast %992 : vector<16x1xf32> to vector<16x16xf32>
    %994 = arith.mulf %989, %993 : vector<16x16xf32>
    %995 = vector.broadcast %14 : vector<1x40xf32> to vector<16x40xf32>
    %996 = arith.mulf %959, %995 : vector<16x40xf32>
    %cst_623 = arith.constant dense<0.000000e+00> : vector<16x40xf32>
    %997 = tpu.matmul %994, %996, %cst_623 {dimension_numbers = #tpu.dot_dimension_numbers<[1], [0], [0], [1], [0, 0, 1, 1], [], []>} : vector<16x16xf32>, vector<16x40xf32>, vector<16x40xf32> -> vector<16x40xf32>
    %998 = arith.addf %979, %997 : vector<16x40xf32>
    %999 = vector.broadcast %21 : vector<1x40xf32> to vector<16x40xf32>
    %1000 = arith.mulf %953, %999 : vector<16x40xf32>
    %cst_624 = arith.constant dense<0.000000e+00> : vector<16x16xf32>
    %1001 = tpu.matmul %1000, %956, %cst_624 {dimension_numbers = #tpu.dot_dimension_numbers<[1], [1], [0], [0], [0, 0, 1, 0], [], []>} : vector<16x40xf32>, vector<16x40xf32>, vector<16x16xf32> -> vector<16x16xf32>
    %cst_625 = arith.constant 0.316227764 : f32
    %1002 = vector.broadcast %cst_625 : f32 to vector<16x16xf32>
    %1003 = arith.mulf %1001, %1002 : vector<16x16xf32>
    %cst_626 = arith.constant dense<0xFF800000> : vector<16xf32>
    %1004 = vector.multi_reduction <maximumf>, %1003, %cst_626 [1] : vector<16x16xf32> to vector<16xf32>
    %1005 = vector.shape_cast %1004 : vector<16xf32> to vector<16x1xf32>
    %1006 = vector.broadcast %1005 : vector<16x1xf32> to vector<16x16xf32>
    %1007 = arith.subf %1003, %1006 : vector<16x16xf32>
    %1008 = math.exp %1007 : vector<16x16xf32>
    %cst_627 = arith.constant dense<0.000000e+00> : vector<16xf32>
    %1009 = vector.multi_reduction <add>, %1008, %cst_627 [1] : vector<16x16xf32> to vector<16xf32>
    %1010 = vector.shape_cast %1009 : vector<16xf32> to vector<16x1xf32>
    %1011 = tpu.reciprocal %1010 {approx = true} : vector<16x1xf32> -> vector<16x1xf32>
    %1012 = vector.broadcast %1011 : vector<16x1xf32> to vector<16x16xf32>
    %1013 = arith.mulf %1008, %1012 : vector<16x16xf32>
    %1014 = vector.broadcast %21 : vector<1x40xf32> to vector<16x40xf32>
    %1015 = arith.mulf %959, %1014 : vector<16x40xf32>
    %cst_628 = arith.constant dense<0.000000e+00> : vector<16x40xf32>
    %1016 = tpu.matmul %1013, %1015, %cst_628 {dimension_numbers = #tpu.dot_dimension_numbers<[1], [0], [0], [1], [0, 0, 1, 1], [], []>} : vector<16x16xf32>, vector<16x40xf32>, vector<16x40xf32> -> vector<16x40xf32>
    %1017 = arith.addf %998, %1016 : vector<16x40xf32>
    %1018 = vector.broadcast %28 : vector<1x40xf32> to vector<16x40xf32>
    %1019 = arith.mulf %953, %1018 : vector<16x40xf32>
    %cst_629 = arith.constant dense<0.000000e+00> : vector<16x16xf32>
    %1020 = tpu.matmul %1019, %956, %cst_629 {dimension_numbers = #tpu.dot_dimension_numbers<[1], [1], [0], [0], [0, 0, 1, 0], [], []>} : vector<16x40xf32>, vector<16x40xf32>, vector<16x16xf32> -> vector<16x16xf32>
    %cst_630 = arith.constant 0.316227764 : f32
    %1021 = vector.broadcast %cst_630 : f32 to vector<16x16xf32>
    %1022 = arith.mulf %1020, %1021 : vector<16x16xf32>
    %cst_631 = arith.constant dense<0xFF800000> : vector<16xf32>
    %1023 = vector.multi_reduction <maximumf>, %1022, %cst_631 [1] : vector<16x16xf32> to vector<16xf32>
    %1024 = vector.shape_cast %1023 : vector<16xf32> to vector<16x1xf32>
    %1025 = vector.broadcast %1024 : vector<16x1xf32> to vector<16x16xf32>
    %1026 = arith.subf %1022, %1025 : vector<16x16xf32>
    %1027 = math.exp %1026 : vector<16x16xf32>
    %cst_632 = arith.constant dense<0.000000e+00> : vector<16xf32>
    %1028 = vector.multi_reduction <add>, %1027, %cst_632 [1] : vector<16x16xf32> to vector<16xf32>
    %1029 = vector.shape_cast %1028 : vector<16xf32> to vector<16x1xf32>
    %1030 = tpu.reciprocal %1029 {approx = true} : vector<16x1xf32> -> vector<16x1xf32>
    %1031 = vector.broadcast %1030 : vector<16x1xf32> to vector<16x16xf32>
    %1032 = arith.mulf %1027, %1031 : vector<16x16xf32>
    %1033 = vector.broadcast %28 : vector<1x40xf32> to vector<16x40xf32>
    %1034 = arith.mulf %959, %1033 : vector<16x40xf32>
    %cst_633 = arith.constant dense<0.000000e+00> : vector<16x40xf32>
    %1035 = tpu.matmul %1032, %1034, %cst_633 {dimension_numbers = #tpu.dot_dimension_numbers<[1], [0], [0], [1], [0, 0, 1, 1], [], []>} : vector<16x16xf32>, vector<16x40xf32>, vector<16x40xf32> -> vector<16x40xf32>
    %1036 = arith.addf %1017, %1035 : vector<16x40xf32>
    %c4_634 = arith.constant 4 : index
    %c0_635 = arith.constant 0 : index
    %c0_636 = arith.constant 0 : index
    %1037 = vector.load %arg12[%c4_634, %c0_635, %c0_636] : memref<7x40x40xf32, #tpu.memory_space<vmem>>, vector<1x40x40xf32>
    %1038 = vector.shape_cast %1037 : vector<1x40x40xf32> to vector<40x40xf32>
    %cst_637 = arith.constant dense<0.000000e+00> : vector<16x40xf32>
    %1039 = tpu.matmul %1036, %1038, %cst_637 {dimension_numbers = #tpu.dot_dimension_numbers<[1], [0], [0], [1], [0, 0, 1, 1], [], []>} : vector<16x40xf32>, vector<40x40xf32>, vector<16x40xf32> -> vector<16x40xf32>
    %c4_638 = arith.constant 4 : index
    %c0_639 = arith.constant 0 : index
    %c0_640 = arith.constant 0 : index
    %1040 = vector.load %arg13[%c4_638, %c0_639, %c0_640] : memref<7x1x40xf32, #tpu.memory_space<vmem>>, vector<1x1x40xf32>
    %1041 = vector.shape_cast %1040 : vector<1x1x40xf32> to vector<1x40xf32>
    %1042 = vector.broadcast %1041 : vector<1x40xf32> to vector<16x40xf32>
    %1043 = arith.addf %1039, %1042 : vector<16x40xf32>
    %1044 = arith.addf %1043, %927 : vector<16x40xf32>
    %c4_641 = arith.constant 4 : index
    %c0_642 = arith.constant 0 : index
    %c0_643 = arith.constant 0 : index
    %1045 = vector.load %arg16[%c4_641, %c0_642, %c0_643] : memref<7x1x40xf32, #tpu.memory_space<vmem>>, vector<1x1x40xf32>
    %1046 = vector.shape_cast %1045 : vector<1x1x40xf32> to vector<1x40xf32>
    %1047 = vector.broadcast %1046 : vector<1x40xf32> to vector<16x40xf32>
    %1048 = arith.mulf %1044, %1047 : vector<16x40xf32>
    %c4_644 = arith.constant 4 : index
    %c0_645 = arith.constant 0 : index
    %c0_646 = arith.constant 0 : index
    %1049 = vector.load %arg17[%c4_644, %c0_645, %c0_646] : memref<7x1x40xf32, #tpu.memory_space<vmem>>, vector<1x1x40xf32>
    %1050 = vector.shape_cast %1049 : vector<1x1x40xf32> to vector<1x40xf32>
    %1051 = vector.broadcast %1050 : vector<1x40xf32> to vector<16x40xf32>
    %1052 = arith.addf %1048, %1051 : vector<16x40xf32>
    %1053 = arith.addf %950, %1052 : vector<16x40xf32>
    %c4_647 = arith.constant 4 : index
    %c0_648 = arith.constant 0 : index
    %c0_649 = arith.constant 0 : index
    %1054 = vector.load %arg20[%c4_647, %c0_648, %c0_649] : memref<7x40x80xf32, #tpu.memory_space<vmem>>, vector<1x40x80xf32>
    %1055 = vector.shape_cast %1054 : vector<1x40x80xf32> to vector<40x80xf32>
    %cst_650 = arith.constant dense<0.000000e+00> : vector<16x80xf32>
    %1056 = tpu.matmul %1053, %1055, %cst_650 {dimension_numbers = #tpu.dot_dimension_numbers<[1], [0], [0], [1], [0, 0, 1, 1], [], []>} : vector<16x40xf32>, vector<40x80xf32>, vector<16x80xf32> -> vector<16x80xf32>
    %c4_651 = arith.constant 4 : index
    %c0_652 = arith.constant 0 : index
    %c0_653 = arith.constant 0 : index
    %1057 = vector.load %arg21[%c4_651, %c0_652, %c0_653] : memref<7x1x80xf32, #tpu.memory_space<vmem>>, vector<1x1x80xf32>
    %1058 = vector.shape_cast %1057 : vector<1x1x80xf32> to vector<1x80xf32>
    %1059 = vector.broadcast %1058 : vector<1x80xf32> to vector<16x80xf32>
    %1060 = arith.addf %1056, %1059 : vector<16x80xf32>
    %cst_654 = arith.constant 0.000000e+00 : f32
    %1061 = vector.broadcast %cst_654 : f32 to vector<16x80xf32>
    %1062 = arith.maximumf %1060, %1061 : vector<16x80xf32>
    %c4_655 = arith.constant 4 : index
    %c0_656 = arith.constant 0 : index
    %c0_657 = arith.constant 0 : index
    %1063 = vector.load %arg22[%c4_655, %c0_656, %c0_657] : memref<7x80x40xf32, #tpu.memory_space<vmem>>, vector<1x80x40xf32>
    %1064 = vector.shape_cast %1063 : vector<1x80x40xf32> to vector<80x40xf32>
    %cst_658 = arith.constant dense<0.000000e+00> : vector<16x40xf32>
    %1065 = tpu.matmul %1062, %1064, %cst_658 {dimension_numbers = #tpu.dot_dimension_numbers<[1], [0], [0], [1], [0, 0, 1, 1], [], []>} : vector<16x80xf32>, vector<80x40xf32>, vector<16x40xf32> -> vector<16x40xf32>
    %c4_659 = arith.constant 4 : index
    %c0_660 = arith.constant 0 : index
    %c0_661 = arith.constant 0 : index
    %1066 = vector.load %arg23[%c4_659, %c0_660, %c0_661] : memref<7x1x40xf32, #tpu.memory_space<vmem>>, vector<1x1x40xf32>
    %1067 = vector.shape_cast %1066 : vector<1x1x40xf32> to vector<1x40xf32>
    %1068 = vector.broadcast %1067 : vector<1x40xf32> to vector<16x40xf32>
    %1069 = arith.addf %1065, %1068 : vector<16x40xf32>
    %1070 = arith.addf %1053, %1069 : vector<16x40xf32>
    %c4_662 = arith.constant 4 : index
    %c0_663 = arith.constant 0 : index
    %c0_664 = arith.constant 0 : index
    %1071 = vector.load %arg18[%c4_662, %c0_663, %c0_664] : memref<7x1x40xf32, #tpu.memory_space<vmem>>, vector<1x1x40xf32>
    %1072 = vector.shape_cast %1071 : vector<1x1x40xf32> to vector<1x40xf32>
    %1073 = vector.broadcast %1072 : vector<1x40xf32> to vector<16x40xf32>
    %1074 = arith.mulf %1070, %1073 : vector<16x40xf32>
    %c4_665 = arith.constant 4 : index
    %c0_666 = arith.constant 0 : index
    %c0_667 = arith.constant 0 : index
    %1075 = vector.load %arg19[%c4_665, %c0_666, %c0_667] : memref<7x1x40xf32, #tpu.memory_space<vmem>>, vector<1x1x40xf32>
    %1076 = vector.shape_cast %1075 : vector<1x1x40xf32> to vector<1x40xf32>
    %1077 = vector.broadcast %1076 : vector<1x40xf32> to vector<16x40xf32>
    %1078 = arith.addf %1074, %1077 : vector<16x40xf32>
    %c4_668 = arith.constant 4 : index
    %c0_669 = arith.constant 0 : index
    %c0_670 = arith.constant 0 : index
    %1079 = vector.load %arg24[%c4_668, %c0_669, %c0_670] : memref<7x40x32xf32, #tpu.memory_space<vmem>>, vector<1x40x32xf32>
    %1080 = vector.shape_cast %1079 : vector<1x40x32xf32> to vector<40x32xf32>
    %cst_671 = arith.constant dense<0.000000e+00> : vector<16x32xf32>
    %1081 = tpu.matmul %1078, %1080, %cst_671 {dimension_numbers = #tpu.dot_dimension_numbers<[1], [0], [0], [1], [0, 0, 1, 1], [], []>} : vector<16x40xf32>, vector<40x32xf32>, vector<16x32xf32> -> vector<16x32xf32>
    %c4_672 = arith.constant 4 : index
    %c0_673 = arith.constant 0 : index
    %c0_674 = arith.constant 0 : index
    %1082 = vector.load %arg25[%c4_672, %c0_673, %c0_674] : memref<7x1x32xf32, #tpu.memory_space<vmem>>, vector<1x1x32xf32>
    %1083 = vector.shape_cast %1082 : vector<1x1x32xf32> to vector<1x32xf32>
    %1084 = vector.broadcast %1083 : vector<1x32xf32> to vector<16x32xf32>
    %1085 = arith.addf %1081, %1084 : vector<16x32xf32>
    %c4_675 = arith.constant 4 : index
    %c0_676 = arith.constant 0 : index
    %c0_677 = arith.constant 0 : index
    %1086 = vector.load %arg26[%c4_675, %c0_676, %c0_677] : memref<7x32x32xf32, #tpu.memory_space<vmem>>, vector<1x32x32xf32>
    %1087 = vector.shape_cast %1086 : vector<1x32x32xf32> to vector<32x32xf32>
    %cst_678 = arith.constant dense<0.000000e+00> : vector<16x32xf32>
    %1088 = tpu.matmul %1085, %1087, %cst_678 {dimension_numbers = #tpu.dot_dimension_numbers<[1], [0], [0], [1], [0, 0, 1, 1], [], []>} : vector<16x32xf32>, vector<32x32xf32>, vector<16x32xf32> -> vector<16x32xf32>
    %c4_679 = arith.constant 4 : index
    %c0_680 = arith.constant 0 : index
    %c0_681 = arith.constant 0 : index
    %1089 = vector.load %arg28[%c4_679, %c0_680, %c0_681] : memref<7x1x32xf32, #tpu.memory_space<vmem>>, vector<1x1x32xf32>
    %1090 = vector.shape_cast %1089 : vector<1x1x32xf32> to vector<1x32xf32>
    %1091 = vector.broadcast %1090 : vector<1x32xf32> to vector<16x32xf32>
    %1092 = arith.mulf %1088, %1091 : vector<16x32xf32>
    %cst_682 = arith.constant dense<0.000000e+00> : vector<16xf32>
    %1093 = vector.multi_reduction <add>, %1092, %cst_682 [1] : vector<16x32xf32> to vector<16xf32>
    %1094 = vector.shape_cast %1093 : vector<16xf32> to vector<16x1xf32>
    %c4_683 = arith.constant 4 : index
    %c0_684 = arith.constant 0 : index
    %c0_685 = arith.constant 0 : index
    %1095 = vector.load %arg27[%c4_683, %c0_684, %c0_685] : memref<7x1x32xf32, #tpu.memory_space<vmem>>, vector<1x1x32xf32>
    %1096 = vector.shape_cast %1095 : vector<1x1x32xf32> to vector<1x32xf32>
    %cst_686 = arith.constant dense<0.000000e+00> : vector<1x16xf32>
    %1097 = tpu.matmul %1096, %1088, %cst_686 {dimension_numbers = #tpu.dot_dimension_numbers<[1], [1], [0], [0], [0, 0, 1, 0], [], []>} : vector<1x32xf32>, vector<16x32xf32>, vector<1x16xf32> -> vector<1x16xf32>
    %1098 = vector.broadcast %1094 : vector<16x1xf32> to vector<16x16xf32>
    %1099 = vector.broadcast %1097 : vector<1x16xf32> to vector<16x16xf32>
    %1100 = arith.addf %1098, %1099 : vector<16x16xf32>
    %cst_687 = arith.constant 0.000000e+00 : f32
    %1101 = vector.broadcast %cst_687 : f32 to vector<16x16xf32>
    %1102 = arith.cmpf ogt, %1100, %1101 : vector<16x16xf32>
    %cst_688 = arith.constant 2.000000e-01 : f32
    %1103 = vector.broadcast %cst_688 : f32 to vector<16x16xf32>
    %1104 = arith.mulf %1103, %1100 : vector<16x16xf32>
    %1105 = arith.select %1102, %1100, %1104 : vector<16x16xi1>, vector<16x16xf32>
    %cst_689 = arith.constant 0.000000e+00 : f32
    %1106 = vector.broadcast %cst_689 : f32 to vector<16x16xf32>
    %1107 = arith.cmpf ogt, %933, %1106 : vector<16x16xf32>
    %cst_690 = arith.constant -1.000000e+30 : f32
    %1108 = vector.broadcast %cst_690 : f32 to vector<16x16xf32>
    %1109 = arith.select %1107, %1105, %1108 : vector<16x16xi1>, vector<16x16xf32>
    %cst_691 = arith.constant dense<0xFF800000> : vector<16xf32>
    %1110 = vector.multi_reduction <maximumf>, %1109, %cst_691 [1] : vector<16x16xf32> to vector<16xf32>
    %1111 = vector.shape_cast %1110 : vector<16xf32> to vector<16x1xf32>
    %1112 = vector.broadcast %1111 : vector<16x1xf32> to vector<16x16xf32>
    %1113 = arith.subf %1109, %1112 : vector<16x16xf32>
    %1114 = math.exp %1113 : vector<16x16xf32>
    %cst_692 = arith.constant dense<0.000000e+00> : vector<16xf32>
    %1115 = vector.multi_reduction <add>, %1114, %cst_692 [1] : vector<16x16xf32> to vector<16xf32>
    %1116 = vector.shape_cast %1115 : vector<16xf32> to vector<16x1xf32>
    %1117 = tpu.reciprocal %1116 {approx = true} : vector<16x1xf32> -> vector<16x1xf32>
    %1118 = vector.broadcast %1117 : vector<16x1xf32> to vector<16x16xf32>
    %1119 = arith.mulf %1114, %1118 : vector<16x16xf32>
    %cst_693 = arith.constant dense<0.000000e+00> : vector<16x32xf32>
    %1120 = tpu.matmul %1119, %1088, %cst_693 {dimension_numbers = #tpu.dot_dimension_numbers<[1], [0], [0], [1], [0, 0, 1, 1], [], []>} : vector<16x16xf32>, vector<16x32xf32>, vector<16x32xf32> -> vector<16x32xf32>
    %c4_694 = arith.constant 4 : index
    %c0_695 = arith.constant 0 : index
    %c0_696 = arith.constant 0 : index
    %1121 = vector.load %arg29[%c4_694, %c0_695, %c0_696] : memref<7x1x32xf32, #tpu.memory_space<vmem>>, vector<1x1x32xf32>
    %1122 = vector.shape_cast %1121 : vector<1x1x32xf32> to vector<1x32xf32>
    %1123 = vector.broadcast %1122 : vector<1x32xf32> to vector<16x32xf32>
    %1124 = arith.addf %1120, %1123 : vector<16x32xf32>
    %c4_697 = arith.constant 4 : index
    %c0_698 = arith.constant 0 : index
    %c0_699 = arith.constant 0 : index
    %1125 = vector.load %arg30[%c4_697, %c0_698, %c0_699] : memref<7x32x32xf32, #tpu.memory_space<vmem>>, vector<1x32x32xf32>
    %1126 = vector.shape_cast %1125 : vector<1x32x32xf32> to vector<32x32xf32>
    %cst_700 = arith.constant dense<0.000000e+00> : vector<16x32xf32>
    %1127 = tpu.matmul %1124, %1126, %cst_700 {dimension_numbers = #tpu.dot_dimension_numbers<[1], [0], [0], [1], [0, 0, 1, 1], [], []>} : vector<16x32xf32>, vector<32x32xf32>, vector<16x32xf32> -> vector<16x32xf32>
    %cst_701 = arith.constant dense<0.000000e+00> : vector<16x32xf32>
    %1128 = tpu.matmul %931, %1127, %cst_701 {dimension_numbers = #tpu.dot_dimension_numbers<[1], [0], [0], [1], [0, 0, 1, 1], [], []>} : vector<16x16xf32>, vector<16x32xf32>, vector<16x32xf32> -> vector<16x32xf32>
    %c4_702 = arith.constant 4 : index
    %c0_703 = arith.constant 0 : index
    %c0_704 = arith.constant 0 : index
    %1129 = vector.load %arg31[%c4_702, %c0_703, %c0_704] : memref<7x1x32xf32, #tpu.memory_space<vmem>>, vector<1x1x32xf32>
    %1130 = vector.shape_cast %1129 : vector<1x1x32xf32> to vector<1x32xf32>
    %1131 = vector.broadcast %1130 : vector<1x32xf32> to vector<16x32xf32>
    %1132 = arith.addf %1128, %1131 : vector<16x32xf32>
    %c4_705 = arith.constant 4 : index
    %c0_706 = arith.constant 0 : index
    %c0_707 = arith.constant 0 : index
    %1133 = vector.load %arg32[%c4_705, %c0_706, %c0_707] : memref<7x32x32xf32, #tpu.memory_space<vmem>>, vector<1x32x32xf32>
    %1134 = vector.shape_cast %1133 : vector<1x32x32xf32> to vector<32x32xf32>
    %cst_708 = arith.constant dense<0.000000e+00> : vector<16x32xf32>
    %1135 = tpu.matmul %1124, %1134, %cst_708 {dimension_numbers = #tpu.dot_dimension_numbers<[1], [0], [0], [1], [0, 0, 1, 1], [], []>} : vector<16x32xf32>, vector<32x32xf32>, vector<16x32xf32> -> vector<16x32xf32>
    %cst_709 = arith.constant dense<0.000000e+00> : vector<16x32xf32>
    %1136 = tpu.matmul %929, %1135, %cst_709 {dimension_numbers = #tpu.dot_dimension_numbers<[1], [0], [0], [1], [0, 0, 1, 1], [], []>} : vector<16x16xf32>, vector<16x32xf32>, vector<16x32xf32> -> vector<16x32xf32>
    %c4_710 = arith.constant 4 : index
    %c0_711 = arith.constant 0 : index
    %c0_712 = arith.constant 0 : index
    %1137 = vector.load %arg33[%c4_710, %c0_711, %c0_712] : memref<7x1x32xf32, #tpu.memory_space<vmem>>, vector<1x1x32xf32>
    %1138 = vector.shape_cast %1137 : vector<1x1x32xf32> to vector<1x32xf32>
    %1139 = vector.broadcast %1138 : vector<1x32xf32> to vector<16x32xf32>
    %1140 = arith.addf %1136, %1139 : vector<16x32xf32>
    %1141 = arith.addf %1140, %1132 : vector<16x32xf32>
    %c4_713 = arith.constant 4 : index
    %c0_714 = arith.constant 0 : index
    %c0_715 = arith.constant 0 : index
    %1142 = vector.load %arg34[%c4_713, %c0_714, %c0_715] : memref<7x1x32xf32, #tpu.memory_space<vmem>>, vector<1x1x32xf32>
    %1143 = vector.shape_cast %1142 : vector<1x1x32xf32> to vector<1x32xf32>
    %1144 = vector.broadcast %1143 : vector<1x32xf32> to vector<16x32xf32>
    %1145 = arith.mulf %1141, %1144 : vector<16x32xf32>
    %c4_716 = arith.constant 4 : index
    %c0_717 = arith.constant 0 : index
    %c0_718 = arith.constant 0 : index
    %1146 = vector.load %arg35[%c4_716, %c0_717, %c0_718] : memref<7x1x32xf32, #tpu.memory_space<vmem>>, vector<1x1x32xf32>
    %1147 = vector.shape_cast %1146 : vector<1x1x32xf32> to vector<1x32xf32>
    %1148 = vector.broadcast %1147 : vector<1x32xf32> to vector<16x32xf32>
    %1149 = arith.addf %1145, %1148 : vector<16x32xf32>
    %c5 = arith.constant 5 : index
    %c0_719 = arith.constant 0 : index
    %c0_720 = arith.constant 0 : index
    %1150 = vector.load %arg0[%c5, %c0_719, %c0_720] : memref<7x16x40xf32, #tpu.memory_space<vmem>>, vector<1x16x40xf32>
    %1151 = vector.shape_cast %1150 : vector<1x16x40xf32> to vector<16x40xf32>
    %c5_721 = arith.constant 5 : index
    %c0_722 = arith.constant 0 : index
    %c0_723 = arith.constant 0 : index
    %1152 = vector.load %arg2[%c5_721, %c0_722, %c0_723] : memref<7x16x16xf32, #tpu.memory_space<vmem>>, vector<1x16x16xf32>
    %1153 = vector.shape_cast %1152 : vector<1x16x16xf32> to vector<16x16xf32>
    %c5_724 = arith.constant 5 : index
    %c0_725 = arith.constant 0 : index
    %c0_726 = arith.constant 0 : index
    %1154 = vector.load %arg3[%c5_724, %c0_725, %c0_726] : memref<7x16x16xf32, #tpu.memory_space<vmem>>, vector<1x16x16xf32>
    %1155 = vector.shape_cast %1154 : vector<1x16x16xf32> to vector<16x16xf32>
    %c5_727 = arith.constant 5 : index
    %c0_728 = arith.constant 0 : index
    %c0_729 = arith.constant 0 : index
    %1156 = vector.load %arg4[%c5_727, %c0_728, %c0_729] : memref<7x16x16xf32, #tpu.memory_space<vmem>>, vector<1x16x16xf32>
    %1157 = vector.shape_cast %1156 : vector<1x16x16xf32> to vector<16x16xf32>
    %c5_730 = arith.constant 5 : index
    %c0_731 = arith.constant 0 : index
    %c0_732 = arith.constant 0 : index
    %1158 = vector.load %arg7[%c5_730, %c0_731, %c0_732] : memref<7x40x40xf32, #tpu.memory_space<vmem>>, vector<1x40x40xf32>
    %1159 = vector.shape_cast %1158 : vector<1x40x40xf32> to vector<40x40xf32>
    %cst_733 = arith.constant dense<0.000000e+00> : vector<16x40xf32>
    %1160 = tpu.matmul %1151, %1159, %cst_733 {dimension_numbers = #tpu.dot_dimension_numbers<[1], [0], [0], [1], [0, 0, 1, 1], [], []>} : vector<16x40xf32>, vector<40x40xf32>, vector<16x40xf32> -> vector<16x40xf32>
    %cst_734 = arith.constant dense<0.000000e+00> : vector<16x40xf32>
    %1161 = tpu.matmul %1153, %1160, %cst_734 {dimension_numbers = #tpu.dot_dimension_numbers<[1], [0], [0], [1], [0, 0, 1, 1], [], []>} : vector<16x16xf32>, vector<16x40xf32>, vector<16x40xf32> -> vector<16x40xf32>
    %c5_735 = arith.constant 5 : index
    %c0_736 = arith.constant 0 : index
    %c0_737 = arith.constant 0 : index
    %1162 = vector.load %arg8[%c5_735, %c0_736, %c0_737] : memref<7x1x40xf32, #tpu.memory_space<vmem>>, vector<1x1x40xf32>
    %1163 = vector.shape_cast %1162 : vector<1x1x40xf32> to vector<1x40xf32>
    %1164 = vector.broadcast %1163 : vector<1x40xf32> to vector<16x40xf32>
    %1165 = arith.addf %1161, %1164 : vector<16x40xf32>
    %1166 = arith.addf %1165, %1151 : vector<16x40xf32>
    %c5_738 = arith.constant 5 : index
    %c0_739 = arith.constant 0 : index
    %c0_740 = arith.constant 0 : index
    %1167 = vector.load %arg14[%c5_738, %c0_739, %c0_740] : memref<7x1x40xf32, #tpu.memory_space<vmem>>, vector<1x1x40xf32>
    %1168 = vector.shape_cast %1167 : vector<1x1x40xf32> to vector<1x40xf32>
    %1169 = vector.broadcast %1168 : vector<1x40xf32> to vector<16x40xf32>
    %1170 = arith.mulf %1166, %1169 : vector<16x40xf32>
    %c5_741 = arith.constant 5 : index
    %c0_742 = arith.constant 0 : index
    %c0_743 = arith.constant 0 : index
    %1171 = vector.load %arg15[%c5_741, %c0_742, %c0_743] : memref<7x1x40xf32, #tpu.memory_space<vmem>>, vector<1x1x40xf32>
    %1172 = vector.shape_cast %1171 : vector<1x1x40xf32> to vector<1x40xf32>
    %1173 = vector.broadcast %1172 : vector<1x40xf32> to vector<16x40xf32>
    %1174 = arith.addf %1170, %1173 : vector<16x40xf32>
    %c5_744 = arith.constant 5 : index
    %c0_745 = arith.constant 0 : index
    %c0_746 = arith.constant 0 : index
    %1175 = vector.load %arg9[%c5_744, %c0_745, %c0_746] : memref<7x40x40xf32, #tpu.memory_space<vmem>>, vector<1x40x40xf32>
    %1176 = vector.shape_cast %1175 : vector<1x40x40xf32> to vector<40x40xf32>
    %cst_747 = arith.constant dense<0.000000e+00> : vector<16x40xf32>
    %1177 = tpu.matmul %1151, %1176, %cst_747 {dimension_numbers = #tpu.dot_dimension_numbers<[1], [0], [0], [1], [0, 0, 1, 1], [], []>} : vector<16x40xf32>, vector<40x40xf32>, vector<16x40xf32> -> vector<16x40xf32>
    %c5_748 = arith.constant 5 : index
    %c0_749 = arith.constant 0 : index
    %c0_750 = arith.constant 0 : index
    %1178 = vector.load %arg10[%c5_748, %c0_749, %c0_750] : memref<7x40x40xf32, #tpu.memory_space<vmem>>, vector<1x40x40xf32>
    %1179 = vector.shape_cast %1178 : vector<1x40x40xf32> to vector<40x40xf32>
    %cst_751 = arith.constant dense<0.000000e+00> : vector<16x40xf32>
    %1180 = tpu.matmul %1151, %1179, %cst_751 {dimension_numbers = #tpu.dot_dimension_numbers<[1], [0], [0], [1], [0, 0, 1, 1], [], []>} : vector<16x40xf32>, vector<40x40xf32>, vector<16x40xf32> -> vector<16x40xf32>
    %c5_752 = arith.constant 5 : index
    %c0_753 = arith.constant 0 : index
    %c0_754 = arith.constant 0 : index
    %1181 = vector.load %arg11[%c5_752, %c0_753, %c0_754] : memref<7x40x40xf32, #tpu.memory_space<vmem>>, vector<1x40x40xf32>
    %1182 = vector.shape_cast %1181 : vector<1x40x40xf32> to vector<40x40xf32>
    %cst_755 = arith.constant dense<0.000000e+00> : vector<16x40xf32>
    %1183 = tpu.matmul %1151, %1182, %cst_755 {dimension_numbers = #tpu.dot_dimension_numbers<[1], [0], [0], [1], [0, 0, 1, 1], [], []>} : vector<16x40xf32>, vector<40x40xf32>, vector<16x40xf32> -> vector<16x40xf32>
    %cst_756 = arith.constant 0.000000e+00 : f32
    %1184 = vector.broadcast %cst_756 : f32 to vector<16x40xf32>
    %1185 = vector.broadcast %7 : vector<1x40xf32> to vector<16x40xf32>
    %1186 = arith.mulf %1177, %1185 : vector<16x40xf32>
    %cst_757 = arith.constant dense<0.000000e+00> : vector<16x16xf32>
    %1187 = tpu.matmul %1186, %1180, %cst_757 {dimension_numbers = #tpu.dot_dimension_numbers<[1], [1], [0], [0], [0, 0, 1, 0], [], []>} : vector<16x40xf32>, vector<16x40xf32>, vector<16x16xf32> -> vector<16x16xf32>
    %cst_758 = arith.constant 0.316227764 : f32
    %1188 = vector.broadcast %cst_758 : f32 to vector<16x16xf32>
    %1189 = arith.mulf %1187, %1188 : vector<16x16xf32>
    %cst_759 = arith.constant dense<0xFF800000> : vector<16xf32>
    %1190 = vector.multi_reduction <maximumf>, %1189, %cst_759 [1] : vector<16x16xf32> to vector<16xf32>
    %1191 = vector.shape_cast %1190 : vector<16xf32> to vector<16x1xf32>
    %1192 = vector.broadcast %1191 : vector<16x1xf32> to vector<16x16xf32>
    %1193 = arith.subf %1189, %1192 : vector<16x16xf32>
    %1194 = math.exp %1193 : vector<16x16xf32>
    %cst_760 = arith.constant dense<0.000000e+00> : vector<16xf32>
    %1195 = vector.multi_reduction <add>, %1194, %cst_760 [1] : vector<16x16xf32> to vector<16xf32>
    %1196 = vector.shape_cast %1195 : vector<16xf32> to vector<16x1xf32>
    %1197 = tpu.reciprocal %1196 {approx = true} : vector<16x1xf32> -> vector<16x1xf32>
    %1198 = vector.broadcast %1197 : vector<16x1xf32> to vector<16x16xf32>
    %1199 = arith.mulf %1194, %1198 : vector<16x16xf32>
    %1200 = vector.broadcast %7 : vector<1x40xf32> to vector<16x40xf32>
    %1201 = arith.mulf %1183, %1200 : vector<16x40xf32>
    %cst_761 = arith.constant dense<0.000000e+00> : vector<16x40xf32>
    %1202 = tpu.matmul %1199, %1201, %cst_761 {dimension_numbers = #tpu.dot_dimension_numbers<[1], [0], [0], [1], [0, 0, 1, 1], [], []>} : vector<16x16xf32>, vector<16x40xf32>, vector<16x40xf32> -> vector<16x40xf32>
    %1203 = arith.addf %1184, %1202 : vector<16x40xf32>
    %1204 = vector.broadcast %14 : vector<1x40xf32> to vector<16x40xf32>
    %1205 = arith.mulf %1177, %1204 : vector<16x40xf32>
    %cst_762 = arith.constant dense<0.000000e+00> : vector<16x16xf32>
    %1206 = tpu.matmul %1205, %1180, %cst_762 {dimension_numbers = #tpu.dot_dimension_numbers<[1], [1], [0], [0], [0, 0, 1, 0], [], []>} : vector<16x40xf32>, vector<16x40xf32>, vector<16x16xf32> -> vector<16x16xf32>
    %cst_763 = arith.constant 0.316227764 : f32
    %1207 = vector.broadcast %cst_763 : f32 to vector<16x16xf32>
    %1208 = arith.mulf %1206, %1207 : vector<16x16xf32>
    %cst_764 = arith.constant dense<0xFF800000> : vector<16xf32>
    %1209 = vector.multi_reduction <maximumf>, %1208, %cst_764 [1] : vector<16x16xf32> to vector<16xf32>
    %1210 = vector.shape_cast %1209 : vector<16xf32> to vector<16x1xf32>
    %1211 = vector.broadcast %1210 : vector<16x1xf32> to vector<16x16xf32>
    %1212 = arith.subf %1208, %1211 : vector<16x16xf32>
    %1213 = math.exp %1212 : vector<16x16xf32>
    %cst_765 = arith.constant dense<0.000000e+00> : vector<16xf32>
    %1214 = vector.multi_reduction <add>, %1213, %cst_765 [1] : vector<16x16xf32> to vector<16xf32>
    %1215 = vector.shape_cast %1214 : vector<16xf32> to vector<16x1xf32>
    %1216 = tpu.reciprocal %1215 {approx = true} : vector<16x1xf32> -> vector<16x1xf32>
    %1217 = vector.broadcast %1216 : vector<16x1xf32> to vector<16x16xf32>
    %1218 = arith.mulf %1213, %1217 : vector<16x16xf32>
    %1219 = vector.broadcast %14 : vector<1x40xf32> to vector<16x40xf32>
    %1220 = arith.mulf %1183, %1219 : vector<16x40xf32>
    %cst_766 = arith.constant dense<0.000000e+00> : vector<16x40xf32>
    %1221 = tpu.matmul %1218, %1220, %cst_766 {dimension_numbers = #tpu.dot_dimension_numbers<[1], [0], [0], [1], [0, 0, 1, 1], [], []>} : vector<16x16xf32>, vector<16x40xf32>, vector<16x40xf32> -> vector<16x40xf32>
    %1222 = arith.addf %1203, %1221 : vector<16x40xf32>
    %1223 = vector.broadcast %21 : vector<1x40xf32> to vector<16x40xf32>
    %1224 = arith.mulf %1177, %1223 : vector<16x40xf32>
    %cst_767 = arith.constant dense<0.000000e+00> : vector<16x16xf32>
    %1225 = tpu.matmul %1224, %1180, %cst_767 {dimension_numbers = #tpu.dot_dimension_numbers<[1], [1], [0], [0], [0, 0, 1, 0], [], []>} : vector<16x40xf32>, vector<16x40xf32>, vector<16x16xf32> -> vector<16x16xf32>
    %cst_768 = arith.constant 0.316227764 : f32
    %1226 = vector.broadcast %cst_768 : f32 to vector<16x16xf32>
    %1227 = arith.mulf %1225, %1226 : vector<16x16xf32>
    %cst_769 = arith.constant dense<0xFF800000> : vector<16xf32>
    %1228 = vector.multi_reduction <maximumf>, %1227, %cst_769 [1] : vector<16x16xf32> to vector<16xf32>
    %1229 = vector.shape_cast %1228 : vector<16xf32> to vector<16x1xf32>
    %1230 = vector.broadcast %1229 : vector<16x1xf32> to vector<16x16xf32>
    %1231 = arith.subf %1227, %1230 : vector<16x16xf32>
    %1232 = math.exp %1231 : vector<16x16xf32>
    %cst_770 = arith.constant dense<0.000000e+00> : vector<16xf32>
    %1233 = vector.multi_reduction <add>, %1232, %cst_770 [1] : vector<16x16xf32> to vector<16xf32>
    %1234 = vector.shape_cast %1233 : vector<16xf32> to vector<16x1xf32>
    %1235 = tpu.reciprocal %1234 {approx = true} : vector<16x1xf32> -> vector<16x1xf32>
    %1236 = vector.broadcast %1235 : vector<16x1xf32> to vector<16x16xf32>
    %1237 = arith.mulf %1232, %1236 : vector<16x16xf32>
    %1238 = vector.broadcast %21 : vector<1x40xf32> to vector<16x40xf32>
    %1239 = arith.mulf %1183, %1238 : vector<16x40xf32>
    %cst_771 = arith.constant dense<0.000000e+00> : vector<16x40xf32>
    %1240 = tpu.matmul %1237, %1239, %cst_771 {dimension_numbers = #tpu.dot_dimension_numbers<[1], [0], [0], [1], [0, 0, 1, 1], [], []>} : vector<16x16xf32>, vector<16x40xf32>, vector<16x40xf32> -> vector<16x40xf32>
    %1241 = arith.addf %1222, %1240 : vector<16x40xf32>
    %1242 = vector.broadcast %28 : vector<1x40xf32> to vector<16x40xf32>
    %1243 = arith.mulf %1177, %1242 : vector<16x40xf32>
    %cst_772 = arith.constant dense<0.000000e+00> : vector<16x16xf32>
    %1244 = tpu.matmul %1243, %1180, %cst_772 {dimension_numbers = #tpu.dot_dimension_numbers<[1], [1], [0], [0], [0, 0, 1, 0], [], []>} : vector<16x40xf32>, vector<16x40xf32>, vector<16x16xf32> -> vector<16x16xf32>
    %cst_773 = arith.constant 0.316227764 : f32
    %1245 = vector.broadcast %cst_773 : f32 to vector<16x16xf32>
    %1246 = arith.mulf %1244, %1245 : vector<16x16xf32>
    %cst_774 = arith.constant dense<0xFF800000> : vector<16xf32>
    %1247 = vector.multi_reduction <maximumf>, %1246, %cst_774 [1] : vector<16x16xf32> to vector<16xf32>
    %1248 = vector.shape_cast %1247 : vector<16xf32> to vector<16x1xf32>
    %1249 = vector.broadcast %1248 : vector<16x1xf32> to vector<16x16xf32>
    %1250 = arith.subf %1246, %1249 : vector<16x16xf32>
    %1251 = math.exp %1250 : vector<16x16xf32>
    %cst_775 = arith.constant dense<0.000000e+00> : vector<16xf32>
    %1252 = vector.multi_reduction <add>, %1251, %cst_775 [1] : vector<16x16xf32> to vector<16xf32>
    %1253 = vector.shape_cast %1252 : vector<16xf32> to vector<16x1xf32>
    %1254 = tpu.reciprocal %1253 {approx = true} : vector<16x1xf32> -> vector<16x1xf32>
    %1255 = vector.broadcast %1254 : vector<16x1xf32> to vector<16x16xf32>
    %1256 = arith.mulf %1251, %1255 : vector<16x16xf32>
    %1257 = vector.broadcast %28 : vector<1x40xf32> to vector<16x40xf32>
    %1258 = arith.mulf %1183, %1257 : vector<16x40xf32>
    %cst_776 = arith.constant dense<0.000000e+00> : vector<16x40xf32>
    %1259 = tpu.matmul %1256, %1258, %cst_776 {dimension_numbers = #tpu.dot_dimension_numbers<[1], [0], [0], [1], [0, 0, 1, 1], [], []>} : vector<16x16xf32>, vector<16x40xf32>, vector<16x40xf32> -> vector<16x40xf32>
    %1260 = arith.addf %1241, %1259 : vector<16x40xf32>
    %c5_777 = arith.constant 5 : index
    %c0_778 = arith.constant 0 : index
    %c0_779 = arith.constant 0 : index
    %1261 = vector.load %arg12[%c5_777, %c0_778, %c0_779] : memref<7x40x40xf32, #tpu.memory_space<vmem>>, vector<1x40x40xf32>
    %1262 = vector.shape_cast %1261 : vector<1x40x40xf32> to vector<40x40xf32>
    %cst_780 = arith.constant dense<0.000000e+00> : vector<16x40xf32>
    %1263 = tpu.matmul %1260, %1262, %cst_780 {dimension_numbers = #tpu.dot_dimension_numbers<[1], [0], [0], [1], [0, 0, 1, 1], [], []>} : vector<16x40xf32>, vector<40x40xf32>, vector<16x40xf32> -> vector<16x40xf32>
    %c5_781 = arith.constant 5 : index
    %c0_782 = arith.constant 0 : index
    %c0_783 = arith.constant 0 : index
    %1264 = vector.load %arg13[%c5_781, %c0_782, %c0_783] : memref<7x1x40xf32, #tpu.memory_space<vmem>>, vector<1x1x40xf32>
    %1265 = vector.shape_cast %1264 : vector<1x1x40xf32> to vector<1x40xf32>
    %1266 = vector.broadcast %1265 : vector<1x40xf32> to vector<16x40xf32>
    %1267 = arith.addf %1263, %1266 : vector<16x40xf32>
    %1268 = arith.addf %1267, %1151 : vector<16x40xf32>
    %c5_784 = arith.constant 5 : index
    %c0_785 = arith.constant 0 : index
    %c0_786 = arith.constant 0 : index
    %1269 = vector.load %arg16[%c5_784, %c0_785, %c0_786] : memref<7x1x40xf32, #tpu.memory_space<vmem>>, vector<1x1x40xf32>
    %1270 = vector.shape_cast %1269 : vector<1x1x40xf32> to vector<1x40xf32>
    %1271 = vector.broadcast %1270 : vector<1x40xf32> to vector<16x40xf32>
    %1272 = arith.mulf %1268, %1271 : vector<16x40xf32>
    %c5_787 = arith.constant 5 : index
    %c0_788 = arith.constant 0 : index
    %c0_789 = arith.constant 0 : index
    %1273 = vector.load %arg17[%c5_787, %c0_788, %c0_789] : memref<7x1x40xf32, #tpu.memory_space<vmem>>, vector<1x1x40xf32>
    %1274 = vector.shape_cast %1273 : vector<1x1x40xf32> to vector<1x40xf32>
    %1275 = vector.broadcast %1274 : vector<1x40xf32> to vector<16x40xf32>
    %1276 = arith.addf %1272, %1275 : vector<16x40xf32>
    %1277 = arith.addf %1174, %1276 : vector<16x40xf32>
    %c5_790 = arith.constant 5 : index
    %c0_791 = arith.constant 0 : index
    %c0_792 = arith.constant 0 : index
    %1278 = vector.load %arg20[%c5_790, %c0_791, %c0_792] : memref<7x40x80xf32, #tpu.memory_space<vmem>>, vector<1x40x80xf32>
    %1279 = vector.shape_cast %1278 : vector<1x40x80xf32> to vector<40x80xf32>
    %cst_793 = arith.constant dense<0.000000e+00> : vector<16x80xf32>
    %1280 = tpu.matmul %1277, %1279, %cst_793 {dimension_numbers = #tpu.dot_dimension_numbers<[1], [0], [0], [1], [0, 0, 1, 1], [], []>} : vector<16x40xf32>, vector<40x80xf32>, vector<16x80xf32> -> vector<16x80xf32>
    %c5_794 = arith.constant 5 : index
    %c0_795 = arith.constant 0 : index
    %c0_796 = arith.constant 0 : index
    %1281 = vector.load %arg21[%c5_794, %c0_795, %c0_796] : memref<7x1x80xf32, #tpu.memory_space<vmem>>, vector<1x1x80xf32>
    %1282 = vector.shape_cast %1281 : vector<1x1x80xf32> to vector<1x80xf32>
    %1283 = vector.broadcast %1282 : vector<1x80xf32> to vector<16x80xf32>
    %1284 = arith.addf %1280, %1283 : vector<16x80xf32>
    %cst_797 = arith.constant 0.000000e+00 : f32
    %1285 = vector.broadcast %cst_797 : f32 to vector<16x80xf32>
    %1286 = arith.maximumf %1284, %1285 : vector<16x80xf32>
    %c5_798 = arith.constant 5 : index
    %c0_799 = arith.constant 0 : index
    %c0_800 = arith.constant 0 : index
    %1287 = vector.load %arg22[%c5_798, %c0_799, %c0_800] : memref<7x80x40xf32, #tpu.memory_space<vmem>>, vector<1x80x40xf32>
    %1288 = vector.shape_cast %1287 : vector<1x80x40xf32> to vector<80x40xf32>
    %cst_801 = arith.constant dense<0.000000e+00> : vector<16x40xf32>
    %1289 = tpu.matmul %1286, %1288, %cst_801 {dimension_numbers = #tpu.dot_dimension_numbers<[1], [0], [0], [1], [0, 0, 1, 1], [], []>} : vector<16x80xf32>, vector<80x40xf32>, vector<16x40xf32> -> vector<16x40xf32>
    %c5_802 = arith.constant 5 : index
    %c0_803 = arith.constant 0 : index
    %c0_804 = arith.constant 0 : index
    %1290 = vector.load %arg23[%c5_802, %c0_803, %c0_804] : memref<7x1x40xf32, #tpu.memory_space<vmem>>, vector<1x1x40xf32>
    %1291 = vector.shape_cast %1290 : vector<1x1x40xf32> to vector<1x40xf32>
    %1292 = vector.broadcast %1291 : vector<1x40xf32> to vector<16x40xf32>
    %1293 = arith.addf %1289, %1292 : vector<16x40xf32>
    %1294 = arith.addf %1277, %1293 : vector<16x40xf32>
    %c5_805 = arith.constant 5 : index
    %c0_806 = arith.constant 0 : index
    %c0_807 = arith.constant 0 : index
    %1295 = vector.load %arg18[%c5_805, %c0_806, %c0_807] : memref<7x1x40xf32, #tpu.memory_space<vmem>>, vector<1x1x40xf32>
    %1296 = vector.shape_cast %1295 : vector<1x1x40xf32> to vector<1x40xf32>
    %1297 = vector.broadcast %1296 : vector<1x40xf32> to vector<16x40xf32>
    %1298 = arith.mulf %1294, %1297 : vector<16x40xf32>
    %c5_808 = arith.constant 5 : index
    %c0_809 = arith.constant 0 : index
    %c0_810 = arith.constant 0 : index
    %1299 = vector.load %arg19[%c5_808, %c0_809, %c0_810] : memref<7x1x40xf32, #tpu.memory_space<vmem>>, vector<1x1x40xf32>
    %1300 = vector.shape_cast %1299 : vector<1x1x40xf32> to vector<1x40xf32>
    %1301 = vector.broadcast %1300 : vector<1x40xf32> to vector<16x40xf32>
    %1302 = arith.addf %1298, %1301 : vector<16x40xf32>
    %c5_811 = arith.constant 5 : index
    %c0_812 = arith.constant 0 : index
    %c0_813 = arith.constant 0 : index
    %1303 = vector.load %arg24[%c5_811, %c0_812, %c0_813] : memref<7x40x32xf32, #tpu.memory_space<vmem>>, vector<1x40x32xf32>
    %1304 = vector.shape_cast %1303 : vector<1x40x32xf32> to vector<40x32xf32>
    %cst_814 = arith.constant dense<0.000000e+00> : vector<16x32xf32>
    %1305 = tpu.matmul %1302, %1304, %cst_814 {dimension_numbers = #tpu.dot_dimension_numbers<[1], [0], [0], [1], [0, 0, 1, 1], [], []>} : vector<16x40xf32>, vector<40x32xf32>, vector<16x32xf32> -> vector<16x32xf32>
    %c5_815 = arith.constant 5 : index
    %c0_816 = arith.constant 0 : index
    %c0_817 = arith.constant 0 : index
    %1306 = vector.load %arg25[%c5_815, %c0_816, %c0_817] : memref<7x1x32xf32, #tpu.memory_space<vmem>>, vector<1x1x32xf32>
    %1307 = vector.shape_cast %1306 : vector<1x1x32xf32> to vector<1x32xf32>
    %1308 = vector.broadcast %1307 : vector<1x32xf32> to vector<16x32xf32>
    %1309 = arith.addf %1305, %1308 : vector<16x32xf32>
    %c5_818 = arith.constant 5 : index
    %c0_819 = arith.constant 0 : index
    %c0_820 = arith.constant 0 : index
    %1310 = vector.load %arg26[%c5_818, %c0_819, %c0_820] : memref<7x32x32xf32, #tpu.memory_space<vmem>>, vector<1x32x32xf32>
    %1311 = vector.shape_cast %1310 : vector<1x32x32xf32> to vector<32x32xf32>
    %cst_821 = arith.constant dense<0.000000e+00> : vector<16x32xf32>
    %1312 = tpu.matmul %1309, %1311, %cst_821 {dimension_numbers = #tpu.dot_dimension_numbers<[1], [0], [0], [1], [0, 0, 1, 1], [], []>} : vector<16x32xf32>, vector<32x32xf32>, vector<16x32xf32> -> vector<16x32xf32>
    %c5_822 = arith.constant 5 : index
    %c0_823 = arith.constant 0 : index
    %c0_824 = arith.constant 0 : index
    %1313 = vector.load %arg28[%c5_822, %c0_823, %c0_824] : memref<7x1x32xf32, #tpu.memory_space<vmem>>, vector<1x1x32xf32>
    %1314 = vector.shape_cast %1313 : vector<1x1x32xf32> to vector<1x32xf32>
    %1315 = vector.broadcast %1314 : vector<1x32xf32> to vector<16x32xf32>
    %1316 = arith.mulf %1312, %1315 : vector<16x32xf32>
    %cst_825 = arith.constant dense<0.000000e+00> : vector<16xf32>
    %1317 = vector.multi_reduction <add>, %1316, %cst_825 [1] : vector<16x32xf32> to vector<16xf32>
    %1318 = vector.shape_cast %1317 : vector<16xf32> to vector<16x1xf32>
    %c5_826 = arith.constant 5 : index
    %c0_827 = arith.constant 0 : index
    %c0_828 = arith.constant 0 : index
    %1319 = vector.load %arg27[%c5_826, %c0_827, %c0_828] : memref<7x1x32xf32, #tpu.memory_space<vmem>>, vector<1x1x32xf32>
    %1320 = vector.shape_cast %1319 : vector<1x1x32xf32> to vector<1x32xf32>
    %cst_829 = arith.constant dense<0.000000e+00> : vector<1x16xf32>
    %1321 = tpu.matmul %1320, %1312, %cst_829 {dimension_numbers = #tpu.dot_dimension_numbers<[1], [1], [0], [0], [0, 0, 1, 0], [], []>} : vector<1x32xf32>, vector<16x32xf32>, vector<1x16xf32> -> vector<1x16xf32>
    %1322 = vector.broadcast %1318 : vector<16x1xf32> to vector<16x16xf32>
    %1323 = vector.broadcast %1321 : vector<1x16xf32> to vector<16x16xf32>
    %1324 = arith.addf %1322, %1323 : vector<16x16xf32>
    %cst_830 = arith.constant 0.000000e+00 : f32
    %1325 = vector.broadcast %cst_830 : f32 to vector<16x16xf32>
    %1326 = arith.cmpf ogt, %1324, %1325 : vector<16x16xf32>
    %cst_831 = arith.constant 2.000000e-01 : f32
    %1327 = vector.broadcast %cst_831 : f32 to vector<16x16xf32>
    %1328 = arith.mulf %1327, %1324 : vector<16x16xf32>
    %1329 = arith.select %1326, %1324, %1328 : vector<16x16xi1>, vector<16x16xf32>
    %cst_832 = arith.constant 0.000000e+00 : f32
    %1330 = vector.broadcast %cst_832 : f32 to vector<16x16xf32>
    %1331 = arith.cmpf ogt, %1157, %1330 : vector<16x16xf32>
    %cst_833 = arith.constant -1.000000e+30 : f32
    %1332 = vector.broadcast %cst_833 : f32 to vector<16x16xf32>
    %1333 = arith.select %1331, %1329, %1332 : vector<16x16xi1>, vector<16x16xf32>
    %cst_834 = arith.constant dense<0xFF800000> : vector<16xf32>
    %1334 = vector.multi_reduction <maximumf>, %1333, %cst_834 [1] : vector<16x16xf32> to vector<16xf32>
    %1335 = vector.shape_cast %1334 : vector<16xf32> to vector<16x1xf32>
    %1336 = vector.broadcast %1335 : vector<16x1xf32> to vector<16x16xf32>
    %1337 = arith.subf %1333, %1336 : vector<16x16xf32>
    %1338 = math.exp %1337 : vector<16x16xf32>
    %cst_835 = arith.constant dense<0.000000e+00> : vector<16xf32>
    %1339 = vector.multi_reduction <add>, %1338, %cst_835 [1] : vector<16x16xf32> to vector<16xf32>
    %1340 = vector.shape_cast %1339 : vector<16xf32> to vector<16x1xf32>
    %1341 = tpu.reciprocal %1340 {approx = true} : vector<16x1xf32> -> vector<16x1xf32>
    %1342 = vector.broadcast %1341 : vector<16x1xf32> to vector<16x16xf32>
    %1343 = arith.mulf %1338, %1342 : vector<16x16xf32>
    %cst_836 = arith.constant dense<0.000000e+00> : vector<16x32xf32>
    %1344 = tpu.matmul %1343, %1312, %cst_836 {dimension_numbers = #tpu.dot_dimension_numbers<[1], [0], [0], [1], [0, 0, 1, 1], [], []>} : vector<16x16xf32>, vector<16x32xf32>, vector<16x32xf32> -> vector<16x32xf32>
    %c5_837 = arith.constant 5 : index
    %c0_838 = arith.constant 0 : index
    %c0_839 = arith.constant 0 : index
    %1345 = vector.load %arg29[%c5_837, %c0_838, %c0_839] : memref<7x1x32xf32, #tpu.memory_space<vmem>>, vector<1x1x32xf32>
    %1346 = vector.shape_cast %1345 : vector<1x1x32xf32> to vector<1x32xf32>
    %1347 = vector.broadcast %1346 : vector<1x32xf32> to vector<16x32xf32>
    %1348 = arith.addf %1344, %1347 : vector<16x32xf32>
    %c5_840 = arith.constant 5 : index
    %c0_841 = arith.constant 0 : index
    %c0_842 = arith.constant 0 : index
    %1349 = vector.load %arg30[%c5_840, %c0_841, %c0_842] : memref<7x32x32xf32, #tpu.memory_space<vmem>>, vector<1x32x32xf32>
    %1350 = vector.shape_cast %1349 : vector<1x32x32xf32> to vector<32x32xf32>
    %cst_843 = arith.constant dense<0.000000e+00> : vector<16x32xf32>
    %1351 = tpu.matmul %1348, %1350, %cst_843 {dimension_numbers = #tpu.dot_dimension_numbers<[1], [0], [0], [1], [0, 0, 1, 1], [], []>} : vector<16x32xf32>, vector<32x32xf32>, vector<16x32xf32> -> vector<16x32xf32>
    %cst_844 = arith.constant dense<0.000000e+00> : vector<16x32xf32>
    %1352 = tpu.matmul %1155, %1351, %cst_844 {dimension_numbers = #tpu.dot_dimension_numbers<[1], [0], [0], [1], [0, 0, 1, 1], [], []>} : vector<16x16xf32>, vector<16x32xf32>, vector<16x32xf32> -> vector<16x32xf32>
    %c5_845 = arith.constant 5 : index
    %c0_846 = arith.constant 0 : index
    %c0_847 = arith.constant 0 : index
    %1353 = vector.load %arg31[%c5_845, %c0_846, %c0_847] : memref<7x1x32xf32, #tpu.memory_space<vmem>>, vector<1x1x32xf32>
    %1354 = vector.shape_cast %1353 : vector<1x1x32xf32> to vector<1x32xf32>
    %1355 = vector.broadcast %1354 : vector<1x32xf32> to vector<16x32xf32>
    %1356 = arith.addf %1352, %1355 : vector<16x32xf32>
    %c5_848 = arith.constant 5 : index
    %c0_849 = arith.constant 0 : index
    %c0_850 = arith.constant 0 : index
    %1357 = vector.load %arg32[%c5_848, %c0_849, %c0_850] : memref<7x32x32xf32, #tpu.memory_space<vmem>>, vector<1x32x32xf32>
    %1358 = vector.shape_cast %1357 : vector<1x32x32xf32> to vector<32x32xf32>
    %cst_851 = arith.constant dense<0.000000e+00> : vector<16x32xf32>
    %1359 = tpu.matmul %1348, %1358, %cst_851 {dimension_numbers = #tpu.dot_dimension_numbers<[1], [0], [0], [1], [0, 0, 1, 1], [], []>} : vector<16x32xf32>, vector<32x32xf32>, vector<16x32xf32> -> vector<16x32xf32>
    %cst_852 = arith.constant dense<0.000000e+00> : vector<16x32xf32>
    %1360 = tpu.matmul %1153, %1359, %cst_852 {dimension_numbers = #tpu.dot_dimension_numbers<[1], [0], [0], [1], [0, 0, 1, 1], [], []>} : vector<16x16xf32>, vector<16x32xf32>, vector<16x32xf32> -> vector<16x32xf32>
    %c5_853 = arith.constant 5 : index
    %c0_854 = arith.constant 0 : index
    %c0_855 = arith.constant 0 : index
    %1361 = vector.load %arg33[%c5_853, %c0_854, %c0_855] : memref<7x1x32xf32, #tpu.memory_space<vmem>>, vector<1x1x32xf32>
    %1362 = vector.shape_cast %1361 : vector<1x1x32xf32> to vector<1x32xf32>
    %1363 = vector.broadcast %1362 : vector<1x32xf32> to vector<16x32xf32>
    %1364 = arith.addf %1360, %1363 : vector<16x32xf32>
    %1365 = arith.addf %1364, %1356 : vector<16x32xf32>
    %c5_856 = arith.constant 5 : index
    %c0_857 = arith.constant 0 : index
    %c0_858 = arith.constant 0 : index
    %1366 = vector.load %arg34[%c5_856, %c0_857, %c0_858] : memref<7x1x32xf32, #tpu.memory_space<vmem>>, vector<1x1x32xf32>
    %1367 = vector.shape_cast %1366 : vector<1x1x32xf32> to vector<1x32xf32>
    %1368 = vector.broadcast %1367 : vector<1x32xf32> to vector<16x32xf32>
    %1369 = arith.mulf %1365, %1368 : vector<16x32xf32>
    %c5_859 = arith.constant 5 : index
    %c0_860 = arith.constant 0 : index
    %c0_861 = arith.constant 0 : index
    %1370 = vector.load %arg35[%c5_859, %c0_860, %c0_861] : memref<7x1x32xf32, #tpu.memory_space<vmem>>, vector<1x1x32xf32>
    %1371 = vector.shape_cast %1370 : vector<1x1x32xf32> to vector<1x32xf32>
    %1372 = vector.broadcast %1371 : vector<1x32xf32> to vector<16x32xf32>
    %1373 = arith.addf %1369, %1372 : vector<16x32xf32>
    %c6 = arith.constant 6 : index
    %c0_862 = arith.constant 0 : index
    %c0_863 = arith.constant 0 : index
    %1374 = vector.load %arg0[%c6, %c0_862, %c0_863] : memref<7x16x40xf32, #tpu.memory_space<vmem>>, vector<1x16x40xf32>
    %1375 = vector.shape_cast %1374 : vector<1x16x40xf32> to vector<16x40xf32>
    %c6_864 = arith.constant 6 : index
    %c0_865 = arith.constant 0 : index
    %c0_866 = arith.constant 0 : index
    %1376 = vector.load %arg2[%c6_864, %c0_865, %c0_866] : memref<7x16x16xf32, #tpu.memory_space<vmem>>, vector<1x16x16xf32>
    %1377 = vector.shape_cast %1376 : vector<1x16x16xf32> to vector<16x16xf32>
    %c6_867 = arith.constant 6 : index
    %c0_868 = arith.constant 0 : index
    %c0_869 = arith.constant 0 : index
    %1378 = vector.load %arg3[%c6_867, %c0_868, %c0_869] : memref<7x16x16xf32, #tpu.memory_space<vmem>>, vector<1x16x16xf32>
    %1379 = vector.shape_cast %1378 : vector<1x16x16xf32> to vector<16x16xf32>
    %c6_870 = arith.constant 6 : index
    %c0_871 = arith.constant 0 : index
    %c0_872 = arith.constant 0 : index
    %1380 = vector.load %arg4[%c6_870, %c0_871, %c0_872] : memref<7x16x16xf32, #tpu.memory_space<vmem>>, vector<1x16x16xf32>
    %1381 = vector.shape_cast %1380 : vector<1x16x16xf32> to vector<16x16xf32>
    %c6_873 = arith.constant 6 : index
    %c0_874 = arith.constant 0 : index
    %c0_875 = arith.constant 0 : index
    %1382 = vector.load %arg7[%c6_873, %c0_874, %c0_875] : memref<7x40x40xf32, #tpu.memory_space<vmem>>, vector<1x40x40xf32>
    %1383 = vector.shape_cast %1382 : vector<1x40x40xf32> to vector<40x40xf32>
    %cst_876 = arith.constant dense<0.000000e+00> : vector<16x40xf32>
    %1384 = tpu.matmul %1375, %1383, %cst_876 {dimension_numbers = #tpu.dot_dimension_numbers<[1], [0], [0], [1], [0, 0, 1, 1], [], []>} : vector<16x40xf32>, vector<40x40xf32>, vector<16x40xf32> -> vector<16x40xf32>
    %cst_877 = arith.constant dense<0.000000e+00> : vector<16x40xf32>
    %1385 = tpu.matmul %1377, %1384, %cst_877 {dimension_numbers = #tpu.dot_dimension_numbers<[1], [0], [0], [1], [0, 0, 1, 1], [], []>} : vector<16x16xf32>, vector<16x40xf32>, vector<16x40xf32> -> vector<16x40xf32>
    %c6_878 = arith.constant 6 : index
    %c0_879 = arith.constant 0 : index
    %c0_880 = arith.constant 0 : index
    %1386 = vector.load %arg8[%c6_878, %c0_879, %c0_880] : memref<7x1x40xf32, #tpu.memory_space<vmem>>, vector<1x1x40xf32>
    %1387 = vector.shape_cast %1386 : vector<1x1x40xf32> to vector<1x40xf32>
    %1388 = vector.broadcast %1387 : vector<1x40xf32> to vector<16x40xf32>
    %1389 = arith.addf %1385, %1388 : vector<16x40xf32>
    %1390 = arith.addf %1389, %1375 : vector<16x40xf32>
    %c6_881 = arith.constant 6 : index
    %c0_882 = arith.constant 0 : index
    %c0_883 = arith.constant 0 : index
    %1391 = vector.load %arg14[%c6_881, %c0_882, %c0_883] : memref<7x1x40xf32, #tpu.memory_space<vmem>>, vector<1x1x40xf32>
    %1392 = vector.shape_cast %1391 : vector<1x1x40xf32> to vector<1x40xf32>
    %1393 = vector.broadcast %1392 : vector<1x40xf32> to vector<16x40xf32>
    %1394 = arith.mulf %1390, %1393 : vector<16x40xf32>
    %c6_884 = arith.constant 6 : index
    %c0_885 = arith.constant 0 : index
    %c0_886 = arith.constant 0 : index
    %1395 = vector.load %arg15[%c6_884, %c0_885, %c0_886] : memref<7x1x40xf32, #tpu.memory_space<vmem>>, vector<1x1x40xf32>
    %1396 = vector.shape_cast %1395 : vector<1x1x40xf32> to vector<1x40xf32>
    %1397 = vector.broadcast %1396 : vector<1x40xf32> to vector<16x40xf32>
    %1398 = arith.addf %1394, %1397 : vector<16x40xf32>
    %c6_887 = arith.constant 6 : index
    %c0_888 = arith.constant 0 : index
    %c0_889 = arith.constant 0 : index
    %1399 = vector.load %arg9[%c6_887, %c0_888, %c0_889] : memref<7x40x40xf32, #tpu.memory_space<vmem>>, vector<1x40x40xf32>
    %1400 = vector.shape_cast %1399 : vector<1x40x40xf32> to vector<40x40xf32>
    %cst_890 = arith.constant dense<0.000000e+00> : vector<16x40xf32>
    %1401 = tpu.matmul %1375, %1400, %cst_890 {dimension_numbers = #tpu.dot_dimension_numbers<[1], [0], [0], [1], [0, 0, 1, 1], [], []>} : vector<16x40xf32>, vector<40x40xf32>, vector<16x40xf32> -> vector<16x40xf32>
    %c6_891 = arith.constant 6 : index
    %c0_892 = arith.constant 0 : index
    %c0_893 = arith.constant 0 : index
    %1402 = vector.load %arg10[%c6_891, %c0_892, %c0_893] : memref<7x40x40xf32, #tpu.memory_space<vmem>>, vector<1x40x40xf32>
    %1403 = vector.shape_cast %1402 : vector<1x40x40xf32> to vector<40x40xf32>
    %cst_894 = arith.constant dense<0.000000e+00> : vector<16x40xf32>
    %1404 = tpu.matmul %1375, %1403, %cst_894 {dimension_numbers = #tpu.dot_dimension_numbers<[1], [0], [0], [1], [0, 0, 1, 1], [], []>} : vector<16x40xf32>, vector<40x40xf32>, vector<16x40xf32> -> vector<16x40xf32>
    %c6_895 = arith.constant 6 : index
    %c0_896 = arith.constant 0 : index
    %c0_897 = arith.constant 0 : index
    %1405 = vector.load %arg11[%c6_895, %c0_896, %c0_897] : memref<7x40x40xf32, #tpu.memory_space<vmem>>, vector<1x40x40xf32>
    %1406 = vector.shape_cast %1405 : vector<1x40x40xf32> to vector<40x40xf32>
    %cst_898 = arith.constant dense<0.000000e+00> : vector<16x40xf32>
    %1407 = tpu.matmul %1375, %1406, %cst_898 {dimension_numbers = #tpu.dot_dimension_numbers<[1], [0], [0], [1], [0, 0, 1, 1], [], []>} : vector<16x40xf32>, vector<40x40xf32>, vector<16x40xf32> -> vector<16x40xf32>
    %cst_899 = arith.constant 0.000000e+00 : f32
    %1408 = vector.broadcast %cst_899 : f32 to vector<16x40xf32>
    %1409 = vector.broadcast %7 : vector<1x40xf32> to vector<16x40xf32>
    %1410 = arith.mulf %1401, %1409 : vector<16x40xf32>
    %cst_900 = arith.constant dense<0.000000e+00> : vector<16x16xf32>
    %1411 = tpu.matmul %1410, %1404, %cst_900 {dimension_numbers = #tpu.dot_dimension_numbers<[1], [1], [0], [0], [0, 0, 1, 0], [], []>} : vector<16x40xf32>, vector<16x40xf32>, vector<16x16xf32> -> vector<16x16xf32>
    %cst_901 = arith.constant 0.316227764 : f32
    %1412 = vector.broadcast %cst_901 : f32 to vector<16x16xf32>
    %1413 = arith.mulf %1411, %1412 : vector<16x16xf32>
    %cst_902 = arith.constant dense<0xFF800000> : vector<16xf32>
    %1414 = vector.multi_reduction <maximumf>, %1413, %cst_902 [1] : vector<16x16xf32> to vector<16xf32>
    %1415 = vector.shape_cast %1414 : vector<16xf32> to vector<16x1xf32>
    %1416 = vector.broadcast %1415 : vector<16x1xf32> to vector<16x16xf32>
    %1417 = arith.subf %1413, %1416 : vector<16x16xf32>
    %1418 = math.exp %1417 : vector<16x16xf32>
    %cst_903 = arith.constant dense<0.000000e+00> : vector<16xf32>
    %1419 = vector.multi_reduction <add>, %1418, %cst_903 [1] : vector<16x16xf32> to vector<16xf32>
    %1420 = vector.shape_cast %1419 : vector<16xf32> to vector<16x1xf32>
    %1421 = tpu.reciprocal %1420 {approx = true} : vector<16x1xf32> -> vector<16x1xf32>
    %1422 = vector.broadcast %1421 : vector<16x1xf32> to vector<16x16xf32>
    %1423 = arith.mulf %1418, %1422 : vector<16x16xf32>
    %1424 = vector.broadcast %7 : vector<1x40xf32> to vector<16x40xf32>
    %1425 = arith.mulf %1407, %1424 : vector<16x40xf32>
    %cst_904 = arith.constant dense<0.000000e+00> : vector<16x40xf32>
    %1426 = tpu.matmul %1423, %1425, %cst_904 {dimension_numbers = #tpu.dot_dimension_numbers<[1], [0], [0], [1], [0, 0, 1, 1], [], []>} : vector<16x16xf32>, vector<16x40xf32>, vector<16x40xf32> -> vector<16x40xf32>
    %1427 = arith.addf %1408, %1426 : vector<16x40xf32>
    %1428 = vector.broadcast %14 : vector<1x40xf32> to vector<16x40xf32>
    %1429 = arith.mulf %1401, %1428 : vector<16x40xf32>
    %cst_905 = arith.constant dense<0.000000e+00> : vector<16x16xf32>
    %1430 = tpu.matmul %1429, %1404, %cst_905 {dimension_numbers = #tpu.dot_dimension_numbers<[1], [1], [0], [0], [0, 0, 1, 0], [], []>} : vector<16x40xf32>, vector<16x40xf32>, vector<16x16xf32> -> vector<16x16xf32>
    %cst_906 = arith.constant 0.316227764 : f32
    %1431 = vector.broadcast %cst_906 : f32 to vector<16x16xf32>
    %1432 = arith.mulf %1430, %1431 : vector<16x16xf32>
    %cst_907 = arith.constant dense<0xFF800000> : vector<16xf32>
    %1433 = vector.multi_reduction <maximumf>, %1432, %cst_907 [1] : vector<16x16xf32> to vector<16xf32>
    %1434 = vector.shape_cast %1433 : vector<16xf32> to vector<16x1xf32>
    %1435 = vector.broadcast %1434 : vector<16x1xf32> to vector<16x16xf32>
    %1436 = arith.subf %1432, %1435 : vector<16x16xf32>
    %1437 = math.exp %1436 : vector<16x16xf32>
    %cst_908 = arith.constant dense<0.000000e+00> : vector<16xf32>
    %1438 = vector.multi_reduction <add>, %1437, %cst_908 [1] : vector<16x16xf32> to vector<16xf32>
    %1439 = vector.shape_cast %1438 : vector<16xf32> to vector<16x1xf32>
    %1440 = tpu.reciprocal %1439 {approx = true} : vector<16x1xf32> -> vector<16x1xf32>
    %1441 = vector.broadcast %1440 : vector<16x1xf32> to vector<16x16xf32>
    %1442 = arith.mulf %1437, %1441 : vector<16x16xf32>
    %1443 = vector.broadcast %14 : vector<1x40xf32> to vector<16x40xf32>
    %1444 = arith.mulf %1407, %1443 : vector<16x40xf32>
    %cst_909 = arith.constant dense<0.000000e+00> : vector<16x40xf32>
    %1445 = tpu.matmul %1442, %1444, %cst_909 {dimension_numbers = #tpu.dot_dimension_numbers<[1], [0], [0], [1], [0, 0, 1, 1], [], []>} : vector<16x16xf32>, vector<16x40xf32>, vector<16x40xf32> -> vector<16x40xf32>
    %1446 = arith.addf %1427, %1445 : vector<16x40xf32>
    %1447 = vector.broadcast %21 : vector<1x40xf32> to vector<16x40xf32>
    %1448 = arith.mulf %1401, %1447 : vector<16x40xf32>
    %cst_910 = arith.constant dense<0.000000e+00> : vector<16x16xf32>
    %1449 = tpu.matmul %1448, %1404, %cst_910 {dimension_numbers = #tpu.dot_dimension_numbers<[1], [1], [0], [0], [0, 0, 1, 0], [], []>} : vector<16x40xf32>, vector<16x40xf32>, vector<16x16xf32> -> vector<16x16xf32>
    %cst_911 = arith.constant 0.316227764 : f32
    %1450 = vector.broadcast %cst_911 : f32 to vector<16x16xf32>
    %1451 = arith.mulf %1449, %1450 : vector<16x16xf32>
    %cst_912 = arith.constant dense<0xFF800000> : vector<16xf32>
    %1452 = vector.multi_reduction <maximumf>, %1451, %cst_912 [1] : vector<16x16xf32> to vector<16xf32>
    %1453 = vector.shape_cast %1452 : vector<16xf32> to vector<16x1xf32>
    %1454 = vector.broadcast %1453 : vector<16x1xf32> to vector<16x16xf32>
    %1455 = arith.subf %1451, %1454 : vector<16x16xf32>
    %1456 = math.exp %1455 : vector<16x16xf32>
    %cst_913 = arith.constant dense<0.000000e+00> : vector<16xf32>
    %1457 = vector.multi_reduction <add>, %1456, %cst_913 [1] : vector<16x16xf32> to vector<16xf32>
    %1458 = vector.shape_cast %1457 : vector<16xf32> to vector<16x1xf32>
    %1459 = tpu.reciprocal %1458 {approx = true} : vector<16x1xf32> -> vector<16x1xf32>
    %1460 = vector.broadcast %1459 : vector<16x1xf32> to vector<16x16xf32>
    %1461 = arith.mulf %1456, %1460 : vector<16x16xf32>
    %1462 = vector.broadcast %21 : vector<1x40xf32> to vector<16x40xf32>
    %1463 = arith.mulf %1407, %1462 : vector<16x40xf32>
    %cst_914 = arith.constant dense<0.000000e+00> : vector<16x40xf32>
    %1464 = tpu.matmul %1461, %1463, %cst_914 {dimension_numbers = #tpu.dot_dimension_numbers<[1], [0], [0], [1], [0, 0, 1, 1], [], []>} : vector<16x16xf32>, vector<16x40xf32>, vector<16x40xf32> -> vector<16x40xf32>
    %1465 = arith.addf %1446, %1464 : vector<16x40xf32>
    %1466 = vector.broadcast %28 : vector<1x40xf32> to vector<16x40xf32>
    %1467 = arith.mulf %1401, %1466 : vector<16x40xf32>
    %cst_915 = arith.constant dense<0.000000e+00> : vector<16x16xf32>
    %1468 = tpu.matmul %1467, %1404, %cst_915 {dimension_numbers = #tpu.dot_dimension_numbers<[1], [1], [0], [0], [0, 0, 1, 0], [], []>} : vector<16x40xf32>, vector<16x40xf32>, vector<16x16xf32> -> vector<16x16xf32>
    %cst_916 = arith.constant 0.316227764 : f32
    %1469 = vector.broadcast %cst_916 : f32 to vector<16x16xf32>
    %1470 = arith.mulf %1468, %1469 : vector<16x16xf32>
    %cst_917 = arith.constant dense<0xFF800000> : vector<16xf32>
    %1471 = vector.multi_reduction <maximumf>, %1470, %cst_917 [1] : vector<16x16xf32> to vector<16xf32>
    %1472 = vector.shape_cast %1471 : vector<16xf32> to vector<16x1xf32>
    %1473 = vector.broadcast %1472 : vector<16x1xf32> to vector<16x16xf32>
    %1474 = arith.subf %1470, %1473 : vector<16x16xf32>
    %1475 = math.exp %1474 : vector<16x16xf32>
    %cst_918 = arith.constant dense<0.000000e+00> : vector<16xf32>
    %1476 = vector.multi_reduction <add>, %1475, %cst_918 [1] : vector<16x16xf32> to vector<16xf32>
    %1477 = vector.shape_cast %1476 : vector<16xf32> to vector<16x1xf32>
    %1478 = tpu.reciprocal %1477 {approx = true} : vector<16x1xf32> -> vector<16x1xf32>
    %1479 = vector.broadcast %1478 : vector<16x1xf32> to vector<16x16xf32>
    %1480 = arith.mulf %1475, %1479 : vector<16x16xf32>
    %1481 = vector.broadcast %28 : vector<1x40xf32> to vector<16x40xf32>
    %1482 = arith.mulf %1407, %1481 : vector<16x40xf32>
    %cst_919 = arith.constant dense<0.000000e+00> : vector<16x40xf32>
    %1483 = tpu.matmul %1480, %1482, %cst_919 {dimension_numbers = #tpu.dot_dimension_numbers<[1], [0], [0], [1], [0, 0, 1, 1], [], []>} : vector<16x16xf32>, vector<16x40xf32>, vector<16x40xf32> -> vector<16x40xf32>
    %1484 = arith.addf %1465, %1483 : vector<16x40xf32>
    %c6_920 = arith.constant 6 : index
    %c0_921 = arith.constant 0 : index
    %c0_922 = arith.constant 0 : index
    %1485 = vector.load %arg12[%c6_920, %c0_921, %c0_922] : memref<7x40x40xf32, #tpu.memory_space<vmem>>, vector<1x40x40xf32>
    %1486 = vector.shape_cast %1485 : vector<1x40x40xf32> to vector<40x40xf32>
    %cst_923 = arith.constant dense<0.000000e+00> : vector<16x40xf32>
    %1487 = tpu.matmul %1484, %1486, %cst_923 {dimension_numbers = #tpu.dot_dimension_numbers<[1], [0], [0], [1], [0, 0, 1, 1], [], []>} : vector<16x40xf32>, vector<40x40xf32>, vector<16x40xf32> -> vector<16x40xf32>
    %c6_924 = arith.constant 6 : index
    %c0_925 = arith.constant 0 : index
    %c0_926 = arith.constant 0 : index
    %1488 = vector.load %arg13[%c6_924, %c0_925, %c0_926] : memref<7x1x40xf32, #tpu.memory_space<vmem>>, vector<1x1x40xf32>
    %1489 = vector.shape_cast %1488 : vector<1x1x40xf32> to vector<1x40xf32>
    %1490 = vector.broadcast %1489 : vector<1x40xf32> to vector<16x40xf32>
    %1491 = arith.addf %1487, %1490 : vector<16x40xf32>
    %1492 = arith.addf %1491, %1375 : vector<16x40xf32>
    %c6_927 = arith.constant 6 : index
    %c0_928 = arith.constant 0 : index
    %c0_929 = arith.constant 0 : index
    %1493 = vector.load %arg16[%c6_927, %c0_928, %c0_929] : memref<7x1x40xf32, #tpu.memory_space<vmem>>, vector<1x1x40xf32>
    %1494 = vector.shape_cast %1493 : vector<1x1x40xf32> to vector<1x40xf32>
    %1495 = vector.broadcast %1494 : vector<1x40xf32> to vector<16x40xf32>
    %1496 = arith.mulf %1492, %1495 : vector<16x40xf32>
    %c6_930 = arith.constant 6 : index
    %c0_931 = arith.constant 0 : index
    %c0_932 = arith.constant 0 : index
    %1497 = vector.load %arg17[%c6_930, %c0_931, %c0_932] : memref<7x1x40xf32, #tpu.memory_space<vmem>>, vector<1x1x40xf32>
    %1498 = vector.shape_cast %1497 : vector<1x1x40xf32> to vector<1x40xf32>
    %1499 = vector.broadcast %1498 : vector<1x40xf32> to vector<16x40xf32>
    %1500 = arith.addf %1496, %1499 : vector<16x40xf32>
    %1501 = arith.addf %1398, %1500 : vector<16x40xf32>
    %c6_933 = arith.constant 6 : index
    %c0_934 = arith.constant 0 : index
    %c0_935 = arith.constant 0 : index
    %1502 = vector.load %arg20[%c6_933, %c0_934, %c0_935] : memref<7x40x80xf32, #tpu.memory_space<vmem>>, vector<1x40x80xf32>
    %1503 = vector.shape_cast %1502 : vector<1x40x80xf32> to vector<40x80xf32>
    %cst_936 = arith.constant dense<0.000000e+00> : vector<16x80xf32>
    %1504 = tpu.matmul %1501, %1503, %cst_936 {dimension_numbers = #tpu.dot_dimension_numbers<[1], [0], [0], [1], [0, 0, 1, 1], [], []>} : vector<16x40xf32>, vector<40x80xf32>, vector<16x80xf32> -> vector<16x80xf32>
    %c6_937 = arith.constant 6 : index
    %c0_938 = arith.constant 0 : index
    %c0_939 = arith.constant 0 : index
    %1505 = vector.load %arg21[%c6_937, %c0_938, %c0_939] : memref<7x1x80xf32, #tpu.memory_space<vmem>>, vector<1x1x80xf32>
    %1506 = vector.shape_cast %1505 : vector<1x1x80xf32> to vector<1x80xf32>
    %1507 = vector.broadcast %1506 : vector<1x80xf32> to vector<16x80xf32>
    %1508 = arith.addf %1504, %1507 : vector<16x80xf32>
    %cst_940 = arith.constant 0.000000e+00 : f32
    %1509 = vector.broadcast %cst_940 : f32 to vector<16x80xf32>
    %1510 = arith.maximumf %1508, %1509 : vector<16x80xf32>
    %c6_941 = arith.constant 6 : index
    %c0_942 = arith.constant 0 : index
    %c0_943 = arith.constant 0 : index
    %1511 = vector.load %arg22[%c6_941, %c0_942, %c0_943] : memref<7x80x40xf32, #tpu.memory_space<vmem>>, vector<1x80x40xf32>
    %1512 = vector.shape_cast %1511 : vector<1x80x40xf32> to vector<80x40xf32>
    %cst_944 = arith.constant dense<0.000000e+00> : vector<16x40xf32>
    %1513 = tpu.matmul %1510, %1512, %cst_944 {dimension_numbers = #tpu.dot_dimension_numbers<[1], [0], [0], [1], [0, 0, 1, 1], [], []>} : vector<16x80xf32>, vector<80x40xf32>, vector<16x40xf32> -> vector<16x40xf32>
    %c6_945 = arith.constant 6 : index
    %c0_946 = arith.constant 0 : index
    %c0_947 = arith.constant 0 : index
    %1514 = vector.load %arg23[%c6_945, %c0_946, %c0_947] : memref<7x1x40xf32, #tpu.memory_space<vmem>>, vector<1x1x40xf32>
    %1515 = vector.shape_cast %1514 : vector<1x1x40xf32> to vector<1x40xf32>
    %1516 = vector.broadcast %1515 : vector<1x40xf32> to vector<16x40xf32>
    %1517 = arith.addf %1513, %1516 : vector<16x40xf32>
    %1518 = arith.addf %1501, %1517 : vector<16x40xf32>
    %c6_948 = arith.constant 6 : index
    %c0_949 = arith.constant 0 : index
    %c0_950 = arith.constant 0 : index
    %1519 = vector.load %arg18[%c6_948, %c0_949, %c0_950] : memref<7x1x40xf32, #tpu.memory_space<vmem>>, vector<1x1x40xf32>
    %1520 = vector.shape_cast %1519 : vector<1x1x40xf32> to vector<1x40xf32>
    %1521 = vector.broadcast %1520 : vector<1x40xf32> to vector<16x40xf32>
    %1522 = arith.mulf %1518, %1521 : vector<16x40xf32>
    %c6_951 = arith.constant 6 : index
    %c0_952 = arith.constant 0 : index
    %c0_953 = arith.constant 0 : index
    %1523 = vector.load %arg19[%c6_951, %c0_952, %c0_953] : memref<7x1x40xf32, #tpu.memory_space<vmem>>, vector<1x1x40xf32>
    %1524 = vector.shape_cast %1523 : vector<1x1x40xf32> to vector<1x40xf32>
    %1525 = vector.broadcast %1524 : vector<1x40xf32> to vector<16x40xf32>
    %1526 = arith.addf %1522, %1525 : vector<16x40xf32>
    %c6_954 = arith.constant 6 : index
    %c0_955 = arith.constant 0 : index
    %c0_956 = arith.constant 0 : index
    %1527 = vector.load %arg24[%c6_954, %c0_955, %c0_956] : memref<7x40x32xf32, #tpu.memory_space<vmem>>, vector<1x40x32xf32>
    %1528 = vector.shape_cast %1527 : vector<1x40x32xf32> to vector<40x32xf32>
    %cst_957 = arith.constant dense<0.000000e+00> : vector<16x32xf32>
    %1529 = tpu.matmul %1526, %1528, %cst_957 {dimension_numbers = #tpu.dot_dimension_numbers<[1], [0], [0], [1], [0, 0, 1, 1], [], []>} : vector<16x40xf32>, vector<40x32xf32>, vector<16x32xf32> -> vector<16x32xf32>
    %c6_958 = arith.constant 6 : index
    %c0_959 = arith.constant 0 : index
    %c0_960 = arith.constant 0 : index
    %1530 = vector.load %arg25[%c6_958, %c0_959, %c0_960] : memref<7x1x32xf32, #tpu.memory_space<vmem>>, vector<1x1x32xf32>
    %1531 = vector.shape_cast %1530 : vector<1x1x32xf32> to vector<1x32xf32>
    %1532 = vector.broadcast %1531 : vector<1x32xf32> to vector<16x32xf32>
    %1533 = arith.addf %1529, %1532 : vector<16x32xf32>
    %c6_961 = arith.constant 6 : index
    %c0_962 = arith.constant 0 : index
    %c0_963 = arith.constant 0 : index
    %1534 = vector.load %arg26[%c6_961, %c0_962, %c0_963] : memref<7x32x32xf32, #tpu.memory_space<vmem>>, vector<1x32x32xf32>
    %1535 = vector.shape_cast %1534 : vector<1x32x32xf32> to vector<32x32xf32>
    %cst_964 = arith.constant dense<0.000000e+00> : vector<16x32xf32>
    %1536 = tpu.matmul %1533, %1535, %cst_964 {dimension_numbers = #tpu.dot_dimension_numbers<[1], [0], [0], [1], [0, 0, 1, 1], [], []>} : vector<16x32xf32>, vector<32x32xf32>, vector<16x32xf32> -> vector<16x32xf32>
    %c6_965 = arith.constant 6 : index
    %c0_966 = arith.constant 0 : index
    %c0_967 = arith.constant 0 : index
    %1537 = vector.load %arg28[%c6_965, %c0_966, %c0_967] : memref<7x1x32xf32, #tpu.memory_space<vmem>>, vector<1x1x32xf32>
    %1538 = vector.shape_cast %1537 : vector<1x1x32xf32> to vector<1x32xf32>
    %1539 = vector.broadcast %1538 : vector<1x32xf32> to vector<16x32xf32>
    %1540 = arith.mulf %1536, %1539 : vector<16x32xf32>
    %cst_968 = arith.constant dense<0.000000e+00> : vector<16xf32>
    %1541 = vector.multi_reduction <add>, %1540, %cst_968 [1] : vector<16x32xf32> to vector<16xf32>
    %1542 = vector.shape_cast %1541 : vector<16xf32> to vector<16x1xf32>
    %c6_969 = arith.constant 6 : index
    %c0_970 = arith.constant 0 : index
    %c0_971 = arith.constant 0 : index
    %1543 = vector.load %arg27[%c6_969, %c0_970, %c0_971] : memref<7x1x32xf32, #tpu.memory_space<vmem>>, vector<1x1x32xf32>
    %1544 = vector.shape_cast %1543 : vector<1x1x32xf32> to vector<1x32xf32>
    %cst_972 = arith.constant dense<0.000000e+00> : vector<1x16xf32>
    %1545 = tpu.matmul %1544, %1536, %cst_972 {dimension_numbers = #tpu.dot_dimension_numbers<[1], [1], [0], [0], [0, 0, 1, 0], [], []>} : vector<1x32xf32>, vector<16x32xf32>, vector<1x16xf32> -> vector<1x16xf32>
    %1546 = vector.broadcast %1542 : vector<16x1xf32> to vector<16x16xf32>
    %1547 = vector.broadcast %1545 : vector<1x16xf32> to vector<16x16xf32>
    %1548 = arith.addf %1546, %1547 : vector<16x16xf32>
    %cst_973 = arith.constant 0.000000e+00 : f32
    %1549 = vector.broadcast %cst_973 : f32 to vector<16x16xf32>
    %1550 = arith.cmpf ogt, %1548, %1549 : vector<16x16xf32>
    %cst_974 = arith.constant 2.000000e-01 : f32
    %1551 = vector.broadcast %cst_974 : f32 to vector<16x16xf32>
    %1552 = arith.mulf %1551, %1548 : vector<16x16xf32>
    %1553 = arith.select %1550, %1548, %1552 : vector<16x16xi1>, vector<16x16xf32>
    %cst_975 = arith.constant 0.000000e+00 : f32
    %1554 = vector.broadcast %cst_975 : f32 to vector<16x16xf32>
    %1555 = arith.cmpf ogt, %1381, %1554 : vector<16x16xf32>
    %cst_976 = arith.constant -1.000000e+30 : f32
    %1556 = vector.broadcast %cst_976 : f32 to vector<16x16xf32>
    %1557 = arith.select %1555, %1553, %1556 : vector<16x16xi1>, vector<16x16xf32>
    %cst_977 = arith.constant dense<0xFF800000> : vector<16xf32>
    %1558 = vector.multi_reduction <maximumf>, %1557, %cst_977 [1] : vector<16x16xf32> to vector<16xf32>
    %1559 = vector.shape_cast %1558 : vector<16xf32> to vector<16x1xf32>
    %1560 = vector.broadcast %1559 : vector<16x1xf32> to vector<16x16xf32>
    %1561 = arith.subf %1557, %1560 : vector<16x16xf32>
    %1562 = math.exp %1561 : vector<16x16xf32>
    %cst_978 = arith.constant dense<0.000000e+00> : vector<16xf32>
    %1563 = vector.multi_reduction <add>, %1562, %cst_978 [1] : vector<16x16xf32> to vector<16xf32>
    %1564 = vector.shape_cast %1563 : vector<16xf32> to vector<16x1xf32>
    %1565 = tpu.reciprocal %1564 {approx = true} : vector<16x1xf32> -> vector<16x1xf32>
    %1566 = vector.broadcast %1565 : vector<16x1xf32> to vector<16x16xf32>
    %1567 = arith.mulf %1562, %1566 : vector<16x16xf32>
    %cst_979 = arith.constant dense<0.000000e+00> : vector<16x32xf32>
    %1568 = tpu.matmul %1567, %1536, %cst_979 {dimension_numbers = #tpu.dot_dimension_numbers<[1], [0], [0], [1], [0, 0, 1, 1], [], []>} : vector<16x16xf32>, vector<16x32xf32>, vector<16x32xf32> -> vector<16x32xf32>
    %c6_980 = arith.constant 6 : index
    %c0_981 = arith.constant 0 : index
    %c0_982 = arith.constant 0 : index
    %1569 = vector.load %arg29[%c6_980, %c0_981, %c0_982] : memref<7x1x32xf32, #tpu.memory_space<vmem>>, vector<1x1x32xf32>
    %1570 = vector.shape_cast %1569 : vector<1x1x32xf32> to vector<1x32xf32>
    %1571 = vector.broadcast %1570 : vector<1x32xf32> to vector<16x32xf32>
    %1572 = arith.addf %1568, %1571 : vector<16x32xf32>
    %c6_983 = arith.constant 6 : index
    %c0_984 = arith.constant 0 : index
    %c0_985 = arith.constant 0 : index
    %1573 = vector.load %arg30[%c6_983, %c0_984, %c0_985] : memref<7x32x32xf32, #tpu.memory_space<vmem>>, vector<1x32x32xf32>
    %1574 = vector.shape_cast %1573 : vector<1x32x32xf32> to vector<32x32xf32>
    %cst_986 = arith.constant dense<0.000000e+00> : vector<16x32xf32>
    %1575 = tpu.matmul %1572, %1574, %cst_986 {dimension_numbers = #tpu.dot_dimension_numbers<[1], [0], [0], [1], [0, 0, 1, 1], [], []>} : vector<16x32xf32>, vector<32x32xf32>, vector<16x32xf32> -> vector<16x32xf32>
    %cst_987 = arith.constant dense<0.000000e+00> : vector<16x32xf32>
    %1576 = tpu.matmul %1379, %1575, %cst_987 {dimension_numbers = #tpu.dot_dimension_numbers<[1], [0], [0], [1], [0, 0, 1, 1], [], []>} : vector<16x16xf32>, vector<16x32xf32>, vector<16x32xf32> -> vector<16x32xf32>
    %c6_988 = arith.constant 6 : index
    %c0_989 = arith.constant 0 : index
    %c0_990 = arith.constant 0 : index
    %1577 = vector.load %arg31[%c6_988, %c0_989, %c0_990] : memref<7x1x32xf32, #tpu.memory_space<vmem>>, vector<1x1x32xf32>
    %1578 = vector.shape_cast %1577 : vector<1x1x32xf32> to vector<1x32xf32>
    %1579 = vector.broadcast %1578 : vector<1x32xf32> to vector<16x32xf32>
    %1580 = arith.addf %1576, %1579 : vector<16x32xf32>
    %c6_991 = arith.constant 6 : index
    %c0_992 = arith.constant 0 : index
    %c0_993 = arith.constant 0 : index
    %1581 = vector.load %arg32[%c6_991, %c0_992, %c0_993] : memref<7x32x32xf32, #tpu.memory_space<vmem>>, vector<1x32x32xf32>
    %1582 = vector.shape_cast %1581 : vector<1x32x32xf32> to vector<32x32xf32>
    %cst_994 = arith.constant dense<0.000000e+00> : vector<16x32xf32>
    %1583 = tpu.matmul %1572, %1582, %cst_994 {dimension_numbers = #tpu.dot_dimension_numbers<[1], [0], [0], [1], [0, 0, 1, 1], [], []>} : vector<16x32xf32>, vector<32x32xf32>, vector<16x32xf32> -> vector<16x32xf32>
    %cst_995 = arith.constant dense<0.000000e+00> : vector<16x32xf32>
    %1584 = tpu.matmul %1377, %1583, %cst_995 {dimension_numbers = #tpu.dot_dimension_numbers<[1], [0], [0], [1], [0, 0, 1, 1], [], []>} : vector<16x16xf32>, vector<16x32xf32>, vector<16x32xf32> -> vector<16x32xf32>
    %c6_996 = arith.constant 6 : index
    %c0_997 = arith.constant 0 : index
    %c0_998 = arith.constant 0 : index
    %1585 = vector.load %arg33[%c6_996, %c0_997, %c0_998] : memref<7x1x32xf32, #tpu.memory_space<vmem>>, vector<1x1x32xf32>
    %1586 = vector.shape_cast %1585 : vector<1x1x32xf32> to vector<1x32xf32>
    %1587 = vector.broadcast %1586 : vector<1x32xf32> to vector<16x32xf32>
    %1588 = arith.addf %1584, %1587 : vector<16x32xf32>
    %1589 = arith.addf %1588, %1580 : vector<16x32xf32>
    %c6_999 = arith.constant 6 : index
    %c0_1000 = arith.constant 0 : index
    %c0_1001 = arith.constant 0 : index
    %1590 = vector.load %arg34[%c6_999, %c0_1000, %c0_1001] : memref<7x1x32xf32, #tpu.memory_space<vmem>>, vector<1x1x32xf32>
    %1591 = vector.shape_cast %1590 : vector<1x1x32xf32> to vector<1x32xf32>
    %1592 = vector.broadcast %1591 : vector<1x32xf32> to vector<16x32xf32>
    %1593 = arith.mulf %1589, %1592 : vector<16x32xf32>
    %c6_1002 = arith.constant 6 : index
    %c0_1003 = arith.constant 0 : index
    %c0_1004 = arith.constant 0 : index
    %1594 = vector.load %arg35[%c6_1002, %c0_1003, %c0_1004] : memref<7x1x32xf32, #tpu.memory_space<vmem>>, vector<1x1x32xf32>
    %1595 = vector.shape_cast %1594 : vector<1x1x32xf32> to vector<1x32xf32>
    %1596 = vector.broadcast %1595 : vector<1x32xf32> to vector<16x32xf32>
    %1597 = arith.addf %1593, %1596 : vector<16x32xf32>
    %1598 = tpu.concatenate %29, %253, %477, %701, %925, %1149, %1373, %1597 in 1 : vector<16x32xf32>, vector<16x32xf32>, vector<16x32xf32>, vector<16x32xf32>, vector<16x32xf32>, vector<16x32xf32>, vector<16x32xf32>, vector<16x32xf32> -> vector<16x256xf32>
    %c0_1005 = arith.constant 0 : index
    %c0_1006 = arith.constant 0 : index
    %1599 = vector.load %arg5[%c0_1005, %c0_1006] : memref<8x16xf32, #tpu.memory_space<vmem>>, vector<8x16xf32>
    %cst_1007 = arith.constant dense<0.000000e+00> : vector<8x256xf32>
    %1600 = tpu.matmul %1599, %1598, %cst_1007 {dimension_numbers = #tpu.dot_dimension_numbers<[1], [0], [0], [1], [0, 0, 1, 1], [], []>} : vector<8x16xf32>, vector<16x256xf32>, vector<8x256xf32> -> vector<8x256xf32>
    %c0_1008 = arith.constant 0 : index
    %c0_1009 = arith.constant 0 : index
    %1601 = vector.load %arg6[%c0_1008, %c0_1009] : memref<8x16xf32, #tpu.memory_space<vmem>>, vector<8x16xf32>
    %cst_1010 = arith.constant dense<0.000000e+00> : vector<8x256xf32>
    %1602 = tpu.matmul %1601, %1598, %cst_1010 {dimension_numbers = #tpu.dot_dimension_numbers<[1], [0], [0], [1], [0, 0, 1, 1], [], []>} : vector<8x16xf32>, vector<16x256xf32>, vector<8x256xf32> -> vector<8x256xf32>
    %1603 = arith.mulf %1600, %1602 : vector<8x256xf32>
    %c0_1011 = arith.constant 0 : index
    %c0_1012 = arith.constant 0 : index
    %1604 = vector.load %arg36[%c0_1011, %c0_1012] : memref<256x128xf32, #tpu.memory_space<vmem>>, vector<256x128xf32>
    %cst_1013 = arith.constant dense<0.000000e+00> : vector<8x128xf32>
    %1605 = tpu.matmul %1603, %1604, %cst_1013 {dimension_numbers = #tpu.dot_dimension_numbers<[1], [0], [0], [1], [0, 0, 1, 1], [], []>} : vector<8x256xf32>, vector<256x128xf32>, vector<8x128xf32> -> vector<8x128xf32>
    %c0_1014 = arith.constant 0 : index
    %c0_1015 = arith.constant 0 : index
    %1606 = vector.load %arg37[%c0_1014, %c0_1015] : memref<1x128xf32, #tpu.memory_space<vmem>>, vector<1x128xf32>
    %1607 = vector.broadcast %1606 : vector<1x128xf32> to vector<8x128xf32>
    %1608 = arith.addf %1605, %1607 : vector<8x128xf32>
    %c0_1016 = arith.constant 0 : index
    %c0_1017 = arith.constant 0 : index
    %1609 = vector.load %arg38[%c0_1016, %c0_1017] : memref<128x64xf32, #tpu.memory_space<vmem>>, vector<128x64xf32>
    %cst_1018 = arith.constant dense<0.000000e+00> : vector<8x64xf32>
    %1610 = tpu.matmul %1608, %1609, %cst_1018 {dimension_numbers = #tpu.dot_dimension_numbers<[1], [0], [0], [1], [0, 0, 1, 1], [], []>} : vector<8x128xf32>, vector<128x64xf32>, vector<8x64xf32> -> vector<8x64xf32>
    %c0_1019 = arith.constant 0 : index
    %c0_1020 = arith.constant 0 : index
    %1611 = vector.load %arg39[%c0_1019, %c0_1020] : memref<1x64xf32, #tpu.memory_space<vmem>>, vector<1x64xf32>
    %1612 = vector.broadcast %1611 : vector<1x64xf32> to vector<8x64xf32>
    %1613 = arith.addf %1610, %1612 : vector<8x64xf32>
    %c0_1021 = arith.constant 0 : index
    %c0_1022 = arith.constant 0 : index
    %1614 = vector.load %arg40[%c0_1021, %c0_1022] : memref<64x32xf32, #tpu.memory_space<vmem>>, vector<64x32xf32>
    %cst_1023 = arith.constant dense<0.000000e+00> : vector<8x32xf32>
    %1615 = tpu.matmul %1613, %1614, %cst_1023 {dimension_numbers = #tpu.dot_dimension_numbers<[1], [0], [0], [1], [0, 0, 1, 1], [], []>} : vector<8x64xf32>, vector<64x32xf32>, vector<8x32xf32> -> vector<8x32xf32>
    %c0_1024 = arith.constant 0 : index
    %c0_1025 = arith.constant 0 : index
    %1616 = vector.load %arg41[%c0_1024, %c0_1025] : memref<1x32xf32, #tpu.memory_space<vmem>>, vector<1x32xf32>
    %1617 = vector.broadcast %1616 : vector<1x32xf32> to vector<8x32xf32>
    %1618 = arith.addf %1615, %1617 : vector<8x32xf32>
    %c0_1026 = arith.constant 0 : index
    %c0_1027 = arith.constant 0 : index
    %1619 = vector.load %arg42[%c0_1026, %c0_1027] : memref<32x16xf32, #tpu.memory_space<vmem>>, vector<32x16xf32>
    %cst_1028 = arith.constant dense<0.000000e+00> : vector<8x16xf32>
    %1620 = tpu.matmul %1618, %1619, %cst_1028 {dimension_numbers = #tpu.dot_dimension_numbers<[1], [0], [0], [1], [0, 0, 1, 1], [], []>} : vector<8x32xf32>, vector<32x16xf32>, vector<8x16xf32> -> vector<8x16xf32>
    %c0_1029 = arith.constant 0 : index
    %c0_1030 = arith.constant 0 : index
    %1621 = vector.load %arg43[%c0_1029, %c0_1030] : memref<1x16xf32, #tpu.memory_space<vmem>>, vector<1x16xf32>
    %1622 = vector.broadcast %1621 : vector<1x16xf32> to vector<8x16xf32>
    %1623 = arith.addf %1620, %1622 : vector<8x16xf32>
    %c0_1031 = arith.constant 0 : index
    %c0_1032 = arith.constant 0 : index
    %1624 = vector.load %arg44[%c0_1031, %c0_1032] : memref<16x8xf32, #tpu.memory_space<vmem>>, vector<16x8xf32>
    %cst_1033 = arith.constant dense<0.000000e+00> : vector<8x8xf32>
    %1625 = tpu.matmul %1623, %1624, %cst_1033 {dimension_numbers = #tpu.dot_dimension_numbers<[1], [0], [0], [1], [0, 0, 1, 1], [], []>} : vector<8x16xf32>, vector<16x8xf32>, vector<8x8xf32> -> vector<8x8xf32>
    %c0_1034 = arith.constant 0 : index
    %c0_1035 = arith.constant 0 : index
    %1626 = vector.load %arg45[%c0_1034, %c0_1035] : memref<1x8xf32, #tpu.memory_space<vmem>>, vector<1x8xf32>
    %1627 = vector.broadcast %1626 : vector<1x8xf32> to vector<8x8xf32>
    %1628 = arith.addf %1625, %1627 : vector<8x8xf32>
    %c0_1036 = arith.constant 0 : index
    %c0_1037 = arith.constant 0 : index
    %1629 = vector.load %arg46[%c0_1036, %c0_1037] : memref<8x7xf32, #tpu.memory_space<vmem>>, vector<8x7xf32>
    %cst_1038 = arith.constant dense<0.000000e+00> : vector<8x7xf32>
    %1630 = tpu.matmul %1628, %1629, %cst_1038 {dimension_numbers = #tpu.dot_dimension_numbers<[1], [0], [0], [1], [0, 0, 1, 1], [], []>} : vector<8x8xf32>, vector<8x7xf32>, vector<8x7xf32> -> vector<8x7xf32>
    %c0_1039 = arith.constant 0 : index
    %c0_1040 = arith.constant 0 : index
    %1631 = vector.load %arg47[%c0_1039, %c0_1040] : memref<1x7xf32, #tpu.memory_space<vmem>>, vector<1x7xf32>
    %1632 = vector.broadcast %1631 : vector<1x7xf32> to vector<8x7xf32>
    %1633 = arith.addf %1630, %1632 : vector<8x7xf32>
    %c0_1041 = arith.constant 0 : index
    %c0_1042 = arith.constant 0 : index
    %1634 = vector.load %arg48[%c0_1041, %c0_1042] : memref<8x7xf32, #tpu.memory_space<vmem>>, vector<8x7xf32>
    tpu.vector_store %arg48[%c0_1041, %c0_1042], %1633 {strides = array<i32>} : memref<8x7xf32, #tpu.memory_space<vmem>>, vector<8x7xf32>,
    return
  }
}

</mosaic_0001>

<llo_original>
// kernel: mesm_forward.1
$region0: #{mesm_forward.1}
  #allocation0 [shape = 'u32[]', space=smem, size = 0x4, offset = 0x4, fixed_abs, tag = 'smem constant byte address 0x4 - core index']
  #allocation1 [shape = 'u32[72,128]{1,0:T(1,128)}', space=vmem, size = 0x9000, scoped, tag = 'internal scratch']
  %s0 = inlined_call_operand.smem [shape: u32[49], index: -1, kind: input, shape index: {}]
  %s1 = sld [smem:[%s0]]
  %s2 = scalar_lea.smem %s0, 1
  %s3 = sld [smem:[%s2]]
  %s4 = scalar_lea.smem %s0, 2
  %s5 = sld [smem:[%s4]]
  %s6 = scalar_lea.smem %s0, 3
  %s7 = sld [smem:[%s6]]
  %s8 = scalar_lea.smem %s0, 4
  %s9 = sld [smem:[%s8]]
  %s10 = scalar_lea.smem %s0, 5
  %s11 = sld [smem:[%s10]]
  %s12 = scalar_lea.smem %s0, 6
  %s13 = sld [smem:[%s12]]
  %s14 = scalar_lea.smem %s0, 7
  %s15 = sld [smem:[%s14]]
  %s16 = scalar_lea.smem %s0, 8
  %s17 = sld [smem:[%s16]]
  %s18 = scalar_lea.smem %s0, 9
  %s19 = sld [smem:[%s18]]
  %s20 = scalar_lea.smem %s0, 10
  %s21 = sld [smem:[%s20]]
  %s22 = scalar_lea.smem %s0, 11
  %s23 = sld [smem:[%s22]]
  %s24 = scalar_lea.smem %s0, 12
  %s25 = sld [smem:[%s24]]
  %s26 = scalar_lea.smem %s0, 13
  %s27 = sld [smem:[%s26]]
  %s28 = scalar_lea.smem %s0, 14
  %s29 = sld [smem:[%s28]]
  %s30 = scalar_lea.smem %s0, 15
  %s31 = sld [smem:[%s30]]
  %s32 = scalar_lea.smem %s0, 16
  %s33 = sld [smem:[%s32]]
  %s34 = scalar_lea.smem %s0, 17
  %s35 = sld [smem:[%s34]]
  %s36 = scalar_lea.smem %s0, 18
  %s37 = sld [smem:[%s36]]
  %s38 = scalar_lea.smem %s0, 19
  %s39 = sld [smem:[%s38]]
  %s40 = scalar_lea.smem %s0, 20
  %s41 = sld [smem:[%s40]]
  %s42 = scalar_lea.smem %s0, 21
  %s43 = sld [smem:[%s42]]
  %s44 = scalar_lea.smem %s0, 22
  %s45 = sld [smem:[%s44]]
  %s46 = scalar_lea.smem %s0, 23
  %s47 = sld [smem:[%s46]]
  %s48 = scalar_lea.smem %s0, 24
  %s49 = sld [smem:[%s48]]
  %s50 = scalar_lea.smem %s0, 25
  %s51 = sld [smem:[%s50]]
  %s52 = scalar_lea.smem %s0, 26
  %s53 = sld [smem:[%s52]]
  %s54 = scalar_lea.smem %s0, 27
  %s55 = sld [smem:[%s54]]
  %s56 = scalar_lea.smem %s0, 28
  %s57 = sld [smem:[%s56]]
  %s58 = scalar_lea.smem %s0, 29
  %s59 = sld [smem:[%s58]]
  %s60 = scalar_lea.smem %s0, 30
  %s61 = sld [smem:[%s60]]
  %s62 = scalar_lea.smem %s0, 31
  %s63 = sld [smem:[%s62]]
  %s64 = scalar_lea.smem %s0, 32
  %s65 = sld [smem:[%s64]]
  %s66 = scalar_lea.smem %s0, 33
  %s67 = sld [smem:[%s66]]
  %s68 = scalar_lea.smem %s0, 34
  %s69 = sld [smem:[%s68]]
  %s70 = scalar_lea.smem %s0, 35
  %s71 = sld [smem:[%s70]]
  %s72 = scalar_lea.smem %s0, 36
  %s73 = sld [smem:[%s72]]
  %s74 = scalar_lea.smem %s0, 37
  %s75 = sld [smem:[%s74]]
  %s76 = scalar_lea.smem %s0, 38
  %s77 = sld [smem:[%s76]]
  %s78 = scalar_lea.smem %s0, 39
  %s79 = sld [smem:[%s78]]
  %s80 = scalar_lea.smem %s0, 40
  %s81 = sld [smem:[%s80]]
  %s82 = scalar_lea.smem %s0, 41
  %s83 = sld [smem:[%s82]]
  %s84 = scalar_lea.smem %s0, 42
  %s85 = sld [smem:[%s84]]
  %s86 = scalar_lea.smem %s0, 43
  %s87 = sld [smem:[%s86]]
  %s88 = scalar_lea.smem %s0, 44
  %s89 = sld [smem:[%s88]]
  %s90 = scalar_lea.smem %s0, 45
  %s91 = sld [smem:[%s90]]
  %s92 = scalar_lea.smem %s0, 46
  %s93 = sld [smem:[%s92]]
  %s94 = scalar_lea.smem %s0, 47
  %s95 = sld [smem:[%s94]]
  %s96 = scalar_lea.smem %s0, 48
  %s97 = sld [smem:[%s96]]
  %s98 = sld [smem:[#allocation0]]
  $region230: #{mesm_forward.1} parent=0
    _
  %s100 = ssub.s32 1, %s98
  %s101 = scalar_select 0, %s100, %s98
  $region1: #{mesm_forward.1} parent=0
    #allocation2 [shape = 'u8[57344]{0}', space=vmem, size = 0xe000, scoped, tag = 'input window, operand 3, single buffered']
    #allocation3 [shape = 's32[1]{0}', space=sflag, size = 0x4, scoped, tag = 'scoped memory for mesm_forward.1']
    #allocation4 [shape = 's32[1]{0}', space=sflag, size = 0x4, scoped, tag = 'scoped memory for mesm_forward.1']
    #allocation5 [shape = 'u8[57344]{0}', space=vmem, size = 0xe000, scoped, tag = 'input window, operand 4, single buffered']
    #allocation6 [shape = 's32[1]{0}', space=sflag, size = 0x4, scoped, tag = 'scoped memory for mesm_forward.1']
    #allocation7 [shape = 'u8[143360]{0}', space=vmem, size = 0x23000, scoped, tag = 'input window, operand 20, single buffered']
    #allocation8 [shape = 'u8[114688]{0}', space=vmem, size = 0x1c000, scoped, tag = 'input window, operand 26, single buffered']
    #allocation9 [shape = 's32[1]{0}', space=sflag, size = 0x4, scoped, tag = 'scoped memory for mesm_forward.1']
    #allocation10 [shape = 'u8[114688]{0}', space=vmem, size = 0x1c000, scoped, tag = 'input window, operand 30, single buffered']
    #allocation11 [shape = 'u8[114688]{0}', space=vmem, size = 0x1c000, scoped, tag = 'input window, operand 32, single buffered']
    #allocation12 [shape = 's32[1]{0}', space=sflag, size = 0x4, scoped, tag = 'scoped memory for mesm_forward.1']
    #allocation13 [shape = 'u8[131072]{0}', space=vmem, size = 0x20000, scoped, tag = 'input window, operand 36, single buffered']
    #allocation14 [shape = 'u8[4096]{0}', space=vmem, size = 0x1000, scoped, tag = 'output window, operand 0, single buffered']
    %102 = vsyncpa [#allocation3], 0
    %103 = vsyncpa [#allocation6], 0
    %104 = vsyncpa [#allocation9], 0
    %105 = vsyncpa [#allocation12], 0
    %106 = vsyncpa [#allocation4], 0
    // Predicated region
    $region2: #{mesm_forward.1} parent=1 // pred_check
      _
    $region3: #{mesm_forward.1} parent=1 // pred_check_branch
      %108 = sbr.rel (0) target = $region5
    $region4: #{mesm_forward.1} parent=1 // pred_region
      _
    $region5: #{mesm_forward.1} parent=1 // pred_fallthru
      _
    // Predicated region
    $region6: #{mesm_forward.1} parent=1 // pred_check
      _
    $region7: #{mesm_forward.1} parent=1 // pred_check_branch
      %110 = sbr.rel (0) target = $region9
    $region8: #{mesm_forward.1} parent=1 // pred_region
      _
    $region9: #{mesm_forward.1} parent=1 // pred_fallthru
      _
    // Predicated region
    $region10: #{mesm_forward.1} parent=1 // pred_check
      _
    $region11: #{mesm_forward.1} parent=1 // pred_check_branch
      %112 = sbr.rel (0) target = $region13
    $region12: #{mesm_forward.1} parent=1 // pred_region
      _
    $region13: #{mesm_forward.1} parent=1 // pred_fallthru
      _
    // Predicated region
    $region14: #{mesm_forward.1} parent=1 // pred_check
      _
    $region15: #{mesm_forward.1} parent=1 // pred_check_branch
      %114 = sbr.rel (0) target = $region17
    $region16: #{mesm_forward.1} parent=1 // pred_region
      %116 = vsyncadd [#allocation3], 0
      %s117 = sshll.u32 %s7, 4
      %s118 = int_to_ptr.hbm [resolvable:$true] %s117
      %s119 = sshll.u32 [#allocation2], 4
      %s120 = int_to_ptr.vmem [resolvable:$true] %s119
      %125 = dma.hbm_to_vmem [thread:$0]  %s118, 1792, %s120, [#allocation3], 128, 128, 8
    $region17: #{mesm_forward.1} parent=1 // pred_fallthru
      _
    // Predicated region
    $region18: #{mesm_forward.1} parent=1 // pred_check
      _
    $region19: #{mesm_forward.1} parent=1 // pred_check_branch
      %127 = sbr.rel (0) target = $region21
    $region20: #{mesm_forward.1} parent=1 // pred_region
      %129 = vsyncadd [#allocation6], 0
      %s130 = sshll.u32 %s9, 4
      %s131 = int_to_ptr.hbm [resolvable:$true] %s130
      %s132 = sshll.u32 [#allocation5], 4
      %s133 = int_to_ptr.vmem [resolvable:$true] %s132
      %138 = dma.hbm_to_vmem [thread:$0]  %s131, 1792, %s133, [#allocation6], 128, 128, 8
    $region21: #{mesm_forward.1} parent=1 // pred_fallthru
      _
    // Predicated region
    $region22: #{mesm_forward.1} parent=1 // pred_check
      _
    $region23: #{mesm_forward.1} parent=1 // pred_check_branch
      %140 = sbr.rel (0) target = $region25
    $region24: #{mesm_forward.1} parent=1 // pred_region
      _
    $region25: #{mesm_forward.1} parent=1 // pred_fallthru
      _
    // Predicated region
    $region26: #{mesm_forward.1} parent=1 // pred_check
      _
    $region27: #{mesm_forward.1} parent=1 // pred_check_branch
      %142 = sbr.rel (0) target = $region29
    $region28: #{mesm_forward.1} parent=1 // pred_region
      _
    $region29: #{mesm_forward.1} parent=1 // pred_fallthru
      _
    // Predicated region
    $region30: #{mesm_forward.1} parent=1 // pred_check
      _
    $region31: #{mesm_forward.1} parent=1 // pred_check_branch
      %144 = sbr.rel (0) target = $region33
    $region32: #{mesm_forward.1} parent=1 // pred_region
      _
    $region33: #{mesm_forward.1} parent=1 // pred_fallthru
      _
    // Predicated region
    $region34: #{mesm_forward.1} parent=1 // pred_check
      _
    $region35: #{mesm_forward.1} parent=1 // pred_check_branch
      %146 = sbr.rel (0) target = $region37
    $region36: #{mesm_forward.1} parent=1 // pred_region
      _
    $region37: #{mesm_forward.1} parent=1 // pred_fallthru
      _
    // Predicated region
    $region38: #{mesm_forward.1} parent=1 // pred_check
      _
    $region39: #{mesm_forward.1} parent=1 // pred_check_branch
      %148 = sbr.rel (0) target = $region41
    $region40: #{mesm_forward.1} parent=1 // pred_region
      _
    $region41: #{mesm_forward.1} parent=1 // pred_fallthru
      _
    // Predicated region
    $region42: #{mesm_forward.1} parent=1 // pred_check
      _
    $region43: #{mesm_forward.1} parent=1 // pred_check_branch
      %150 = sbr.rel (0) target = $region45
    $region44: #{mesm_forward.1} parent=1 // pred_region
      _
    $region45: #{mesm_forward.1} parent=1 // pred_fallthru
      _
    // Predicated region
    $region46: #{mesm_forward.1} parent=1 // pred_check
      _
    $region47: #{mesm_forward.1} parent=1 // pred_check_branch
      %152 = sbr.rel (0) target = $region49
    $region48: #{mesm_forward.1} parent=1 // pred_region
      _
    $region49: #{mesm_forward.1} parent=1 // pred_fallthru
      _
    // Predicated region
    $region50: #{mesm_forward.1} parent=1 // pred_check
      _
    $region51: #{mesm_forward.1} parent=1 // pred_check_branch
      %154 = sbr.rel (0) target = $region53
    $region52: #{mesm_forward.1} parent=1 // pred_region
      _
    $region53: #{mesm_forward.1} parent=1 // pred_fallthru
      _
    // Predicated region
    $region54: #{mesm_forward.1} parent=1 // pred_check
      _
    $region55: #{mesm_forward.1} parent=1 // pred_check_branch
      %156 = sbr.rel (0) target = $region57
    $region56: #{mesm_forward.1} parent=1 // pred_region
      _
    $region57: #{mesm_forward.1} parent=1 // pred_fallthru
      _
    // Predicated region
    $region58: #{mesm_forward.1} parent=1 // pred_check
      _
    $region59: #{mesm_forward.1} parent=1 // pred_check_branch
      %158 = sbr.rel (0) target = $region61
    $region60: #{mesm_forward.1} parent=1 // pred_region
      _
    $region61: #{mesm_forward.1} parent=1 // pred_fallthru
      _
    // Predicated region
    $region62: #{mesm_forward.1} parent=1 // pred_check
      _
    $region63: #{mesm_forward.1} parent=1 // pred_check_branch
      %160 = sbr.rel (0) target = $region65
    $region64: #{mesm_forward.1} parent=1 // pred_region
      _
    $region65: #{mesm_forward.1} parent=1 // pred_fallthru
      _
    // Predicated region
    $region66: #{mesm_forward.1} parent=1 // pred_check
      _
    $region67: #{mesm_forward.1} parent=1 // pred_check_branch
      %162 = sbr.rel (0) target = $region69
    $region68: #{mesm_forward.1} parent=1 // pred_region
      _
    $region69: #{mesm_forward.1} parent=1 // pred_fallthru
      _
    // Predicated region
    $region70: #{mesm_forward.1} parent=1 // pred_check
      _
    $region71: #{mesm_forward.1} parent=1 // pred_check_branch
      %164 = sbr.rel (0) target = $region73
    $region72: #{mesm_forward.1} parent=1 // pred_region
      _
    $region73: #{mesm_forward.1} parent=1 // pred_fallthru
      _
    // Predicated region
    $region74: #{mesm_forward.1} parent=1 // pred_check
      _
    $region75: #{mesm_forward.1} parent=1 // pred_check_branch
      %166 = sbr.rel (0) target = $region77
    $region76: #{mesm_forward.1} parent=1 // pred_region
      _
    $region77: #{mesm_forward.1} parent=1 // pred_fallthru
      _
    // Predicated region
    $region78: #{mesm_forward.1} parent=1 // pred_check
      _
    $region79: #{mesm_forward.1} parent=1 // pred_check_branch
      %168 = sbr.rel (0) target = $region81
    $region80: #{mesm_forward.1} parent=1 // pred_region
      _
    $region81: #{mesm_forward.1} parent=1 // pred_fallthru
      _
    // Predicated region
    $region82: #{mesm_forward.1} parent=1 // pred_check
      _
    $region83: #{mesm_forward.1} parent=1 // pred_check_branch
      %170 = sbr.rel (0) target = $region85
    $region84: #{mesm_forward.1} parent=1 // pred_region
      %172 = vsyncadd [#allocation6], 0
      %s173 = sshll.u32 %s41, 4
      %s174 = int_to_ptr.hbm [resolvable:$true] %s173
      %s175 = sshll.u32 [#allocation7], 4
      %s176 = int_to_ptr.vmem [resolvable:$true] %s175
      %181 = dma.hbm_to_vmem [thread:$0]  %s174, 4480, %s176, [#allocation6], 128, 128, 8
    $region85: #{mesm_forward.1} parent=1 // pred_fallthru
      _
    // Predicated region
    $region86: #{mesm_forward.1} parent=1 // pred_check
      _
    $region87: #{mesm_forward.1} parent=1 // pred_check_branch
      %183 = sbr.rel (0) target = $region89
    $region88: #{mesm_forward.1} parent=1 // pred_region
      _
    $region89: #{mesm_forward.1} parent=1 // pred_fallthru
      _
    // Predicated region
    $region90: #{mesm_forward.1} parent=1 // pred_check
      _
    $region91: #{mesm_forward.1} parent=1 // pred_check_branch
      %185 = sbr.rel (0) target = $region93
    $region92: #{mesm_forward.1} parent=1 // pred_region
      _
    $region93: #{mesm_forward.1} parent=1 // pred_fallthru
      _
    // Predicated region
    $region94: #{mesm_forward.1} parent=1 // pred_check
      _
    $region95: #{mesm_forward.1} parent=1 // pred_check_branch
      %187 = sbr.rel (0) target = $region97
    $region96: #{mesm_forward.1} parent=1 // pred_region
      _
    $region97: #{mesm_forward.1} parent=1 // pred_fallthru
      _
    // Predicated region
    $region98: #{mesm_forward.1} parent=1 // pred_check
      _
    $region99: #{mesm_forward.1} parent=1 // pred_check_branch
      %189 = sbr.rel (0) target = $region101
    $region100: #{mesm_forward.1} parent=1 // pred_region
      _
    $region101: #{mesm_forward.1} parent=1 // pred_fallthru
      _
    // Predicated region
    $region102: #{mesm_forward.1} parent=1 // pred_check
      _
    $region103: #{mesm_forward.1} parent=1 // pred_check_branch
      %191 = sbr.rel (0) target = $region105
    $region104: #{mesm_forward.1} parent=1 // pred_region
      _
    $region105: #{mesm_forward.1} parent=1 // pred_fallthru
      _
    // Predicated region
    $region106: #{mesm_forward.1} parent=1 // pred_check
      _
    $region107: #{mesm_forward.1} parent=1 // pred_check_branch
      %193 = sbr.rel (0) target = $region109
    $region108: #{mesm_forward.1} parent=1 // pred_region
      %195 = vsyncadd [#allocation9], 0
      %s196 = sshll.u32 %s53, 4
      %s197 = int_to_ptr.hbm [resolvable:$true] %s196
      %s198 = sshll.u32 [#allocation8], 4
      %s199 = int_to_ptr.vmem [resolvable:$true] %s198
      %204 = dma.hbm_to_vmem [thread:$0]  %s197, 3584, %s199, [#allocation9], 128, 128, 8
    $region109: #{mesm_forward.1} parent=1 // pred_fallthru
      _
    // Predicated region
    $region110: #{mesm_forward.1} parent=1 // pred_check
      _
    $region111: #{mesm_forward.1} parent=1 // pred_check_branch
      %206 = sbr.rel (0) target = $region113
    $region112: #{mesm_forward.1} parent=1 // pred_region
      _
    $region113: #{mesm_forward.1} parent=1 // pred_fallthru
      _
    // Predicated region
    $region114: #{mesm_forward.1} parent=1 // pred_check
      _
    $region115: #{mesm_forward.1} parent=1 // pred_check_branch
      %208 = sbr.rel (0) target = $region117
    $region116: #{mesm_forward.1} parent=1 // pred_region
      _
    $region117: #{mesm_forward.1} parent=1 // pred_fallthru
      _
    // Predicated region
    $region118: #{mesm_forward.1} parent=1 // pred_check
      _
    $region119: #{mesm_forward.1} parent=1 // pred_check_branch
      %210 = sbr.rel (0) target = $region121
    $region120: #{mesm_forward.1} parent=1 // pred_region
      _
    $region121: #{mesm_forward.1} parent=1 // pred_fallthru
      _
    // Predicated region
    $region122: #{mesm_forward.1} parent=1 // pred_check
      _
    $region123: #{mesm_forward.1} parent=1 // pred_check_branch
      %212 = sbr.rel (0) target = $region125
    $region124: #{mesm_forward.1} parent=1 // pred_region
      %214 = vsyncadd [#allocation9], 0
      %s215 = sshll.u32 %s61, 4
      %s216 = int_to_ptr.hbm [resolvable:$true] %s215
      %s217 = sshll.u32 [#allocation10], 4
      %s218 = int_to_ptr.vmem [resolvable:$true] %s217
      %223 = dma.hbm_to_vmem [thread:$0]  %s216, 3584, %s218, [#allocation9], 128, 128, 8
    $region125: #{mesm_forward.1} parent=1 // pred_fallthru
      _
    // Predicated region
    $region126: #{mesm_forward.1} parent=1 // pred_check
      _
    $region127: #{mesm_forward.1} parent=1 // pred_check_branch
      %225 = sbr.rel (0) target = $region129
    $region128: #{mesm_forward.1} parent=1 // pred_region
      _
    $region129: #{mesm_forward.1} parent=1 // pred_fallthru
      _
    // Predicated region
    $region130: #{mesm_forward.1} parent=1 // pred_check
      _
    $region131: #{mesm_forward.1} parent=1 // pred_check_branch
      %227 = sbr.rel (0) target = $region133
    $region132: #{mesm_forward.1} parent=1 // pred_region
      %229 = vsyncadd [#allocation12], 0
      %s230 = sshll.u32 %s65, 4
      %s231 = int_to_ptr.hbm [resolvable:$true] %s230
      %s232 = sshll.u32 [#allocation11], 4
      %s233 = int_to_ptr.vmem [resolvable:$true] %s232
      %238 = dma.hbm_to_vmem [thread:$0]  %s231, 3584, %s233, [#allocation12], 128, 128, 8
    $region133: #{mesm_forward.1} parent=1 // pred_fallthru
      _
    // Predicated region
    $region134: #{mesm_forward.1} parent=1 // pred_check
      _
    $region135: #{mesm_forward.1} parent=1 // pred_check_branch
      %240 = sbr.rel (0) target = $region137
    $region136: #{mesm_forward.1} parent=1 // pred_region
      _
    $region137: #{mesm_forward.1} parent=1 // pred_fallthru
      _
    // Predicated region
    $region138: #{mesm_forward.1} parent=1 // pred_check
      _
    $region139: #{mesm_forward.1} parent=1 // pred_check_branch
      %242 = sbr.rel (0) target = $region141
    $region140: #{mesm_forward.1} parent=1 // pred_region
      _
    $region141: #{mesm_forward.1} parent=1 // pred_fallthru
      _
    // Predicated region
    $region142: #{mesm_forward.1} parent=1 // pred_check
      _
    $region143: #{mesm_forward.1} parent=1 // pred_check_branch
      %244 = sbr.rel (0) target = $region145
    $region144: #{mesm_forward.1} parent=1 // pred_region
      _
    $region145: #{mesm_forward.1} parent=1 // pred_fallthru
      _
    // Predicated region
    $region146: #{mesm_forward.1} parent=1 // pred_check
      _
    $region147: #{mesm_forward.1} parent=1 // pred_check_branch
      %246 = sbr.rel (0) target = $region149
    $region148: #{mesm_forward.1} parent=1 // pred_region
      %248 = vsyncadd [#allocation12], 0
      %s249 = sshll.u32 %s73, 4
      %s250 = int_to_ptr.hbm [resolvable:$true] %s249
      %s251 = sshll.u32 [#allocation13], 4
      %s252 = int_to_ptr.vmem [resolvable:$true] %s251
      %257 = dma.hbm_to_vmem [thread:$0]  %s250, 4096, %s252, [#allocation12], 128, 128, 8
    $region149: #{mesm_forward.1} parent=1 // pred_fallthru
      _
    // Predicated region
    $region150: #{mesm_forward.1} parent=1 // pred_check
      _
    $region151: #{mesm_forward.1} parent=1 // pred_check_branch
      %259 = sbr.rel (0) target = $region153
    $region152: #{mesm_forward.1} parent=1 // pred_region
      _
    $region153: #{mesm_forward.1} parent=1 // pred_fallthru
      _
    // Predicated region
    $region154: #{mesm_forward.1} parent=1 // pred_check
      _
    $region155: #{mesm_forward.1} parent=1 // pred_check_branch
      %261 = sbr.rel (0) target = $region157
    $region156: #{mesm_forward.1} parent=1 // pred_region
      _
    $region157: #{mesm_forward.1} parent=1 // pred_fallthru
      _
    // Predicated region
    $region158: #{mesm_forward.1} parent=1 // pred_check
      _
    $region159: #{mesm_forward.1} parent=1 // pred_check_branch
      %263 = sbr.rel (0) target = $region161
    $region160: #{mesm_forward.1} parent=1 // pred_region
      _
    $region161: #{mesm_forward.1} parent=1 // pred_fallthru
      _
    // Predicated region
    $region162: #{mesm_forward.1} parent=1 // pred_check
      _
    $region163: #{mesm_forward.1} parent=1 // pred_check_branch
      %265 = sbr.rel (0) target = $region165
    $region164: #{mesm_forward.1} parent=1 // pred_region
      _
    $region165: #{mesm_forward.1} parent=1 // pred_fallthru
      _
    // Predicated region
    $region166: #{mesm_forward.1} parent=1 // pred_check
      _
    $region167: #{mesm_forward.1} parent=1 // pred_check_branch
      %267 = sbr.rel (0) target = $region169
    $region168: #{mesm_forward.1} parent=1 // pred_region
      _
    $region169: #{mesm_forward.1} parent=1 // pred_fallthru
      _
    // Predicated region
    $region170: #{mesm_forward.1} parent=1 // pred_check
      _
    $region171: #{mesm_forward.1} parent=1 // pred_check_branch
      %269 = sbr.rel (0) target = $region173
    $region172: #{mesm_forward.1} parent=1 // pred_region
      _
    $region173: #{mesm_forward.1} parent=1 // pred_fallthru
      _
    // Predicated region
    $region174: #{mesm_forward.1} parent=1 // pred_check
      _
    $region175: #{mesm_forward.1} parent=1 // pred_check_branch
      %271 = sbr.rel (0) target = $region177
    $region176: #{mesm_forward.1} parent=1 // pred_region
      _
    $region177: #{mesm_forward.1} parent=1 // pred_fallthru
      _
    // Predicated region
    $region178: #{mesm_forward.1} parent=1 // pred_check
      _
    $region179: #{mesm_forward.1} parent=1 // pred_check_branch
      %273 = sbr.rel (0) target = $region181
    $region180: #{mesm_forward.1} parent=1 // pred_region
      _
    $region181: #{mesm_forward.1} parent=1 // pred_fallthru
      _
    // Predicated region
    $region182: #{mesm_forward.1} parent=1 // pred_check
      _
    $region183: #{mesm_forward.1} parent=1 // pred_check_branch
      %275 = sbr.rel (0) target = $region185
    $region184: #{mesm_forward.1} parent=1 // pred_region
      _
    $region185: #{mesm_forward.1} parent=1 // pred_fallthru
      _
    // Predicated region
    $region186: #{mesm_forward.1} parent=1 // pred_check
      _
    $region187: #{mesm_forward.1} parent=1 // pred_check_branch
      %277 = sbr.rel (0) target = $region189
    $region188: #{mesm_forward.1} parent=1 // pred_region
      _
    $region189: #{mesm_forward.1} parent=1 // pred_fallthru
      _
    // Predicated region
    $region190: #{mesm_forward.1} parent=1 // pred_check
      _
    $region191: #{mesm_forward.1} parent=1 // pred_check_branch
      %279 = sbr.rel (0) target = $region193
    $region192: #{mesm_forward.1} parent=1 // pred_region
      _
    $region193: #{mesm_forward.1} parent=1 // pred_fallthru
      _
    // Predicated region
    $region194: #{mesm_forward.1} parent=1 // pred_check
      _
    $region195: #{mesm_forward.1} parent=1 // pred_check_branch
      %281 = sbr.rel (0) target = $region197
    $region196: #{mesm_forward.1} parent=1 // pred_region
      %283 = dma.done [#allocation3], 1792
    $region197: #{mesm_forward.1} parent=1 // pred_fallthru
      _
    // Predicated region
    $region198: #{mesm_forward.1} parent=1 // pred_check
      _
    $region199: #{mesm_forward.1} parent=1 // pred_check_branch
      %285 = sbr.rel (0) target = $region201
    $region200: #{mesm_forward.1} parent=1 // pred_region
      %287 = dma.done [#allocation6], 1792
    $region201: #{mesm_forward.1} parent=1 // pred_fallthru
      _
    // Predicated region
    $region202: #{mesm_forward.1} parent=1 // pred_check
      _
    $region203: #{mesm_forward.1} parent=1 // pred_check_branch
      %289 = sbr.rel (0) target = $region205
    $region204: #{mesm_forward.1} parent=1 // pred_region
      %291 = dma.done [#allocation6], 4480
    $region205: #{mesm_forward.1} parent=1 // pred_fallthru
      _
    // Predicated region
    $region206: #{mesm_forward.1} parent=1 // pred_check
      _
    $region207: #{mesm_forward.1} parent=1 // pred_check_branch
      %293 = sbr.rel (0) target = $region209
    $region208: #{mesm_forward.1} parent=1 // pred_region
      %295 = dma.done [#allocation9], 3584
    $region209: #{mesm_forward.1} parent=1 // pred_fallthru
      _
    // Predicated region
    $region210: #{mesm_forward.1} parent=1 // pred_check
      _
    $region211: #{mesm_forward.1} parent=1 // pred_check_branch
      %297 = sbr.rel (0) target = $region213
    $region212: #{mesm_forward.1} parent=1 // pred_region
      %299 = dma.done [#allocation9], 3584
    $region213: #{mesm_forward.1} parent=1 // pred_fallthru
      _
    // Predicated region
    $region214: #{mesm_forward.1} parent=1 // pred_check
      _
    $region215: #{mesm_forward.1} parent=1 // pred_check_branch
      %301 = sbr.rel (0) target = $region217
    $region216: #{mesm_forward.1} parent=1 // pred_region
      %303 = dma.done [#allocation12], 3584
    $region217: #{mesm_forward.1} parent=1 // pred_fallthru
      _
    // Predicated region
    $region218: #{mesm_forward.1} parent=1 // pred_check
      _
    $region219: #{mesm_forward.1} parent=1 // pred_check_branch
      %305 = sbr.rel (0) target = $region221
    $region220: #{mesm_forward.1} parent=1 // pred_region
      %307 = dma.done [#allocation12], 4096
    $region221: #{mesm_forward.1} parent=1 // pred_fallthru
      _
    %v308 = vlaneseq
    %v309 = vand.u32 %v308, 127
    %vm310 = vcmp.ge.s32.totalorder %v309, 0
    %vm311 = vcmp.lt.s32.totalorder %v309, 10
    %vm312 = vmand %vm310, %vm311
    %v313 = vsel %vm312, 1, 0
    %v314 = vcvt.s32.f32 %v313
    %vm315 = vcmp.ge.s32.totalorder %v309, 10
    %vm316 = vcmp.lt.s32.totalorder %v309, 20
    %vm317 = vmand %vm315, %vm316
    %v318 = vsel %vm317, 1, 0
    %v319 = vcvt.s32.f32 %v318
    %vm320 = vcmp.ge.s32.totalorder %v309, 20
    %vm321 = vcmp.lt.s32.totalorder %v309, 30
    %vm322 = vmand %vm320, %vm321
    %v323 = vsel %vm322, 1, 0
    %v324 = vcvt.s32.f32 %v323
    %vm325 = vcmp.ge.s32.totalorder %v309, 30
    %vm326 = vcmp.lt.s32.totalorder %v309, 40
    %vm327 = vmand %vm325, %vm326
    %v328 = vsel %vm327, 1, 0
    %v329 = vcvt.s32.f32 %v328
    %v330 = vld [vmem:[%s3] sm:$0xff]
    %v331 = vld [vmem:[%s3 + $0x8] sm:$0xff]
    %v332 = vld [vmem:[%s1] sm:$0xff]
    %v333 = vld [vmem:[%s1 + $0x8] sm:$0xff]
    %v334 = vld [vmem:[%s5] sm:$0xff]
    %v335 = vld [vmem:[%s5 + $0x8] sm:$0xff]
    %v336 = vld [vmem:[#allocation2] sm:$0xff]
    %v337 = vld [vmem:[#allocation2 + $0x8] sm:$0xff]
    %v338 = vld [vmem:[#allocation5] sm:$0xff]
    %v339 = vld [vmem:[#allocation5 + $0x8] sm:$0xff]
    %v340 = vld [vmem:[%s15] sm:$0xff]
    %v341 = vld [vmem:[%s15 + $0x8] sm:$0xff]
    %v342 = vld [vmem:[%s15 + $0x10] sm:$0xff]
    %v343 = vld [vmem:[%s15 + $0x18] sm:$0xff]
    %v344 = vld [vmem:[%s15 + $0x20] sm:$0xff]
    %vm345 = vcmask 326656
    %v347 = vsel %vm345, %v332, 0
    %v350 = vsel %vm345, %v333, 0
    %352 = vmatpush.msra.mxu0 0.0
    %353 = vmatpush.msra.mxu0 0.0
    %354 = vmatpush.msra.mxu0 0.0
    %355 = vmatpush.msra.mxu0 0.0
    %356 = vmatpush.msra.mxu0 0.0
    %357 = vmatpush.msra.mxu0 0.0
    %358 = vmatpush.msra.mxu0 0.0
    %359 = vmatpush.msra.mxu0 0.0
    %360 = vmatpush.msra.mxu0 0.0
    %361 = vmatpush.msra.mxu0 0.0
    %362 = vmatpush.msra.mxu0 0.0
    %363 = vmatpush.msra.mxu0 %v344
    %364 = vmatpush.msra.mxu0 %v343
    %365 = vmatpush.msra.mxu0 %v342
    %366 = vmatpush.msra.mxu0 %v341
    %367 = vmatpush.msra.mxu0 %v340
    %368 = vmatmul.f32.gmra.mxu0 %v347
    %v369 = vpop.f32.mrf.mxu0
    %v370 = vadd.f32 0.0, %v369
    %371 = vmatmul.f32.gmra.mxu0 %v350
    %v372 = vpop.f32.mrf.mxu0
    %v373 = vadd.f32 0.0, %v372
    %374 = vdwg.mxu0
    %v375 = vld [vmem:[%s17] sm:$0x1]
    %v377 = vperm.slane %v375, 0
    %vm379 = vcmask 130048
    %v381 = vsel %vm379, %v334, 0
    %v384 = vsel %vm379, %v335, 0
    %386 = vmatpush.msra.mxu0 0.0
    %387 = vmatpush.msra.mxu0 0.0
    %388 = vmatpush.msra.mxu0 0.0
    %389 = vmatpush.msra.mxu0 0.0
    %390 = vmatpush.msra.mxu0 0.0
    %391 = vmatpush.msra.mxu0 0.0
    %392 = vmatpush.msra.mxu0 0.0
    %393 = vmatpush.msra.mxu0 0.0
    %394 = vmatpush.msra.mxu0 0.0
    %395 = vmatpush.msra.mxu0 0.0
    %396 = vmatpush.msra.mxu0 0.0
    %397 = vmatpush.msra.mxu0 0.0
    %398 = vmatpush.msra.mxu0 0.0
    %399 = vmatpush.msra.mxu0 0.0
    %400 = vmatpush.msra.mxu0 %v373
    %401 = vmatpush.msra.mxu0 %v370
    %402 = vmatmul.f32.gmra.mxu0 %v381
    %v403 = vpop.f32.mrf.mxu0
    %v404 = vadd.f32 %v377, %v403
    %405 = vmatmul.f32.gmra.mxu0 %v384
    %v406 = vpop.f32.mrf.mxu0
    %v407 = vadd.f32 %v377, %v406
    %408 = vdwg.mxu0
    %v409 = vadd.f32 %v404, %v332
    %v410 = vadd.f32 %v407, %v333
    %v411 = vld [vmem:[%s29] sm:$0x1]
    %v413 = vperm.slane %v411, 0
    %v415 = vmul.f32 %v409, %v413
    %v416 = vmul.f32 %v410, %v413
    %v417 = vld [vmem:[%s31] sm:$0x1]
    %v419 = vperm.slane %v417, 0
    %v421 = vadd.f32 %v415, %v419
    %v422 = vadd.f32 %v416, %v419
    %v423 = vld [vmem:[%s19] sm:$0xff]
    %v424 = vld [vmem:[%s19 + $0x8] sm:$0xff]
    %v425 = vld [vmem:[%s19 + $0x10] sm:$0xff]
    %v426 = vld [vmem:[%s19 + $0x18] sm:$0xff]
    %v427 = vld [vmem:[%s19 + $0x20] sm:$0xff]
    %428 = vmatpush.msra.mxu0 0.0
    %429 = vmatpush.msra.mxu0 0.0
    %430 = vmatpush.msra.mxu0 0.0
    %431 = vmatpush.msra.mxu0 0.0
    %432 = vmatpush.msra.mxu0 0.0
    %433 = vmatpush.msra.mxu0 0.0
    %434 = vmatpush.msra.mxu0 0.0
    %435 = vmatpush.msra.mxu0 0.0
    %436 = vmatpush.msra.mxu0 0.0
    %437 = vmatpush.msra.mxu0 0.0
    %438 = vmatpush.msra.mxu0 0.0
    %439 = vmatpush.msra.mxu0 %v427
    %440 = vmatpush.msra.mxu0 %v426
    %441 = vmatpush.msra.mxu0 %v425
    %442 = vmatpush.msra.mxu0 %v424
    %443 = vmatpush.msra.mxu0 %v423
    %444 = vmatmul.f32.gmra.mxu0 %v347
    %v445 = vpop.f32.mrf.mxu0
    %v446 = vadd.f32 0.0, %v445
    %447 = vmatmul.f32.gmra.mxu0 %v350
    %v448 = vpop.f32.mrf.mxu0
    %v449 = vadd.f32 0.0, %v448
    %450 = vdwg.mxu0
    %v451 = vld [vmem:[%s21] sm:$0xff]
    %v452 = vld [vmem:[%s21 + $0x8] sm:$0xff]
    %v453 = vld [vmem:[%s21 + $0x10] sm:$0xff]
    %v454 = vld [vmem:[%s21 + $0x18] sm:$0xff]
    %v455 = vld [vmem:[%s21 + $0x20] sm:$0xff]
    %456 = vmatpush.msra.mxu0 0.0
    %457 = vmatpush.msra.mxu0 0.0
    %458 = vmatpush.msra.mxu0 0.0
    %459 = vmatpush.msra.mxu0 0.0
    %460 = vmatpush.msra.mxu0 0.0
    %461 = vmatpush.msra.mxu0 0.0
    %462 = vmatpush.msra.mxu0 0.0
    %463 = vmatpush.msra.mxu0 0.0
    %464 = vmatpush.msra.mxu0 0.0
    %465 = vmatpush.msra.mxu0 0.0
    %466 = vmatpush.msra.mxu0 0.0
    %467 = vmatpush.msra.mxu0 %v455
    %468 = vmatpush.msra.mxu0 %v454
    %469 = vmatpush.msra.mxu0 %v453
    %470 = vmatpush.msra.mxu0 %v452
    %471 = vmatpush.msra.mxu0 %v451
    %472 = vmatmul.f32.gmra.mxu0 %v347
    %v473 = vpop.f32.mrf.mxu0
    %v474 = vadd.f32 0.0, %v473
    %475 = vmatmul.f32.gmra.mxu0 %v350
    %v476 = vpop.f32.mrf.mxu0
    %v477 = vadd.f32 0.0, %v476
    %478 = vdwg.mxu0
    %v479 = vld [vmem:[%s23] sm:$0xff]
    %v480 = vld [vmem:[%s23 + $0x8] sm:$0xff]
    %v481 = vld [vmem:[%s23 + $0x10] sm:$0xff]
    %v482 = vld [vmem:[%s23 + $0x18] sm:$0xff]
    %v483 = vld [vmem:[%s23 + $0x20] sm:$0xff]
    %484 = vmatpush.msra.mxu0 0.0
    %485 = vmatpush.msra.mxu0 0.0
    %486 = vmatpush.msra.mxu0 0.0
    %487 = vmatpush.msra.mxu0 0.0
    %488 = vmatpush.msra.mxu0 0.0
    %489 = vmatpush.msra.mxu0 0.0
    %490 = vmatpush.msra.mxu0 0.0
    %491 = vmatpush.msra.mxu0 0.0
    %492 = vmatpush.msra.mxu0 0.0
    %493 = vmatpush.msra.mxu0 0.0
    %494 = vmatpush.msra.mxu0 0.0
    %495 = vmatpush.msra.mxu0 %v483
    %496 = vmatpush.msra.mxu0 %v482
    %497 = vmatpush.msra.mxu0 %v481
    %498 = vmatpush.msra.mxu0 %v480
    %499 = vmatpush.msra.mxu0 %v479
    %500 = vmatmul.f32.gmra.mxu0 %v347
    %v501 = vpop.f32.mrf.mxu0
    %v502 = vadd.f32 0.0, %v501
    %503 = vmatmul.f32.gmra.mxu0 %v350
    %v504 = vpop.f32.mrf.mxu0
    %v505 = vadd.f32 0.0, %v504
    %506 = vdwg.mxu0
    %v507 = vmul.f32 %v446, %v314
    %v508 = vmul.f32 %v449, %v314
    %v510 = vsel %vm345, %v507, 0
    %v513 = vsel %vm345, %v508, 0
    %v516 = vsel %vm345, %v474, 0
    %v519 = vsel %vm345, %v477, 0
    %521 = vmatpush.xpose.msra.mxu0 0.0
    %522 = vmatpush.xpose.msra.mxu0 0.0
    %523 = vmatpush.xpose.msra.mxu0 0.0
    %524 = vmatpush.xpose.msra.mxu0 0.0
    %525 = vmatpush.xpose.msra.mxu0 0.0
    %526 = vmatpush.xpose.msra.mxu0 0.0
    %527 = vmatpush.xpose.msra.mxu0 0.0
    %528 = vmatpush.xpose.msra.mxu0 0.0
    %529 = vmatpush.xpose.msra.mxu0 0.0
    %530 = vmatpush.xpose.msra.mxu0 0.0
    %531 = vmatpush.xpose.msra.mxu0 0.0
    %532 = vmatpush.xpose.msra.mxu0 0.0
    %533 = vmatpush.xpose.msra.mxu0 0.0
    %534 = vmatpush.xpose.msra.mxu0 0.0
    %535 = vmatpush.xpose.msra.mxu0 %v519
    %536 = vmatpush.xpose.msra.mxu0 %v516
    %537 = vmatmul.f32.gmra.mxu0 %v510
    %v538 = vpop.f32.mrf.mxu0
    %v539 = vadd.f32 0.0, %v538
    %540 = vmatmul.f32.gmra.mxu0 %v513
    %v541 = vpop.f32.mrf.mxu0
    %v542 = vadd.f32 0.0, %v541
    %543 = vdwg.mxu0
    %v544 = vmul.f32 %v539, 0.31622776
    %v545 = vmul.f32 %v542, 0.31622776
    %v546 = vsel %vm379, %v544, -inf
    %547 = vmax.xlane.f32.xlu0 %v546
    %v548 = vpop.xlane.xlu0 %547
    %v549 = vsel %vm379, %v545, -inf
    %550 = vmax.xlane.f32.xlu0 %v549
    %v551 = vpop.xlane.xlu0 %550
    %v552 = vsub.f32 %v544, %v548
    %v553 = vsub.f32 %v545, %v551
    %v554 = vmul.f32 %v552, 1.442695
    %v555 = vpow.pop %v554
    %v556 = vmul.f32 %v553, 1.442695
    %v557 = vpow.pop %v556
    %v558 = vsel %vm379, %v555, 0.0
    %559 = vadd.xlane.f32.xlu0 %v558
    %v560 = vpop.xlane.xlu0 %559
    %v561 = vsel %vm379, %v557, 0.0
    %562 = vadd.xlane.f32.xlu0 %v561
    %v563 = vpop.xlane.xlu0 %562
    %v564 = vrcp.pop %v560
    %v565 = vrcp.pop %v563
    %v566 = vmul.f32 %v555, %v564
    %v567 = vmul.f32 %v557, %v565
    %v568 = vmul.f32 %v502, %v314
    %v569 = vmul.f32 %v505, %v314
    %v570 = vmul.f32 %v446, %v319
    %v571 = vmul.f32 %v449, %v319
    %v573 = vsel %vm345, %v570, 0
    %v576 = vsel %vm345, %v571, 0
    %578 = vmatpush.xpose.msra.mxu0 0.0
    %579 = vmatpush.xpose.msra.mxu0 0.0
    %580 = vmatpush.xpose.msra.mxu0 0.0
    %581 = vmatpush.xpose.msra.mxu0 0.0
    %582 = vmatpush.xpose.msra.mxu0 0.0
    %583 = vmatpush.xpose.msra.mxu0 0.0
    %584 = vmatpush.xpose.msra.mxu0 0.0
    %585 = vmatpush.xpose.msra.mxu0 0.0
    %586 = vmatpush.xpose.msra.mxu0 0.0
    %587 = vmatpush.xpose.msra.mxu0 0.0
    %588 = vmatpush.xpose.msra.mxu0 0.0
    %589 = vmatpush.xpose.msra.mxu0 0.0
    %590 = vmatpush.xpose.msra.mxu0 0.0
    %591 = vmatpush.xpose.msra.mxu0 0.0
    %592 = vmatpush.xpose.msra.mxu0 %v519
    %593 = vmatpush.xpose.msra.mxu0 %v516
    %594 = vmatmul.f32.gmra.mxu0 %v573
    %v595 = vpop.f32.mrf.mxu0
    %v596 = vadd.f32 0.0, %v595
    %597 = vmatmul.f32.gmra.mxu0 %v576
    %v598 = vpop.f32.mrf.mxu0
    %v599 = vadd.f32 0.0, %v598
    %600 = vdwg.mxu0
    %v601 = vmul.f32 %v596, 0.31622776
    %v602 = vmul.f32 %v599, 0.31622776
    %v603 = vsel %vm379, %v601, -inf
    %604 = vmax.xlane.f32.xlu0 %v603
    %v605 = vpop.xlane.xlu0 %604
    %v606 = vsel %vm379, %v602, -inf
    %607 = vmax.xlane.f32.xlu0 %v606
    %v608 = vpop.xlane.xlu0 %607
    %v609 = vsub.f32 %v601, %v605
    %v610 = vsub.f32 %v602, %v608
    %v611 = vmul.f32 %v609, 1.442695
    %v612 = vpow.pop %v611
    %v613 = vmul.f32 %v610, 1.442695
    %v614 = vpow.pop %v613
    %v615 = vsel %vm379, %v612, 0.0
    %616 = vadd.xlane.f32.xlu0 %v615
    %v617 = vpop.xlane.xlu0 %616
    %v618 = vsel %vm379, %v614, 0.0
    %619 = vadd.xlane.f32.xlu0 %v618
    %v620 = vpop.xlane.xlu0 %619
    %v621 = vrcp.pop %v617
    %v622 = vrcp.pop %v620
    %v623 = vmul.f32 %v612, %v621
    %v624 = vmul.f32 %v614, %v622
    %v625 = vmul.f32 %v502, %v319
    %v626 = vmul.f32 %v505, %v319
    %v628 = vsel %vm379, %v623, 0
    %v631 = vsel %vm379, %v624, 0
    %633 = vmatpush.msra.mxu0 0.0
    %634 = vmatpush.msra.mxu0 0.0
    %635 = vmatpush.msra.mxu0 0.0
    %636 = vmatpush.msra.mxu0 0.0
    %637 = vmatpush.msra.mxu0 0.0
    %638 = vmatpush.msra.mxu0 0.0
    %639 = vmatpush.msra.mxu0 0.0
    %640 = vmatpush.msra.mxu0 0.0
    %641 = vmatpush.msra.mxu0 0.0
    %642 = vmatpush.msra.mxu0 0.0
    %643 = vmatpush.msra.mxu0 0.0
    %644 = vmatpush.msra.mxu0 0.0
    %645 = vmatpush.msra.mxu0 0.0
    %646 = vmatpush.msra.mxu0 0.0
    %647 = vmatpush.msra.mxu0 %v626
    %648 = vmatpush.msra.mxu0 %v625
    %649 = vmatmul.f32.gmra.mxu0 %v628
    %v650 = vpop.f32.mrf.mxu0
    %v651 = vadd.f32 0.0, %v650
    %652 = vmatmul.f32.gmra.mxu0 %v631
    %v653 = vpop.f32.mrf.mxu0
    %v654 = vadd.f32 0.0, %v653
    %655 = vdwg.mxu0
    %v657 = vsel %vm379, %v566, 0
    %v660 = vsel %vm379, %v567, 0
    %662 = vmatpush.msra.mxu0 0.0
    %663 = vmatpush.msra.mxu0 0.0
    %664 = vmatpush.msra.mxu0 0.0
    %665 = vmatpush.msra.mxu0 0.0
    %666 = vmatpush.msra.mxu0 0.0
    %667 = vmatpush.msra.mxu0 0.0
    %668 = vmatpush.msra.mxu0 0.0
    %669 = vmatpush.msra.mxu0 0.0
    %670 = vmatpush.msra.mxu0 0.0
    %671 = vmatpush.msra.mxu0 0.0
    %672 = vmatpush.msra.mxu0 0.0
    %673 = vmatpush.msra.mxu0 0.0
    %674 = vmatpush.msra.mxu0 0.0
    %675 = vmatpush.msra.mxu0 0.0
    %676 = vmatpush.msra.mxu0 %v569
    %677 = vmatpush.msra.mxu0 %v568
    %678 = vmatmul.f32.gmra.mxu0 %v657
    %v679 = vpop.f32.mrf.mxu0
    %v680 = vadd.f32 %v651, %v679
    %681 = vmatmul.f32.gmra.mxu0 %v660
    %v682 = vpop.f32.mrf.mxu0
    %v683 = vadd.f32 %v654, %v682
    %684 = vdwg.mxu0
    %v685 = vmul.f32 %v446, %v324
    %v686 = vmul.f32 %v449, %v324
    %v688 = vsel %vm345, %v685, 0
    %v691 = vsel %vm345, %v686, 0
    %693 = vmatpush.xpose.msra.mxu0 0.0
    %694 = vmatpush.xpose.msra.mxu0 0.0
    %695 = vmatpush.xpose.msra.mxu0 0.0
    %696 = vmatpush.xpose.msra.mxu0 0.0
    %697 = vmatpush.xpose.msra.mxu0 0.0
    %698 = vmatpush.xpose.msra.mxu0 0.0
    %699 = vmatpush.xpose.msra.mxu0 0.0
    %700 = vmatpush.xpose.msra.mxu0 0.0
    %701 = vmatpush.xpose.msra.mxu0 0.0
    %702 = vmatpush.xpose.msra.mxu0 0.0
    %703 = vmatpush.xpose.msra.mxu0 0.0
    %704 = vmatpush.xpose.msra.mxu0 0.0
    %705 = vmatpush.xpose.msra.mxu0 0.0
    %706 = vmatpush.xpose.msra.mxu0 0.0
    %707 = vmatpush.xpose.msra.mxu0 %v519
    %708 = vmatpush.xpose.msra.mxu0 %v516
    %709 = vmatmul.f32.gmra.mxu0 %v688
    %v710 = vpop.f32.mrf.mxu0
    %v711 = vadd.f32 0.0, %v710
    %712 = vmatmul.f32.gmra.mxu0 %v691
    %v713 = vpop.f32.mrf.mxu0
    %v714 = vadd.f32 0.0, %v713
    %715 = vdwg.mxu0
    %v716 = vmul.f32 %v711, 0.31622776
    %v717 = vmul.f32 %v714, 0.31622776
    %v718 = vsel %vm379, %v716, -inf
    %719 = vmax.xlane.f32.xlu0 %v718
    %v720 = vpop.xlane.xlu0 %719
    %v721 = vsel %vm379, %v717, -inf
    %722 = vmax.xlane.f32.xlu0 %v721
    %v723 = vpop.xlane.xlu0 %722
    %v724 = vsub.f32 %v716, %v720
    %v725 = vsub.f32 %v717, %v723
    %v726 = vmul.f32 %v724, 1.442695
    %v727 = vpow.pop %v726
    %v728 = vmul.f32 %v725, 1.442695
    %v729 = vpow.pop %v728
    %v730 = vsel %vm379, %v727, 0.0
    %731 = vadd.xlane.f32.xlu0 %v730
    %v732 = vpop.xlane.xlu0 %731
    %v733 = vsel %vm379, %v729, 0.0
    %734 = vadd.xlane.f32.xlu0 %v733
    %v735 = vpop.xlane.xlu0 %734
    %v736 = vrcp.pop %v732
    %v737 = vrcp.pop %v735
    %v738 = vmul.f32 %v727, %v736
    %v739 = vmul.f32 %v729, %v737
    %v740 = vmul.f32 %v502, %v324
    %v741 = vmul.f32 %v505, %v324
    %v743 = vsel %vm379, %v738, 0
    %v746 = vsel %vm379, %v739, 0
    %748 = vmatpush.msra.mxu0 0.0
    %749 = vmatpush.msra.mxu0 0.0
    %750 = vmatpush.msra.mxu0 0.0
    %751 = vmatpush.msra.mxu0 0.0
    %752 = vmatpush.msra.mxu0 0.0
    %753 = vmatpush.msra.mxu0 0.0
    %754 = vmatpush.msra.mxu0 0.0
    %755 = vmatpush.msra.mxu0 0.0
    %756 = vmatpush.msra.mxu0 0.0
    %757 = vmatpush.msra.mxu0 0.0
    %758 = vmatpush.msra.mxu0 0.0
    %759 = vmatpush.msra.mxu0 0.0
    %760 = vmatpush.msra.mxu0 0.0
    %761 = vmatpush.msra.mxu0 0.0
    %762 = vmatpush.msra.mxu0 %v741
    %763 = vmatpush.msra.mxu0 %v740
    %764 = vmatmul.f32.gmra.mxu0 %v743
    %v765 = vpop.f32.mrf.mxu0
    %v766 = vadd.f32 0.0, %v765
    %767 = vmatmul.f32.gmra.mxu0 %v746
    %v768 = vpop.f32.mrf.mxu0
    %v769 = vadd.f32 0.0, %v768
    %770 = vdwg.mxu0
    %v771 = vadd.f32 %v680, %v766
    %v772 = vadd.f32 %v683, %v769
    %v773 = vmul.f32 %v446, %v329
    %v774 = vmul.f32 %v449, %v329
    %v776 = vsel %vm345, %v773, 0
    %v779 = vsel %vm345, %v774, 0
    %781 = vmatpush.xpose.msra.mxu0 0.0
    %782 = vmatpush.xpose.msra.mxu0 0.0
    %783 = vmatpush.xpose.msra.mxu0 0.0
    %784 = vmatpush.xpose.msra.mxu0 0.0
    %785 = vmatpush.xpose.msra.mxu0 0.0
    %786 = vmatpush.xpose.msra.mxu0 0.0
    %787 = vmatpush.xpose.msra.mxu0 0.0
    %788 = vmatpush.xpose.msra.mxu0 0.0
    %789 = vmatpush.xpose.msra.mxu0 0.0
    %790 = vmatpush.xpose.msra.mxu0 0.0
    %791 = vmatpush.xpose.msra.mxu0 0.0
    %792 = vmatpush.xpose.msra.mxu0 0.0
    %793 = vmatpush.xpose.msra.mxu0 0.0
    %794 = vmatpush.xpose.msra.mxu0 0.0
    %795 = vmatpush.xpose.msra.mxu0 %v519
    %796 = vmatpush.xpose.msra.mxu0 %v516
    %797 = vmatmul.f32.gmra.mxu0 %v776
    %v798 = vpop.f32.mrf.mxu0
    %v799 = vadd.f32 0.0, %v798
    %800 = vmatmul.f32.gmra.mxu0 %v779
    %v801 = vpop.f32.mrf.mxu0
    %v802 = vadd.f32 0.0, %v801
    %803 = vdwg.mxu0
    %v804 = vmul.f32 %v799, 0.31622776
    %v805 = vmul.f32 %v802, 0.31622776
    %v806 = vsel %vm379, %v804, -inf
    %807 = vmax.xlane.f32.xlu0 %v806
    %v808 = vpop.xlane.xlu0 %807
    %v809 = vsel %vm379, %v805, -inf
    %810 = vmax.xlane.f32.xlu0 %v809
    %v811 = vpop.xlane.xlu0 %810
    %v812 = vsub.f32 %v804, %v808
    %v813 = vsub.f32 %v805, %v811
    %v814 = vmul.f32 %v812, 1.442695
    %v815 = vpow.pop %v814
    %v816 = vmul.f32 %v813, 1.442695
    %v817 = vpow.pop %v816
    %v818 = vsel %vm379, %v815, 0.0
    %819 = vadd.xlane.f32.xlu0 %v818
    %v820 = vpop.xlane.xlu0 %819
    %v821 = vsel %vm379, %v817, 0.0
    %822 = vadd.xlane.f32.xlu0 %v821
    %v823 = vpop.xlane.xlu0 %822
    %v824 = vrcp.pop %v820
    %v825 = vrcp.pop %v823
    %v826 = vmul.f32 %v815, %v824
    %v827 = vmul.f32 %v817, %v825
    %v828 = vmul.f32 %v502, %v329
    %v829 = vmul.f32 %v505, %v329
    %v831 = vsel %vm379, %v826, 0
    %v834 = vsel %vm379, %v827, 0
    %836 = vmatpush.msra.mxu0 0.0
    %837 = vmatpush.msra.mxu0 0.0
    %838 = vmatpush.msra.mxu0 0.0
    %839 = vmatpush.msra.mxu0 0.0
    %840 = vmatpush.msra.mxu0 0.0
    %841 = vmatpush.msra.mxu0 0.0
    %842 = vmatpush.msra.mxu0 0.0
    %843 = vmatpush.msra.mxu0 0.0
    %844 = vmatpush.msra.mxu0 0.0
    %845 = vmatpush.msra.mxu0 0.0
    %846 = vmatpush.msra.mxu0 0.0
    %847 = vmatpush.msra.mxu0 0.0
    %848 = vmatpush.msra.mxu0 0.0
    %849 = vmatpush.msra.mxu0 0.0
    %850 = vmatpush.msra.mxu0 %v829
    %851 = vmatpush.msra.mxu0 %v828
    %852 = vmatmul.f32.gmra.mxu0 %v831
    %v853 = vpop.f32.mrf.mxu0
    %v854 = vadd.f32 0.0, %v853
    %855 = vmatmul.f32.gmra.mxu0 %v834
    %v856 = vpop.f32.mrf.mxu0
    %v857 = vadd.f32 0.0, %v856
    %858 = vdwg.mxu0
    %v859 = vadd.f32 %v771, %v854
    %v860 = vadd.f32 %v772, %v857
    %v861 = vld [vmem:[%s25] sm:$0xff]
    %v862 = vld [vmem:[%s25 + $0x8] sm:$0xff]
    %v863 = vld [vmem:[%s25 + $0x10] sm:$0xff]
    %v864 = vld [vmem:[%s25 + $0x18] sm:$0xff]
    %v865 = vld [vmem:[%s25 + $0x20] sm:$0xff]
    %v866 = vld [vmem:[%s27] sm:$0x1]
    %v868 = vperm.slane %v866, 0
    %v871 = vsel %vm345, %v859, 0
    %v874 = vsel %vm345, %v860, 0
    %876 = vmatpush.msra.mxu0 0.0
    %877 = vmatpush.msra.mxu0 0.0
    %878 = vmatpush.msra.mxu0 0.0
    %879 = vmatpush.msra.mxu0 0.0
    %880 = vmatpush.msra.mxu0 0.0
    %881 = vmatpush.msra.mxu0 0.0
    %882 = vmatpush.msra.mxu0 0.0
    %883 = vmatpush.msra.mxu0 0.0
    %884 = vmatpush.msra.mxu0 0.0
    %885 = vmatpush.msra.mxu0 0.0
    %886 = vmatpush.msra.mxu0 0.0
    %887 = vmatpush.msra.mxu0 %v865
    %888 = vmatpush.msra.mxu0 %v864
    %889 = vmatpush.msra.mxu0 %v863
    %890 = vmatpush.msra.mxu0 %v862
    %891 = vmatpush.msra.mxu0 %v861
    %892 = vmatmul.f32.gmra.mxu0 %v871
    %v893 = vpop.f32.mrf.mxu0
    %v894 = vadd.f32 %v868, %v893
    %895 = vmatmul.f32.gmra.mxu0 %v874
    %v896 = vpop.f32.mrf.mxu0
    %v897 = vadd.f32 %v868, %v896
    %898 = vdwg.mxu0
    %v899 = vadd.f32 %v894, %v332
    %v900 = vadd.f32 %v897, %v333
    %v901 = vld [vmem:[%s33] sm:$0x1]
    %v903 = vperm.slane %v901, 0
    %v905 = vmul.f32 %v899, %v903
    %v906 = vmul.f32 %v900, %v903
    %v907 = vld [vmem:[%s35] sm:$0x1]
    %v909 = vperm.slane %v907, 0
    %v911 = vadd.f32 %v905, %v909
    %v912 = vadd.f32 %v906, %v909
    %v913 = vadd.f32 %v421, %v911
    %v914 = vadd.f32 %v422, %v912
    %v915 = vld [vmem:[#allocation7] sm:$0xff]
    %v916 = vld [vmem:[#allocation7 + $0x8] sm:$0xff]
    %v917 = vld [vmem:[#allocation7 + $0x10] sm:$0xff]
    %v918 = vld [vmem:[#allocation7 + $0x18] sm:$0xff]
    %v919 = vld [vmem:[#allocation7 + $0x20] sm:$0xff]
    %v920 = vld [vmem:[%s43] sm:$0x1]
    %v922 = vperm.slane %v920, 0
    %v925 = vsel %vm345, %v913, 0
    %v928 = vsel %vm345, %v914, 0
    %930 = vmatpush.msra.mxu0 0.0
    %931 = vmatpush.msra.mxu0 0.0
    %932 = vmatpush.msra.mxu0 0.0
    %933 = vmatpush.msra.mxu0 0.0
    %934 = vmatpush.msra.mxu0 0.0
    %935 = vmatpush.msra.mxu0 0.0
    %936 = vmatpush.msra.mxu0 0.0
    %937 = vmatpush.msra.mxu0 0.0
    %938 = vmatpush.msra.mxu0 0.0
    %939 = vmatpush.msra.mxu0 0.0
    %940 = vmatpush.msra.mxu0 0.0
    %941 = vmatpush.msra.mxu0 %v919
    %942 = vmatpush.msra.mxu0 %v918
    %943 = vmatpush.msra.mxu0 %v917
    %944 = vmatpush.msra.mxu0 %v916
    %945 = vmatpush.msra.mxu0 %v915
    %946 = vmatmul.f32.gmra.mxu0 %v925
    %v947 = vpop.f32.mrf.mxu0
    %v948 = vadd.f32 %v922, %v947
    %949 = vmatmul.f32.gmra.mxu0 %v928
    %v950 = vpop.f32.mrf.mxu0
    %v951 = vadd.f32 %v922, %v950
    %952 = vdwg.mxu0
    %v953 = vmax.f32 %v948, 0.0
    %v954 = vmax.f32 %v951, 0.0
    %v955 = vld [vmem:[%s45] sm:$0xff]
    %v956 = vld [vmem:[%s45 + $0x8] sm:$0xff]
    %v957 = vld [vmem:[%s45 + $0x10] sm:$0xff]
    %v958 = vld [vmem:[%s45 + $0x18] sm:$0xff]
    %v959 = vld [vmem:[%s45 + $0x20] sm:$0xff]
    %v960 = vld [vmem:[%s45 + $0x28] sm:$0xff]
    %v961 = vld [vmem:[%s45 + $0x30] sm:$0xff]
    %v962 = vld [vmem:[%s45 + $0x38] sm:$0xff]
    %v963 = vld [vmem:[%s45 + $0x40] sm:$0xff]
    %v964 = vld [vmem:[%s45 + $0x48] sm:$0xff]
    %v965 = vld [vmem:[%s47] sm:$0x1]
    %v967 = vperm.slane %v965, 0
    %vm969 = vcmask 654336
    %v971 = vsel %vm969, %v953, 0
    %v974 = vsel %vm969, %v954, 0
    %976 = vmatpush.msra.mxu0 0.0
    %977 = vmatpush.msra.mxu0 0.0
    %978 = vmatpush.msra.mxu0 0.0
    %979 = vmatpush.msra.mxu0 0.0
    %980 = vmatpush.msra.mxu0 0.0
    %981 = vmatpush.msra.mxu0 0.0
    %982 = vmatpush.msra.mxu0 %v964
    %983 = vmatpush.msra.mxu0 %v963
    %984 = vmatpush.msra.mxu0 %v962
    %985 = vmatpush.msra.mxu0 %v961
    %986 = vmatpush.msra.mxu0 %v960
    %987 = vmatpush.msra.mxu0 %v959
    %988 = vmatpush.msra.mxu0 %v958
    %989 = vmatpush.msra.mxu0 %v957
    %990 = vmatpush.msra.mxu0 %v956
    %991 = vmatpush.msra.mxu0 %v955
    %992 = vmatmul.f32.gmra.mxu0 %v971
    %v993 = vpop.f32.mrf.mxu0
    %v994 = vadd.f32 %v967, %v993
    %995 = vmatmul.f32.gmra.mxu0 %v974
    %v996 = vpop.f32.mrf.mxu0
    %v997 = vadd.f32 %v967, %v996
    %998 = vdwg.mxu0
    %v999 = vadd.f32 %v913, %v994
    %v1000 = vadd.f32 %v914, %v997
    %v1001 = vld [vmem:[%s37] sm:$0x1]
    %v1003 = vperm.slane %v1001, 0
    %v1005 = vmul.f32 %v999, %v1003
    %v1006 = vmul.f32 %v1000, %v1003
    %v1007 = vld [vmem:[%s39] sm:$0x1]
    %v1009 = vperm.slane %v1007, 0
    %v1011 = vadd.f32 %v1005, %v1009
    %v1012 = vadd.f32 %v1006, %v1009
    %v1013 = vld [vmem:[%s49] sm:$0xff]
    %v1014 = vld [vmem:[%s49 + $0x8] sm:$0xff]
    %v1015 = vld [vmem:[%s49 + $0x10] sm:$0xff]
    %v1016 = vld [vmem:[%s49 + $0x18] sm:$0xff]
    %v1017 = vld [vmem:[%s49 + $0x20] sm:$0xff]
    %v1018 = vld [vmem:[%s51] sm:$0x1]
    %v1020 = vperm.slane %v1018, 0
    %v1023 = vsel %vm345, %v1011, 0
    %v1026 = vsel %vm345, %v1012, 0
    %1028 = vmatpush.msra.mxu0 0.0
    %1029 = vmatpush.msra.mxu0 0.0
    %1030 = vmatpush.msra.mxu0 0.0
    %1031 = vmatpush.msra.mxu0 0.0
    %1032 = vmatpush.msra.mxu0 0.0
    %1033 = vmatpush.msra.mxu0 0.0
    %1034 = vmatpush.msra.mxu0 0.0
    %1035 = vmatpush.msra.mxu0 0.0
    %1036 = vmatpush.msra.mxu0 0.0
    %1037 = vmatpush.msra.mxu0 0.0
    %1038 = vmatpush.msra.mxu0 0.0
    %1039 = vmatpush.msra.mxu0 %v1017
    %1040 = vmatpush.msra.mxu0 %v1016
    %1041 = vmatpush.msra.mxu0 %v1015
    %1042 = vmatpush.msra.mxu0 %v1014
    %1043 = vmatpush.msra.mxu0 %v1013
    %1044 = vmatmul.f32.gmra.mxu0 %v1023
    %v1045 = vpop.f32.mrf.mxu0
    %v1046 = vadd.f32 %v1020, %v1045
    %1047 = vmatmul.f32.gmra.mxu0 %v1026
    %v1048 = vpop.f32.mrf.mxu0
    %v1049 = vadd.f32 %v1020, %v1048
    %1050 = vdwg.mxu0
    %v1051 = vld [vmem:[#allocation8] sm:$0xff]
    %v1052 = vld [vmem:[#allocation8 + $0x8] sm:$0xff]
    %v1053 = vld [vmem:[#allocation8 + $0x10] sm:$0xff]
    %v1054 = vld [vmem:[#allocation8 + $0x18] sm:$0xff]
    %vm1055 = vcmask 261120
    %v1057 = vsel %vm1055, %v1046, 0
    %v1060 = vsel %vm1055, %v1049, 0
    %1062 = vmatpush.msra.mxu0 0.0
    %1063 = vmatpush.msra.mxu0 0.0
    %1064 = vmatpush.msra.mxu0 0.0
    %1065 = vmatpush.msra.mxu0 0.0
    %1066 = vmatpush.msra.mxu0 0.0
    %1067 = vmatpush.msra.mxu0 0.0
    %1068 = vmatpush.msra.mxu0 0.0
    %1069 = vmatpush.msra.mxu0 0.0
    %1070 = vmatpush.msra.mxu0 0.0
    %1071 = vmatpush.msra.mxu0 0.0
    %1072 = vmatpush.msra.mxu0 0.0
    %1073 = vmatpush.msra.mxu0 0.0
    %1074 = vmatpush.msra.mxu0 %v1054
    %1075 = vmatpush.msra.mxu0 %v1053
    %1076 = vmatpush.msra.mxu0 %v1052
    %1077 = vmatpush.msra.mxu0 %v1051
    %1078 = vmatmul.f32.gmra.mxu0 %v1057
    %v1079 = vpop.f32.mrf.mxu0
    %v1080 = vadd.f32 0.0, %v1079
    %1081 = vmatmul.f32.gmra.mxu0 %v1060
    %v1082 = vpop.f32.mrf.mxu0
    %v1083 = vadd.f32 0.0, %v1082
    %1084 = vdwg.mxu0
    %v1085 = vld [vmem:[%s57] sm:$0x1]
    %v1087 = vperm.slane %v1085, 0
    %v1089 = vmul.f32 %v1080, %v1087
    %v1090 = vmul.f32 %v1083, %v1087
    %v1091 = vsel %vm1055, %v1089, 0.0
    %1092 = vadd.xlane.f32.xlu0 %v1091
    %v1093 = vpop.xlane.xlu0 %1092
    %v1094 = vsel %vm1055, %v1090, 0.0
    %1095 = vadd.xlane.f32.xlu0 %v1094
    %v1096 = vpop.xlane.xlu0 %1095
    %v1097 = vld [vmem:[%s55] sm:$0x1]
    %v1099 = vsel %vm1055, %v1097, 0
    %v1102 = vsel %vm1055, %v1080, 0
    %v1105 = vsel %vm1055, %v1083, 0
    %1107 = vmatpush.xpose.msra.mxu0 0.0
    %1108 = vmatpush.xpose.msra.mxu0 0.0
    %1109 = vmatpush.xpose.msra.mxu0 0.0
    %1110 = vmatpush.xpose.msra.mxu0 0.0
    %1111 = vmatpush.xpose.msra.mxu0 0.0
    %1112 = vmatpush.xpose.msra.mxu0 0.0
    %1113 = vmatpush.xpose.msra.mxu0 0.0
    %1114 = vmatpush.xpose.msra.mxu0 0.0
    %1115 = vmatpush.xpose.msra.mxu0 0.0
    %1116 = vmatpush.xpose.msra.mxu0 0.0
    %1117 = vmatpush.xpose.msra.mxu0 0.0
    %1118 = vmatpush.xpose.msra.mxu0 0.0
    %1119 = vmatpush.xpose.msra.mxu0 0.0
    %1120 = vmatpush.xpose.msra.mxu0 0.0
    %1121 = vmatpush.xpose.msra.mxu0 %v1105
    %1122 = vmatpush.xpose.msra.mxu0 %v1102
    %1123 = vmatmul.f32.gmra.mxu0 %v1099
    %v1124 = vpop.f32.mrf.mxu0
    %v1125 = vadd.f32 0.0, %v1124
    %1126 = vdwg.mxu0
    %v1127 = vperm.slane %v1125, 0
    %v1128 = vadd.f32 %v1093, %v1127
    %v1129 = vadd.f32 %v1096, %v1127
    %vm1130 = vcmp.gt.f32.partialorder %v1128, 0.0
    %vm1131 = vcmp.gt.f32.partialorder %v1129, 0.0
    %v1132 = vmul.f32 %v1128, 0.2
    %v1133 = vmul.f32 %v1129, 0.2
    %v1134 = vsel %vm1130, %v1128, %v1132
    %v1135 = vsel %vm1131, %v1129, %v1133
    %vm1136 = vcmp.gt.f32.partialorder %v338, 0.0
    %vm1137 = vcmp.gt.f32.partialorder %v339, 0.0
    %v1138 = vsel %vm1136, %v1134, -1e+30
    %v1139 = vsel %vm1137, %v1135, -1e+30
    %v1140 = vsel %vm379, %v1138, -inf
    %1141 = vmax.xlane.f32.xlu0 %v1140
    %v1142 = vpop.xlane.xlu0 %1141
    %v1143 = vsel %vm379, %v1139, -inf
    %1144 = vmax.xlane.f32.xlu0 %v1143
    %v1145 = vpop.xlane.xlu0 %1144
    %v1146 = vsub.f32 %v1138, %v1142
    %v1147 = vsub.f32 %v1139, %v1145
    %v1148 = vmul.f32 %v1146, 1.442695
    %v1149 = vpow.pop %v1148
    %v1150 = vmul.f32 %v1147, 1.442695
    %v1151 = vpow.pop %v1150
    %v1152 = vsel %vm379, %v1149, 0.0
    %1153 = vadd.xlane.f32.xlu0 %v1152
    %v1154 = vpop.xlane.xlu0 %1153
    %v1155 = vsel %vm379, %v1151, 0.0
    %1156 = vadd.xlane.f32.xlu0 %v1155
    %v1157 = vpop.xlane.xlu0 %1156
    %v1158 = vrcp.pop %v1154
    %v1159 = vrcp.pop %v1157
    %v1160 = vmul.f32 %v1149, %v1158
    %v1161 = vmul.f32 %v1151, %v1159
    %v1162 = vld [vmem:[%s59] sm:$0x1]
    %v1164 = vperm.slane %v1162, 0
    %v1167 = vsel %vm379, %v1160, 0
    %v1170 = vsel %vm379, %v1161, 0
    %1172 = vmatpush.msra.mxu0 0.0
    %1173 = vmatpush.msra.mxu0 0.0
    %1174 = vmatpush.msra.mxu0 0.0
    %1175 = vmatpush.msra.mxu0 0.0
    %1176 = vmatpush.msra.mxu0 0.0
    %1177 = vmatpush.msra.mxu0 0.0
    %1178 = vmatpush.msra.mxu0 0.0
    %1179 = vmatpush.msra.mxu0 0.0
    %1180 = vmatpush.msra.mxu0 0.0
    %1181 = vmatpush.msra.mxu0 0.0
    %1182 = vmatpush.msra.mxu0 0.0
    %1183 = vmatpush.msra.mxu0 0.0
    %1184 = vmatpush.msra.mxu0 0.0
    %1185 = vmatpush.msra.mxu0 0.0
    %1186 = vmatpush.msra.mxu0 %v1083
    %1187 = vmatpush.msra.mxu0 %v1080
    %1188 = vmatmul.f32.gmra.mxu0 %v1167
    %v1189 = vpop.f32.mrf.mxu0
    %v1190 = vadd.f32 %v1164, %v1189
    %1191 = vmatmul.f32.gmra.mxu0 %v1170
    %v1192 = vpop.f32.mrf.mxu0
    %v1193 = vadd.f32 %v1164, %v1192
    %1194 = vdwg.mxu0
    %v1195 = vld [vmem:[#allocation10] sm:$0xff]
    %v1196 = vld [vmem:[#allocation10 + $0x8] sm:$0xff]
    %v1197 = vld [vmem:[#allocation10 + $0x10] sm:$0xff]
    %v1198 = vld [vmem:[#allocation10 + $0x18] sm:$0xff]
    %v1200 = vsel %vm1055, %v1190, 0
    %v1203 = vsel %vm1055, %v1193, 0
    %1205 = vmatpush.msra.mxu0 0.0
    %1206 = vmatpush.msra.mxu0 0.0
    %1207 = vmatpush.msra.mxu0 0.0
    %1208 = vmatpush.msra.mxu0 0.0
    %1209 = vmatpush.msra.mxu0 0.0
    %1210 = vmatpush.msra.mxu0 0.0
    %1211 = vmatpush.msra.mxu0 0.0
    %1212 = vmatpush.msra.mxu0 0.0
    %1213 = vmatpush.msra.mxu0 0.0
    %1214 = vmatpush.msra.mxu0 0.0
    %1215 = vmatpush.msra.mxu0 0.0
    %1216 = vmatpush.msra.mxu0 0.0
    %1217 = vmatpush.msra.mxu0 %v1198
    %1218 = vmatpush.msra.mxu0 %v1197
    %1219 = vmatpush.msra.mxu0 %v1196
    %1220 = vmatpush.msra.mxu0 %v1195
    %1221 = vmatmul.f32.gmra.mxu0 %v1200
    %v1222 = vpop.f32.mrf.mxu0
    %v1223 = vadd.f32 0.0, %v1222
    %1224 = vmatmul.f32.gmra.mxu0 %v1203
    %v1225 = vpop.f32.mrf.mxu0
    %v1226 = vadd.f32 0.0, %v1225
    %1227 = vdwg.mxu0
    %v1228 = vld [vmem:[%s63] sm:$0x1]
    %v1230 = vperm.slane %v1228, 0
    %v1233 = vsel %vm379, %v336, 0
    %v1236 = vsel %vm379, %v337, 0
    %1238 = vmatpush.msra.mxu0 0.0
    %1239 = vmatpush.msra.mxu0 0.0
    %1240 = vmatpush.msra.mxu0 0.0
    %1241 = vmatpush.msra.mxu0 0.0
    %1242 = vmatpush.msra.mxu0 0.0
    %1243 = vmatpush.msra.mxu0 0.0
    %1244 = vmatpush.msra.mxu0 0.0
    %1245 = vmatpush.msra.mxu0 0.0
    %1246 = vmatpush.msra.mxu0 0.0
    %1247 = vmatpush.msra.mxu0 0.0
    %1248 = vmatpush.msra.mxu0 0.0
    %1249 = vmatpush.msra.mxu0 0.0
    %1250 = vmatpush.msra.mxu0 0.0
    %1251 = vmatpush.msra.mxu0 0.0
    %1252 = vmatpush.msra.mxu0 %v1226
    %1253 = vmatpush.msra.mxu0 %v1223
    %1254 = vmatmul.f32.gmra.mxu0 %v1233
    %v1255 = vpop.f32.mrf.mxu0
    %v1256 = vadd.f32 %v1230, %v1255
    %1257 = vmatmul.f32.gmra.mxu0 %v1236
    %v1258 = vpop.f32.mrf.mxu0
    %v1259 = vadd.f32 %v1230, %v1258
    %1260 = vdwg.mxu0
    %v1261 = vld [vmem:[#allocation11] sm:$0xff]
    %v1262 = vld [vmem:[#allocation11 + $0x8] sm:$0xff]
    %v1263 = vld [vmem:[#allocation11 + $0x10] sm:$0xff]
    %v1264 = vld [vmem:[#allocation11 + $0x18] sm:$0xff]
    %1265 = vmatpush.msra.mxu0 0.0
    %1266 = vmatpush.msra.mxu0 0.0
    %1267 = vmatpush.msra.mxu0 0.0
    %1268 = vmatpush.msra.mxu0 0.0
    %1269 = vmatpush.msra.mxu0 0.0
    %1270 = vmatpush.msra.mxu0 0.0
    %1271 = vmatpush.msra.mxu0 0.0
    %1272 = vmatpush.msra.mxu0 0.0
    %1273 = vmatpush.msra.mxu0 0.0
    %1274 = vmatpush.msra.mxu0 0.0
    %1275 = vmatpush.msra.mxu0 0.0
    %1276 = vmatpush.msra.mxu0 0.0
    %1277 = vmatpush.msra.mxu0 %v1264
    %1278 = vmatpush.msra.mxu0 %v1263
    %1279 = vmatpush.msra.mxu0 %v1262
    %1280 = vmatpush.msra.mxu0 %v1261
    %1281 = vmatmul.f32.gmra.mxu0 %v1200
    %v1282 = vpop.f32.mrf.mxu0
    %v1283 = vadd.f32 0.0, %v1282
    %1284 = vmatmul.f32.gmra.mxu0 %v1203
    %v1285 = vpop.f32.mrf.mxu0
    %v1286 = vadd.f32 0.0, %v1285
    %1287 = vdwg.mxu0
    %v1288 = vld [vmem:[%s67] sm:$0x1]
    %v1290 = vperm.slane %v1288, 0
    %1292 = vmatpush.msra.mxu0 0.0
    %1293 = vmatpush.msra.mxu0 0.0
    %1294 = vmatpush.msra.mxu0 0.0
    %1295 = vmatpush.msra.mxu0 0.0
    %1296 = vmatpush.msra.mxu0 0.0
    %1297 = vmatpush.msra.mxu0 0.0
    %1298 = vmatpush.msra.mxu0 0.0
    %1299 = vmatpush.msra.mxu0 0.0
    %1300 = vmatpush.msra.mxu0 0.0
    %1301 = vmatpush.msra.mxu0 0.0
    %1302 = vmatpush.msra.mxu0 0.0
    %1303 = vmatpush.msra.mxu0 0.0
    %1304 = vmatpush.msra.mxu0 0.0
    %1305 = vmatpush.msra.mxu0 0.0
    %1306 = vmatpush.msra.mxu0 %v1286
    %1307 = vmatpush.msra.mxu0 %v1283
    %1308 = vmatmul.f32.gmra.mxu0 %v381
    %v1309 = vpop.f32.mrf.mxu0
    %v1310 = vadd.f32 %v1290, %v1309
    %1311 = vmatmul.f32.gmra.mxu0 %v384
    %v1312 = vpop.f32.mrf.mxu0
    %v1313 = vadd.f32 %v1290, %v1312
    %1314 = vdwg.mxu0
    %v1315 = vadd.f32 %v1310, %v1256
    %v1316 = vadd.f32 %v1313, %v1259
    %v1317 = vld [vmem:[%s69] sm:$0x1]
    %v1319 = vperm.slane %v1317, 0
    %v1321 = vmul.f32 %v1315, %v1319
    %v1322 = vmul.f32 %v1316, %v1319
    %v1323 = vld [vmem:[%s71] sm:$0x1]
    %v1325 = vperm.slane %v1323, 0
    %v1327 = vadd.f32 %v1321, %v1325
    %v1328 = vadd.f32 %v1322, %v1325
    %s1329 = scalar_lea.vmem %s1, 16
    %v1330 = vld [vmem:[%s1329] sm:$0xff]
    %v1331 = vld [vmem:[%s1329 + $0x8] sm:$0xff]
    %s1332 = scalar_lea.vmem %s5, 16
    %v1333 = vld [vmem:[%s1332] sm:$0xff]
    %v1334 = vld [vmem:[%s1332 + $0x8] sm:$0xff]
    %s1335 = scalar_lea.vmem [#allocation2], 16
    %v1336 = vld [vmem:[%s1335] sm:$0xff]
    %v1337 = vld [vmem:[%s1335 + $0x8] sm:$0xff]
    %s1338 = scalar_lea.vmem [#allocation5], 16
    %v1339 = vld [vmem:[%s1338] sm:$0xff]
    %v1340 = vld [vmem:[%s1338 + $0x8] sm:$0xff]
    %s1341 = scalar_lea.vmem %s15, 40
    %v1342 = vld [vmem:[%s1341] sm:$0xff]
    %v1343 = vld [vmem:[%s1341 + $0x8] sm:$0xff]
    %v1344 = vld [vmem:[%s1341 + $0x10] sm:$0xff]
    %v1345 = vld [vmem:[%s1341 + $0x18] sm:$0xff]
    %v1346 = vld [vmem:[%s1341 + $0x20] sm:$0xff]
    %v1348 = vsel %vm345, %v1330, 0
    %v1351 = vsel %vm345, %v1331, 0
    %1353 = vmatpush.msra.mxu0 0.0
    %1354 = vmatpush.msra.mxu0 0.0
    %1355 = vmatpush.msra.mxu0 0.0
    %1356 = vmatpush.msra.mxu0 0.0
    %1357 = vmatpush.msra.mxu0 0.0
    %1358 = vmatpush.msra.mxu0 0.0
    %1359 = vmatpush.msra.mxu0 0.0
    %1360 = vmatpush.msra.mxu0 0.0
    %1361 = vmatpush.msra.mxu0 0.0
    %1362 = vmatpush.msra.mxu0 0.0
    %1363 = vmatpush.msra.mxu0 0.0
    %1364 = vmatpush.msra.mxu0 %v1346
    %1365 = vmatpush.msra.mxu0 %v1345
    %1366 = vmatpush.msra.mxu0 %v1344
    %1367 = vmatpush.msra.mxu0 %v1343
    %1368 = vmatpush.msra.mxu0 %v1342
    %1369 = vmatmul.f32.gmra.mxu0 %v1348
    %v1370 = vpop.f32.mrf.mxu0
    %v1371 = vadd.f32 0.0, %v1370
    %1372 = vmatmul.f32.gmra.mxu0 %v1351
    %v1373 = vpop.f32.mrf.mxu0
    %v1374 = vadd.f32 0.0, %v1373
    %1375 = vdwg.mxu0
    %s1376 = scalar_lea.vmem %s17, 1
    %v1377 = vld [vmem:[%s1376] sm:$0x1]
    %v1379 = vperm.slane %v1377, 0
    %v1382 = vsel %vm379, %v1333, 0
    %v1385 = vsel %vm379, %v1334, 0
    %1387 = vmatpush.msra.mxu0 0.0
    %1388 = vmatpush.msra.mxu0 0.0
    %1389 = vmatpush.msra.mxu0 0.0
    %1390 = vmatpush.msra.mxu0 0.0
    %1391 = vmatpush.msra.mxu0 0.0
    %1392 = vmatpush.msra.mxu0 0.0
    %1393 = vmatpush.msra.mxu0 0.0
    %1394 = vmatpush.msra.mxu0 0.0
    %1395 = vmatpush.msra.mxu0 0.0
    %1396 = vmatpush.msra.mxu0 0.0
    %1397 = vmatpush.msra.mxu0 0.0
    %1398 = vmatpush.msra.mxu0 0.0
    %1399 = vmatpush.msra.mxu0 0.0
    %1400 = vmatpush.msra.mxu0 0.0
    %1401 = vmatpush.msra.mxu0 %v1374
    %1402 = vmatpush.msra.mxu0 %v1371
    %1403 = vmatmul.f32.gmra.mxu0 %v1382
    %v1404 = vpop.f32.mrf.mxu0
    %v1405 = vadd.f32 %v1379, %v1404
    %1406 = vmatmul.f32.gmra.mxu0 %v1385
    %v1407 = vpop.f32.mrf.mxu0
    %v1408 = vadd.f32 %v1379, %v1407
    %1409 = vdwg.mxu0
    %v1410 = vadd.f32 %v1405, %v1330
    %v1411 = vadd.f32 %v1408, %v1331
    %s1412 = scalar_lea.vmem %s29, 1
    %v1413 = vld [vmem:[%s1412] sm:$0x1]
    %v1415 = vperm.slane %v1413, 0
    %v1417 = vmul.f32 %v1410, %v1415
    %v1418 = vmul.f32 %v1411, %v1415
    %s1419 = scalar_lea.vmem %s31, 1
    %v1420 = vld [vmem:[%s1419] sm:$0x1]
    %v1422 = vperm.slane %v1420, 0
    %v1424 = vadd.f32 %v1417, %v1422
    %v1425 = vadd.f32 %v1418, %v1422
    %s1426 = scalar_lea.vmem %s19, 40
    %v1427 = vld [vmem:[%s1426] sm:$0xff]
    %v1428 = vld [vmem:[%s1426 + $0x8] sm:$0xff]
    %v1429 = vld [vmem:[%s1426 + $0x10] sm:$0xff]
    %v1430 = vld [vmem:[%s1426 + $0x18] sm:$0xff]
    %v1431 = vld [vmem:[%s1426 + $0x20] sm:$0xff]
    %1432 = vmatpush.msra.mxu0 0.0
    %1433 = vmatpush.msra.mxu0 0.0
    %1434 = vmatpush.msra.mxu0 0.0
    %1435 = vmatpush.msra.mxu0 0.0
    %1436 = vmatpush.msra.mxu0 0.0
    %1437 = vmatpush.msra.mxu0 0.0
    %1438 = vmatpush.msra.mxu0 0.0
    %1439 = vmatpush.msra.mxu0 0.0
    %1440 = vmatpush.msra.mxu0 0.0
    %1441 = vmatpush.msra.mxu0 0.0
    %1442 = vmatpush.msra.mxu0 0.0
    %1443 = vmatpush.msra.mxu0 %v1431
    %1444 = vmatpush.msra.mxu0 %v1430
    %1445 = vmatpush.msra.mxu0 %v1429
    %1446 = vmatpush.msra.mxu0 %v1428
    %1447 = vmatpush.msra.mxu0 %v1427
    %1448 = vmatmul.f32.gmra.mxu0 %v1348
    %v1449 = vpop.f32.mrf.mxu0
    %v1450 = vadd.f32 0.0, %v1449
    %1451 = vmatmul.f32.gmra.mxu0 %v1351
    %v1452 = vpop.f32.mrf.mxu0
    %v1453 = vadd.f32 0.0, %v1452
    %1454 = vdwg.mxu0
    %s1455 = scalar_lea.vmem %s21, 40
    %v1456 = vld [vmem:[%s1455] sm:$0xff]
    %v1457 = vld [vmem:[%s1455 + $0x8] sm:$0xff]
    %v1458 = vld [vmem:[%s1455 + $0x10] sm:$0xff]
    %v1459 = vld [vmem:[%s1455 + $0x18] sm:$0xff]
    %v1460 = vld [vmem:[%s1455 + $0x20] sm:$0xff]
    %1461 = vmatpush.msra.mxu0 0.0
    %1462 = vmatpush.msra.mxu0 0.0
    %1463 = vmatpush.msra.mxu0 0.0
    %1464 = vmatpush.msra.mxu0 0.0
    %1465 = vmatpush.msra.mxu0 0.0
    %1466 = vmatpush.msra.mxu0 0.0
    %1467 = vmatpush.msra.mxu0 0.0
    %1468 = vmatpush.msra.mxu0 0.0
    %1469 = vmatpush.msra.mxu0 0.0
    %1470 = vmatpush.msra.mxu0 0.0
    %1471 = vmatpush.msra.mxu0 0.0
    %1472 = vmatpush.msra.mxu0 %v1460
    %1473 = vmatpush.msra.mxu0 %v1459
    %1474 = vmatpush.msra.mxu0 %v1458
    %1475 = vmatpush.msra.mxu0 %v1457
    %1476 = vmatpush.msra.mxu0 %v1456
    %1477 = vmatmul.f32.gmra.mxu0 %v1348
    %v1478 = vpop.f32.mrf.mxu0
    %v1479 = vadd.f32 0.0, %v1478
    %1480 = vmatmul.f32.gmra.mxu0 %v1351
    %v1481 = vpop.f32.mrf.mxu0
    %v1482 = vadd.f32 0.0, %v1481
    %1483 = vdwg.mxu0
    %s1484 = scalar_lea.vmem %s23, 40
    %v1485 = vld [vmem:[%s1484] sm:$0xff]
    %v1486 = vld [vmem:[%s1484 + $0x8] sm:$0xff]
    %v1487 = vld [vmem:[%s1484 + $0x10] sm:$0xff]
    %v1488 = vld [vmem:[%s1484 + $0x18] sm:$0xff]
    %v1489 = vld [vmem:[%s1484 + $0x20] sm:$0xff]
    %1490 = vmatpush.msra.mxu0 0.0
    %1491 = vmatpush.msra.mxu0 0.0
    %1492 = vmatpush.msra.mxu0 0.0
    %1493 = vmatpush.msra.mxu0 0.0
    %1494 = vmatpush.msra.mxu0 0.0
    %1495 = vmatpush.msra.mxu0 0.0
    %1496 = vmatpush.msra.mxu0 0.0
    %1497 = vmatpush.msra.mxu0 0.0
    %1498 = vmatpush.msra.mxu0 0.0
    %1499 = vmatpush.msra.mxu0 0.0
    %1500 = vmatpush.msra.mxu0 0.0
    %1501 = vmatpush.msra.mxu0 %v1489
    %1502 = vmatpush.msra.mxu0 %v1488
    %1503 = vmatpush.msra.mxu0 %v1487
    %1504 = vmatpush.msra.mxu0 %v1486
    %1505 = vmatpush.msra.mxu0 %v1485
    %1506 = vmatmul.f32.gmra.mxu0 %v1348
    %v1507 = vpop.f32.mrf.mxu0
    %v1508 = vadd.f32 0.0, %v1507
    %1509 = vmatmul.f32.gmra.mxu0 %v1351
    %v1510 = vpop.f32.mrf.mxu0
    %v1511 = vadd.f32 0.0, %v1510
    %1512 = vdwg.mxu0
    %v1513 = vmul.f32 %v1450, %v314
    %v1514 = vmul.f32 %v1453, %v314
    %v1516 = vsel %vm345, %v1513, 0
    %v1519 = vsel %vm345, %v1514, 0
    %v1522 = vsel %vm345, %v1479, 0
    %v1525 = vsel %vm345, %v1482, 0
    %1527 = vmatpush.xpose.msra.mxu0 0.0
    %1528 = vmatpush.xpose.msra.mxu0 0.0
    %1529 = vmatpush.xpose.msra.mxu0 0.0
    %1530 = vmatpush.xpose.msra.mxu0 0.0
    %1531 = vmatpush.xpose.msra.mxu0 0.0
    %1532 = vmatpush.xpose.msra.mxu0 0.0
    %1533 = vmatpush.xpose.msra.mxu0 0.0
    %1534 = vmatpush.xpose.msra.mxu0 0.0
    %1535 = vmatpush.xpose.msra.mxu0 0.0
    %1536 = vmatpush.xpose.msra.mxu0 0.0
    %1537 = vmatpush.xpose.msra.mxu0 0.0
    %1538 = vmatpush.xpose.msra.mxu0 0.0
    %1539 = vmatpush.xpose.msra.mxu0 0.0
    %1540 = vmatpush.xpose.msra.mxu0 0.0
    %1541 = vmatpush.xpose.msra.mxu0 %v1525
    %1542 = vmatpush.xpose.msra.mxu0 %v1522
    %1543 = vmatmul.f32.gmra.mxu0 %v1516
    %v1544 = vpop.f32.mrf.mxu0
    %v1545 = vadd.f32 0.0, %v1544
    %1546 = vmatmul.f32.gmra.mxu0 %v1519
    %v1547 = vpop.f32.mrf.mxu0
    %v1548 = vadd.f32 0.0, %v1547
    %1549 = vdwg.mxu0
    %v1550 = vmul.f32 %v1545, 0.31622776
    %v1551 = vmul.f32 %v1548, 0.31622776
    %v1552 = vsel %vm379, %v1550, -inf
    %1553 = vmax.xlane.f32.xlu0 %v1552
    %v1554 = vpop.xlane.xlu0 %1553
    %v1555 = vsel %vm379, %v1551, -inf
    %1556 = vmax.xlane.f32.xlu0 %v1555
    %v1557 = vpop.xlane.xlu0 %1556
    %v1558 = vsub.f32 %v1550, %v1554
    %v1559 = vsub.f32 %v1551, %v1557
    %v1560 = vmul.f32 %v1558, 1.442695
    %v1561 = vpow.pop %v1560
    %v1562 = vmul.f32 %v1559, 1.442695
    %v1563 = vpow.pop %v1562
    %v1564 = vsel %vm379, %v1561, 0.0
    %1565 = vadd.xlane.f32.xlu0 %v1564
    %v1566 = vpop.xlane.xlu0 %1565
    %v1567 = vsel %vm379, %v1563, 0.0
    %1568 = vadd.xlane.f32.xlu0 %v1567
    %v1569 = vpop.xlane.xlu0 %1568
    %v1570 = vrcp.pop %v1566
    %v1571 = vrcp.pop %v1569
    %v1572 = vmul.f32 %v1561, %v1570
    %v1573 = vmul.f32 %v1563, %v1571
    %v1574 = vmul.f32 %v1508, %v314
    %v1575 = vmul.f32 %v1511, %v314
    %v1576 = vmul.f32 %v1450, %v319
    %v1577 = vmul.f32 %v1453, %v319
    %v1579 = vsel %vm345, %v1576, 0
    %v1582 = vsel %vm345, %v1577, 0
    %1584 = vmatpush.xpose.msra.mxu0 0.0
    %1585 = vmatpush.xpose.msra.mxu0 0.0
    %1586 = vmatpush.xpose.msra.mxu0 0.0
    %1587 = vmatpush.xpose.msra.mxu0 0.0
    %1588 = vmatpush.xpose.msra.mxu0 0.0
    %1589 = vmatpush.xpose.msra.mxu0 0.0
    %1590 = vmatpush.xpose.msra.mxu0 0.0
    %1591 = vmatpush.xpose.msra.mxu0 0.0
    %1592 = vmatpush.xpose.msra.mxu0 0.0
    %1593 = vmatpush.xpose.msra.mxu0 0.0
    %1594 = vmatpush.xpose.msra.mxu0 0.0
    %1595 = vmatpush.xpose.msra.mxu0 0.0
    %1596 = vmatpush.xpose.msra.mxu0 0.0
    %1597 = vmatpush.xpose.msra.mxu0 0.0
    %1598 = vmatpush.xpose.msra.mxu0 %v1525
    %1599 = vmatpush.xpose.msra.mxu0 %v1522
    %1600 = vmatmul.f32.gmra.mxu0 %v1579
    %v1601 = vpop.f32.mrf.mxu0
    %v1602 = vadd.f32 0.0, %v1601
    %1603 = vmatmul.f32.gmra.mxu0 %v1582
    %v1604 = vpop.f32.mrf.mxu0
    %v1605 = vadd.f32 0.0, %v1604
    %1606 = vdwg.mxu0
    %v1607 = vmul.f32 %v1602, 0.31622776
    %v1608 = vmul.f32 %v1605, 0.31622776
    %v1609 = vsel %vm379, %v1607, -inf
    %1610 = vmax.xlane.f32.xlu0 %v1609
    %v1611 = vpop.xlane.xlu0 %1610
    %v1612 = vsel %vm379, %v1608, -inf
    %1613 = vmax.xlane.f32.xlu0 %v1612
    %v1614 = vpop.xlane.xlu0 %1613
    %v1615 = vsub.f32 %v1607, %v1611
    %v1616 = vsub.f32 %v1608, %v1614
    %v1617 = vmul.f32 %v1615, 1.442695
    %v1618 = vpow.pop %v1617
    %v1619 = vmul.f32 %v1616, 1.442695
    %v1620 = vpow.pop %v1619
    %v1621 = vsel %vm379, %v1618, 0.0
    %1622 = vadd.xlane.f32.xlu0 %v1621
    %v1623 = vpop.xlane.xlu0 %1622
    %v1624 = vsel %vm379, %v1620, 0.0
    %1625 = vadd.xlane.f32.xlu0 %v1624
    %v1626 = vpop.xlane.xlu0 %1625
    %v1627 = vrcp.pop %v1623
    %v1628 = vrcp.pop %v1626
    %v1629 = vmul.f32 %v1618, %v1627
    %v1630 = vmul.f32 %v1620, %v1628
    %v1631 = vmul.f32 %v1508, %v319
    %v1632 = vmul.f32 %v1511, %v319
    %v1634 = vsel %vm379, %v1629, 0
    %v1637 = vsel %vm379, %v1630, 0
    %1639 = vmatpush.msra.mxu0 0.0
    %1640 = vmatpush.msra.mxu0 0.0
    %1641 = vmatpush.msra.mxu0 0.0
    %1642 = vmatpush.msra.mxu0 0.0
    %1643 = vmatpush.msra.mxu0 0.0
    %1644 = vmatpush.msra.mxu0 0.0
    %1645 = vmatpush.msra.mxu0 0.0
    %1646 = vmatpush.msra.mxu0 0.0
    %1647 = vmatpush.msra.mxu0 0.0
    %1648 = vmatpush.msra.mxu0 0.0
    %1649 = vmatpush.msra.mxu0 0.0
    %1650 = vmatpush.msra.mxu0 0.0
    %1651 = vmatpush.msra.mxu0 0.0
    %1652 = vmatpush.msra.mxu0 0.0
    %1653 = vmatpush.msra.mxu0 %v1632
    %1654 = vmatpush.msra.mxu0 %v1631
    %1655 = vmatmul.f32.gmra.mxu0 %v1634
    %v1656 = vpop.f32.mrf.mxu0
    %v1657 = vadd.f32 0.0, %v1656
    %1658 = vmatmul.f32.gmra.mxu0 %v1637
    %v1659 = vpop.f32.mrf.mxu0
    %v1660 = vadd.f32 0.0, %v1659
    %1661 = vdwg.mxu0
    %v1663 = vsel %vm379, %v1572, 0
    %v1666 = vsel %vm379, %v1573, 0
    %1668 = vmatpush.msra.mxu0 0.0
    %1669 = vmatpush.msra.mxu0 0.0
    %1670 = vmatpush.msra.mxu0 0.0
    %1671 = vmatpush.msra.mxu0 0.0
    %1672 = vmatpush.msra.mxu0 0.0
    %1673 = vmatpush.msra.mxu0 0.0
    %1674 = vmatpush.msra.mxu0 0.0
    %1675 = vmatpush.msra.mxu0 0.0
    %1676 = vmatpush.msra.mxu0 0.0
    %1677 = vmatpush.msra.mxu0 0.0
    %1678 = vmatpush.msra.mxu0 0.0
    %1679 = vmatpush.msra.mxu0 0.0
    %1680 = vmatpush.msra.mxu0 0.0
    %1681 = vmatpush.msra.mxu0 0.0
    %1682 = vmatpush.msra.mxu0 %v1575
    %1683 = vmatpush.msra.mxu0 %v1574
    %1684 = vmatmul.f32.gmra.mxu0 %v1663
    %v1685 = vpop.f32.mrf.mxu0
    %v1686 = vadd.f32 %v1657, %v1685
    %1687 = vmatmul.f32.gmra.mxu0 %v1666
    %v1688 = vpop.f32.mrf.mxu0
    %v1689 = vadd.f32 %v1660, %v1688
    %1690 = vdwg.mxu0
    %v1691 = vmul.f32 %v1450, %v324
    %v1692 = vmul.f32 %v1453, %v324
    %v1694 = vsel %vm345, %v1691, 0
    %v1697 = vsel %vm345, %v1692, 0
    %1699 = vmatpush.xpose.msra.mxu0 0.0
    %1700 = vmatpush.xpose.msra.mxu0 0.0
    %1701 = vmatpush.xpose.msra.mxu0 0.0
    %1702 = vmatpush.xpose.msra.mxu0 0.0
    %1703 = vmatpush.xpose.msra.mxu0 0.0
    %1704 = vmatpush.xpose.msra.mxu0 0.0
    %1705 = vmatpush.xpose.msra.mxu0 0.0
    %1706 = vmatpush.xpose.msra.mxu0 0.0
    %1707 = vmatpush.xpose.msra.mxu0 0.0
    %1708 = vmatpush.xpose.msra.mxu0 0.0
    %1709 = vmatpush.xpose.msra.mxu0 0.0
    %1710 = vmatpush.xpose.msra.mxu0 0.0
    %1711 = vmatpush.xpose.msra.mxu0 0.0
    %1712 = vmatpush.xpose.msra.mxu0 0.0
    %1713 = vmatpush.xpose.msra.mxu0 %v1525
    %1714 = vmatpush.xpose.msra.mxu0 %v1522
    %1715 = vmatmul.f32.gmra.mxu0 %v1694
    %v1716 = vpop.f32.mrf.mxu0
    %v1717 = vadd.f32 0.0, %v1716
    %1718 = vmatmul.f32.gmra.mxu0 %v1697
    %v1719 = vpop.f32.mrf.mxu0
    %v1720 = vadd.f32 0.0, %v1719
    %1721 = vdwg.mxu0
    %v1722 = vmul.f32 %v1717, 0.31622776
    %v1723 = vmul.f32 %v1720, 0.31622776
    %v1724 = vsel %vm379, %v1722, -inf
    %1725 = vmax.xlane.f32.xlu0 %v1724
    %v1726 = vpop.xlane.xlu0 %1725
    %v1727 = vsel %vm379, %v1723, -inf
    %1728 = vmax.xlane.f32.xlu0 %v1727
    %v1729 = vpop.xlane.xlu0 %1728
    %v1730 = vsub.f32 %v1722, %v1726
    %v1731 = vsub.f32 %v1723, %v1729
    %v1732 = vmul.f32 %v1730, 1.442695
    %v1733 = vpow.pop %v1732
    %v1734 = vmul.f32 %v1731, 1.442695
    %v1735 = vpow.pop %v1734
    %v1736 = vsel %vm379, %v1733, 0.0
    %1737 = vadd.xlane.f32.xlu0 %v1736
    %v1738 = vpop.xlane.xlu0 %1737
    %v1739 = vsel %vm379, %v1735, 0.0
    %1740 = vadd.xlane.f32.xlu0 %v1739
    %v1741 = vpop.xlane.xlu0 %1740
    %v1742 = vrcp.pop %v1738
    %v1743 = vrcp.pop %v1741
    %v1744 = vmul.f32 %v1733, %v1742
    %v1745 = vmul.f32 %v1735, %v1743
    %v1746 = vmul.f32 %v1508, %v324
    %v1747 = vmul.f32 %v1511, %v324
    %v1749 = vsel %vm379, %v1744, 0
    %v1752 = vsel %vm379, %v1745, 0
    %1754 = vmatpush.msra.mxu0 0.0
    %1755 = vmatpush.msra.mxu0 0.0
    %1756 = vmatpush.msra.mxu0 0.0
    %1757 = vmatpush.msra.mxu0 0.0
    %1758 = vmatpush.msra.mxu0 0.0
    %1759 = vmatpush.msra.mxu0 0.0
    %1760 = vmatpush.msra.mxu0 0.0
    %1761 = vmatpush.msra.mxu0 0.0
    %1762 = vmatpush.msra.mxu0 0.0
    %1763 = vmatpush.msra.mxu0 0.0
    %1764 = vmatpush.msra.mxu0 0.0
    %1765 = vmatpush.msra.mxu0 0.0
    %1766 = vmatpush.msra.mxu0 0.0
    %1767 = vmatpush.msra.mxu0 0.0
    %1768 = vmatpush.msra.mxu0 %v1747
    %1769 = vmatpush.msra.mxu0 %v1746
    %1770 = vmatmul.f32.gmra.mxu0 %v1749
    %v1771 = vpop.f32.mrf.mxu0
    %v1772 = vadd.f32 0.0, %v1771
    %1773 = vmatmul.f32.gmra.mxu0 %v1752
    %v1774 = vpop.f32.mrf.mxu0
    %v1775 = vadd.f32 0.0, %v1774
    %1776 = vdwg.mxu0
    %v1777 = vadd.f32 %v1686, %v1772
    %v1778 = vadd.f32 %v1689, %v1775
    %v1779 = vmul.f32 %v1450, %v329
    %v1780 = vmul.f32 %v1453, %v329
    %v1782 = vsel %vm345, %v1779, 0
    %v1785 = vsel %vm345, %v1780, 0
    %1787 = vmatpush.xpose.msra.mxu0 0.0
    %1788 = vmatpush.xpose.msra.mxu0 0.0
    %1789 = vmatpush.xpose.msra.mxu0 0.0
    %1790 = vmatpush.xpose.msra.mxu0 0.0
    %1791 = vmatpush.xpose.msra.mxu0 0.0
    %1792 = vmatpush.xpose.msra.mxu0 0.0
    %1793 = vmatpush.xpose.msra.mxu0 0.0
    %1794 = vmatpush.xpose.msra.mxu0 0.0
    %1795 = vmatpush.xpose.msra.mxu0 0.0
    %1796 = vmatpush.xpose.msra.mxu0 0.0
    %1797 = vmatpush.xpose.msra.mxu0 0.0
    %1798 = vmatpush.xpose.msra.mxu0 0.0
    %1799 = vmatpush.xpose.msra.mxu0 0.0
    %1800 = vmatpush.xpose.msra.mxu0 0.0
    %1801 = vmatpush.xpose.msra.mxu0 %v1525
    %1802 = vmatpush.xpose.msra.mxu0 %v1522
    %1803 = vmatmul.f32.gmra.mxu0 %v1782
    %v1804 = vpop.f32.mrf.mxu0
    %v1805 = vadd.f32 0.0, %v1804
    %1806 = vmatmul.f32.gmra.mxu0 %v1785
    %v1807 = vpop.f32.mrf.mxu0
    %v1808 = vadd.f32 0.0, %v1807
    %1809 = vdwg.mxu0
    %v1810 = vmul.f32 %v1805, 0.31622776
    %v1811 = vmul.f32 %v1808, 0.31622776
    %v1812 = vsel %vm379, %v1810, -inf
    %1813 = vmax.xlane.f32.xlu0 %v1812
    %v1814 = vpop.xlane.xlu0 %1813
    %v1815 = vsel %vm379, %v1811, -inf
    %1816 = vmax.xlane.f32.xlu0 %v1815
    %v1817 = vpop.xlane.xlu0 %1816
    %v1818 = vsub.f32 %v1810, %v1814
    %v1819 = vsub.f32 %v1811, %v1817
    %v1820 = vmul.f32 %v1818, 1.442695
    %v1821 = vpow.pop %v1820
    %v1822 = vmul.f32 %v1819, 1.442695
    %v1823 = vpow.pop %v1822
    %v1824 = vsel %vm379, %v1821, 0.0
    %1825 = vadd.xlane.f32.xlu0 %v1824
    %v1826 = vpop.xlane.xlu0 %1825
    %v1827 = vsel %vm379, %v1823, 0.0
    %1828 = vadd.xlane.f32.xlu0 %v1827
    %v1829 = vpop.xlane.xlu0 %1828
    %v1830 = vrcp.pop %v1826
    %v1831 = vrcp.pop %v1829
    %v1832 = vmul.f32 %v1821, %v1830
    %v1833 = vmul.f32 %v1823, %v1831
    %v1834 = vmul.f32 %v1508, %v329
    %v1835 = vmul.f32 %v1511, %v329
    %v1837 = vsel %vm379, %v1832, 0
    %v1840 = vsel %vm379, %v1833, 0
    %1842 = vmatpush.msra.mxu0 0.0
    %1843 = vmatpush.msra.mxu0 0.0
    %1844 = vmatpush.msra.mxu0 0.0
    %1845 = vmatpush.msra.mxu0 0.0
    %1846 = vmatpush.msra.mxu0 0.0
    %1847 = vmatpush.msra.mxu0 0.0
    %1848 = vmatpush.msra.mxu0 0.0
    %1849 = vmatpush.msra.mxu0 0.0
    %1850 = vmatpush.msra.mxu0 0.0
    %1851 = vmatpush.msra.mxu0 0.0
    %1852 = vmatpush.msra.mxu0 0.0
    %1853 = vmatpush.msra.mxu0 0.0
    %1854 = vmatpush.msra.mxu0 0.0
    %1855 = vmatpush.msra.mxu0 0.0
    %1856 = vmatpush.msra.mxu0 %v1835
    %1857 = vmatpush.msra.mxu0 %v1834
    %1858 = vmatmul.f32.gmra.mxu0 %v1837
    %v1859 = vpop.f32.mrf.mxu0
    %v1860 = vadd.f32 0.0, %v1859
    %1861 = vmatmul.f32.gmra.mxu0 %v1840
    %v1862 = vpop.f32.mrf.mxu0
    %v1863 = vadd.f32 0.0, %v1862
    %1864 = vdwg.mxu0
    %v1865 = vadd.f32 %v1777, %v1860
    %v1866 = vadd.f32 %v1778, %v1863
    %s1867 = scalar_lea.vmem %s25, 40
    %v1868 = vld [vmem:[%s1867] sm:$0xff]
    %v1869 = vld [vmem:[%s1867 + $0x8] sm:$0xff]
    %v1870 = vld [vmem:[%s1867 + $0x10] sm:$0xff]
    %v1871 = vld [vmem:[%s1867 + $0x18] sm:$0xff]
    %v1872 = vld [vmem:[%s1867 + $0x20] sm:$0xff]
    %s1873 = scalar_lea.vmem %s27, 1
    %v1874 = vld [vmem:[%s1873] sm:$0x1]
    %v1876 = vperm.slane %v1874, 0
    %v1879 = vsel %vm345, %v1865, 0
    %v1882 = vsel %vm345, %v1866, 0
    %1884 = vmatpush.msra.mxu0 0.0
    %1885 = vmatpush.msra.mxu0 0.0
    %1886 = vmatpush.msra.mxu0 0.0
    %1887 = vmatpush.msra.mxu0 0.0
    %1888 = vmatpush.msra.mxu0 0.0
    %1889 = vmatpush.msra.mxu0 0.0
    %1890 = vmatpush.msra.mxu0 0.0
    %1891 = vmatpush.msra.mxu0 0.0
    %1892 = vmatpush.msra.mxu0 0.0
    %1893 = vmatpush.msra.mxu0 0.0
    %1894 = vmatpush.msra.mxu0 0.0
    %1895 = vmatpush.msra.mxu0 %v1872
    %1896 = vmatpush.msra.mxu0 %v1871
    %1897 = vmatpush.msra.mxu0 %v1870
    %1898 = vmatpush.msra.mxu0 %v1869
    %1899 = vmatpush.msra.mxu0 %v1868
    %1900 = vmatmul.f32.gmra.mxu0 %v1879
    %v1901 = vpop.f32.mrf.mxu0
    %v1902 = vadd.f32 %v1876, %v1901
    %1903 = vmatmul.f32.gmra.mxu0 %v1882
    %v1904 = vpop.f32.mrf.mxu0
    %v1905 = vadd.f32 %v1876, %v1904
    %1906 = vdwg.mxu0
    %v1907 = vadd.f32 %v1902, %v1330
    %v1908 = vadd.f32 %v1905, %v1331
    %s1909 = scalar_lea.vmem %s33, 1
    %v1910 = vld [vmem:[%s1909] sm:$0x1]
    %v1912 = vperm.slane %v1910, 0
    %v1914 = vmul.f32 %v1907, %v1912
    %v1915 = vmul.f32 %v1908, %v1912
    %s1916 = scalar_lea.vmem %s35, 1
    %v1917 = vld [vmem:[%s1916] sm:$0x1]
    %v1919 = vperm.slane %v1917, 0
    %v1921 = vadd.f32 %v1914, %v1919
    %v1922 = vadd.f32 %v1915, %v1919
    %v1923 = vadd.f32 %v1424, %v1921
    %v1924 = vadd.f32 %v1425, %v1922
    %s1925 = scalar_lea.vmem [#allocation7], 40
    %v1926 = vld [vmem:[%s1925] sm:$0xff]
    %v1927 = vld [vmem:[%s1925 + $0x8] sm:$0xff]
    %v1928 = vld [vmem:[%s1925 + $0x10] sm:$0xff]
    %v1929 = vld [vmem:[%s1925 + $0x18] sm:$0xff]
    %v1930 = vld [vmem:[%s1925 + $0x20] sm:$0xff]
    %s1931 = scalar_lea.vmem %s43, 1
    %v1932 = vld [vmem:[%s1931] sm:$0x1]
    %v1934 = vperm.slane %v1932, 0
    %v1937 = vsel %vm345, %v1923, 0
    %v1940 = vsel %vm345, %v1924, 0
    %1942 = vmatpush.msra.mxu0 0.0
    %1943 = vmatpush.msra.mxu0 0.0
    %1944 = vmatpush.msra.mxu0 0.0
    %1945 = vmatpush.msra.mxu0 0.0
    %1946 = vmatpush.msra.mxu0 0.0
    %1947 = vmatpush.msra.mxu0 0.0
    %1948 = vmatpush.msra.mxu0 0.0
    %1949 = vmatpush.msra.mxu0 0.0
    %1950 = vmatpush.msra.mxu0 0.0
    %1951 = vmatpush.msra.mxu0 0.0
    %1952 = vmatpush.msra.mxu0 0.0
    %1953 = vmatpush.msra.mxu0 %v1930
    %1954 = vmatpush.msra.mxu0 %v1929
    %1955 = vmatpush.msra.mxu0 %v1928
    %1956 = vmatpush.msra.mxu0 %v1927
    %1957 = vmatpush.msra.mxu0 %v1926
    %1958 = vmatmul.f32.gmra.mxu0 %v1937
    %v1959 = vpop.f32.mrf.mxu0
    %v1960 = vadd.f32 %v1934, %v1959
    %1961 = vmatmul.f32.gmra.mxu0 %v1940
    %v1962 = vpop.f32.mrf.mxu0
    %v1963 = vadd.f32 %v1934, %v1962
    %1964 = vdwg.mxu0
    %v1965 = vmax.f32 %v1960, 0.0
    %v1966 = vmax.f32 %v1963, 0.0
    %s1967 = scalar_lea.vmem %s45, 80
    %v1968 = vld [vmem:[%s1967] sm:$0xff]
    %v1969 = vld [vmem:[%s1967 + $0x8] sm:$0xff]
    %v1970 = vld [vmem:[%s1967 + $0x10] sm:$0xff]
    %v1971 = vld [vmem:[%s1967 + $0x18] sm:$0xff]
    %v1972 = vld [vmem:[%s1967 + $0x20] sm:$0xff]
    %v1973 = vld [vmem:[%s1967 + $0x28] sm:$0xff]
    %v1974 = vld [vmem:[%s1967 + $0x30] sm:$0xff]
    %v1975 = vld [vmem:[%s1967 + $0x38] sm:$0xff]
    %v1976 = vld [vmem:[%s1967 + $0x40] sm:$0xff]
    %v1977 = vld [vmem:[%s1967 + $0x48] sm:$0xff]
    %s1978 = scalar_lea.vmem %s47, 1
    %v1979 = vld [vmem:[%s1978] sm:$0x1]
    %v1981 = vperm.slane %v1979, 0
    %v1984 = vsel %vm969, %v1965, 0
    %v1987 = vsel %vm969, %v1966, 0
    %1989 = vmatpush.msra.mxu0 0.0
    %1990 = vmatpush.msra.mxu0 0.0
    %1991 = vmatpush.msra.mxu0 0.0
    %1992 = vmatpush.msra.mxu0 0.0
    %1993 = vmatpush.msra.mxu0 0.0
    %1994 = vmatpush.msra.mxu0 0.0
    %1995 = vmatpush.msra.mxu0 %v1977
    %1996 = vmatpush.msra.mxu0 %v1976
    %1997 = vmatpush.msra.mxu0 %v1975
    %1998 = vmatpush.msra.mxu0 %v1974
    %1999 = vmatpush.msra.mxu0 %v1973
    %2000 = vmatpush.msra.mxu0 %v1972
    %2001 = vmatpush.msra.mxu0 %v1971
    %2002 = vmatpush.msra.mxu0 %v1970
    %2003 = vmatpush.msra.mxu0 %v1969
    %2004 = vmatpush.msra.mxu0 %v1968
    %2005 = vmatmul.f32.gmra.mxu0 %v1984
    %v2006 = vpop.f32.mrf.mxu0
    %v2007 = vadd.f32 %v1981, %v2006
    %2008 = vmatmul.f32.gmra.mxu0 %v1987
    %v2009 = vpop.f32.mrf.mxu0
    %v2010 = vadd.f32 %v1981, %v2009
    %2011 = vdwg.mxu0
    %v2012 = vadd.f32 %v1923, %v2007
    %v2013 = vadd.f32 %v1924, %v2010
    %s2014 = scalar_lea.vmem %s37, 1
    %v2015 = vld [vmem:[%s2014] sm:$0x1]
    %v2017 = vperm.slane %v2015, 0
    %v2019 = vmul.f32 %v2012, %v2017
    %v2020 = vmul.f32 %v2013, %v2017
    %s2021 = scalar_lea.vmem %s39, 1
    %v2022 = vld [vmem:[%s2021] sm:$0x1]
    %v2024 = vperm.slane %v2022, 0
    %v2026 = vadd.f32 %v2019, %v2024
    %v2027 = vadd.f32 %v2020, %v2024
    %s2028 = scalar_lea.vmem %s49, 40
    %v2029 = vld [vmem:[%s2028] sm:$0xff]
    %v2030 = vld [vmem:[%s2028 + $0x8] sm:$0xff]
    %v2031 = vld [vmem:[%s2028 + $0x10] sm:$0xff]
    %v2032 = vld [vmem:[%s2028 + $0x18] sm:$0xff]
    %v2033 = vld [vmem:[%s2028 + $0x20] sm:$0xff]
    %s2034 = scalar_lea.vmem %s51, 1
    %v2035 = vld [vmem:[%s2034] sm:$0x1]
    %v2037 = vperm.slane %v2035, 0
    %v2040 = vsel %vm345, %v2026, 0
    %v2043 = vsel %vm345, %v2027, 0
    %2045 = vmatpush.msra.mxu0 0.0
    %2046 = vmatpush.msra.mxu0 0.0
    %2047 = vmatpush.msra.mxu0 0.0
    %2048 = vmatpush.msra.mxu0 0.0
    %2049 = vmatpush.msra.mxu0 0.0
    %2050 = vmatpush.msra.mxu0 0.0
    %2051 = vmatpush.msra.mxu0 0.0
    %2052 = vmatpush.msra.mxu0 0.0
    %2053 = vmatpush.msra.mxu0 0.0
    %2054 = vmatpush.msra.mxu0 0.0
    %2055 = vmatpush.msra.mxu0 0.0
    %2056 = vmatpush.msra.mxu0 %v2033
    %2057 = vmatpush.msra.mxu0 %v2032
    %2058 = vmatpush.msra.mxu0 %v2031
    %2059 = vmatpush.msra.mxu0 %v2030
    %2060 = vmatpush.msra.mxu0 %v2029
    %2061 = vmatmul.f32.gmra.mxu0 %v2040
    %v2062 = vpop.f32.mrf.mxu0
    %v2063 = vadd.f32 %v2037, %v2062
    %2064 = vmatmul.f32.gmra.mxu0 %v2043
    %v2065 = vpop.f32.mrf.mxu0
    %v2066 = vadd.f32 %v2037, %v2065
    %2067 = vdwg.mxu0
    %s2068 = scalar_lea.vmem [#allocation8], 32
    %v2069 = vld [vmem:[%s2068] sm:$0xff]
    %v2070 = vld [vmem:[%s2068 + $0x8] sm:$0xff]
    %v2071 = vld [vmem:[%s2068 + $0x10] sm:$0xff]
    %v2072 = vld [vmem:[%s2068 + $0x18] sm:$0xff]
    %v2074 = vsel %vm1055, %v2063, 0
    %v2077 = vsel %vm1055, %v2066, 0
    %2079 = vmatpush.msra.mxu0 0.0
    %2080 = vmatpush.msra.mxu0 0.0
    %2081 = vmatpush.msra.mxu0 0.0
    %2082 = vmatpush.msra.mxu0 0.0
    %2083 = vmatpush.msra.mxu0 0.0
    %2084 = vmatpush.msra.mxu0 0.0
    %2085 = vmatpush.msra.mxu0 0.0
    %2086 = vmatpush.msra.mxu0 0.0
    %2087 = vmatpush.msra.mxu0 0.0
    %2088 = vmatpush.msra.mxu0 0.0
    %2089 = vmatpush.msra.mxu0 0.0
    %2090 = vmatpush.msra.mxu0 0.0
    %2091 = vmatpush.msra.mxu0 %v2072
    %2092 = vmatpush.msra.mxu0 %v2071
    %2093 = vmatpush.msra.mxu0 %v2070
    %2094 = vmatpush.msra.mxu0 %v2069
    %2095 = vmatmul.f32.gmra.mxu0 %v2074
    %v2096 = vpop.f32.mrf.mxu0
    %v2097 = vadd.f32 0.0, %v2096
    %2098 = vmatmul.f32.gmra.mxu0 %v2077
    %v2099 = vpop.f32.mrf.mxu0
    %v2100 = vadd.f32 0.0, %v2099
    %2101 = vdwg.mxu0
    %s2102 = scalar_lea.vmem %s57, 1
    %v2103 = vld [vmem:[%s2102] sm:$0x1]
    %v2105 = vperm.slane %v2103, 0
    %v2107 = vmul.f32 %v2097, %v2105
    %v2108 = vmul.f32 %v2100, %v2105
    %v2109 = vsel %vm1055, %v2107, 0.0
    %2110 = vadd.xlane.f32.xlu0 %v2109
    %v2111 = vpop.xlane.xlu0 %2110
    %v2112 = vsel %vm1055, %v2108, 0.0
    %2113 = vadd.xlane.f32.xlu0 %v2112
    %v2114 = vpop.xlane.xlu0 %2113
    %s2115 = scalar_lea.vmem %s55, 1
    %v2116 = vld [vmem:[%s2115] sm:$0x1]
    %v2118 = vsel %vm1055, %v2116, 0
    %v2121 = vsel %vm1055, %v2097, 0
    %v2124 = vsel %vm1055, %v2100, 0
    %2126 = vmatpush.xpose.msra.mxu0 0.0
    %2127 = vmatpush.xpose.msra.mxu0 0.0
    %2128 = vmatpush.xpose.msra.mxu0 0.0
    %2129 = vmatpush.xpose.msra.mxu0 0.0
    %2130 = vmatpush.xpose.msra.mxu0 0.0
    %2131 = vmatpush.xpose.msra.mxu0 0.0
    %2132 = vmatpush.xpose.msra.mxu0 0.0
    %2133 = vmatpush.xpose.msra.mxu0 0.0
    %2134 = vmatpush.xpose.msra.mxu0 0.0
    %2135 = vmatpush.xpose.msra.mxu0 0.0
    %2136 = vmatpush.xpose.msra.mxu0 0.0
    %2137 = vmatpush.xpose.msra.mxu0 0.0
    %2138 = vmatpush.xpose.msra.mxu0 0.0
    %2139 = vmatpush.xpose.msra.mxu0 0.0
    %2140 = vmatpush.xpose.msra.mxu0 %v2124
    %2141 = vmatpush.xpose.msra.mxu0 %v2121
    %2142 = vmatmul.f32.gmra.mxu0 %v2118
    %v2143 = vpop.f32.mrf.mxu0
    %v2144 = vadd.f32 0.0, %v2143
    %2145 = vdwg.mxu0
    %v2146 = vperm.slane %v2144, 0
    %v2147 = vadd.f32 %v2111, %v2146
    %v2148 = vadd.f32 %v2114, %v2146
    %vm2149 = vcmp.gt.f32.partialorder %v2147, 0.0
    %vm2150 = vcmp.gt.f32.partialorder %v2148, 0.0
    %v2151 = vmul.f32 %v2147, 0.2
    %v2152 = vmul.f32 %v2148, 0.2
    %v2153 = vsel %vm2149, %v2147, %v2151
    %v2154 = vsel %vm2150, %v2148, %v2152
    %vm2155 = vcmp.gt.f32.partialorder %v1339, 0.0
    %vm2156 = vcmp.gt.f32.partialorder %v1340, 0.0
    %v2157 = vsel %vm2155, %v2153, -1e+30
    %v2158 = vsel %vm2156, %v2154, -1e+30
    %v2159 = vsel %vm379, %v2157, -inf
    %2160 = vmax.xlane.f32.xlu0 %v2159
    %v2161 = vpop.xlane.xlu0 %2160
    %v2162 = vsel %vm379, %v2158, -inf
    %2163 = vmax.xlane.f32.xlu0 %v2162
    %v2164 = vpop.xlane.xlu0 %2163
    %v2165 = vsub.f32 %v2157, %v2161
    %v2166 = vsub.f32 %v2158, %v2164
    %v2167 = vmul.f32 %v2165, 1.442695
    %v2168 = vpow.pop %v2167
    %v2169 = vmul.f32 %v2166, 1.442695
    %v2170 = vpow.pop %v2169
    %v2171 = vsel %vm379, %v2168, 0.0
    %2172 = vadd.xlane.f32.xlu0 %v2171
    %v2173 = vpop.xlane.xlu0 %2172
    %v2174 = vsel %vm379, %v2170, 0.0
    %2175 = vadd.xlane.f32.xlu0 %v2174
    %v2176 = vpop.xlane.xlu0 %2175
    %v2177 = vrcp.pop %v2173
    %v2178 = vrcp.pop %v2176
    %v2179 = vmul.f32 %v2168, %v2177
    %v2180 = vmul.f32 %v2170, %v2178
    %s2181 = scalar_lea.vmem %s59, 1
    %v2182 = vld [vmem:[%s2181] sm:$0x1]
    %v2184 = vperm.slane %v2182, 0
    %v2187 = vsel %vm379, %v2179, 0
    %v2190 = vsel %vm379, %v2180, 0
    %2192 = vmatpush.msra.mxu0 0.0
    %2193 = vmatpush.msra.mxu0 0.0
    %2194 = vmatpush.msra.mxu0 0.0
    %2195 = vmatpush.msra.mxu0 0.0
    %2196 = vmatpush.msra.mxu0 0.0
    %2197 = vmatpush.msra.mxu0 0.0
    %2198 = vmatpush.msra.mxu0 0.0
    %2199 = vmatpush.msra.mxu0 0.0
    %2200 = vmatpush.msra.mxu0 0.0
    %2201 = vmatpush.msra.mxu0 0.0
    %2202 = vmatpush.msra.mxu0 0.0
    %2203 = vmatpush.msra.mxu0 0.0
    %2204 = vmatpush.msra.mxu0 0.0
    %2205 = vmatpush.msra.mxu0 0.0
    %2206 = vmatpush.msra.mxu0 %v2100
    %2207 = vmatpush.msra.mxu0 %v2097
    %2208 = vmatmul.f32.gmra.mxu0 %v2187
    %v2209 = vpop.f32.mrf.mxu0
    %v2210 = vadd.f32 %v2184, %v2209
    %2211 = vmatmul.f32.gmra.mxu0 %v2190
    %v2212 = vpop.f32.mrf.mxu0
    %v2213 = vadd.f32 %v2184, %v2212
    %2214 = vdwg.mxu0
    %s2215 = scalar_lea.vmem [#allocation10], 32
    %v2216 = vld [vmem:[%s2215] sm:$0xff]
    %v2217 = vld [vmem:[%s2215 + $0x8] sm:$0xff]
    %v2218 = vld [vmem:[%s2215 + $0x10] sm:$0xff]
    %v2219 = vld [vmem:[%s2215 + $0x18] sm:$0xff]
    %v2221 = vsel %vm1055, %v2210, 0
    %v2224 = vsel %vm1055, %v2213, 0
    %2226 = vmatpush.msra.mxu0 0.0
    %2227 = vmatpush.msra.mxu0 0.0
    %2228 = vmatpush.msra.mxu0 0.0
    %2229 = vmatpush.msra.mxu0 0.0
    %2230 = vmatpush.msra.mxu0 0.0
    %2231 = vmatpush.msra.mxu0 0.0
    %2232 = vmatpush.msra.mxu0 0.0
    %2233 = vmatpush.msra.mxu0 0.0
    %2234 = vmatpush.msra.mxu0 0.0
    %2235 = vmatpush.msra.mxu0 0.0
    %2236 = vmatpush.msra.mxu0 0.0
    %2237 = vmatpush.msra.mxu0 0.0
    %2238 = vmatpush.msra.mxu0 %v2219
    %2239 = vmatpush.msra.mxu0 %v2218
    %2240 = vmatpush.msra.mxu0 %v2217
    %2241 = vmatpush.msra.mxu0 %v2216
    %2242 = vmatmul.f32.gmra.mxu0 %v2221
    %v2243 = vpop.f32.mrf.mxu0
    %v2244 = vadd.f32 0.0, %v2243
    %2245 = vmatmul.f32.gmra.mxu0 %v2224
    %v2246 = vpop.f32.mrf.mxu0
    %v2247 = vadd.f32 0.0, %v2246
    %2248 = vdwg.mxu0
    %s2249 = scalar_lea.vmem %s63, 1
    %v2250 = vld [vmem:[%s2249] sm:$0x1]
    %v2252 = vperm.slane %v2250, 0
    %v2255 = vsel %vm379, %v1336, 0
    %v2258 = vsel %vm379, %v1337, 0
    %2260 = vmatpush.msra.mxu0 0.0
    %2261 = vmatpush.msra.mxu0 0.0
    %2262 = vmatpush.msra.mxu0 0.0
    %2263 = vmatpush.msra.mxu0 0.0
    %2264 = vmatpush.msra.mxu0 0.0
    %2265 = vmatpush.msra.mxu0 0.0
    %2266 = vmatpush.msra.mxu0 0.0
    %2267 = vmatpush.msra.mxu0 0.0
    %2268 = vmatpush.msra.mxu0 0.0
    %2269 = vmatpush.msra.mxu0 0.0
    %2270 = vmatpush.msra.mxu0 0.0
    %2271 = vmatpush.msra.mxu0 0.0
    %2272 = vmatpush.msra.mxu0 0.0
    %2273 = vmatpush.msra.mxu0 0.0
    %2274 = vmatpush.msra.mxu0 %v2247
    %2275 = vmatpush.msra.mxu0 %v2244
    %2276 = vmatmul.f32.gmra.mxu0 %v2255
    %v2277 = vpop.f32.mrf.mxu0
    %v2278 = vadd.f32 %v2252, %v2277
    %2279 = vmatmul.f32.gmra.mxu0 %v2258
    %v2280 = vpop.f32.mrf.mxu0
    %v2281 = vadd.f32 %v2252, %v2280
    %2282 = vdwg.mxu0
    %s2283 = scalar_lea.vmem [#allocation11], 32
    %v2284 = vld [vmem:[%s2283] sm:$0xff]
    %v2285 = vld [vmem:[%s2283 + $0x8] sm:$0xff]
    %v2286 = vld [vmem:[%s2283 + $0x10] sm:$0xff]
    %v2287 = vld [vmem:[%s2283 + $0x18] sm:$0xff]
    %2288 = vmatpush.msra.mxu0 0.0
    %2289 = vmatpush.msra.mxu0 0.0
    %2290 = vmatpush.msra.mxu0 0.0
    %2291 = vmatpush.msra.mxu0 0.0
    %2292 = vmatpush.msra.mxu0 0.0
    %2293 = vmatpush.msra.mxu0 0.0
    %2294 = vmatpush.msra.mxu0 0.0
    %2295 = vmatpush.msra.mxu0 0.0
    %2296 = vmatpush.msra.mxu0 0.0
    %2297 = vmatpush.msra.mxu0 0.0
    %2298 = vmatpush.msra.mxu0 0.0
    %2299 = vmatpush.msra.mxu0 0.0
    %2300 = vmatpush.msra.mxu0 %v2287
    %2301 = vmatpush.msra.mxu0 %v2286
    %2302 = vmatpush.msra.mxu0 %v2285
    %2303 = vmatpush.msra.mxu0 %v2284
    %2304 = vmatmul.f32.gmra.mxu0 %v2221
    %v2305 = vpop.f32.mrf.mxu0
    %v2306 = vadd.f32 0.0, %v2305
    %2307 = vmatmul.f32.gmra.mxu0 %v2224
    %v2308 = vpop.f32.mrf.mxu0
    %v2309 = vadd.f32 0.0, %v2308
    %2310 = vdwg.mxu0
    %s2311 = scalar_lea.vmem %s67, 1
    %v2312 = vld [vmem:[%s2311] sm:$0x1]
    %v2314 = vperm.slane %v2312, 0
    %2316 = vmatpush.msra.mxu0 0.0
    %2317 = vmatpush.msra.mxu0 0.0
    %2318 = vmatpush.msra.mxu0 0.0
    %2319 = vmatpush.msra.mxu0 0.0
    %2320 = vmatpush.msra.mxu0 0.0
    %2321 = vmatpush.msra.mxu0 0.0
    %2322 = vmatpush.msra.mxu0 0.0
    %2323 = vmatpush.msra.mxu0 0.0
    %2324 = vmatpush.msra.mxu0 0.0
    %2325 = vmatpush.msra.mxu0 0.0
    %2326 = vmatpush.msra.mxu0 0.0
    %2327 = vmatpush.msra.mxu0 0.0
    %2328 = vmatpush.msra.mxu0 0.0
    %2329 = vmatpush.msra.mxu0 0.0
    %2330 = vmatpush.msra.mxu0 %v2309
    %2331 = vmatpush.msra.mxu0 %v2306
    %2332 = vmatmul.f32.gmra.mxu0 %v1382
    %v2333 = vpop.f32.mrf.mxu0
    %v2334 = vadd.f32 %v2314, %v2333
    %2335 = vmatmul.f32.gmra.mxu0 %v1385
    %v2336 = vpop.f32.mrf.mxu0
    %v2337 = vadd.f32 %v2314, %v2336
    %2338 = vdwg.mxu0
    %v2339 = vadd.f32 %v2334, %v2278
    %v2340 = vadd.f32 %v2337, %v2281
    %s2341 = scalar_lea.vmem %s69, 1
    %v2342 = vld [vmem:[%s2341] sm:$0x1]
    %v2344 = vperm.slane %v2342, 0
    %v2346 = vmul.f32 %v2339, %v2344
    %v2347 = vmul.f32 %v2340, %v2344
    %s2348 = scalar_lea.vmem %s71, 1
    %v2349 = vld [vmem:[%s2348] sm:$0x1]
    %v2351 = vperm.slane %v2349, 0
    %v2353 = vadd.f32 %v2346, %v2351
    %v2354 = vadd.f32 %v2347, %v2351
    %s2355 = scalar_lea.vmem %s1, 32
    %v2356 = vld [vmem:[%s2355] sm:$0xff]
    %v2357 = vld [vmem:[%s2355 + $0x8] sm:$0xff]
    %s2358 = scalar_lea.vmem %s5, 32
    %v2359 = vld [vmem:[%s2358] sm:$0xff]
    %v2360 = vld [vmem:[%s2358 + $0x8] sm:$0xff]
    %s2361 = scalar_lea.vmem [#allocation2], 32
    %v2362 = vld [vmem:[%s2361] sm:$0xff]
    %v2363 = vld [vmem:[%s2361 + $0x8] sm:$0xff]
    %s2364 = scalar_lea.vmem [#allocation5], 32
    %v2365 = vld [vmem:[%s2364] sm:$0xff]
    %v2366 = vld [vmem:[%s2364 + $0x8] sm:$0xff]
    %s2367 = scalar_lea.vmem %s15, 80
    %v2368 = vld [vmem:[%s2367] sm:$0xff]
    %v2369 = vld [vmem:[%s2367 + $0x8] sm:$0xff]
    %v2370 = vld [vmem:[%s2367 + $0x10] sm:$0xff]
    %v2371 = vld [vmem:[%s2367 + $0x18] sm:$0xff]
    %v2372 = vld [vmem:[%s2367 + $0x20] sm:$0xff]
    %v2374 = vsel %vm345, %v2356, 0
    %v2377 = vsel %vm345, %v2357, 0
    %2379 = vmatpush.msra.mxu0 0.0
    %2380 = vmatpush.msra.mxu0 0.0
    %2381 = vmatpush.msra.mxu0 0.0
    %2382 = vmatpush.msra.mxu0 0.0
    %2383 = vmatpush.msra.mxu0 0.0
    %2384 = vmatpush.msra.mxu0 0.0
    %2385 = vmatpush.msra.mxu0 0.0
    %2386 = vmatpush.msra.mxu0 0.0
    %2387 = vmatpush.msra.mxu0 0.0
    %2388 = vmatpush.msra.mxu0 0.0
    %2389 = vmatpush.msra.mxu0 0.0
    %2390 = vmatpush.msra.mxu0 %v2372
    %2391 = vmatpush.msra.mxu0 %v2371
    %2392 = vmatpush.msra.mxu0 %v2370
    %2393 = vmatpush.msra.mxu0 %v2369
    %2394 = vmatpush.msra.mxu0 %v2368
    %2395 = vmatmul.f32.gmra.mxu0 %v2374
    %v2396 = vpop.f32.mrf.mxu0
    %v2397 = vadd.f32 0.0, %v2396
    %2398 = vmatmul.f32.gmra.mxu0 %v2377
    %v2399 = vpop.f32.mrf.mxu0
    %v2400 = vadd.f32 0.0, %v2399
    %2401 = vdwg.mxu0
    %s2402 = scalar_lea.vmem %s17, 2
    %v2403 = vld [vmem:[%s2402] sm:$0x1]
    %v2405 = vperm.slane %v2403, 0
    %v2408 = vsel %vm379, %v2359, 0
    %v2411 = vsel %vm379, %v2360, 0
    %2413 = vmatpush.msra.mxu0 0.0
    %2414 = vmatpush.msra.mxu0 0.0
    %2415 = vmatpush.msra.mxu0 0.0
    %2416 = vmatpush.msra.mxu0 0.0
    %2417 = vmatpush.msra.mxu0 0.0
    %2418 = vmatpush.msra.mxu0 0.0
    %2419 = vmatpush.msra.mxu0 0.0
    %2420 = vmatpush.msra.mxu0 0.0
    %2421 = vmatpush.msra.mxu0 0.0
    %2422 = vmatpush.msra.mxu0 0.0
    %2423 = vmatpush.msra.mxu0 0.0
    %2424 = vmatpush.msra.mxu0 0.0
    %2425 = vmatpush.msra.mxu0 0.0
    %2426 = vmatpush.msra.mxu0 0.0
    %2427 = vmatpush.msra.mxu0 %v2400
    %2428 = vmatpush.msra.mxu0 %v2397
    %2429 = vmatmul.f32.gmra.mxu0 %v2408
    %v2430 = vpop.f32.mrf.mxu0
    %v2431 = vadd.f32 %v2405, %v2430
    %2432 = vmatmul.f32.gmra.mxu0 %v2411
    %v2433 = vpop.f32.mrf.mxu0
    %v2434 = vadd.f32 %v2405, %v2433
    %2435 = vdwg.mxu0
    %v2436 = vadd.f32 %v2431, %v2356
    %v2437 = vadd.f32 %v2434, %v2357
    %s2438 = scalar_lea.vmem %s29, 2
    %v2439 = vld [vmem:[%s2438] sm:$0x1]
    %v2441 = vperm.slane %v2439, 0
    %v2443 = vmul.f32 %v2436, %v2441
    %v2444 = vmul.f32 %v2437, %v2441
    %s2445 = scalar_lea.vmem %s31, 2
    %v2446 = vld [vmem:[%s2445] sm:$0x1]
    %v2448 = vperm.slane %v2446, 0
    %v2450 = vadd.f32 %v2443, %v2448
    %v2451 = vadd.f32 %v2444, %v2448
    %s2452 = scalar_lea.vmem %s19, 80
    %v2453 = vld [vmem:[%s2452] sm:$0xff]
    %v2454 = vld [vmem:[%s2452 + $0x8] sm:$0xff]
    %v2455 = vld [vmem:[%s2452 + $0x10] sm:$0xff]
    %v2456 = vld [vmem:[%s2452 + $0x18] sm:$0xff]
    %v2457 = vld [vmem:[%s2452 + $0x20] sm:$0xff]
    %2458 = vmatpush.msra.mxu0 0.0
    %2459 = vmatpush.msra.mxu0 0.0
    %2460 = vmatpush.msra.mxu0 0.0
    %2461 = vmatpush.msra.mxu0 0.0
    %2462 = vmatpush.msra.mxu0 0.0
    %2463 = vmatpush.msra.mxu0 0.0
    %2464 = vmatpush.msra.mxu0 0.0
    %2465 = vmatpush.msra.mxu0 0.0
    %2466 = vmatpush.msra.mxu0 0.0
    %2467 = vmatpush.msra.mxu0 0.0
    %2468 = vmatpush.msra.mxu0 0.0
    %2469 = vmatpush.msra.mxu0 %v2457
    %2470 = vmatpush.msra.mxu0 %v2456
    %2471 = vmatpush.msra.mxu0 %v2455
    %2472 = vmatpush.msra.mxu0 %v2454
    %2473 = vmatpush.msra.mxu0 %v2453
    %2474 = vmatmul.f32.gmra.mxu0 %v2374
    %v2475 = vpop.f32.mrf.mxu0
    %v2476 = vadd.f32 0.0, %v2475
    %2477 = vmatmul.f32.gmra.mxu0 %v2377
    %v2478 = vpop.f32.mrf.mxu0
    %v2479 = vadd.f32 0.0, %v2478
    %2480 = vdwg.mxu0
    %s2481 = scalar_lea.vmem %s21, 80
    %v2482 = vld [vmem:[%s2481] sm:$0xff]
    %v2483 = vld [vmem:[%s2481 + $0x8] sm:$0xff]
    %v2484 = vld [vmem:[%s2481 + $0x10] sm:$0xff]
    %v2485 = vld [vmem:[%s2481 + $0x18] sm:$0xff]
    %v2486 = vld [vmem:[%s2481 + $0x20] sm:$0xff]
    %2487 = vmatpush.msra.mxu0 0.0
    %2488 = vmatpush.msra.mxu0 0.0
    %2489 = vmatpush.msra.mxu0 0.0
    %2490 = vmatpush.msra.mxu0 0.0
    %2491 = vmatpush.msra.mxu0 0.0
    %2492 = vmatpush.msra.mxu0 0.0
    %2493 = vmatpush.msra.mxu0 0.0
    %2494 = vmatpush.msra.mxu0 0.0
    %2495 = vmatpush.msra.mxu0 0.0
    %2496 = vmatpush.msra.mxu0 0.0
    %2497 = vmatpush.msra.mxu0 0.0
    %2498 = vmatpush.msra.mxu0 %v2486
    %2499 = vmatpush.msra.mxu0 %v2485
    %2500 = vmatpush.msra.mxu0 %v2484
    %2501 = vmatpush.msra.mxu0 %v2483
    %2502 = vmatpush.msra.mxu0 %v2482
    %2503 = vmatmul.f32.gmra.mxu0 %v2374
    %v2504 = vpop.f32.mrf.mxu0
    %v2505 = vadd.f32 0.0, %v2504
    %2506 = vmatmul.f32.gmra.mxu0 %v2377
    %v2507 = vpop.f32.mrf.mxu0
    %v2508 = vadd.f32 0.0, %v2507
    %2509 = vdwg.mxu0
    %s2510 = scalar_lea.vmem %s23, 80
    %v2511 = vld [vmem:[%s2510] sm:$0xff]
    %v2512 = vld [vmem:[%s2510 + $0x8] sm:$0xff]
    %v2513 = vld [vmem:[%s2510 + $0x10] sm:$0xff]
    %v2514 = vld [vmem:[%s2510 + $0x18] sm:$0xff]
    %v2515 = vld [vmem:[%s2510 + $0x20] sm:$0xff]
    %2516 = vmatpush.msra.mxu0 0.0
    %2517 = vmatpush.msra.mxu0 0.0
    %2518 = vmatpush.msra.mxu0 0.0
    %2519 = vmatpush.msra.mxu0 0.0
    %2520 = vmatpush.msra.mxu0 0.0
    %2521 = vmatpush.msra.mxu0 0.0
    %2522 = vmatpush.msra.mxu0 0.0
    %2523 = vmatpush.msra.mxu0 0.0
    %2524 = vmatpush.msra.mxu0 0.0
    %2525 = vmatpush.msra.mxu0 0.0
    %2526 = vmatpush.msra.mxu0 0.0
    %2527 = vmatpush.msra.mxu0 %v2515
    %2528 = vmatpush.msra.mxu0 %v2514
    %2529 = vmatpush.msra.mxu0 %v2513
    %2530 = vmatpush.msra.mxu0 %v2512
    %2531 = vmatpush.msra.mxu0 %v2511
    %2532 = vmatmul.f32.gmra.mxu0 %v2374
    %v2533 = vpop.f32.mrf.mxu0
    %v2534 = vadd.f32 0.0, %v2533
    %2535 = vmatmul.f32.gmra.mxu0 %v2377
    %v2536 = vpop.f32.mrf.mxu0
    %v2537 = vadd.f32 0.0, %v2536
    %2538 = vdwg.mxu0
    %v2539 = vmul.f32 %v2476, %v314
    %v2540 = vmul.f32 %v2479, %v314
    %v2542 = vsel %vm345, %v2539, 0
    %v2545 = vsel %vm345, %v2540, 0
    %v2548 = vsel %vm345, %v2505, 0
    %v2551 = vsel %vm345, %v2508, 0
    %2553 = vmatpush.xpose.msra.mxu0 0.0
    %2554 = vmatpush.xpose.msra.mxu0 0.0
    %2555 = vmatpush.xpose.msra.mxu0 0.0
    %2556 = vmatpush.xpose.msra.mxu0 0.0
    %2557 = vmatpush.xpose.msra.mxu0 0.0
    %2558 = vmatpush.xpose.msra.mxu0 0.0
    %2559 = vmatpush.xpose.msra.mxu0 0.0
    %2560 = vmatpush.xpose.msra.mxu0 0.0
    %2561 = vmatpush.xpose.msra.mxu0 0.0
    %2562 = vmatpush.xpose.msra.mxu0 0.0
    %2563 = vmatpush.xpose.msra.mxu0 0.0
    %2564 = vmatpush.xpose.msra.mxu0 0.0
    %2565 = vmatpush.xpose.msra.mxu0 0.0
    %2566 = vmatpush.xpose.msra.mxu0 0.0
    %2567 = vmatpush.xpose.msra.mxu0 %v2551
    %2568 = vmatpush.xpose.msra.mxu0 %v2548
    %2569 = vmatmul.f32.gmra.mxu0 %v2542
    %v2570 = vpop.f32.mrf.mxu0
    %v2571 = vadd.f32 0.0, %v2570
    %2572 = vmatmul.f32.gmra.mxu0 %v2545
    %v2573 = vpop.f32.mrf.mxu0
    %v2574 = vadd.f32 0.0, %v2573
    %2575 = vdwg.mxu0
    %v2576 = vmul.f32 %v2571, 0.31622776
    %v2577 = vmul.f32 %v2574, 0.31622776
    %v2578 = vsel %vm379, %v2576, -inf
    %2579 = vmax.xlane.f32.xlu0 %v2578
    %v2580 = vpop.xlane.xlu0 %2579
    %v2581 = vsel %vm379, %v2577, -inf
    %2582 = vmax.xlane.f32.xlu0 %v2581
    %v2583 = vpop.xlane.xlu0 %2582
    %v2584 = vsub.f32 %v2576, %v2580
    %v2585 = vsub.f32 %v2577, %v2583
    %v2586 = vmul.f32 %v2584, 1.442695
    %v2587 = vpow.pop %v2586
    %v2588 = vmul.f32 %v2585, 1.442695
    %v2589 = vpow.pop %v2588
    %v2590 = vsel %vm379, %v2587, 0.0
    %2591 = vadd.xlane.f32.xlu0 %v2590
    %v2592 = vpop.xlane.xlu0 %2591
    %v2593 = vsel %vm379, %v2589, 0.0
    %2594 = vadd.xlane.f32.xlu0 %v2593
    %v2595 = vpop.xlane.xlu0 %2594
    %v2596 = vrcp.pop %v2592
    %v2597 = vrcp.pop %v2595
    %v2598 = vmul.f32 %v2587, %v2596
    %v2599 = vmul.f32 %v2589, %v2597
    %v2600 = vmul.f32 %v2534, %v314
    %v2601 = vmul.f32 %v2537, %v314
    %v2602 = vmul.f32 %v2476, %v319
    %v2603 = vmul.f32 %v2479, %v319
    %v2605 = vsel %vm345, %v2602, 0
    %v2608 = vsel %vm345, %v2603, 0
    %2610 = vmatpush.xpose.msra.mxu0 0.0
    %2611 = vmatpush.xpose.msra.mxu0 0.0
    %2612 = vmatpush.xpose.msra.mxu0 0.0
    %2613 = vmatpush.xpose.msra.mxu0 0.0
    %2614 = vmatpush.xpose.msra.mxu0 0.0
    %2615 = vmatpush.xpose.msra.mxu0 0.0
    %2616 = vmatpush.xpose.msra.mxu0 0.0
    %2617 = vmatpush.xpose.msra.mxu0 0.0
    %2618 = vmatpush.xpose.msra.mxu0 0.0
    %2619 = vmatpush.xpose.msra.mxu0 0.0
    %2620 = vmatpush.xpose.msra.mxu0 0.0
    %2621 = vmatpush.xpose.msra.mxu0 0.0
    %2622 = vmatpush.xpose.msra.mxu0 0.0
    %2623 = vmatpush.xpose.msra.mxu0 0.0
    %2624 = vmatpush.xpose.msra.mxu0 %v2551
    %2625 = vmatpush.xpose.msra.mxu0 %v2548
    %2626 = vmatmul.f32.gmra.mxu0 %v2605
    %v2627 = vpop.f32.mrf.mxu0
    %v2628 = vadd.f32 0.0, %v2627
    %2629 = vmatmul.f32.gmra.mxu0 %v2608
    %v2630 = vpop.f32.mrf.mxu0
    %v2631 = vadd.f32 0.0, %v2630
    %2632 = vdwg.mxu0
    %v2633 = vmul.f32 %v2628, 0.31622776
    %v2634 = vmul.f32 %v2631, 0.31622776
    %v2635 = vsel %vm379, %v2633, -inf
    %2636 = vmax.xlane.f32.xlu0 %v2635
    %v2637 = vpop.xlane.xlu0 %2636
    %v2638 = vsel %vm379, %v2634, -inf
    %2639 = vmax.xlane.f32.xlu0 %v2638
    %v2640 = vpop.xlane.xlu0 %2639
    %v2641 = vsub.f32 %v2633, %v2637
    %v2642 = vsub.f32 %v2634, %v2640
    %v2643 = vmul.f32 %v2641, 1.442695
    %v2644 = vpow.pop %v2643
    %v2645 = vmul.f32 %v2642, 1.442695
    %v2646 = vpow.pop %v2645
    %v2647 = vsel %vm379, %v2644, 0.0
    %2648 = vadd.xlane.f32.xlu0 %v2647
    %v2649 = vpop.xlane.xlu0 %2648
    %v2650 = vsel %vm379, %v2646, 0.0
    %2651 = vadd.xlane.f32.xlu0 %v2650
    %v2652 = vpop.xlane.xlu0 %2651
    %v2653 = vrcp.pop %v2649
    %v2654 = vrcp.pop %v2652
    %v2655 = vmul.f32 %v2644, %v2653
    %v2656 = vmul.f32 %v2646, %v2654
    %v2657 = vmul.f32 %v2534, %v319
    %v2658 = vmul.f32 %v2537, %v319
    %v2660 = vsel %vm379, %v2655, 0
    %v2663 = vsel %vm379, %v2656, 0
    %2665 = vmatpush.msra.mxu0 0.0
    %2666 = vmatpush.msra.mxu0 0.0
    %2667 = vmatpush.msra.mxu0 0.0
    %2668 = vmatpush.msra.mxu0 0.0
    %2669 = vmatpush.msra.mxu0 0.0
    %2670 = vmatpush.msra.mxu0 0.0
    %2671 = vmatpush.msra.mxu0 0.0
    %2672 = vmatpush.msra.mxu0 0.0
    %2673 = vmatpush.msra.mxu0 0.0
    %2674 = vmatpush.msra.mxu0 0.0
    %2675 = vmatpush.msra.mxu0 0.0
    %2676 = vmatpush.msra.mxu0 0.0
    %2677 = vmatpush.msra.mxu0 0.0
    %2678 = vmatpush.msra.mxu0 0.0
    %2679 = vmatpush.msra.mxu0 %v2658
    %2680 = vmatpush.msra.mxu0 %v2657
    %2681 = vmatmul.f32.gmra.mxu0 %v2660
    %v2682 = vpop.f32.mrf.mxu0
    %v2683 = vadd.f32 0.0, %v2682
    %2684 = vmatmul.f32.gmra.mxu0 %v2663
    %v2685 = vpop.f32.mrf.mxu0
    %v2686 = vadd.f32 0.0, %v2685
    %2687 = vdwg.mxu0
    %v2689 = vsel %vm379, %v2598, 0
    %v2692 = vsel %vm379, %v2599, 0
    %2694 = vmatpush.msra.mxu0 0.0
    %2695 = vmatpush.msra.mxu0 0.0
    %2696 = vmatpush.msra.mxu0 0.0
    %2697 = vmatpush.msra.mxu0 0.0
    %2698 = vmatpush.msra.mxu0 0.0
    %2699 = vmatpush.msra.mxu0 0.0
    %2700 = vmatpush.msra.mxu0 0.0
    %2701 = vmatpush.msra.mxu0 0.0
    %2702 = vmatpush.msra.mxu0 0.0
    %2703 = vmatpush.msra.mxu0 0.0
    %2704 = vmatpush.msra.mxu0 0.0
    %2705 = vmatpush.msra.mxu0 0.0
    %2706 = vmatpush.msra.mxu0 0.0
    %2707 = vmatpush.msra.mxu0 0.0
    %2708 = vmatpush.msra.mxu0 %v2601
    %2709 = vmatpush.msra.mxu0 %v2600
    %2710 = vmatmul.f32.gmra.mxu0 %v2689
    %v2711 = vpop.f32.mrf.mxu0
    %v2712 = vadd.f32 %v2683, %v2711
    %2713 = vmatmul.f32.gmra.mxu0 %v2692
    %v2714 = vpop.f32.mrf.mxu0
    %v2715 = vadd.f32 %v2686, %v2714
    %2716 = vdwg.mxu0
    %v2717 = vmul.f32 %v2476, %v324
    %v2718 = vmul.f32 %v2479, %v324
    %v2720 = vsel %vm345, %v2717, 0
    %v2723 = vsel %vm345, %v2718, 0
    %2725 = vmatpush.xpose.msra.mxu0 0.0
    %2726 = vmatpush.xpose.msra.mxu0 0.0
    %2727 = vmatpush.xpose.msra.mxu0 0.0
    %2728 = vmatpush.xpose.msra.mxu0 0.0
    %2729 = vmatpush.xpose.msra.mxu0 0.0
    %2730 = vmatpush.xpose.msra.mxu0 0.0
    %2731 = vmatpush.xpose.msra.mxu0 0.0
    %2732 = vmatpush.xpose.msra.mxu0 0.0
    %2733 = vmatpush.xpose.msra.mxu0 0.0
    %2734 = vmatpush.xpose.msra.mxu0 0.0
    %2735 = vmatpush.xpose.msra.mxu0 0.0
    %2736 = vmatpush.xpose.msra.mxu0 0.0
    %2737 = vmatpush.xpose.msra.mxu0 0.0
    %2738 = vmatpush.xpose.msra.mxu0 0.0
    %2739 = vmatpush.xpose.msra.mxu0 %v2551
    %2740 = vmatpush.xpose.msra.mxu0 %v2548
    %2741 = vmatmul.f32.gmra.mxu0 %v2720
    %v2742 = vpop.f32.mrf.mxu0
    %v2743 = vadd.f32 0.0, %v2742
    %2744 = vmatmul.f32.gmra.mxu0 %v2723
    %v2745 = vpop.f32.mrf.mxu0
    %v2746 = vadd.f32 0.0, %v2745
    %2747 = vdwg.mxu0
    %v2748 = vmul.f32 %v2743, 0.31622776
    %v2749 = vmul.f32 %v2746, 0.31622776
    %v2750 = vsel %vm379, %v2748, -inf
    %2751 = vmax.xlane.f32.xlu0 %v2750
    %v2752 = vpop.xlane.xlu0 %2751
    %v2753 = vsel %vm379, %v2749, -inf
    %2754 = vmax.xlane.f32.xlu0 %v2753
    %v2755 = vpop.xlane.xlu0 %2754
    %v2756 = vsub.f32 %v2748, %v2752
    %v2757 = vsub.f32 %v2749, %v2755
    %v2758 = vmul.f32 %v2756, 1.442695
    %v2759 = vpow.pop %v2758
    %v2760 = vmul.f32 %v2757, 1.442695
    %v2761 = vpow.pop %v2760
    %v2762 = vsel %vm379, %v2759, 0.0
    %2763 = vadd.xlane.f32.xlu0 %v2762
    %v2764 = vpop.xlane.xlu0 %2763
    %v2765 = vsel %vm379, %v2761, 0.0
    %2766 = vadd.xlane.f32.xlu0 %v2765
    %v2767 = vpop.xlane.xlu0 %2766
    %v2768 = vrcp.pop %v2764
    %v2769 = vrcp.pop %v2767
    %v2770 = vmul.f32 %v2759, %v2768
    %v2771 = vmul.f32 %v2761, %v2769
    %v2772 = vmul.f32 %v2534, %v324
    %v2773 = vmul.f32 %v2537, %v324
    %v2775 = vsel %vm379, %v2770, 0
    %v2778 = vsel %vm379, %v2771, 0
    %2780 = vmatpush.msra.mxu0 0.0
    %2781 = vmatpush.msra.mxu0 0.0
    %2782 = vmatpush.msra.mxu0 0.0
    %2783 = vmatpush.msra.mxu0 0.0
    %2784 = vmatpush.msra.mxu0 0.0
    %2785 = vmatpush.msra.mxu0 0.0
    %2786 = vmatpush.msra.mxu0 0.0
    %2787 = vmatpush.msra.mxu0 0.0
    %2788 = vmatpush.msra.mxu0 0.0
    %2789 = vmatpush.msra.mxu0 0.0
    %2790 = vmatpush.msra.mxu0 0.0
    %2791 = vmatpush.msra.mxu0 0.0
    %2792 = vmatpush.msra.mxu0 0.0
    %2793 = vmatpush.msra.mxu0 0.0
    %2794 = vmatpush.msra.mxu0 %v2773
    %2795 = vmatpush.msra.mxu0 %v2772
    %2796 = vmatmul.f32.gmra.mxu0 %v2775
    %v2797 = vpop.f32.mrf.mxu0
    %v2798 = vadd.f32 0.0, %v2797
    %2799 = vmatmul.f32.gmra.mxu0 %v2778
    %v2800 = vpop.f32.mrf.mxu0
    %v2801 = vadd.f32 0.0, %v2800
    %2802 = vdwg.mxu0
    %v2803 = vadd.f32 %v2712, %v2798
    %v2804 = vadd.f32 %v2715, %v2801
    %v2805 = vmul.f32 %v2476, %v329
    %v2806 = vmul.f32 %v2479, %v329
    %v2808 = vsel %vm345, %v2805, 0
    %v2811 = vsel %vm345, %v2806, 0
    %2813 = vmatpush.xpose.msra.mxu0 0.0
    %2814 = vmatpush.xpose.msra.mxu0 0.0
    %2815 = vmatpush.xpose.msra.mxu0 0.0
    %2816 = vmatpush.xpose.msra.mxu0 0.0
    %2817 = vmatpush.xpose.msra.mxu0 0.0
    %2818 = vmatpush.xpose.msra.mxu0 0.0
    %2819 = vmatpush.xpose.msra.mxu0 0.0
    %2820 = vmatpush.xpose.msra.mxu0 0.0
    %2821 = vmatpush.xpose.msra.mxu0 0.0
    %2822 = vmatpush.xpose.msra.mxu0 0.0
    %2823 = vmatpush.xpose.msra.mxu0 0.0
    %2824 = vmatpush.xpose.msra.mxu0 0.0
    %2825 = vmatpush.xpose.msra.mxu0 0.0
    %2826 = vmatpush.xpose.msra.mxu0 0.0
    %2827 = vmatpush.xpose.msra.mxu0 %v2551
    %2828 = vmatpush.xpose.msra.mxu0 %v2548
    %2829 = vmatmul.f32.gmra.mxu0 %v2808
    %v2830 = vpop.f32.mrf.mxu0
    %v2831 = vadd.f32 0.0, %v2830
    %2832 = vmatmul.f32.gmra.mxu0 %v2811
    %v2833 = vpop.f32.mrf.mxu0
    %v2834 = vadd.f32 0.0, %v2833
    %2835 = vdwg.mxu0
    %v2836 = vmul.f32 %v2831, 0.31622776
    %v2837 = vmul.f32 %v2834, 0.31622776
    %v2838 = vsel %vm379, %v2836, -inf
    %2839 = vmax.xlane.f32.xlu0 %v2838
    %v2840 = vpop.xlane.xlu0 %2839
    %v2841 = vsel %vm379, %v2837, -inf
    %2842 = vmax.xlane.f32.xlu0 %v2841
    %v2843 = vpop.xlane.xlu0 %2842
    %v2844 = vsub.f32 %v2836, %v2840
    %v2845 = vsub.f32 %v2837, %v2843
    %v2846 = vmul.f32 %v2844, 1.442695
    %v2847 = vpow.pop %v2846
    %v2848 = vmul.f32 %v2845, 1.442695
    %v2849 = vpow.pop %v2848
    %v2850 = vsel %vm379, %v2847, 0.0
    %2851 = vadd.xlane.f32.xlu0 %v2850
    %v2852 = vpop.xlane.xlu0 %2851
    %v2853 = vsel %vm379, %v2849, 0.0
    %2854 = vadd.xlane.f32.xlu0 %v2853
    %v2855 = vpop.xlane.xlu0 %2854
    %v2856 = vrcp.pop %v2852
    %v2857 = vrcp.pop %v2855
    %v2858 = vmul.f32 %v2847, %v2856
    %v2859 = vmul.f32 %v2849, %v2857
    %v2860 = vmul.f32 %v2534, %v329
    %v2861 = vmul.f32 %v2537, %v329
    %v2863 = vsel %vm379, %v2858, 0
    %v2866 = vsel %vm379, %v2859, 0
    %2868 = vmatpush.msra.mxu0 0.0
    %2869 = vmatpush.msra.mxu0 0.0
    %2870 = vmatpush.msra.mxu0 0.0
    %2871 = vmatpush.msra.mxu0 0.0
    %2872 = vmatpush.msra.mxu0 0.0
    %2873 = vmatpush.msra.mxu0 0.0
    %2874 = vmatpush.msra.mxu0 0.0
    %2875 = vmatpush.msra.mxu0 0.0
    %2876 = vmatpush.msra.mxu0 0.0
    %2877 = vmatpush.msra.mxu0 0.0
    %2878 = vmatpush.msra.mxu0 0.0
    %2879 = vmatpush.msra.mxu0 0.0
    %2880 = vmatpush.msra.mxu0 0.0
    %2881 = vmatpush.msra.mxu0 0.0
    %2882 = vmatpush.msra.mxu0 %v2861
    %2883 = vmatpush.msra.mxu0 %v2860
    %2884 = vmatmul.f32.gmra.mxu0 %v2863
    %v2885 = vpop.f32.mrf.mxu0
    %v2886 = vadd.f32 0.0, %v2885
    %2887 = vmatmul.f32.gmra.mxu0 %v2866
    %v2888 = vpop.f32.mrf.mxu0
    %v2889 = vadd.f32 0.0, %v2888
    %2890 = vdwg.mxu0
    %v2891 = vadd.f32 %v2803, %v2886
    %v2892 = vadd.f32 %v2804, %v2889
    %s2893 = scalar_lea.vmem %s25, 80
    %v2894 = vld [vmem:[%s2893] sm:$0xff]
    %v2895 = vld [vmem:[%s2893 + $0x8] sm:$0xff]
    %v2896 = vld [vmem:[%s2893 + $0x10] sm:$0xff]
    %v2897 = vld [vmem:[%s2893 + $0x18] sm:$0xff]
    %v2898 = vld [vmem:[%s2893 + $0x20] sm:$0xff]
    %s2899 = scalar_lea.vmem %s27, 2
    %v2900 = vld [vmem:[%s2899] sm:$0x1]
    %v2902 = vperm.slane %v2900, 0
    %v2905 = vsel %vm345, %v2891, 0
    %v2908 = vsel %vm345, %v2892, 0
    %2910 = vmatpush.msra.mxu0 0.0
    %2911 = vmatpush.msra.mxu0 0.0
    %2912 = vmatpush.msra.mxu0 0.0
    %2913 = vmatpush.msra.mxu0 0.0
    %2914 = vmatpush.msra.mxu0 0.0
    %2915 = vmatpush.msra.mxu0 0.0
    %2916 = vmatpush.msra.mxu0 0.0
    %2917 = vmatpush.msra.mxu0 0.0
    %2918 = vmatpush.msra.mxu0 0.0
    %2919 = vmatpush.msra.mxu0 0.0
    %2920 = vmatpush.msra.mxu0 0.0
    %2921 = vmatpush.msra.mxu0 %v2898
    %2922 = vmatpush.msra.mxu0 %v2897
    %2923 = vmatpush.msra.mxu0 %v2896
    %2924 = vmatpush.msra.mxu0 %v2895
    %2925 = vmatpush.msra.mxu0 %v2894
    %2926 = vmatmul.f32.gmra.mxu0 %v2905
    %v2927 = vpop.f32.mrf.mxu0
    %v2928 = vadd.f32 %v2902, %v2927
    %2929 = vmatmul.f32.gmra.mxu0 %v2908
    %v2930 = vpop.f32.mrf.mxu0
    %v2931 = vadd.f32 %v2902, %v2930
    %2932 = vdwg.mxu0
    %v2933 = vadd.f32 %v2928, %v2356
    %v2934 = vadd.f32 %v2931, %v2357
    %s2935 = scalar_lea.vmem %s33, 2
    %v2936 = vld [vmem:[%s2935] sm:$0x1]
    %v2938 = vperm.slane %v2936, 0
    %v2940 = vmul.f32 %v2933, %v2938
    %v2941 = vmul.f32 %v2934, %v2938
    %s2942 = scalar_lea.vmem %s35, 2
    %v2943 = vld [vmem:[%s2942] sm:$0x1]
    %v2945 = vperm.slane %v2943, 0
    %v2947 = vadd.f32 %v2940, %v2945
    %v2948 = vadd.f32 %v2941, %v2945
    %v2949 = vadd.f32 %v2450, %v2947
    %v2950 = vadd.f32 %v2451, %v2948
    %s2951 = scalar_lea.vmem [#allocation7], 80
    %v2952 = vld [vmem:[%s2951] sm:$0xff]
    %v2953 = vld [vmem:[%s2951 + $0x8] sm:$0xff]
    %v2954 = vld [vmem:[%s2951 + $0x10] sm:$0xff]
    %v2955 = vld [vmem:[%s2951 + $0x18] sm:$0xff]
    %v2956 = vld [vmem:[%s2951 + $0x20] sm:$0xff]
    %s2957 = scalar_lea.vmem %s43, 2
    %v2958 = vld [vmem:[%s2957] sm:$0x1]
    %v2960 = vperm.slane %v2958, 0
    %v2963 = vsel %vm345, %v2949, 0
    %v2966 = vsel %vm345, %v2950, 0
    %2968 = vmatpush.msra.mxu0 0.0
    %2969 = vmatpush.msra.mxu0 0.0
    %2970 = vmatpush.msra.mxu0 0.0
    %2971 = vmatpush.msra.mxu0 0.0
    %2972 = vmatpush.msra.mxu0 0.0
    %2973 = vmatpush.msra.mxu0 0.0
    %2974 = vmatpush.msra.mxu0 0.0
    %2975 = vmatpush.msra.mxu0 0.0
    %2976 = vmatpush.msra.mxu0 0.0
    %2977 = vmatpush.msra.mxu0 0.0
    %2978 = vmatpush.msra.mxu0 0.0
    %2979 = vmatpush.msra.mxu0 %v2956
    %2980 = vmatpush.msra.mxu0 %v2955
    %2981 = vmatpush.msra.mxu0 %v2954
    %2982 = vmatpush.msra.mxu0 %v2953
    %2983 = vmatpush.msra.mxu0 %v2952
    %2984 = vmatmul.f32.gmra.mxu0 %v2963
    %v2985 = vpop.f32.mrf.mxu0
    %v2986 = vadd.f32 %v2960, %v2985
    %2987 = vmatmul.f32.gmra.mxu0 %v2966
    %v2988 = vpop.f32.mrf.mxu0
    %v2989 = vadd.f32 %v2960, %v2988
    %2990 = vdwg.mxu0
    %v2991 = vmax.f32 %v2986, 0.0
    %v2992 = vmax.f32 %v2989, 0.0
    %s2993 = scalar_lea.vmem %s45, 160
    %v2994 = vld [vmem:[%s2993] sm:$0xff]
    %v2995 = vld [vmem:[%s2993 + $0x8] sm:$0xff]
    %v2996 = vld [vmem:[%s2993 + $0x10] sm:$0xff]
    %v2997 = vld [vmem:[%s2993 + $0x18] sm:$0xff]
    %v2998 = vld [vmem:[%s2993 + $0x20] sm:$0xff]
    %v2999 = vld [vmem:[%s2993 + $0x28] sm:$0xff]
    %v3000 = vld [vmem:[%s2993 + $0x30] sm:$0xff]
    %v3001 = vld [vmem:[%s2993 + $0x38] sm:$0xff]
    %v3002 = vld [vmem:[%s2993 + $0x40] sm:$0xff]
    %v3003 = vld [vmem:[%s2993 + $0x48] sm:$0xff]
    %s3004 = scalar_lea.vmem %s47, 2
    %v3005 = vld [vmem:[%s3004] sm:$0x1]
    %v3007 = vperm.slane %v3005, 0
    %v3010 = vsel %vm969, %v2991, 0
    %v3013 = vsel %vm969, %v2992, 0
    %3015 = vmatpush.msra.mxu0 0.0
    %3016 = vmatpush.msra.mxu0 0.0
    %3017 = vmatpush.msra.mxu0 0.0
    %3018 = vmatpush.msra.mxu0 0.0
    %3019 = vmatpush.msra.mxu0 0.0
    %3020 = vmatpush.msra.mxu0 0.0
    %3021 = vmatpush.msra.mxu0 %v3003
    %3022 = vmatpush.msra.mxu0 %v3002
    %3023 = vmatpush.msra.mxu0 %v3001
    %3024 = vmatpush.msra.mxu0 %v3000
    %3025 = vmatpush.msra.mxu0 %v2999
    %3026 = vmatpush.msra.mxu0 %v2998
    %3027 = vmatpush.msra.mxu0 %v2997
    %3028 = vmatpush.msra.mxu0 %v2996
    %3029 = vmatpush.msra.mxu0 %v2995
    %3030 = vmatpush.msra.mxu0 %v2994
    %3031 = vmatmul.f32.gmra.mxu0 %v3010
    %v3032 = vpop.f32.mrf.mxu0
    %v3033 = vadd.f32 %v3007, %v3032
    %3034 = vmatmul.f32.gmra.mxu0 %v3013
    %v3035 = vpop.f32.mrf.mxu0
    %v3036 = vadd.f32 %v3007, %v3035
    %3037 = vdwg.mxu0
    %v3038 = vadd.f32 %v2949, %v3033
    %v3039 = vadd.f32 %v2950, %v3036
    %s3040 = scalar_lea.vmem %s37, 2
    %v3041 = vld [vmem:[%s3040] sm:$0x1]
    %v3043 = vperm.slane %v3041, 0
    %v3045 = vmul.f32 %v3038, %v3043
    %v3046 = vmul.f32 %v3039, %v3043
    %s3047 = scalar_lea.vmem %s39, 2
    %v3048 = vld [vmem:[%s3047] sm:$0x1]
    %v3050 = vperm.slane %v3048, 0
    %v3052 = vadd.f32 %v3045, %v3050
    %v3053 = vadd.f32 %v3046, %v3050
    %s3054 = scalar_lea.vmem %s49, 80
    %v3055 = vld [vmem:[%s3054] sm:$0xff]
    %v3056 = vld [vmem:[%s3054 + $0x8] sm:$0xff]
    %v3057 = vld [vmem:[%s3054 + $0x10] sm:$0xff]
    %v3058 = vld [vmem:[%s3054 + $0x18] sm:$0xff]
    %v3059 = vld [vmem:[%s3054 + $0x20] sm:$0xff]
    %s3060 = scalar_lea.vmem %s51, 2
    %v3061 = vld [vmem:[%s3060] sm:$0x1]
    %v3063 = vperm.slane %v3061, 0
    %v3066 = vsel %vm345, %v3052, 0
    %v3069 = vsel %vm345, %v3053, 0
    %3071 = vmatpush.msra.mxu0 0.0
    %3072 = vmatpush.msra.mxu0 0.0
    %3073 = vmatpush.msra.mxu0 0.0
    %3074 = vmatpush.msra.mxu0 0.0
    %3075 = vmatpush.msra.mxu0 0.0
    %3076 = vmatpush.msra.mxu0 0.0
    %3077 = vmatpush.msra.mxu0 0.0
    %3078 = vmatpush.msra.mxu0 0.0
    %3079 = vmatpush.msra.mxu0 0.0
    %3080 = vmatpush.msra.mxu0 0.0
    %3081 = vmatpush.msra.mxu0 0.0
    %3082 = vmatpush.msra.mxu0 %v3059
    %3083 = vmatpush.msra.mxu0 %v3058
    %3084 = vmatpush.msra.mxu0 %v3057
    %3085 = vmatpush.msra.mxu0 %v3056
    %3086 = vmatpush.msra.mxu0 %v3055
    %3087 = vmatmul.f32.gmra.mxu0 %v3066
    %v3088 = vpop.f32.mrf.mxu0
    %v3089 = vadd.f32 %v3063, %v3088
    %3090 = vmatmul.f32.gmra.mxu0 %v3069
    %v3091 = vpop.f32.mrf.mxu0
    %v3092 = vadd.f32 %v3063, %v3091
    %3093 = vdwg.mxu0
    %s3094 = scalar_lea.vmem [#allocation8], 64
    %v3095 = vld [vmem:[%s3094] sm:$0xff]
    %v3096 = vld [vmem:[%s3094 + $0x8] sm:$0xff]
    %v3097 = vld [vmem:[%s3094 + $0x10] sm:$0xff]
    %v3098 = vld [vmem:[%s3094 + $0x18] sm:$0xff]
    %v3100 = vsel %vm1055, %v3089, 0
    %v3103 = vsel %vm1055, %v3092, 0
    %3105 = vmatpush.msra.mxu0 0.0
    %3106 = vmatpush.msra.mxu0 0.0
    %3107 = vmatpush.msra.mxu0 0.0
    %3108 = vmatpush.msra.mxu0 0.0
    %3109 = vmatpush.msra.mxu0 0.0
    %3110 = vmatpush.msra.mxu0 0.0
    %3111 = vmatpush.msra.mxu0 0.0
    %3112 = vmatpush.msra.mxu0 0.0
    %3113 = vmatpush.msra.mxu0 0.0
    %3114 = vmatpush.msra.mxu0 0.0
    %3115 = vmatpush.msra.mxu0 0.0
    %3116 = vmatpush.msra.mxu0 0.0
    %3117 = vmatpush.msra.mxu0 %v3098
    %3118 = vmatpush.msra.mxu0 %v3097
    %3119 = vmatpush.msra.mxu0 %v3096
    %3120 = vmatpush.msra.mxu0 %v3095
    %3121 = vmatmul.f32.gmra.mxu0 %v3100
    %v3122 = vpop.f32.mrf.mxu0
    %v3123 = vadd.f32 0.0, %v3122
    %3124 = vmatmul.f32.gmra.mxu0 %v3103
    %v3125 = vpop.f32.mrf.mxu0
    %v3126 = vadd.f32 0.0, %v3125
    %3127 = vdwg.mxu0
    %s3128 = scalar_lea.vmem %s57, 2
    %v3129 = vld [vmem:[%s3128] sm:$0x1]
    %v3131 = vperm.slane %v3129, 0
    %v3133 = vmul.f32 %v3123, %v3131
    %v3134 = vmul.f32 %v3126, %v3131
    %v3135 = vsel %vm1055, %v3133, 0.0
    %3136 = vadd.xlane.f32.xlu0 %v3135
    %v3137 = vpop.xlane.xlu0 %3136
    %v3138 = vsel %vm1055, %v3134, 0.0
    %3139 = vadd.xlane.f32.xlu0 %v3138
    %v3140 = vpop.xlane.xlu0 %3139
    %s3141 = scalar_lea.vmem %s55, 2
    %v3142 = vld [vmem:[%s3141] sm:$0x1]
    %v3144 = vsel %vm1055, %v3142, 0
    %v3147 = vsel %vm1055, %v3123, 0
    %v3150 = vsel %vm1055, %v3126, 0
    %3152 = vmatpush.xpose.msra.mxu0 0.0
    %3153 = vmatpush.xpose.msra.mxu0 0.0
    %3154 = vmatpush.xpose.msra.mxu0 0.0
    %3155 = vmatpush.xpose.msra.mxu0 0.0
    %3156 = vmatpush.xpose.msra.mxu0 0.0
    %3157 = vmatpush.xpose.msra.mxu0 0.0
    %3158 = vmatpush.xpose.msra.mxu0 0.0
    %3159 = vmatpush.xpose.msra.mxu0 0.0
    %3160 = vmatpush.xpose.msra.mxu0 0.0
    %3161 = vmatpush.xpose.msra.mxu0 0.0
    %3162 = vmatpush.xpose.msra.mxu0 0.0
    %3163 = vmatpush.xpose.msra.mxu0 0.0
    %3164 = vmatpush.xpose.msra.mxu0 0.0
    %3165 = vmatpush.xpose.msra.mxu0 0.0
    %3166 = vmatpush.xpose.msra.mxu0 %v3150
    %3167 = vmatpush.xpose.msra.mxu0 %v3147
    %3168 = vmatmul.f32.gmra.mxu0 %v3144
    %v3169 = vpop.f32.mrf.mxu0
    %v3170 = vadd.f32 0.0, %v3169
    %3171 = vdwg.mxu0
    %v3172 = vperm.slane %v3170, 0
    %v3173 = vadd.f32 %v3137, %v3172
    %v3174 = vadd.f32 %v3140, %v3172
    %vm3175 = vcmp.gt.f32.partialorder %v3173, 0.0
    %vm3176 = vcmp.gt.f32.partialorder %v3174, 0.0
    %v3177 = vmul.f32 %v3173, 0.2
    %v3178 = vmul.f32 %v3174, 0.2
    %v3179 = vsel %vm3175, %v3173, %v3177
    %v3180 = vsel %vm3176, %v3174, %v3178
    %vm3181 = vcmp.gt.f32.partialorder %v2365, 0.0
    %vm3182 = vcmp.gt.f32.partialorder %v2366, 0.0
    %v3183 = vsel %vm3181, %v3179, -1e+30
    %v3184 = vsel %vm3182, %v3180, -1e+30
    %v3185 = vsel %vm379, %v3183, -inf
    %3186 = vmax.xlane.f32.xlu0 %v3185
    %v3187 = vpop.xlane.xlu0 %3186
    %v3188 = vsel %vm379, %v3184, -inf
    %3189 = vmax.xlane.f32.xlu0 %v3188
    %v3190 = vpop.xlane.xlu0 %3189
    %v3191 = vsub.f32 %v3183, %v3187
    %v3192 = vsub.f32 %v3184, %v3190
    %v3193 = vmul.f32 %v3191, 1.442695
    %v3194 = vpow.pop %v3193
    %v3195 = vmul.f32 %v3192, 1.442695
    %v3196 = vpow.pop %v3195
    %v3197 = vsel %vm379, %v3194, 0.0
    %3198 = vadd.xlane.f32.xlu0 %v3197
    %v3199 = vpop.xlane.xlu0 %3198
    %v3200 = vsel %vm379, %v3196, 0.0
    %3201 = vadd.xlane.f32.xlu0 %v3200
    %v3202 = vpop.xlane.xlu0 %3201
    %v3203 = vrcp.pop %v3199
    %v3204 = vrcp.pop %v3202
    %v3205 = vmul.f32 %v3194, %v3203
    %v3206 = vmul.f32 %v3196, %v3204
    %s3207 = scalar_lea.vmem %s59, 2
    %v3208 = vld [vmem:[%s3207] sm:$0x1]
    %v3210 = vperm.slane %v3208, 0
    %v3213 = vsel %vm379, %v3205, 0
    %v3216 = vsel %vm379, %v3206, 0
    %3218 = vmatpush.msra.mxu0 0.0
    %3219 = vmatpush.msra.mxu0 0.0
    %3220 = vmatpush.msra.mxu0 0.0
    %3221 = vmatpush.msra.mxu0 0.0
    %3222 = vmatpush.msra.mxu0 0.0
    %3223 = vmatpush.msra.mxu0 0.0
    %3224 = vmatpush.msra.mxu0 0.0
    %3225 = vmatpush.msra.mxu0 0.0
    %3226 = vmatpush.msra.mxu0 0.0
    %3227 = vmatpush.msra.mxu0 0.0
    %3228 = vmatpush.msra.mxu0 0.0
    %3229 = vmatpush.msra.mxu0 0.0
    %3230 = vmatpush.msra.mxu0 0.0
    %3231 = vmatpush.msra.mxu0 0.0
    %3232 = vmatpush.msra.mxu0 %v3126
    %3233 = vmatpush.msra.mxu0 %v3123
    %3234 = vmatmul.f32.gmra.mxu0 %v3213
    %v3235 = vpop.f32.mrf.mxu0
    %v3236 = vadd.f32 %v3210, %v3235
    %3237 = vmatmul.f32.gmra.mxu0 %v3216
    %v3238 = vpop.f32.mrf.mxu0
    %v3239 = vadd.f32 %v3210, %v3238
    %3240 = vdwg.mxu0
    %s3241 = scalar_lea.vmem [#allocation10], 64
    %v3242 = vld [vmem:[%s3241] sm:$0xff]
    %v3243 = vld [vmem:[%s3241 + $0x8] sm:$0xff]
    %v3244 = vld [vmem:[%s3241 + $0x10] sm:$0xff]
    %v3245 = vld [vmem:[%s3241 + $0x18] sm:$0xff]
    %v3247 = vsel %vm1055, %v3236, 0
    %v3250 = vsel %vm1055, %v3239, 0
    %3252 = vmatpush.msra.mxu0 0.0
    %3253 = vmatpush.msra.mxu0 0.0
    %3254 = vmatpush.msra.mxu0 0.0
    %3255 = vmatpush.msra.mxu0 0.0
    %3256 = vmatpush.msra.mxu0 0.0
    %3257 = vmatpush.msra.mxu0 0.0
    %3258 = vmatpush.msra.mxu0 0.0
    %3259 = vmatpush.msra.mxu0 0.0
    %3260 = vmatpush.msra.mxu0 0.0
    %3261 = vmatpush.msra.mxu0 0.0
    %3262 = vmatpush.msra.mxu0 0.0
    %3263 = vmatpush.msra.mxu0 0.0
    %3264 = vmatpush.msra.mxu0 %v3245
    %3265 = vmatpush.msra.mxu0 %v3244
    %3266 = vmatpush.msra.mxu0 %v3243
    %3267 = vmatpush.msra.mxu0 %v3242
    %3268 = vmatmul.f32.gmra.mxu0 %v3247
    %v3269 = vpop.f32.mrf.mxu0
    %v3270 = vadd.f32 0.0, %v3269
    %3271 = vmatmul.f32.gmra.mxu0 %v3250
    %v3272 = vpop.f32.mrf.mxu0
    %v3273 = vadd.f32 0.0, %v3272
    %3274 = vdwg.mxu0
    %s3275 = scalar_lea.vmem %s63, 2
    %v3276 = vld [vmem:[%s3275] sm:$0x1]
    %v3278 = vperm.slane %v3276, 0
    %v3281 = vsel %vm379, %v2362, 0
    %v3284 = vsel %vm379, %v2363, 0
    %3286 = vmatpush.msra.mxu0 0.0
    %3287 = vmatpush.msra.mxu0 0.0
    %3288 = vmatpush.msra.mxu0 0.0
    %3289 = vmatpush.msra.mxu0 0.0
    %3290 = vmatpush.msra.mxu0 0.0
    %3291 = vmatpush.msra.mxu0 0.0
    %3292 = vmatpush.msra.mxu0 0.0
    %3293 = vmatpush.msra.mxu0 0.0
    %3294 = vmatpush.msra.mxu0 0.0
    %3295 = vmatpush.msra.mxu0 0.0
    %3296 = vmatpush.msra.mxu0 0.0
    %3297 = vmatpush.msra.mxu0 0.0
    %3298 = vmatpush.msra.mxu0 0.0
    %3299 = vmatpush.msra.mxu0 0.0
    %3300 = vmatpush.msra.mxu0 %v3273
    %3301 = vmatpush.msra.mxu0 %v3270
    %3302 = vmatmul.f32.gmra.mxu0 %v3281
    %v3303 = vpop.f32.mrf.mxu0
    %v3304 = vadd.f32 %v3278, %v3303
    %3305 = vmatmul.f32.gmra.mxu0 %v3284
    %v3306 = vpop.f32.mrf.mxu0
    %v3307 = vadd.f32 %v3278, %v3306
    %3308 = vdwg.mxu0
    %s3309 = scalar_lea.vmem [#allocation11], 64
    %v3310 = vld [vmem:[%s3309] sm:$0xff]
    %v3311 = vld [vmem:[%s3309 + $0x8] sm:$0xff]
    %v3312 = vld [vmem:[%s3309 + $0x10] sm:$0xff]
    %v3313 = vld [vmem:[%s3309 + $0x18] sm:$0xff]
    %3314 = vmatpush.msra.mxu0 0.0
    %3315 = vmatpush.msra.mxu0 0.0
    %3316 = vmatpush.msra.mxu0 0.0
    %3317 = vmatpush.msra.mxu0 0.0
    %3318 = vmatpush.msra.mxu0 0.0
    %3319 = vmatpush.msra.mxu0 0.0
    %3320 = vmatpush.msra.mxu0 0.0
    %3321 = vmatpush.msra.mxu0 0.0
    %3322 = vmatpush.msra.mxu0 0.0
    %3323 = vmatpush.msra.mxu0 0.0
    %3324 = vmatpush.msra.mxu0 0.0
    %3325 = vmatpush.msra.mxu0 0.0
    %3326 = vmatpush.msra.mxu0 %v3313
    %3327 = vmatpush.msra.mxu0 %v3312
    %3328 = vmatpush.msra.mxu0 %v3311
    %3329 = vmatpush.msra.mxu0 %v3310
    %3330 = vmatmul.f32.gmra.mxu0 %v3247
    %v3331 = vpop.f32.mrf.mxu0
    %v3332 = vadd.f32 0.0, %v3331
    %3333 = vmatmul.f32.gmra.mxu0 %v3250
    %v3334 = vpop.f32.mrf.mxu0
    %v3335 = vadd.f32 0.0, %v3334
    %3336 = vdwg.mxu0
    %s3337 = scalar_lea.vmem %s67, 2
    %v3338 = vld [vmem:[%s3337] sm:$0x1]
    %v3340 = vperm.slane %v3338, 0
    %3342 = vmatpush.msra.mxu0 0.0
    %3343 = vmatpush.msra.mxu0 0.0
    %3344 = vmatpush.msra.mxu0 0.0
    %3345 = vmatpush.msra.mxu0 0.0
    %3346 = vmatpush.msra.mxu0 0.0
    %3347 = vmatpush.msra.mxu0 0.0
    %3348 = vmatpush.msra.mxu0 0.0
    %3349 = vmatpush.msra.mxu0 0.0
    %3350 = vmatpush.msra.mxu0 0.0
    %3351 = vmatpush.msra.mxu0 0.0
    %3352 = vmatpush.msra.mxu0 0.0
    %3353 = vmatpush.msra.mxu0 0.0
    %3354 = vmatpush.msra.mxu0 0.0
    %3355 = vmatpush.msra.mxu0 0.0
    %3356 = vmatpush.msra.mxu0 %v3335
    %3357 = vmatpush.msra.mxu0 %v3332
    %3358 = vmatmul.f32.gmra.mxu0 %v2408
    %v3359 = vpop.f32.mrf.mxu0
    %v3360 = vadd.f32 %v3340, %v3359
    %3361 = vmatmul.f32.gmra.mxu0 %v2411
    %v3362 = vpop.f32.mrf.mxu0
    %v3363 = vadd.f32 %v3340, %v3362
    %3364 = vdwg.mxu0
    %v3365 = vadd.f32 %v3360, %v3304
    %v3366 = vadd.f32 %v3363, %v3307
    %s3367 = scalar_lea.vmem %s69, 2
    %v3368 = vld [vmem:[%s3367] sm:$0x1]
    %v3370 = vperm.slane %v3368, 0
    %v3372 = vmul.f32 %v3365, %v3370
    %v3373 = vmul.f32 %v3366, %v3370
    %s3374 = scalar_lea.vmem %s71, 2
    %v3375 = vld [vmem:[%s3374] sm:$0x1]
    %v3377 = vperm.slane %v3375, 0
    %v3379 = vadd.f32 %v3372, %v3377
    %v3380 = vadd.f32 %v3373, %v3377
    %s3381 = scalar_lea.vmem %s1, 48
    %v3382 = vld [vmem:[%s3381] sm:$0xff]
    %v3383 = vld [vmem:[%s3381 + $0x8] sm:$0xff]
    %s3384 = scalar_lea.vmem %s5, 48
    %v3385 = vld [vmem:[%s3384] sm:$0xff]
    %v3386 = vld [vmem:[%s3384 + $0x8] sm:$0xff]
    %s3387 = scalar_lea.vmem [#allocation2], 48
    %v3388 = vld [vmem:[%s3387] sm:$0xff]
    %v3389 = vld [vmem:[%s3387 + $0x8] sm:$0xff]
    %s3390 = scalar_lea.vmem [#allocation5], 48
    %v3391 = vld [vmem:[%s3390] sm:$0xff]
    %v3392 = vld [vmem:[%s3390 + $0x8] sm:$0xff]
    %s3393 = scalar_lea.vmem %s15, 120
    %v3394 = vld [vmem:[%s3393] sm:$0xff]
    %v3395 = vld [vmem:[%s3393 + $0x8] sm:$0xff]
    %v3396 = vld [vmem:[%s3393 + $0x10] sm:$0xff]
    %v3397 = vld [vmem:[%s3393 + $0x18] sm:$0xff]
    %v3398 = vld [vmem:[%s3393 + $0x20] sm:$0xff]
    %v3400 = vsel %vm345, %v3382, 0
    %v3403 = vsel %vm345, %v3383, 0
    %3405 = vmatpush.msra.mxu0 0.0
    %3406 = vmatpush.msra.mxu0 0.0
    %3407 = vmatpush.msra.mxu0 0.0
    %3408 = vmatpush.msra.mxu0 0.0
    %3409 = vmatpush.msra.mxu0 0.0
    %3410 = vmatpush.msra.mxu0 0.0
    %3411 = vmatpush.msra.mxu0 0.0
    %3412 = vmatpush.msra.mxu0 0.0
    %3413 = vmatpush.msra.mxu0 0.0
    %3414 = vmatpush.msra.mxu0 0.0
    %3415 = vmatpush.msra.mxu0 0.0
    %3416 = vmatpush.msra.mxu0 %v3398
    %3417 = vmatpush.msra.mxu0 %v3397
    %3418 = vmatpush.msra.mxu0 %v3396
    %3419 = vmatpush.msra.mxu0 %v3395
    %3420 = vmatpush.msra.mxu0 %v3394
    %3421 = vmatmul.f32.gmra.mxu0 %v3400
    %v3422 = vpop.f32.mrf.mxu0
    %v3423 = vadd.f32 0.0, %v3422
    %3424 = vmatmul.f32.gmra.mxu0 %v3403
    %v3425 = vpop.f32.mrf.mxu0
    %v3426 = vadd.f32 0.0, %v3425
    %3427 = vdwg.mxu0
    %s3428 = scalar_lea.vmem %s17, 3
    %v3429 = vld [vmem:[%s3428] sm:$0x1]
    %v3431 = vperm.slane %v3429, 0
    %v3434 = vsel %vm379, %v3385, 0
    %v3437 = vsel %vm379, %v3386, 0
    %3439 = vmatpush.msra.mxu0 0.0
    %3440 = vmatpush.msra.mxu0 0.0
    %3441 = vmatpush.msra.mxu0 0.0
    %3442 = vmatpush.msra.mxu0 0.0
    %3443 = vmatpush.msra.mxu0 0.0
    %3444 = vmatpush.msra.mxu0 0.0
    %3445 = vmatpush.msra.mxu0 0.0
    %3446 = vmatpush.msra.mxu0 0.0
    %3447 = vmatpush.msra.mxu0 0.0
    %3448 = vmatpush.msra.mxu0 0.0
    %3449 = vmatpush.msra.mxu0 0.0
    %3450 = vmatpush.msra.mxu0 0.0
    %3451 = vmatpush.msra.mxu0 0.0
    %3452 = vmatpush.msra.mxu0 0.0
    %3453 = vmatpush.msra.mxu0 %v3426
    %3454 = vmatpush.msra.mxu0 %v3423
    %3455 = vmatmul.f32.gmra.mxu0 %v3434
    %v3456 = vpop.f32.mrf.mxu0
    %v3457 = vadd.f32 %v3431, %v3456
    %3458 = vmatmul.f32.gmra.mxu0 %v3437
    %v3459 = vpop.f32.mrf.mxu0
    %v3460 = vadd.f32 %v3431, %v3459
    %3461 = vdwg.mxu0
    %v3462 = vadd.f32 %v3457, %v3382
    %v3463 = vadd.f32 %v3460, %v3383
    %s3464 = scalar_lea.vmem %s29, 3
    %v3465 = vld [vmem:[%s3464] sm:$0x1]
    %v3467 = vperm.slane %v3465, 0
    %v3469 = vmul.f32 %v3462, %v3467
    %v3470 = vmul.f32 %v3463, %v3467
    %s3471 = scalar_lea.vmem %s31, 3
    %v3472 = vld [vmem:[%s3471] sm:$0x1]
    %v3474 = vperm.slane %v3472, 0
    %v3476 = vadd.f32 %v3469, %v3474
    %v3477 = vadd.f32 %v3470, %v3474
    %s3478 = scalar_lea.vmem %s19, 120
    %v3479 = vld [vmem:[%s3478] sm:$0xff]
    %v3480 = vld [vmem:[%s3478 + $0x8] sm:$0xff]
    %v3481 = vld [vmem:[%s3478 + $0x10] sm:$0xff]
    %v3482 = vld [vmem:[%s3478 + $0x18] sm:$0xff]
    %v3483 = vld [vmem:[%s3478 + $0x20] sm:$0xff]
    %3484 = vmatpush.msra.mxu0 0.0
    %3485 = vmatpush.msra.mxu0 0.0
    %3486 = vmatpush.msra.mxu0 0.0
    %3487 = vmatpush.msra.mxu0 0.0
    %3488 = vmatpush.msra.mxu0 0.0
    %3489 = vmatpush.msra.mxu0 0.0
    %3490 = vmatpush.msra.mxu0 0.0
    %3491 = vmatpush.msra.mxu0 0.0
    %3492 = vmatpush.msra.mxu0 0.0
    %3493 = vmatpush.msra.mxu0 0.0
    %3494 = vmatpush.msra.mxu0 0.0
    %3495 = vmatpush.msra.mxu0 %v3483
    %3496 = vmatpush.msra.mxu0 %v3482
    %3497 = vmatpush.msra.mxu0 %v3481
    %3498 = vmatpush.msra.mxu0 %v3480
    %3499 = vmatpush.msra.mxu0 %v3479
    %3500 = vmatmul.f32.gmra.mxu0 %v3400
    %v3501 = vpop.f32.mrf.mxu0
    %v3502 = vadd.f32 0.0, %v3501
    %3503 = vmatmul.f32.gmra.mxu0 %v3403
    %v3504 = vpop.f32.mrf.mxu0
    %v3505 = vadd.f32 0.0, %v3504
    %3506 = vdwg.mxu0
    %s3507 = scalar_lea.vmem %s21, 120
    %v3508 = vld [vmem:[%s3507] sm:$0xff]
    %v3509 = vld [vmem:[%s3507 + $0x8] sm:$0xff]
    %v3510 = vld [vmem:[%s3507 + $0x10] sm:$0xff]
    %v3511 = vld [vmem:[%s3507 + $0x18] sm:$0xff]
    %v3512 = vld [vmem:[%s3507 + $0x20] sm:$0xff]
    %3513 = vmatpush.msra.mxu0 0.0
    %3514 = vmatpush.msra.mxu0 0.0
    %3515 = vmatpush.msra.mxu0 0.0
    %3516 = vmatpush.msra.mxu0 0.0
    %3517 = vmatpush.msra.mxu0 0.0
    %3518 = vmatpush.msra.mxu0 0.0
    %3519 = vmatpush.msra.mxu0 0.0
    %3520 = vmatpush.msra.mxu0 0.0
    %3521 = vmatpush.msra.mxu0 0.0
    %3522 = vmatpush.msra.mxu0 0.0
    %3523 = vmatpush.msra.mxu0 0.0
    %3524 = vmatpush.msra.mxu0 %v3512
    %3525 = vmatpush.msra.mxu0 %v3511
    %3526 = vmatpush.msra.mxu0 %v3510
    %3527 = vmatpush.msra.mxu0 %v3509
    %3528 = vmatpush.msra.mxu0 %v3508
    %3529 = vmatmul.f32.gmra.mxu0 %v3400
    %v3530 = vpop.f32.mrf.mxu0
    %v3531 = vadd.f32 0.0, %v3530
    %3532 = vmatmul.f32.gmra.mxu0 %v3403
    %v3533 = vpop.f32.mrf.mxu0
    %v3534 = vadd.f32 0.0, %v3533
    %3535 = vdwg.mxu0
    %s3536 = scalar_lea.vmem %s23, 120
    %v3537 = vld [vmem:[%s3536] sm:$0xff]
    %v3538 = vld [vmem:[%s3536 + $0x8] sm:$0xff]
    %v3539 = vld [vmem:[%s3536 + $0x10] sm:$0xff]
    %v3540 = vld [vmem:[%s3536 + $0x18] sm:$0xff]
    %v3541 = vld [vmem:[%s3536 + $0x20] sm:$0xff]
    %3542 = vmatpush.msra.mxu0 0.0
    %3543 = vmatpush.msra.mxu0 0.0
    %3544 = vmatpush.msra.mxu0 0.0
    %3545 = vmatpush.msra.mxu0 0.0
    %3546 = vmatpush.msra.mxu0 0.0
    %3547 = vmatpush.msra.mxu0 0.0
    %3548 = vmatpush.msra.mxu0 0.0
    %3549 = vmatpush.msra.mxu0 0.0
    %3550 = vmatpush.msra.mxu0 0.0
    %3551 = vmatpush.msra.mxu0 0.0
    %3552 = vmatpush.msra.mxu0 0.0
    %3553 = vmatpush.msra.mxu0 %v3541
    %3554 = vmatpush.msra.mxu0 %v3540
    %3555 = vmatpush.msra.mxu0 %v3539
    %3556 = vmatpush.msra.mxu0 %v3538
    %3557 = vmatpush.msra.mxu0 %v3537
    %3558 = vmatmul.f32.gmra.mxu0 %v3400
    %v3559 = vpop.f32.mrf.mxu0
    %v3560 = vadd.f32 0.0, %v3559
    %3561 = vmatmul.f32.gmra.mxu0 %v3403
    %v3562 = vpop.f32.mrf.mxu0
    %v3563 = vadd.f32 0.0, %v3562
    %3564 = vdwg.mxu0
    %v3565 = vmul.f32 %v3502, %v314
    %v3566 = vmul.f32 %v3505, %v314
    %v3568 = vsel %vm345, %v3565, 0
    %v3571 = vsel %vm345, %v3566, 0
    %v3574 = vsel %vm345, %v3531, 0
    %v3577 = vsel %vm345, %v3534, 0
    %3579 = vmatpush.xpose.msra.mxu0 0.0
    %3580 = vmatpush.xpose.msra.mxu0 0.0
    %3581 = vmatpush.xpose.msra.mxu0 0.0
    %3582 = vmatpush.xpose.msra.mxu0 0.0
    %3583 = vmatpush.xpose.msra.mxu0 0.0
    %3584 = vmatpush.xpose.msra.mxu0 0.0
    %3585 = vmatpush.xpose.msra.mxu0 0.0
    %3586 = vmatpush.xpose.msra.mxu0 0.0
    %3587 = vmatpush.xpose.msra.mxu0 0.0
    %3588 = vmatpush.xpose.msra.mxu0 0.0
    %3589 = vmatpush.xpose.msra.mxu0 0.0
    %3590 = vmatpush.xpose.msra.mxu0 0.0
    %3591 = vmatpush.xpose.msra.mxu0 0.0
    %3592 = vmatpush.xpose.msra.mxu0 0.0
    %3593 = vmatpush.xpose.msra.mxu0 %v3577
    %3594 = vmatpush.xpose.msra.mxu0 %v3574
    %3595 = vmatmul.f32.gmra.mxu0 %v3568
    %v3596 = vpop.f32.mrf.mxu0
    %v3597 = vadd.f32 0.0, %v3596
    %3598 = vmatmul.f32.gmra.mxu0 %v3571
    %v3599 = vpop.f32.mrf.mxu0
    %v3600 = vadd.f32 0.0, %v3599
    %3601 = vdwg.mxu0
    %v3602 = vmul.f32 %v3597, 0.31622776
    %v3603 = vmul.f32 %v3600, 0.31622776
    %v3604 = vsel %vm379, %v3602, -inf
    %3605 = vmax.xlane.f32.xlu0 %v3604
    %v3606 = vpop.xlane.xlu0 %3605
    %v3607 = vsel %vm379, %v3603, -inf
    %3608 = vmax.xlane.f32.xlu0 %v3607
    %v3609 = vpop.xlane.xlu0 %3608
    %v3610 = vsub.f32 %v3602, %v3606
    %v3611 = vsub.f32 %v3603, %v3609
    %v3612 = vmul.f32 %v3610, 1.442695
    %v3613 = vpow.pop %v3612
    %v3614 = vmul.f32 %v3611, 1.442695
    %v3615 = vpow.pop %v3614
    %v3616 = vsel %vm379, %v3613, 0.0
    %3617 = vadd.xlane.f32.xlu0 %v3616
    %v3618 = vpop.xlane.xlu0 %3617
    %v3619 = vsel %vm379, %v3615, 0.0
    %3620 = vadd.xlane.f32.xlu0 %v3619
    %v3621 = vpop.xlane.xlu0 %3620
    %v3622 = vrcp.pop %v3618
    %v3623 = vrcp.pop %v3621
    %v3624 = vmul.f32 %v3613, %v3622
    %v3625 = vmul.f32 %v3615, %v3623
    %v3626 = vmul.f32 %v3560, %v314
    %v3627 = vmul.f32 %v3563, %v314
    %v3628 = vmul.f32 %v3502, %v319
    %v3629 = vmul.f32 %v3505, %v319
    %v3631 = vsel %vm345, %v3628, 0
    %v3634 = vsel %vm345, %v3629, 0
    %3636 = vmatpush.xpose.msra.mxu0 0.0
    %3637 = vmatpush.xpose.msra.mxu0 0.0
    %3638 = vmatpush.xpose.msra.mxu0 0.0
    %3639 = vmatpush.xpose.msra.mxu0 0.0
    %3640 = vmatpush.xpose.msra.mxu0 0.0
    %3641 = vmatpush.xpose.msra.mxu0 0.0
    %3642 = vmatpush.xpose.msra.mxu0 0.0
    %3643 = vmatpush.xpose.msra.mxu0 0.0
    %3644 = vmatpush.xpose.msra.mxu0 0.0
    %3645 = vmatpush.xpose.msra.mxu0 0.0
    %3646 = vmatpush.xpose.msra.mxu0 0.0
    %3647 = vmatpush.xpose.msra.mxu0 0.0
    %3648 = vmatpush.xpose.msra.mxu0 0.0
    %3649 = vmatpush.xpose.msra.mxu0 0.0
    %3650 = vmatpush.xpose.msra.mxu0 %v3577
    %3651 = vmatpush.xpose.msra.mxu0 %v3574
    %3652 = vmatmul.f32.gmra.mxu0 %v3631
    %v3653 = vpop.f32.mrf.mxu0
    %v3654 = vadd.f32 0.0, %v3653
    %3655 = vmatmul.f32.gmra.mxu0 %v3634
    %v3656 = vpop.f32.mrf.mxu0
    %v3657 = vadd.f32 0.0, %v3656
    %3658 = vdwg.mxu0
    %v3659 = vmul.f32 %v3654, 0.31622776
    %v3660 = vmul.f32 %v3657, 0.31622776
    %v3661 = vsel %vm379, %v3659, -inf
    %3662 = vmax.xlane.f32.xlu0 %v3661
    %v3663 = vpop.xlane.xlu0 %3662
    %v3664 = vsel %vm379, %v3660, -inf
    %3665 = vmax.xlane.f32.xlu0 %v3664
    %v3666 = vpop.xlane.xlu0 %3665
    %v3667 = vsub.f32 %v3659, %v3663
    %v3668 = vsub.f32 %v3660, %v3666
    %v3669 = vmul.f32 %v3667, 1.442695
    %v3670 = vpow.pop %v3669
    %v3671 = vmul.f32 %v3668, 1.442695
    %v3672 = vpow.pop %v3671
    %v3673 = vsel %vm379, %v3670, 0.0
    %3674 = vadd.xlane.f32.xlu0 %v3673
    %v3675 = vpop.xlane.xlu0 %3674
    %v3676 = vsel %vm379, %v3672, 0.0
    %3677 = vadd.xlane.f32.xlu0 %v3676
    %v3678 = vpop.xlane.xlu0 %3677
    %v3679 = vrcp.pop %v3675
    %v3680 = vrcp.pop %v3678
    %v3681 = vmul.f32 %v3670, %v3679
    %v3682 = vmul.f32 %v3672, %v3680
    %v3683 = vmul.f32 %v3560, %v319
    %v3684 = vmul.f32 %v3563, %v319
    %v3686 = vsel %vm379, %v3681, 0
    %v3689 = vsel %vm379, %v3682, 0
    %3691 = vmatpush.msra.mxu0 0.0
    %3692 = vmatpush.msra.mxu0 0.0
    %3693 = vmatpush.msra.mxu0 0.0
    %3694 = vmatpush.msra.mxu0 0.0
    %3695 = vmatpush.msra.mxu0 0.0
    %3696 = vmatpush.msra.mxu0 0.0
    %3697 = vmatpush.msra.mxu0 0.0
    %3698 = vmatpush.msra.mxu0 0.0
    %3699 = vmatpush.msra.mxu0 0.0
    %3700 = vmatpush.msra.mxu0 0.0
    %3701 = vmatpush.msra.mxu0 0.0
    %3702 = vmatpush.msra.mxu0 0.0
    %3703 = vmatpush.msra.mxu0 0.0
    %3704 = vmatpush.msra.mxu0 0.0
    %3705 = vmatpush.msra.mxu0 %v3684
    %3706 = vmatpush.msra.mxu0 %v3683
    %3707 = vmatmul.f32.gmra.mxu0 %v3686
    %v3708 = vpop.f32.mrf.mxu0
    %v3709 = vadd.f32 0.0, %v3708
    %3710 = vmatmul.f32.gmra.mxu0 %v3689
    %v3711 = vpop.f32.mrf.mxu0
    %v3712 = vadd.f32 0.0, %v3711
    %3713 = vdwg.mxu0
    %v3715 = vsel %vm379, %v3624, 0
    %v3718 = vsel %vm379, %v3625, 0
    %3720 = vmatpush.msra.mxu0 0.0
    %3721 = vmatpush.msra.mxu0 0.0
    %3722 = vmatpush.msra.mxu0 0.0
    %3723 = vmatpush.msra.mxu0 0.0
    %3724 = vmatpush.msra.mxu0 0.0
    %3725 = vmatpush.msra.mxu0 0.0
    %3726 = vmatpush.msra.mxu0 0.0
    %3727 = vmatpush.msra.mxu0 0.0
    %3728 = vmatpush.msra.mxu0 0.0
    %3729 = vmatpush.msra.mxu0 0.0
    %3730 = vmatpush.msra.mxu0 0.0
    %3731 = vmatpush.msra.mxu0 0.0
    %3732 = vmatpush.msra.mxu0 0.0
    %3733 = vmatpush.msra.mxu0 0.0
    %3734 = vmatpush.msra.mxu0 %v3627
    %3735 = vmatpush.msra.mxu0 %v3626
    %3736 = vmatmul.f32.gmra.mxu0 %v3715
    %v3737 = vpop.f32.mrf.mxu0
    %v3738 = vadd.f32 %v3709, %v3737
    %3739 = vmatmul.f32.gmra.mxu0 %v3718
    %v3740 = vpop.f32.mrf.mxu0
    %v3741 = vadd.f32 %v3712, %v3740
    %3742 = vdwg.mxu0
    %v3743 = vmul.f32 %v3502, %v324
    %v3744 = vmul.f32 %v3505, %v324
    %v3746 = vsel %vm345, %v3743, 0
    %v3749 = vsel %vm345, %v3744, 0
    %3751 = vmatpush.xpose.msra.mxu0 0.0
    %3752 = vmatpush.xpose.msra.mxu0 0.0
    %3753 = vmatpush.xpose.msra.mxu0 0.0
    %3754 = vmatpush.xpose.msra.mxu0 0.0
    %3755 = vmatpush.xpose.msra.mxu0 0.0
    %3756 = vmatpush.xpose.msra.mxu0 0.0
    %3757 = vmatpush.xpose.msra.mxu0 0.0
    %3758 = vmatpush.xpose.msra.mxu0 0.0
    %3759 = vmatpush.xpose.msra.mxu0 0.0
    %3760 = vmatpush.xpose.msra.mxu0 0.0
    %3761 = vmatpush.xpose.msra.mxu0 0.0
    %3762 = vmatpush.xpose.msra.mxu0 0.0
    %3763 = vmatpush.xpose.msra.mxu0 0.0
    %3764 = vmatpush.xpose.msra.mxu0 0.0
    %3765 = vmatpush.xpose.msra.mxu0 %v3577
    %3766 = vmatpush.xpose.msra.mxu0 %v3574
    %3767 = vmatmul.f32.gmra.mxu0 %v3746
    %v3768 = vpop.f32.mrf.mxu0
    %v3769 = vadd.f32 0.0, %v3768
    %3770 = vmatmul.f32.gmra.mxu0 %v3749
    %v3771 = vpop.f32.mrf.mxu0
    %v3772 = vadd.f32 0.0, %v3771
    %3773 = vdwg.mxu0
    %v3774 = vmul.f32 %v3769, 0.31622776
    %v3775 = vmul.f32 %v3772, 0.31622776
    %v3776 = vsel %vm379, %v3774, -inf
    %3777 = vmax.xlane.f32.xlu0 %v3776
    %v3778 = vpop.xlane.xlu0 %3777
    %v3779 = vsel %vm379, %v3775, -inf
    %3780 = vmax.xlane.f32.xlu0 %v3779
    %v3781 = vpop.xlane.xlu0 %3780
    %v3782 = vsub.f32 %v3774, %v3778
    %v3783 = vsub.f32 %v3775, %v3781
    %v3784 = vmul.f32 %v3782, 1.442695
    %v3785 = vpow.pop %v3784
    %v3786 = vmul.f32 %v3783, 1.442695
    %v3787 = vpow.pop %v3786
    %v3788 = vsel %vm379, %v3785, 0.0
    %3789 = vadd.xlane.f32.xlu0 %v3788
    %v3790 = vpop.xlane.xlu0 %3789
    %v3791 = vsel %vm379, %v3787, 0.0
    %3792 = vadd.xlane.f32.xlu0 %v3791
    %v3793 = vpop.xlane.xlu0 %3792
    %v3794 = vrcp.pop %v3790
    %v3795 = vrcp.pop %v3793
    %v3796 = vmul.f32 %v3785, %v3794
    %v3797 = vmul.f32 %v3787, %v3795
    %v3798 = vmul.f32 %v3560, %v324
    %v3799 = vmul.f32 %v3563, %v324
    %v3801 = vsel %vm379, %v3796, 0
    %v3804 = vsel %vm379, %v3797, 0
    %3806 = vmatpush.msra.mxu0 0.0
    %3807 = vmatpush.msra.mxu0 0.0
    %3808 = vmatpush.msra.mxu0 0.0
    %3809 = vmatpush.msra.mxu0 0.0
    %3810 = vmatpush.msra.mxu0 0.0
    %3811 = vmatpush.msra.mxu0 0.0
    %3812 = vmatpush.msra.mxu0 0.0
    %3813 = vmatpush.msra.mxu0 0.0
    %3814 = vmatpush.msra.mxu0 0.0
    %3815 = vmatpush.msra.mxu0 0.0
    %3816 = vmatpush.msra.mxu0 0.0
    %3817 = vmatpush.msra.mxu0 0.0
    %3818 = vmatpush.msra.mxu0 0.0
    %3819 = vmatpush.msra.mxu0 0.0
    %3820 = vmatpush.msra.mxu0 %v3799
    %3821 = vmatpush.msra.mxu0 %v3798
    %3822 = vmatmul.f32.gmra.mxu0 %v3801
    %v3823 = vpop.f32.mrf.mxu0
    %v3824 = vadd.f32 0.0, %v3823
    %3825 = vmatmul.f32.gmra.mxu0 %v3804
    %v3826 = vpop.f32.mrf.mxu0
    %v3827 = vadd.f32 0.0, %v3826
    %3828 = vdwg.mxu0
    %v3829 = vadd.f32 %v3738, %v3824
    %v3830 = vadd.f32 %v3741, %v3827
    %v3831 = vmul.f32 %v3502, %v329
    %v3832 = vmul.f32 %v3505, %v329
    %v3834 = vsel %vm345, %v3831, 0
    %v3837 = vsel %vm345, %v3832, 0
    %3839 = vmatpush.xpose.msra.mxu0 0.0
    %3840 = vmatpush.xpose.msra.mxu0 0.0
    %3841 = vmatpush.xpose.msra.mxu0 0.0
    %3842 = vmatpush.xpose.msra.mxu0 0.0
    %3843 = vmatpush.xpose.msra.mxu0 0.0
    %3844 = vmatpush.xpose.msra.mxu0 0.0
    %3845 = vmatpush.xpose.msra.mxu0 0.0
    %3846 = vmatpush.xpose.msra.mxu0 0.0
    %3847 = vmatpush.xpose.msra.mxu0 0.0
    %3848 = vmatpush.xpose.msra.mxu0 0.0
    %3849 = vmatpush.xpose.msra.mxu0 0.0
    %3850 = vmatpush.xpose.msra.mxu0 0.0
    %3851 = vmatpush.xpose.msra.mxu0 0.0
    %3852 = vmatpush.xpose.msra.mxu0 0.0
    %3853 = vmatpush.xpose.msra.mxu0 %v3577
    %3854 = vmatpush.xpose.msra.mxu0 %v3574
    %3855 = vmatmul.f32.gmra.mxu0 %v3834
    %v3856 = vpop.f32.mrf.mxu0
    %v3857 = vadd.f32 0.0, %v3856
    %3858 = vmatmul.f32.gmra.mxu0 %v3837
    %v3859 = vpop.f32.mrf.mxu0
    %v3860 = vadd.f32 0.0, %v3859
    %3861 = vdwg.mxu0
    %v3862 = vmul.f32 %v3857, 0.31622776
    %v3863 = vmul.f32 %v3860, 0.31622776
    %v3864 = vsel %vm379, %v3862, -inf
    %3865 = vmax.xlane.f32.xlu0 %v3864
    %v3866 = vpop.xlane.xlu0 %3865
    %v3867 = vsel %vm379, %v3863, -inf
    %3868 = vmax.xlane.f32.xlu0 %v3867
    %v3869 = vpop.xlane.xlu0 %3868
    %v3870 = vsub.f32 %v3862, %v3866
    %v3871 = vsub.f32 %v3863, %v3869
    %v3872 = vmul.f32 %v3870, 1.442695
    %v3873 = vpow.pop %v3872
    %v3874 = vmul.f32 %v3871, 1.442695
    %v3875 = vpow.pop %v3874
    %v3876 = vsel %vm379, %v3873, 0.0
    %3877 = vadd.xlane.f32.xlu0 %v3876
    %v3878 = vpop.xlane.xlu0 %3877
    %v3879 = vsel %vm379, %v3875, 0.0
    %3880 = vadd.xlane.f32.xlu0 %v3879
    %v3881 = vpop.xlane.xlu0 %3880
    %v3882 = vrcp.pop %v3878
    %v3883 = vrcp.pop %v3881
    %v3884 = vmul.f32 %v3873, %v3882
    %v3885 = vmul.f32 %v3875, %v3883
    %v3886 = vmul.f32 %v3560, %v329
    %v3887 = vmul.f32 %v3563, %v329
    %v3889 = vsel %vm379, %v3884, 0
    %v3892 = vsel %vm379, %v3885, 0
    %3894 = vmatpush.msra.mxu0 0.0
    %3895 = vmatpush.msra.mxu0 0.0
    %3896 = vmatpush.msra.mxu0 0.0
    %3897 = vmatpush.msra.mxu0 0.0
    %3898 = vmatpush.msra.mxu0 0.0
    %3899 = vmatpush.msra.mxu0 0.0
    %3900 = vmatpush.msra.mxu0 0.0
    %3901 = vmatpush.msra.mxu0 0.0
    %3902 = vmatpush.msra.mxu0 0.0
    %3903 = vmatpush.msra.mxu0 0.0
    %3904 = vmatpush.msra.mxu0 0.0
    %3905 = vmatpush.msra.mxu0 0.0
    %3906 = vmatpush.msra.mxu0 0.0
    %3907 = vmatpush.msra.mxu0 0.0
    %3908 = vmatpush.msra.mxu0 %v3887
    %3909 = vmatpush.msra.mxu0 %v3886
    %3910 = vmatmul.f32.gmra.mxu0 %v3889
    %v3911 = vpop.f32.mrf.mxu0
    %v3912 = vadd.f32 0.0, %v3911
    %3913 = vmatmul.f32.gmra.mxu0 %v3892
    %v3914 = vpop.f32.mrf.mxu0
    %v3915 = vadd.f32 0.0, %v3914
    %3916 = vdwg.mxu0
    %v3917 = vadd.f32 %v3829, %v3912
    %v3918 = vadd.f32 %v3830, %v3915
    %s3919 = scalar_lea.vmem %s25, 120
    %v3920 = vld [vmem:[%s3919] sm:$0xff]
    %v3921 = vld [vmem:[%s3919 + $0x8] sm:$0xff]
    %v3922 = vld [vmem:[%s3919 + $0x10] sm:$0xff]
    %v3923 = vld [vmem:[%s3919 + $0x18] sm:$0xff]
    %v3924 = vld [vmem:[%s3919 + $0x20] sm:$0xff]
    %s3925 = scalar_lea.vmem %s27, 3
    %v3926 = vld [vmem:[%s3925] sm:$0x1]
    %v3928 = vperm.slane %v3926, 0
    %v3931 = vsel %vm345, %v3917, 0
    %v3934 = vsel %vm345, %v3918, 0
    %3936 = vmatpush.msra.mxu0 0.0
    %3937 = vmatpush.msra.mxu0 0.0
    %3938 = vmatpush.msra.mxu0 0.0
    %3939 = vmatpush.msra.mxu0 0.0
    %3940 = vmatpush.msra.mxu0 0.0
    %3941 = vmatpush.msra.mxu0 0.0
    %3942 = vmatpush.msra.mxu0 0.0
    %3943 = vmatpush.msra.mxu0 0.0
    %3944 = vmatpush.msra.mxu0 0.0
    %3945 = vmatpush.msra.mxu0 0.0
    %3946 = vmatpush.msra.mxu0 0.0
    %3947 = vmatpush.msra.mxu0 %v3924
    %3948 = vmatpush.msra.mxu0 %v3923
    %3949 = vmatpush.msra.mxu0 %v3922
    %3950 = vmatpush.msra.mxu0 %v3921
    %3951 = vmatpush.msra.mxu0 %v3920
    %3952 = vmatmul.f32.gmra.mxu0 %v3931
    %v3953 = vpop.f32.mrf.mxu0
    %v3954 = vadd.f32 %v3928, %v3953
    %3955 = vmatmul.f32.gmra.mxu0 %v3934
    %v3956 = vpop.f32.mrf.mxu0
    %v3957 = vadd.f32 %v3928, %v3956
    %3958 = vdwg.mxu0
    %v3959 = vadd.f32 %v3954, %v3382
    %v3960 = vadd.f32 %v3957, %v3383
    %s3961 = scalar_lea.vmem %s33, 3
    %v3962 = vld [vmem:[%s3961] sm:$0x1]
    %v3964 = vperm.slane %v3962, 0
    %v3966 = vmul.f32 %v3959, %v3964
    %v3967 = vmul.f32 %v3960, %v3964
    %s3968 = scalar_lea.vmem %s35, 3
    %v3969 = vld [vmem:[%s3968] sm:$0x1]
    %v3971 = vperm.slane %v3969, 0
    %v3973 = vadd.f32 %v3966, %v3971
    %v3974 = vadd.f32 %v3967, %v3971
    %v3975 = vadd.f32 %v3476, %v3973
    %v3976 = vadd.f32 %v3477, %v3974
    %s3977 = scalar_lea.vmem [#allocation7], 120
    %v3978 = vld [vmem:[%s3977] sm:$0xff]
    %v3979 = vld [vmem:[%s3977 + $0x8] sm:$0xff]
    %v3980 = vld [vmem:[%s3977 + $0x10] sm:$0xff]
    %v3981 = vld [vmem:[%s3977 + $0x18] sm:$0xff]
    %v3982 = vld [vmem:[%s3977 + $0x20] sm:$0xff]
    %s3983 = scalar_lea.vmem %s43, 3
    %v3984 = vld [vmem:[%s3983] sm:$0x1]
    %v3986 = vperm.slane %v3984, 0
    %v3989 = vsel %vm345, %v3975, 0
    %v3992 = vsel %vm345, %v3976, 0
    %3994 = vmatpush.msra.mxu0 0.0
    %3995 = vmatpush.msra.mxu0 0.0
    %3996 = vmatpush.msra.mxu0 0.0
    %3997 = vmatpush.msra.mxu0 0.0
    %3998 = vmatpush.msra.mxu0 0.0
    %3999 = vmatpush.msra.mxu0 0.0
    %4000 = vmatpush.msra.mxu0 0.0
    %4001 = vmatpush.msra.mxu0 0.0
    %4002 = vmatpush.msra.mxu0 0.0
    %4003 = vmatpush.msra.mxu0 0.0
    %4004 = vmatpush.msra.mxu0 0.0
    %4005 = vmatpush.msra.mxu0 %v3982
    %4006 = vmatpush.msra.mxu0 %v3981
    %4007 = vmatpush.msra.mxu0 %v3980
    %4008 = vmatpush.msra.mxu0 %v3979
    %4009 = vmatpush.msra.mxu0 %v3978
    %4010 = vmatmul.f32.gmra.mxu0 %v3989
    %v4011 = vpop.f32.mrf.mxu0
    %v4012 = vadd.f32 %v3986, %v4011
    %4013 = vmatmul.f32.gmra.mxu0 %v3992
    %v4014 = vpop.f32.mrf.mxu0
    %v4015 = vadd.f32 %v3986, %v4014
    %4016 = vdwg.mxu0
    %v4017 = vmax.f32 %v4012, 0.0
    %v4018 = vmax.f32 %v4015, 0.0
    %s4019 = scalar_lea.vmem %s45, 240
    %v4020 = vld [vmem:[%s4019] sm:$0xff]
    %v4021 = vld [vmem:[%s4019 + $0x8] sm:$0xff]
    %v4022 = vld [vmem:[%s4019 + $0x10] sm:$0xff]
    %v4023 = vld [vmem:[%s4019 + $0x18] sm:$0xff]
    %v4024 = vld [vmem:[%s4019 + $0x20] sm:$0xff]
    %v4025 = vld [vmem:[%s4019 + $0x28] sm:$0xff]
    %v4026 = vld [vmem:[%s4019 + $0x30] sm:$0xff]
    %v4027 = vld [vmem:[%s4019 + $0x38] sm:$0xff]
    %v4028 = vld [vmem:[%s4019 + $0x40] sm:$0xff]
    %v4029 = vld [vmem:[%s4019 + $0x48] sm:$0xff]
    %s4030 = scalar_lea.vmem %s47, 3
    %v4031 = vld [vmem:[%s4030] sm:$0x1]
    %v4033 = vperm.slane %v4031, 0
    %v4036 = vsel %vm969, %v4017, 0
    %v4039 = vsel %vm969, %v4018, 0
    %4041 = vmatpush.msra.mxu0 0.0
    %4042 = vmatpush.msra.mxu0 0.0
    %4043 = vmatpush.msra.mxu0 0.0
    %4044 = vmatpush.msra.mxu0 0.0
    %4045 = vmatpush.msra.mxu0 0.0
    %4046 = vmatpush.msra.mxu0 0.0
    %4047 = vmatpush.msra.mxu0 %v4029
    %4048 = vmatpush.msra.mxu0 %v4028
    %4049 = vmatpush.msra.mxu0 %v4027
    %4050 = vmatpush.msra.mxu0 %v4026
    %4051 = vmatpush.msra.mxu0 %v4025
    %4052 = vmatpush.msra.mxu0 %v4024
    %4053 = vmatpush.msra.mxu0 %v4023
    %4054 = vmatpush.msra.mxu0 %v4022
    %4055 = vmatpush.msra.mxu0 %v4021
    %4056 = vmatpush.msra.mxu0 %v4020
    %4057 = vmatmul.f32.gmra.mxu0 %v4036
    %v4058 = vpop.f32.mrf.mxu0
    %v4059 = vadd.f32 %v4033, %v4058
    %4060 = vmatmul.f32.gmra.mxu0 %v4039
    %v4061 = vpop.f32.mrf.mxu0
    %v4062 = vadd.f32 %v4033, %v4061
    %4063 = vdwg.mxu0
    %v4064 = vadd.f32 %v3975, %v4059
    %v4065 = vadd.f32 %v3976, %v4062
    %s4066 = scalar_lea.vmem %s37, 3
    %v4067 = vld [vmem:[%s4066] sm:$0x1]
    %v4069 = vperm.slane %v4067, 0
    %v4071 = vmul.f32 %v4064, %v4069
    %v4072 = vmul.f32 %v4065, %v4069
    %s4073 = scalar_lea.vmem %s39, 3
    %v4074 = vld [vmem:[%s4073] sm:$0x1]
    %v4076 = vperm.slane %v4074, 0
    %v4078 = vadd.f32 %v4071, %v4076
    %v4079 = vadd.f32 %v4072, %v4076
    %s4080 = scalar_lea.vmem %s49, 120
    %v4081 = vld [vmem:[%s4080] sm:$0xff]
    %v4082 = vld [vmem:[%s4080 + $0x8] sm:$0xff]
    %v4083 = vld [vmem:[%s4080 + $0x10] sm:$0xff]
    %v4084 = vld [vmem:[%s4080 + $0x18] sm:$0xff]
    %v4085 = vld [vmem:[%s4080 + $0x20] sm:$0xff]
    %s4086 = scalar_lea.vmem %s51, 3
    %v4087 = vld [vmem:[%s4086] sm:$0x1]
    %v4089 = vperm.slane %v4087, 0
    %v4092 = vsel %vm345, %v4078, 0
    %v4095 = vsel %vm345, %v4079, 0
    %4097 = vmatpush.msra.mxu0 0.0
    %4098 = vmatpush.msra.mxu0 0.0
    %4099 = vmatpush.msra.mxu0 0.0
    %4100 = vmatpush.msra.mxu0 0.0
    %4101 = vmatpush.msra.mxu0 0.0
    %4102 = vmatpush.msra.mxu0 0.0
    %4103 = vmatpush.msra.mxu0 0.0
    %4104 = vmatpush.msra.mxu0 0.0
    %4105 = vmatpush.msra.mxu0 0.0
    %4106 = vmatpush.msra.mxu0 0.0
    %4107 = vmatpush.msra.mxu0 0.0
    %4108 = vmatpush.msra.mxu0 %v4085
    %4109 = vmatpush.msra.mxu0 %v4084
    %4110 = vmatpush.msra.mxu0 %v4083
    %4111 = vmatpush.msra.mxu0 %v4082
    %4112 = vmatpush.msra.mxu0 %v4081
    %4113 = vmatmul.f32.gmra.mxu0 %v4092
    %v4114 = vpop.f32.mrf.mxu0
    %v4115 = vadd.f32 %v4089, %v4114
    %4116 = vmatmul.f32.gmra.mxu0 %v4095
    %v4117 = vpop.f32.mrf.mxu0
    %v4118 = vadd.f32 %v4089, %v4117
    %4119 = vdwg.mxu0
    %s4120 = scalar_lea.vmem [#allocation8], 96
    %v4121 = vld [vmem:[%s4120] sm:$0xff]
    %v4122 = vld [vmem:[%s4120 + $0x8] sm:$0xff]
    %v4123 = vld [vmem:[%s4120 + $0x10] sm:$0xff]
    %v4124 = vld [vmem:[%s4120 + $0x18] sm:$0xff]
    %v4126 = vsel %vm1055, %v4115, 0
    %v4129 = vsel %vm1055, %v4118, 0
    %4131 = vmatpush.msra.mxu0 0.0
    %4132 = vmatpush.msra.mxu0 0.0
    %4133 = vmatpush.msra.mxu0 0.0
    %4134 = vmatpush.msra.mxu0 0.0
    %4135 = vmatpush.msra.mxu0 0.0
    %4136 = vmatpush.msra.mxu0 0.0
    %4137 = vmatpush.msra.mxu0 0.0
    %4138 = vmatpush.msra.mxu0 0.0
    %4139 = vmatpush.msra.mxu0 0.0
    %4140 = vmatpush.msra.mxu0 0.0
    %4141 = vmatpush.msra.mxu0 0.0
    %4142 = vmatpush.msra.mxu0 0.0
    %4143 = vmatpush.msra.mxu0 %v4124
    %4144 = vmatpush.msra.mxu0 %v4123
    %4145 = vmatpush.msra.mxu0 %v4122
    %4146 = vmatpush.msra.mxu0 %v4121
    %4147 = vmatmul.f32.gmra.mxu0 %v4126
    %v4148 = vpop.f32.mrf.mxu0
    %v4149 = vadd.f32 0.0, %v4148
    %4150 = vmatmul.f32.gmra.mxu0 %v4129
    %v4151 = vpop.f32.mrf.mxu0
    %v4152 = vadd.f32 0.0, %v4151
    %4153 = vdwg.mxu0
    %s4154 = scalar_lea.vmem %s57, 3
    %v4155 = vld [vmem:[%s4154] sm:$0x1]
    %v4157 = vperm.slane %v4155, 0
    %v4159 = vmul.f32 %v4149, %v4157
    %v4160 = vmul.f32 %v4152, %v4157
    %v4161 = vsel %vm1055, %v4159, 0.0
    %4162 = vadd.xlane.f32.xlu0 %v4161
    %v4163 = vpop.xlane.xlu0 %4162
    %v4164 = vsel %vm1055, %v4160, 0.0
    %4165 = vadd.xlane.f32.xlu0 %v4164
    %v4166 = vpop.xlane.xlu0 %4165
    %s4167 = scalar_lea.vmem %s55, 3
    %v4168 = vld [vmem:[%s4167] sm:$0x1]
    %v4170 = vsel %vm1055, %v4168, 0
    %v4173 = vsel %vm1055, %v4149, 0
    %v4176 = vsel %vm1055, %v4152, 0
    %4178 = vmatpush.xpose.msra.mxu0 0.0
    %4179 = vmatpush.xpose.msra.mxu0 0.0
    %4180 = vmatpush.xpose.msra.mxu0 0.0
    %4181 = vmatpush.xpose.msra.mxu0 0.0
    %4182 = vmatpush.xpose.msra.mxu0 0.0
    %4183 = vmatpush.xpose.msra.mxu0 0.0
    %4184 = vmatpush.xpose.msra.mxu0 0.0
    %4185 = vmatpush.xpose.msra.mxu0 0.0
    %4186 = vmatpush.xpose.msra.mxu0 0.0
    %4187 = vmatpush.xpose.msra.mxu0 0.0
    %4188 = vmatpush.xpose.msra.mxu0 0.0
    %4189 = vmatpush.xpose.msra.mxu0 0.0
    %4190 = vmatpush.xpose.msra.mxu0 0.0
    %4191 = vmatpush.xpose.msra.mxu0 0.0
    %4192 = vmatpush.xpose.msra.mxu0 %v4176
    %4193 = vmatpush.xpose.msra.mxu0 %v4173
    %4194 = vmatmul.f32.gmra.mxu0 %v4170
    %v4195 = vpop.f32.mrf.mxu0
    %v4196 = vadd.f32 0.0, %v4195
    %4197 = vdwg.mxu0
    %v4198 = vperm.slane %v4196, 0
    %v4199 = vadd.f32 %v4163, %v4198
    %v4200 = vadd.f32 %v4166, %v4198
    %vm4201 = vcmp.gt.f32.partialorder %v4199, 0.0
    %vm4202 = vcmp.gt.f32.partialorder %v4200, 0.0
    %v4203 = vmul.f32 %v4199, 0.2
    %v4204 = vmul.f32 %v4200, 0.2
    %v4205 = vsel %vm4201, %v4199, %v4203
    %v4206 = vsel %vm4202, %v4200, %v4204
    %vm4207 = vcmp.gt.f32.partialorder %v3391, 0.0
    %vm4208 = vcmp.gt.f32.partialorder %v3392, 0.0
    %v4209 = vsel %vm4207, %v4205, -1e+30
    %v4210 = vsel %vm4208, %v4206, -1e+30
    %v4211 = vsel %vm379, %v4209, -inf
    %4212 = vmax.xlane.f32.xlu0 %v4211
    %v4213 = vpop.xlane.xlu0 %4212
    %v4214 = vsel %vm379, %v4210, -inf
    %4215 = vmax.xlane.f32.xlu0 %v4214
    %v4216 = vpop.xlane.xlu0 %4215
    %v4217 = vsub.f32 %v4209, %v4213
    %v4218 = vsub.f32 %v4210, %v4216
    %v4219 = vmul.f32 %v4217, 1.442695
    %v4220 = vpow.pop %v4219
    %v4221 = vmul.f32 %v4218, 1.442695
    %v4222 = vpow.pop %v4221
    %v4223 = vsel %vm379, %v4220, 0.0
    %4224 = vadd.xlane.f32.xlu0 %v4223
    %v4225 = vpop.xlane.xlu0 %4224
    %v4226 = vsel %vm379, %v4222, 0.0
    %4227 = vadd.xlane.f32.xlu0 %v4226
    %v4228 = vpop.xlane.xlu0 %4227
    %v4229 = vrcp.pop %v4225
    %v4230 = vrcp.pop %v4228
    %v4231 = vmul.f32 %v4220, %v4229
    %v4232 = vmul.f32 %v4222, %v4230
    %s4233 = scalar_lea.vmem %s59, 3
    %v4234 = vld [vmem:[%s4233] sm:$0x1]
    %v4236 = vperm.slane %v4234, 0
    %v4239 = vsel %vm379, %v4231, 0
    %v4242 = vsel %vm379, %v4232, 0
    %4244 = vmatpush.msra.mxu0 0.0
    %4245 = vmatpush.msra.mxu0 0.0
    %4246 = vmatpush.msra.mxu0 0.0
    %4247 = vmatpush.msra.mxu0 0.0
    %4248 = vmatpush.msra.mxu0 0.0
    %4249 = vmatpush.msra.mxu0 0.0
    %4250 = vmatpush.msra.mxu0 0.0
    %4251 = vmatpush.msra.mxu0 0.0
    %4252 = vmatpush.msra.mxu0 0.0
    %4253 = vmatpush.msra.mxu0 0.0
    %4254 = vmatpush.msra.mxu0 0.0
    %4255 = vmatpush.msra.mxu0 0.0
    %4256 = vmatpush.msra.mxu0 0.0
    %4257 = vmatpush.msra.mxu0 0.0
    %4258 = vmatpush.msra.mxu0 %v4152
    %4259 = vmatpush.msra.mxu0 %v4149
    %4260 = vmatmul.f32.gmra.mxu0 %v4239
    %v4261 = vpop.f32.mrf.mxu0
    %v4262 = vadd.f32 %v4236, %v4261
    %4263 = vmatmul.f32.gmra.mxu0 %v4242
    %v4264 = vpop.f32.mrf.mxu0
    %v4265 = vadd.f32 %v4236, %v4264
    %4266 = vdwg.mxu0
    %s4267 = scalar_lea.vmem [#allocation10], 96
    %v4268 = vld [vmem:[%s4267] sm:$0xff]
    %v4269 = vld [vmem:[%s4267 + $0x8] sm:$0xff]
    %v4270 = vld [vmem:[%s4267 + $0x10] sm:$0xff]
    %v4271 = vld [vmem:[%s4267 + $0x18] sm:$0xff]
    %v4273 = vsel %vm1055, %v4262, 0
    %v4276 = vsel %vm1055, %v4265, 0
    %4278 = vmatpush.msra.mxu0 0.0
    %4279 = vmatpush.msra.mxu0 0.0
    %4280 = vmatpush.msra.mxu0 0.0
    %4281 = vmatpush.msra.mxu0 0.0
    %4282 = vmatpush.msra.mxu0 0.0
    %4283 = vmatpush.msra.mxu0 0.0
    %4284 = vmatpush.msra.mxu0 0.0
    %4285 = vmatpush.msra.mxu0 0.0
    %4286 = vmatpush.msra.mxu0 0.0
    %4287 = vmatpush.msra.mxu0 0.0
    %4288 = vmatpush.msra.mxu0 0.0
    %4289 = vmatpush.msra.mxu0 0.0
    %4290 = vmatpush.msra.mxu0 %v4271
    %4291 = vmatpush.msra.mxu0 %v4270
    %4292 = vmatpush.msra.mxu0 %v4269
    %4293 = vmatpush.msra.mxu0 %v4268
    %4294 = vmatmul.f32.gmra.mxu0 %v4273
    %v4295 = vpop.f32.mrf.mxu0
    %v4296 = vadd.f32 0.0, %v4295
    %4297 = vmatmul.f32.gmra.mxu0 %v4276
    %v4298 = vpop.f32.mrf.mxu0
    %v4299 = vadd.f32 0.0, %v4298
    %4300 = vdwg.mxu0
    %s4301 = scalar_lea.vmem %s63, 3
    %v4302 = vld [vmem:[%s4301] sm:$0x1]
    %v4304 = vperm.slane %v4302, 0
    %v4307 = vsel %vm379, %v3388, 0
    %v4310 = vsel %vm379, %v3389, 0
    %4312 = vmatpush.msra.mxu0 0.0
    %4313 = vmatpush.msra.mxu0 0.0
    %4314 = vmatpush.msra.mxu0 0.0
    %4315 = vmatpush.msra.mxu0 0.0
    %4316 = vmatpush.msra.mxu0 0.0
    %4317 = vmatpush.msra.mxu0 0.0
    %4318 = vmatpush.msra.mxu0 0.0
    %4319 = vmatpush.msra.mxu0 0.0
    %4320 = vmatpush.msra.mxu0 0.0
    %4321 = vmatpush.msra.mxu0 0.0
    %4322 = vmatpush.msra.mxu0 0.0
    %4323 = vmatpush.msra.mxu0 0.0
    %4324 = vmatpush.msra.mxu0 0.0
    %4325 = vmatpush.msra.mxu0 0.0
    %4326 = vmatpush.msra.mxu0 %v4299
    %4327 = vmatpush.msra.mxu0 %v4296
    %4328 = vmatmul.f32.gmra.mxu0 %v4307
    %v4329 = vpop.f32.mrf.mxu0
    %v4330 = vadd.f32 %v4304, %v4329
    %4331 = vmatmul.f32.gmra.mxu0 %v4310
    %v4332 = vpop.f32.mrf.mxu0
    %v4333 = vadd.f32 %v4304, %v4332
    %4334 = vdwg.mxu0
    %s4335 = scalar_lea.vmem [#allocation11], 96
    %v4336 = vld [vmem:[%s4335] sm:$0xff]
    %v4337 = vld [vmem:[%s4335 + $0x8] sm:$0xff]
    %v4338 = vld [vmem:[%s4335 + $0x10] sm:$0xff]
    %v4339 = vld [vmem:[%s4335 + $0x18] sm:$0xff]
    %4340 = vmatpush.msra.mxu0 0.0
    %4341 = vmatpush.msra.mxu0 0.0
    %4342 = vmatpush.msra.mxu0 0.0
    %4343 = vmatpush.msra.mxu0 0.0
    %4344 = vmatpush.msra.mxu0 0.0
    %4345 = vmatpush.msra.mxu0 0.0
    %4346 = vmatpush.msra.mxu0 0.0
    %4347 = vmatpush.msra.mxu0 0.0
    %4348 = vmatpush.msra.mxu0 0.0
    %4349 = vmatpush.msra.mxu0 0.0
    %4350 = vmatpush.msra.mxu0 0.0
    %4351 = vmatpush.msra.mxu0 0.0
    %4352 = vmatpush.msra.mxu0 %v4339
    %4353 = vmatpush.msra.mxu0 %v4338
    %4354 = vmatpush.msra.mxu0 %v4337
    %4355 = vmatpush.msra.mxu0 %v4336
    %4356 = vmatmul.f32.gmra.mxu0 %v4273
    %v4357 = vpop.f32.mrf.mxu0
    %v4358 = vadd.f32 0.0, %v4357
    %4359 = vmatmul.f32.gmra.mxu0 %v4276
    %v4360 = vpop.f32.mrf.mxu0
    %v4361 = vadd.f32 0.0, %v4360
    %4362 = vdwg.mxu0
    %s4363 = scalar_lea.vmem %s67, 3
    %v4364 = vld [vmem:[%s4363] sm:$0x1]
    %v4366 = vperm.slane %v4364, 0
    %4368 = vmatpush.msra.mxu0 0.0
    %4369 = vmatpush.msra.mxu0 0.0
    %4370 = vmatpush.msra.mxu0 0.0
    %4371 = vmatpush.msra.mxu0 0.0
    %4372 = vmatpush.msra.mxu0 0.0
    %4373 = vmatpush.msra.mxu0 0.0
    %4374 = vmatpush.msra.mxu0 0.0
    %4375 = vmatpush.msra.mxu0 0.0
    %4376 = vmatpush.msra.mxu0 0.0
    %4377 = vmatpush.msra.mxu0 0.0
    %4378 = vmatpush.msra.mxu0 0.0
    %4379 = vmatpush.msra.mxu0 0.0
    %4380 = vmatpush.msra.mxu0 0.0
    %4381 = vmatpush.msra.mxu0 0.0
    %4382 = vmatpush.msra.mxu0 %v4361
    %4383 = vmatpush.msra.mxu0 %v4358
    %4384 = vmatmul.f32.gmra.mxu0 %v3434
    %v4385 = vpop.f32.mrf.mxu0
    %v4386 = vadd.f32 %v4366, %v4385
    %4387 = vmatmul.f32.gmra.mxu0 %v3437
    %v4388 = vpop.f32.mrf.mxu0
    %v4389 = vadd.f32 %v4366, %v4388
    %4390 = vdwg.mxu0
    %v4391 = vadd.f32 %v4386, %v4330
    %v4392 = vadd.f32 %v4389, %v4333
    %s4393 = scalar_lea.vmem %s69, 3
    %v4394 = vld [vmem:[%s4393] sm:$0x1]
    %v4396 = vperm.slane %v4394, 0
    %v4398 = vmul.f32 %v4391, %v4396
    %v4399 = vmul.f32 %v4392, %v4396
    %s4400 = scalar_lea.vmem %s71, 3
    %v4401 = vld [vmem:[%s4400] sm:$0x1]
    %v4403 = vperm.slane %v4401, 0
    %v4405 = vadd.f32 %v4398, %v4403
    %v4406 = vadd.f32 %v4399, %v4403
    %s4407 = scalar_lea.vmem %s1, 64
    %v4408 = vld [vmem:[%s4407] sm:$0xff]
    %v4409 = vld [vmem:[%s4407 + $0x8] sm:$0xff]
    %s4410 = scalar_lea.vmem %s5, 64
    %v4411 = vld [vmem:[%s4410] sm:$0xff]
    %v4412 = vld [vmem:[%s4410 + $0x8] sm:$0xff]
    %s4413 = scalar_lea.vmem [#allocation2], 64
    %v4414 = vld [vmem:[%s4413] sm:$0xff]
    %v4415 = vld [vmem:[%s4413 + $0x8] sm:$0xff]
    %s4416 = scalar_lea.vmem [#allocation5], 64
    %v4417 = vld [vmem:[%s4416] sm:$0xff]
    %v4418 = vld [vmem:[%s4416 + $0x8] sm:$0xff]
    %s4419 = scalar_lea.vmem %s15, 160
    %v4420 = vld [vmem:[%s4419] sm:$0xff]
    %v4421 = vld [vmem:[%s4419 + $0x8] sm:$0xff]
    %v4422 = vld [vmem:[%s4419 + $0x10] sm:$0xff]
    %v4423 = vld [vmem:[%s4419 + $0x18] sm:$0xff]
    %v4424 = vld [vmem:[%s4419 + $0x20] sm:$0xff]
    %v4426 = vsel %vm345, %v4408, 0
    %v4429 = vsel %vm345, %v4409, 0
    %4431 = vmatpush.msra.mxu0 0.0
    %4432 = vmatpush.msra.mxu0 0.0
    %4433 = vmatpush.msra.mxu0 0.0
    %4434 = vmatpush.msra.mxu0 0.0
    %4435 = vmatpush.msra.mxu0 0.0
    %4436 = vmatpush.msra.mxu0 0.0
    %4437 = vmatpush.msra.mxu0 0.0
    %4438 = vmatpush.msra.mxu0 0.0
    %4439 = vmatpush.msra.mxu0 0.0
    %4440 = vmatpush.msra.mxu0 0.0
    %4441 = vmatpush.msra.mxu0 0.0
    %4442 = vmatpush.msra.mxu0 %v4424
    %4443 = vmatpush.msra.mxu0 %v4423
    %4444 = vmatpush.msra.mxu0 %v4422
    %4445 = vmatpush.msra.mxu0 %v4421
    %4446 = vmatpush.msra.mxu0 %v4420
    %4447 = vmatmul.f32.gmra.mxu0 %v4426
    %v4448 = vpop.f32.mrf.mxu0
    %v4449 = vadd.f32 0.0, %v4448
    %4450 = vmatmul.f32.gmra.mxu0 %v4429
    %v4451 = vpop.f32.mrf.mxu0
    %v4452 = vadd.f32 0.0, %v4451
    %4453 = vdwg.mxu0
    %s4454 = scalar_lea.vmem %s17, 4
    %v4455 = vld [vmem:[%s4454] sm:$0x1]
    %v4457 = vperm.slane %v4455, 0
    %v4460 = vsel %vm379, %v4411, 0
    %v4463 = vsel %vm379, %v4412, 0
    %4465 = vmatpush.msra.mxu0 0.0
    %4466 = vmatpush.msra.mxu0 0.0
    %4467 = vmatpush.msra.mxu0 0.0
    %4468 = vmatpush.msra.mxu0 0.0
    %4469 = vmatpush.msra.mxu0 0.0
    %4470 = vmatpush.msra.mxu0 0.0
    %4471 = vmatpush.msra.mxu0 0.0
    %4472 = vmatpush.msra.mxu0 0.0
    %4473 = vmatpush.msra.mxu0 0.0
    %4474 = vmatpush.msra.mxu0 0.0
    %4475 = vmatpush.msra.mxu0 0.0
    %4476 = vmatpush.msra.mxu0 0.0
    %4477 = vmatpush.msra.mxu0 0.0
    %4478 = vmatpush.msra.mxu0 0.0
    %4479 = vmatpush.msra.mxu0 %v4452
    %4480 = vmatpush.msra.mxu0 %v4449
    %4481 = vmatmul.f32.gmra.mxu0 %v4460
    %v4482 = vpop.f32.mrf.mxu0
    %v4483 = vadd.f32 %v4457, %v4482
    %4484 = vmatmul.f32.gmra.mxu0 %v4463
    %v4485 = vpop.f32.mrf.mxu0
    %v4486 = vadd.f32 %v4457, %v4485
    %4487 = vdwg.mxu0
    %v4488 = vadd.f32 %v4483, %v4408
    %v4489 = vadd.f32 %v4486, %v4409
    %s4490 = scalar_lea.vmem %s29, 4
    %v4491 = vld [vmem:[%s4490] sm:$0x1]
    %v4493 = vperm.slane %v4491, 0
    %v4495 = vmul.f32 %v4488, %v4493
    %v4496 = vmul.f32 %v4489, %v4493
    %s4497 = scalar_lea.vmem %s31, 4
    %v4498 = vld [vmem:[%s4497] sm:$0x1]
    %v4500 = vperm.slane %v4498, 0
    %v4502 = vadd.f32 %v4495, %v4500
    %v4503 = vadd.f32 %v4496, %v4500
    %s4504 = scalar_lea.vmem %s19, 160
    %v4505 = vld [vmem:[%s4504] sm:$0xff]
    %v4506 = vld [vmem:[%s4504 + $0x8] sm:$0xff]
    %v4507 = vld [vmem:[%s4504 + $0x10] sm:$0xff]
    %v4508 = vld [vmem:[%s4504 + $0x18] sm:$0xff]
    %v4509 = vld [vmem:[%s4504 + $0x20] sm:$0xff]
    %4510 = vmatpush.msra.mxu0 0.0
    %4511 = vmatpush.msra.mxu0 0.0
    %4512 = vmatpush.msra.mxu0 0.0
    %4513 = vmatpush.msra.mxu0 0.0
    %4514 = vmatpush.msra.mxu0 0.0
    %4515 = vmatpush.msra.mxu0 0.0
    %4516 = vmatpush.msra.mxu0 0.0
    %4517 = vmatpush.msra.mxu0 0.0
    %4518 = vmatpush.msra.mxu0 0.0
    %4519 = vmatpush.msra.mxu0 0.0
    %4520 = vmatpush.msra.mxu0 0.0
    %4521 = vmatpush.msra.mxu0 %v4509
    %4522 = vmatpush.msra.mxu0 %v4508
    %4523 = vmatpush.msra.mxu0 %v4507
    %4524 = vmatpush.msra.mxu0 %v4506
    %4525 = vmatpush.msra.mxu0 %v4505
    %4526 = vmatmul.f32.gmra.mxu0 %v4426
    %v4527 = vpop.f32.mrf.mxu0
    %v4528 = vadd.f32 0.0, %v4527
    %4529 = vmatmul.f32.gmra.mxu0 %v4429
    %v4530 = vpop.f32.mrf.mxu0
    %v4531 = vadd.f32 0.0, %v4530
    %4532 = vdwg.mxu0
    %s4533 = scalar_lea.vmem %s21, 160
    %v4534 = vld [vmem:[%s4533] sm:$0xff]
    %v4535 = vld [vmem:[%s4533 + $0x8] sm:$0xff]
    %v4536 = vld [vmem:[%s4533 + $0x10] sm:$0xff]
    %v4537 = vld [vmem:[%s4533 + $0x18] sm:$0xff]
    %v4538 = vld [vmem:[%s4533 + $0x20] sm:$0xff]
    %4539 = vmatpush.msra.mxu0 0.0
    %4540 = vmatpush.msra.mxu0 0.0
    %4541 = vmatpush.msra.mxu0 0.0
    %4542 = vmatpush.msra.mxu0 0.0
    %4543 = vmatpush.msra.mxu0 0.0
    %4544 = vmatpush.msra.mxu0 0.0
    %4545 = vmatpush.msra.mxu0 0.0
    %4546 = vmatpush.msra.mxu0 0.0
    %4547 = vmatpush.msra.mxu0 0.0
    %4548 = vmatpush.msra.mxu0 0.0
    %4549 = vmatpush.msra.mxu0 0.0
    %4550 = vmatpush.msra.mxu0 %v4538
    %4551 = vmatpush.msra.mxu0 %v4537
    %4552 = vmatpush.msra.mxu0 %v4536
    %4553 = vmatpush.msra.mxu0 %v4535
    %4554 = vmatpush.msra.mxu0 %v4534
    %4555 = vmatmul.f32.gmra.mxu0 %v4426
    %v4556 = vpop.f32.mrf.mxu0
    %v4557 = vadd.f32 0.0, %v4556
    %4558 = vmatmul.f32.gmra.mxu0 %v4429
    %v4559 = vpop.f32.mrf.mxu0
    %v4560 = vadd.f32 0.0, %v4559
    %4561 = vdwg.mxu0
    %s4562 = scalar_lea.vmem %s23, 160
    %v4563 = vld [vmem:[%s4562] sm:$0xff]
    %v4564 = vld [vmem:[%s4562 + $0x8] sm:$0xff]
    %v4565 = vld [vmem:[%s4562 + $0x10] sm:$0xff]
    %v4566 = vld [vmem:[%s4562 + $0x18] sm:$0xff]
    %v4567 = vld [vmem:[%s4562 + $0x20] sm:$0xff]
    %4568 = vmatpush.msra.mxu0 0.0
    %4569 = vmatpush.msra.mxu0 0.0
    %4570 = vmatpush.msra.mxu0 0.0
    %4571 = vmatpush.msra.mxu0 0.0
    %4572 = vmatpush.msra.mxu0 0.0
    %4573 = vmatpush.msra.mxu0 0.0
    %4574 = vmatpush.msra.mxu0 0.0
    %4575 = vmatpush.msra.mxu0 0.0
    %4576 = vmatpush.msra.mxu0 0.0
    %4577 = vmatpush.msra.mxu0 0.0
    %4578 = vmatpush.msra.mxu0 0.0
    %4579 = vmatpush.msra.mxu0 %v4567
    %4580 = vmatpush.msra.mxu0 %v4566
    %4581 = vmatpush.msra.mxu0 %v4565
    %4582 = vmatpush.msra.mxu0 %v4564
    %4583 = vmatpush.msra.mxu0 %v4563
    %4584 = vmatmul.f32.gmra.mxu0 %v4426
    %v4585 = vpop.f32.mrf.mxu0
    %v4586 = vadd.f32 0.0, %v4585
    %4587 = vmatmul.f32.gmra.mxu0 %v4429
    %v4588 = vpop.f32.mrf.mxu0
    %v4589 = vadd.f32 0.0, %v4588
    %4590 = vdwg.mxu0
    %v4591 = vmul.f32 %v4528, %v314
    %v4592 = vmul.f32 %v4531, %v314
    %v4594 = vsel %vm345, %v4591, 0
    %v4597 = vsel %vm345, %v4592, 0
    %v4600 = vsel %vm345, %v4557, 0
    %v4603 = vsel %vm345, %v4560, 0
    %4605 = vmatpush.xpose.msra.mxu0 0.0
    %4606 = vmatpush.xpose.msra.mxu0 0.0
    %4607 = vmatpush.xpose.msra.mxu0 0.0
    %4608 = vmatpush.xpose.msra.mxu0 0.0
    %4609 = vmatpush.xpose.msra.mxu0 0.0
    %4610 = vmatpush.xpose.msra.mxu0 0.0
    %4611 = vmatpush.xpose.msra.mxu0 0.0
    %4612 = vmatpush.xpose.msra.mxu0 0.0
    %4613 = vmatpush.xpose.msra.mxu0 0.0
    %4614 = vmatpush.xpose.msra.mxu0 0.0
    %4615 = vmatpush.xpose.msra.mxu0 0.0
    %4616 = vmatpush.xpose.msra.mxu0 0.0
    %4617 = vmatpush.xpose.msra.mxu0 0.0
    %4618 = vmatpush.xpose.msra.mxu0 0.0
    %4619 = vmatpush.xpose.msra.mxu0 %v4603
    %4620 = vmatpush.xpose.msra.mxu0 %v4600
    %4621 = vmatmul.f32.gmra.mxu0 %v4594
    %v4622 = vpop.f32.mrf.mxu0
    %v4623 = vadd.f32 0.0, %v4622
    %4624 = vmatmul.f32.gmra.mxu0 %v4597
    %v4625 = vpop.f32.mrf.mxu0
    %v4626 = vadd.f32 0.0, %v4625
    %4627 = vdwg.mxu0
    %v4628 = vmul.f32 %v4623, 0.31622776
    %v4629 = vmul.f32 %v4626, 0.31622776
    %v4630 = vsel %vm379, %v4628, -inf
    %4631 = vmax.xlane.f32.xlu0 %v4630
    %v4632 = vpop.xlane.xlu0 %4631
    %v4633 = vsel %vm379, %v4629, -inf
    %4634 = vmax.xlane.f32.xlu0 %v4633
    %v4635 = vpop.xlane.xlu0 %4634
    %v4636 = vsub.f32 %v4628, %v4632
    %v4637 = vsub.f32 %v4629, %v4635
    %v4638 = vmul.f32 %v4636, 1.442695
    %v4639 = vpow.pop %v4638
    %v4640 = vmul.f32 %v4637, 1.442695
    %v4641 = vpow.pop %v4640
    %v4642 = vsel %vm379, %v4639, 0.0
    %4643 = vadd.xlane.f32.xlu0 %v4642
    %v4644 = vpop.xlane.xlu0 %4643
    %v4645 = vsel %vm379, %v4641, 0.0
    %4646 = vadd.xlane.f32.xlu0 %v4645
    %v4647 = vpop.xlane.xlu0 %4646
    %v4648 = vrcp.pop %v4644
    %v4649 = vrcp.pop %v4647
    %v4650 = vmul.f32 %v4639, %v4648
    %v4651 = vmul.f32 %v4641, %v4649
    %v4652 = vmul.f32 %v4586, %v314
    %v4653 = vmul.f32 %v4589, %v314
    %v4654 = vmul.f32 %v4528, %v319
    %v4655 = vmul.f32 %v4531, %v319
    %v4657 = vsel %vm345, %v4654, 0
    %v4660 = vsel %vm345, %v4655, 0
    %4662 = vmatpush.xpose.msra.mxu0 0.0
    %4663 = vmatpush.xpose.msra.mxu0 0.0
    %4664 = vmatpush.xpose.msra.mxu0 0.0
    %4665 = vmatpush.xpose.msra.mxu0 0.0
    %4666 = vmatpush.xpose.msra.mxu0 0.0
    %4667 = vmatpush.xpose.msra.mxu0 0.0
    %4668 = vmatpush.xpose.msra.mxu0 0.0
    %4669 = vmatpush.xpose.msra.mxu0 0.0
    %4670 = vmatpush.xpose.msra.mxu0 0.0
    %4671 = vmatpush.xpose.msra.mxu0 0.0
    %4672 = vmatpush.xpose.msra.mxu0 0.0
    %4673 = vmatpush.xpose.msra.mxu0 0.0
    %4674 = vmatpush.xpose.msra.mxu0 0.0
    %4675 = vmatpush.xpose.msra.mxu0 0.0
    %4676 = vmatpush.xpose.msra.mxu0 %v4603
    %4677 = vmatpush.xpose.msra.mxu0 %v4600
    %4678 = vmatmul.f32.gmra.mxu0 %v4657
    %v4679 = vpop.f32.mrf.mxu0
    %v4680 = vadd.f32 0.0, %v4679
    %4681 = vmatmul.f32.gmra.mxu0 %v4660
    %v4682 = vpop.f32.mrf.mxu0
    %v4683 = vadd.f32 0.0, %v4682
    %4684 = vdwg.mxu0
    %v4685 = vmul.f32 %v4680, 0.31622776
    %v4686 = vmul.f32 %v4683, 0.31622776
    %v4687 = vsel %vm379, %v4685, -inf
    %4688 = vmax.xlane.f32.xlu0 %v4687
    %v4689 = vpop.xlane.xlu0 %4688
    %v4690 = vsel %vm379, %v4686, -inf
    %4691 = vmax.xlane.f32.xlu0 %v4690
    %v4692 = vpop.xlane.xlu0 %4691
    %v4693 = vsub.f32 %v4685, %v4689
    %v4694 = vsub.f32 %v4686, %v4692
    %v4695 = vmul.f32 %v4693, 1.442695
    %v4696 = vpow.pop %v4695
    %v4697 = vmul.f32 %v4694, 1.442695
    %v4698 = vpow.pop %v4697
    %v4699 = vsel %vm379, %v4696, 0.0
    %4700 = vadd.xlane.f32.xlu0 %v4699
    %v4701 = vpop.xlane.xlu0 %4700
    %v4702 = vsel %vm379, %v4698, 0.0
    %4703 = vadd.xlane.f32.xlu0 %v4702
    %v4704 = vpop.xlane.xlu0 %4703
    %v4705 = vrcp.pop %v4701
    %v4706 = vrcp.pop %v4704
    %v4707 = vmul.f32 %v4696, %v4705
    %v4708 = vmul.f32 %v4698, %v4706
    %v4709 = vmul.f32 %v4586, %v319
    %v4710 = vmul.f32 %v4589, %v319
    %v4712 = vsel %vm379, %v4707, 0
    %v4715 = vsel %vm379, %v4708, 0
    %4717 = vmatpush.msra.mxu0 0.0
    %4718 = vmatpush.msra.mxu0 0.0
    %4719 = vmatpush.msra.mxu0 0.0
    %4720 = vmatpush.msra.mxu0 0.0
    %4721 = vmatpush.msra.mxu0 0.0
    %4722 = vmatpush.msra.mxu0 0.0
    %4723 = vmatpush.msra.mxu0 0.0
    %4724 = vmatpush.msra.mxu0 0.0
    %4725 = vmatpush.msra.mxu0 0.0
    %4726 = vmatpush.msra.mxu0 0.0
    %4727 = vmatpush.msra.mxu0 0.0
    %4728 = vmatpush.msra.mxu0 0.0
    %4729 = vmatpush.msra.mxu0 0.0
    %4730 = vmatpush.msra.mxu0 0.0
    %4731 = vmatpush.msra.mxu0 %v4710
    %4732 = vmatpush.msra.mxu0 %v4709
    %4733 = vmatmul.f32.gmra.mxu0 %v4712
    %v4734 = vpop.f32.mrf.mxu0
    %v4735 = vadd.f32 0.0, %v4734
    %4736 = vmatmul.f32.gmra.mxu0 %v4715
    %v4737 = vpop.f32.mrf.mxu0
    %v4738 = vadd.f32 0.0, %v4737
    %4739 = vdwg.mxu0
    %v4741 = vsel %vm379, %v4650, 0
    %v4744 = vsel %vm379, %v4651, 0
    %4746 = vmatpush.msra.mxu0 0.0
    %4747 = vmatpush.msra.mxu0 0.0
    %4748 = vmatpush.msra.mxu0 0.0
    %4749 = vmatpush.msra.mxu0 0.0
    %4750 = vmatpush.msra.mxu0 0.0
    %4751 = vmatpush.msra.mxu0 0.0
    %4752 = vmatpush.msra.mxu0 0.0
    %4753 = vmatpush.msra.mxu0 0.0
    %4754 = vmatpush.msra.mxu0 0.0
    %4755 = vmatpush.msra.mxu0 0.0
    %4756 = vmatpush.msra.mxu0 0.0
    %4757 = vmatpush.msra.mxu0 0.0
    %4758 = vmatpush.msra.mxu0 0.0
    %4759 = vmatpush.msra.mxu0 0.0
    %4760 = vmatpush.msra.mxu0 %v4653
    %4761 = vmatpush.msra.mxu0 %v4652
    %4762 = vmatmul.f32.gmra.mxu0 %v4741
    %v4763 = vpop.f32.mrf.mxu0
    %v4764 = vadd.f32 %v4735, %v4763
    %4765 = vmatmul.f32.gmra.mxu0 %v4744
    %v4766 = vpop.f32.mrf.mxu0
    %v4767 = vadd.f32 %v4738, %v4766
    %4768 = vdwg.mxu0
    %v4769 = vmul.f32 %v4528, %v324
    %v4770 = vmul.f32 %v4531, %v324
    %v4772 = vsel %vm345, %v4769, 0
    %v4775 = vsel %vm345, %v4770, 0
    %4777 = vmatpush.xpose.msra.mxu0 0.0
    %4778 = vmatpush.xpose.msra.mxu0 0.0
    %4779 = vmatpush.xpose.msra.mxu0 0.0
    %4780 = vmatpush.xpose.msra.mxu0 0.0
    %4781 = vmatpush.xpose.msra.mxu0 0.0
    %4782 = vmatpush.xpose.msra.mxu0 0.0
    %4783 = vmatpush.xpose.msra.mxu0 0.0
    %4784 = vmatpush.xpose.msra.mxu0 0.0
    %4785 = vmatpush.xpose.msra.mxu0 0.0
    %4786 = vmatpush.xpose.msra.mxu0 0.0
    %4787 = vmatpush.xpose.msra.mxu0 0.0
    %4788 = vmatpush.xpose.msra.mxu0 0.0
    %4789 = vmatpush.xpose.msra.mxu0 0.0
    %4790 = vmatpush.xpose.msra.mxu0 0.0
    %4791 = vmatpush.xpose.msra.mxu0 %v4603
    %4792 = vmatpush.xpose.msra.mxu0 %v4600
    %4793 = vmatmul.f32.gmra.mxu0 %v4772
    %v4794 = vpop.f32.mrf.mxu0
    %v4795 = vadd.f32 0.0, %v4794
    %4796 = vmatmul.f32.gmra.mxu0 %v4775
    %v4797 = vpop.f32.mrf.mxu0
    %v4798 = vadd.f32 0.0, %v4797
    %4799 = vdwg.mxu0
    %v4800 = vmul.f32 %v4795, 0.31622776
    %v4801 = vmul.f32 %v4798, 0.31622776
    %v4802 = vsel %vm379, %v4800, -inf
    %4803 = vmax.xlane.f32.xlu0 %v4802
    %v4804 = vpop.xlane.xlu0 %4803
    %v4805 = vsel %vm379, %v4801, -inf
    %4806 = vmax.xlane.f32.xlu0 %v4805
    %v4807 = vpop.xlane.xlu0 %4806
    %v4808 = vsub.f32 %v4800, %v4804
    %v4809 = vsub.f32 %v4801, %v4807
    %v4810 = vmul.f32 %v4808, 1.442695
    %v4811 = vpow.pop %v4810
    %v4812 = vmul.f32 %v4809, 1.442695
    %v4813 = vpow.pop %v4812
    %v4814 = vsel %vm379, %v4811, 0.0
    %4815 = vadd.xlane.f32.xlu0 %v4814
    %v4816 = vpop.xlane.xlu0 %4815
    %v4817 = vsel %vm379, %v4813, 0.0
    %4818 = vadd.xlane.f32.xlu0 %v4817
    %v4819 = vpop.xlane.xlu0 %4818
    %v4820 = vrcp.pop %v4816
    %v4821 = vrcp.pop %v4819
    %v4822 = vmul.f32 %v4811, %v4820
    %v4823 = vmul.f32 %v4813, %v4821
    %v4824 = vmul.f32 %v4586, %v324
    %v4825 = vmul.f32 %v4589, %v324
    %v4827 = vsel %vm379, %v4822, 0
    %v4830 = vsel %vm379, %v4823, 0
    %4832 = vmatpush.msra.mxu0 0.0
    %4833 = vmatpush.msra.mxu0 0.0
    %4834 = vmatpush.msra.mxu0 0.0
    %4835 = vmatpush.msra.mxu0 0.0
    %4836 = vmatpush.msra.mxu0 0.0
    %4837 = vmatpush.msra.mxu0 0.0
    %4838 = vmatpush.msra.mxu0 0.0
    %4839 = vmatpush.msra.mxu0 0.0
    %4840 = vmatpush.msra.mxu0 0.0
    %4841 = vmatpush.msra.mxu0 0.0
    %4842 = vmatpush.msra.mxu0 0.0
    %4843 = vmatpush.msra.mxu0 0.0
    %4844 = vmatpush.msra.mxu0 0.0
    %4845 = vmatpush.msra.mxu0 0.0
    %4846 = vmatpush.msra.mxu0 %v4825
    %4847 = vmatpush.msra.mxu0 %v4824
    %4848 = vmatmul.f32.gmra.mxu0 %v4827
    %v4849 = vpop.f32.mrf.mxu0
    %v4850 = vadd.f32 0.0, %v4849
    %4851 = vmatmul.f32.gmra.mxu0 %v4830
    %v4852 = vpop.f32.mrf.mxu0
    %v4853 = vadd.f32 0.0, %v4852
    %4854 = vdwg.mxu0
    %v4855 = vadd.f32 %v4764, %v4850
    %v4856 = vadd.f32 %v4767, %v4853
    %v4857 = vmul.f32 %v4528, %v329
    %v4858 = vmul.f32 %v4531, %v329
    %v4860 = vsel %vm345, %v4857, 0
    %v4863 = vsel %vm345, %v4858, 0
    %4865 = vmatpush.xpose.msra.mxu0 0.0
    %4866 = vmatpush.xpose.msra.mxu0 0.0
    %4867 = vmatpush.xpose.msra.mxu0 0.0
    %4868 = vmatpush.xpose.msra.mxu0 0.0
    %4869 = vmatpush.xpose.msra.mxu0 0.0
    %4870 = vmatpush.xpose.msra.mxu0 0.0
    %4871 = vmatpush.xpose.msra.mxu0 0.0
    %4872 = vmatpush.xpose.msra.mxu0 0.0
    %4873 = vmatpush.xpose.msra.mxu0 0.0
    %4874 = vmatpush.xpose.msra.mxu0 0.0
    %4875 = vmatpush.xpose.msra.mxu0 0.0
    %4876 = vmatpush.xpose.msra.mxu0 0.0
    %4877 = vmatpush.xpose.msra.mxu0 0.0
    %4878 = vmatpush.xpose.msra.mxu0 0.0
    %4879 = vmatpush.xpose.msra.mxu0 %v4603
    %4880 = vmatpush.xpose.msra.mxu0 %v4600
    %4881 = vmatmul.f32.gmra.mxu0 %v4860
    %v4882 = vpop.f32.mrf.mxu0
    %v4883 = vadd.f32 0.0, %v4882
    %4884 = vmatmul.f32.gmra.mxu0 %v4863
    %v4885 = vpop.f32.mrf.mxu0
    %v4886 = vadd.f32 0.0, %v4885
    %4887 = vdwg.mxu0
    %v4888 = vmul.f32 %v4883, 0.31622776
    %v4889 = vmul.f32 %v4886, 0.31622776
    %v4890 = vsel %vm379, %v4888, -inf
    %4891 = vmax.xlane.f32.xlu0 %v4890
    %v4892 = vpop.xlane.xlu0 %4891
    %v4893 = vsel %vm379, %v4889, -inf
    %4894 = vmax.xlane.f32.xlu0 %v4893
    %v4895 = vpop.xlane.xlu0 %4894
    %v4896 = vsub.f32 %v4888, %v4892
    %v4897 = vsub.f32 %v4889, %v4895
    %v4898 = vmul.f32 %v4896, 1.442695
    %v4899 = vpow.pop %v4898
    %v4900 = vmul.f32 %v4897, 1.442695
    %v4901 = vpow.pop %v4900
    %v4902 = vsel %vm379, %v4899, 0.0
    %4903 = vadd.xlane.f32.xlu0 %v4902
    %v4904 = vpop.xlane.xlu0 %4903
    %v4905 = vsel %vm379, %v4901, 0.0
    %4906 = vadd.xlane.f32.xlu0 %v4905
    %v4907 = vpop.xlane.xlu0 %4906
    %v4908 = vrcp.pop %v4904
    %v4909 = vrcp.pop %v4907
    %v4910 = vmul.f32 %v4899, %v4908
    %v4911 = vmul.f32 %v4901, %v4909
    %v4912 = vmul.f32 %v4586, %v329
    %v4913 = vmul.f32 %v4589, %v329
    %v4915 = vsel %vm379, %v4910, 0
    %v4918 = vsel %vm379, %v4911, 0
    %4920 = vmatpush.msra.mxu0 0.0
    %4921 = vmatpush.msra.mxu0 0.0
    %4922 = vmatpush.msra.mxu0 0.0
    %4923 = vmatpush.msra.mxu0 0.0
    %4924 = vmatpush.msra.mxu0 0.0
    %4925 = vmatpush.msra.mxu0 0.0
    %4926 = vmatpush.msra.mxu0 0.0
    %4927 = vmatpush.msra.mxu0 0.0
    %4928 = vmatpush.msra.mxu0 0.0
    %4929 = vmatpush.msra.mxu0 0.0
    %4930 = vmatpush.msra.mxu0 0.0
    %4931 = vmatpush.msra.mxu0 0.0
    %4932 = vmatpush.msra.mxu0 0.0
    %4933 = vmatpush.msra.mxu0 0.0
    %4934 = vmatpush.msra.mxu0 %v4913
    %4935 = vmatpush.msra.mxu0 %v4912
    %4936 = vmatmul.f32.gmra.mxu0 %v4915
    %v4937 = vpop.f32.mrf.mxu0
    %v4938 = vadd.f32 0.0, %v4937
    %4939 = vmatmul.f32.gmra.mxu0 %v4918
    %v4940 = vpop.f32.mrf.mxu0
    %v4941 = vadd.f32 0.0, %v4940
    %4942 = vdwg.mxu0
    %v4943 = vadd.f32 %v4855, %v4938
    %v4944 = vadd.f32 %v4856, %v4941
    %s4945 = scalar_lea.vmem %s25, 160
    %v4946 = vld [vmem:[%s4945] sm:$0xff]
    %v4947 = vld [vmem:[%s4945 + $0x8] sm:$0xff]
    %v4948 = vld [vmem:[%s4945 + $0x10] sm:$0xff]
    %v4949 = vld [vmem:[%s4945 + $0x18] sm:$0xff]
    %v4950 = vld [vmem:[%s4945 + $0x20] sm:$0xff]
    %s4951 = scalar_lea.vmem %s27, 4
    %v4952 = vld [vmem:[%s4951] sm:$0x1]
    %v4954 = vperm.slane %v4952, 0
    %v4957 = vsel %vm345, %v4943, 0
    %v4960 = vsel %vm345, %v4944, 0
    %4962 = vmatpush.msra.mxu0 0.0
    %4963 = vmatpush.msra.mxu0 0.0
    %4964 = vmatpush.msra.mxu0 0.0
    %4965 = vmatpush.msra.mxu0 0.0
    %4966 = vmatpush.msra.mxu0 0.0
    %4967 = vmatpush.msra.mxu0 0.0
    %4968 = vmatpush.msra.mxu0 0.0
    %4969 = vmatpush.msra.mxu0 0.0
    %4970 = vmatpush.msra.mxu0 0.0
    %4971 = vmatpush.msra.mxu0 0.0
    %4972 = vmatpush.msra.mxu0 0.0
    %4973 = vmatpush.msra.mxu0 %v4950
    %4974 = vmatpush.msra.mxu0 %v4949
    %4975 = vmatpush.msra.mxu0 %v4948
    %4976 = vmatpush.msra.mxu0 %v4947
    %4977 = vmatpush.msra.mxu0 %v4946
    %4978 = vmatmul.f32.gmra.mxu0 %v4957
    %v4979 = vpop.f32.mrf.mxu0
    %v4980 = vadd.f32 %v4954, %v4979
    %4981 = vmatmul.f32.gmra.mxu0 %v4960
    %v4982 = vpop.f32.mrf.mxu0
    %v4983 = vadd.f32 %v4954, %v4982
    %4984 = vdwg.mxu0
    %v4985 = vadd.f32 %v4980, %v4408
    %v4986 = vadd.f32 %v4983, %v4409
    %s4987 = scalar_lea.vmem %s33, 4
    %v4988 = vld [vmem:[%s4987] sm:$0x1]
    %v4990 = vperm.slane %v4988, 0
    %v4992 = vmul.f32 %v4985, %v4990
    %v4993 = vmul.f32 %v4986, %v4990
    %s4994 = scalar_lea.vmem %s35, 4
    %v4995 = vld [vmem:[%s4994] sm:$0x1]
    %v4997 = vperm.slane %v4995, 0
    %v4999 = vadd.f32 %v4992, %v4997
    %v5000 = vadd.f32 %v4993, %v4997
    %v5001 = vadd.f32 %v4502, %v4999
    %v5002 = vadd.f32 %v4503, %v5000
    %s5003 = scalar_lea.vmem [#allocation7], 160
    %v5004 = vld [vmem:[%s5003] sm:$0xff]
    %v5005 = vld [vmem:[%s5003 + $0x8] sm:$0xff]
    %v5006 = vld [vmem:[%s5003 + $0x10] sm:$0xff]
    %v5007 = vld [vmem:[%s5003 + $0x18] sm:$0xff]
    %v5008 = vld [vmem:[%s5003 + $0x20] sm:$0xff]
    %s5009 = scalar_lea.vmem %s43, 4
    %v5010 = vld [vmem:[%s5009] sm:$0x1]
    %v5012 = vperm.slane %v5010, 0
    %v5015 = vsel %vm345, %v5001, 0
    %v5018 = vsel %vm345, %v5002, 0
    %5020 = vmatpush.msra.mxu0 0.0
    %5021 = vmatpush.msra.mxu0 0.0
    %5022 = vmatpush.msra.mxu0 0.0
    %5023 = vmatpush.msra.mxu0 0.0
    %5024 = vmatpush.msra.mxu0 0.0
    %5025 = vmatpush.msra.mxu0 0.0
    %5026 = vmatpush.msra.mxu0 0.0
    %5027 = vmatpush.msra.mxu0 0.0
    %5028 = vmatpush.msra.mxu0 0.0
    %5029 = vmatpush.msra.mxu0 0.0
    %5030 = vmatpush.msra.mxu0 0.0
    %5031 = vmatpush.msra.mxu0 %v5008
    %5032 = vmatpush.msra.mxu0 %v5007
    %5033 = vmatpush.msra.mxu0 %v5006
    %5034 = vmatpush.msra.mxu0 %v5005
    %5035 = vmatpush.msra.mxu0 %v5004
    %5036 = vmatmul.f32.gmra.mxu0 %v5015
    %v5037 = vpop.f32.mrf.mxu0
    %v5038 = vadd.f32 %v5012, %v5037
    %5039 = vmatmul.f32.gmra.mxu0 %v5018
    %v5040 = vpop.f32.mrf.mxu0
    %v5041 = vadd.f32 %v5012, %v5040
    %5042 = vdwg.mxu0
    %v5043 = vmax.f32 %v5038, 0.0
    %v5044 = vmax.f32 %v5041, 0.0
    %s5045 = scalar_lea.vmem %s45, 320
    %v5046 = vld [vmem:[%s5045] sm:$0xff]
    %v5047 = vld [vmem:[%s5045 + $0x8] sm:$0xff]
    %v5048 = vld [vmem:[%s5045 + $0x10] sm:$0xff]
    %v5049 = vld [vmem:[%s5045 + $0x18] sm:$0xff]
    %v5050 = vld [vmem:[%s5045 + $0x20] sm:$0xff]
    %v5051 = vld [vmem:[%s5045 + $0x28] sm:$0xff]
    %v5052 = vld [vmem:[%s5045 + $0x30] sm:$0xff]
    %v5053 = vld [vmem:[%s5045 + $0x38] sm:$0xff]
    %v5054 = vld [vmem:[%s5045 + $0x40] sm:$0xff]
    %v5055 = vld [vmem:[%s5045 + $0x48] sm:$0xff]
    %s5056 = scalar_lea.vmem %s47, 4
    %v5057 = vld [vmem:[%s5056] sm:$0x1]
    %v5059 = vperm.slane %v5057, 0
    %v5062 = vsel %vm969, %v5043, 0
    %v5065 = vsel %vm969, %v5044, 0
    %5067 = vmatpush.msra.mxu0 0.0
    %5068 = vmatpush.msra.mxu0 0.0
    %5069 = vmatpush.msra.mxu0 0.0
    %5070 = vmatpush.msra.mxu0 0.0
    %5071 = vmatpush.msra.mxu0 0.0
    %5072 = vmatpush.msra.mxu0 0.0
    %5073 = vmatpush.msra.mxu0 %v5055
    %5074 = vmatpush.msra.mxu0 %v5054
    %5075 = vmatpush.msra.mxu0 %v5053
    %5076 = vmatpush.msra.mxu0 %v5052
    %5077 = vmatpush.msra.mxu0 %v5051
    %5078 = vmatpush.msra.mxu0 %v5050
    %5079 = vmatpush.msra.mxu0 %v5049
    %5080 = vmatpush.msra.mxu0 %v5048
    %5081 = vmatpush.msra.mxu0 %v5047
    %5082 = vmatpush.msra.mxu0 %v5046
    %5083 = vmatmul.f32.gmra.mxu0 %v5062
    %v5084 = vpop.f32.mrf.mxu0
    %v5085 = vadd.f32 %v5059, %v5084
    %5086 = vmatmul.f32.gmra.mxu0 %v5065
    %v5087 = vpop.f32.mrf.mxu0
    %v5088 = vadd.f32 %v5059, %v5087
    %5089 = vdwg.mxu0
    %v5090 = vadd.f32 %v5001, %v5085
    %v5091 = vadd.f32 %v5002, %v5088
    %s5092 = scalar_lea.vmem %s37, 4
    %v5093 = vld [vmem:[%s5092] sm:$0x1]
    %v5095 = vperm.slane %v5093, 0
    %v5097 = vmul.f32 %v5090, %v5095
    %v5098 = vmul.f32 %v5091, %v5095
    %s5099 = scalar_lea.vmem %s39, 4
    %v5100 = vld [vmem:[%s5099] sm:$0x1]
    %v5102 = vperm.slane %v5100, 0
    %v5104 = vadd.f32 %v5097, %v5102
    %v5105 = vadd.f32 %v5098, %v5102
    %s5106 = scalar_lea.vmem %s49, 160
    %v5107 = vld [vmem:[%s5106] sm:$0xff]
    %v5108 = vld [vmem:[%s5106 + $0x8] sm:$0xff]
    %v5109 = vld [vmem:[%s5106 + $0x10] sm:$0xff]
    %v5110 = vld [vmem:[%s5106 + $0x18] sm:$0xff]
    %v5111 = vld [vmem:[%s5106 + $0x20] sm:$0xff]
    %s5112 = scalar_lea.vmem %s51, 4
    %v5113 = vld [vmem:[%s5112] sm:$0x1]
    %v5115 = vperm.slane %v5113, 0
    %v5118 = vsel %vm345, %v5104, 0
    %v5121 = vsel %vm345, %v5105, 0
    %5123 = vmatpush.msra.mxu0 0.0
    %5124 = vmatpush.msra.mxu0 0.0
    %5125 = vmatpush.msra.mxu0 0.0
    %5126 = vmatpush.msra.mxu0 0.0
    %5127 = vmatpush.msra.mxu0 0.0
    %5128 = vmatpush.msra.mxu0 0.0
    %5129 = vmatpush.msra.mxu0 0.0
    %5130 = vmatpush.msra.mxu0 0.0
    %5131 = vmatpush.msra.mxu0 0.0
    %5132 = vmatpush.msra.mxu0 0.0
    %5133 = vmatpush.msra.mxu0 0.0
    %5134 = vmatpush.msra.mxu0 %v5111
    %5135 = vmatpush.msra.mxu0 %v5110
    %5136 = vmatpush.msra.mxu0 %v5109
    %5137 = vmatpush.msra.mxu0 %v5108
    %5138 = vmatpush.msra.mxu0 %v5107
    %5139 = vmatmul.f32.gmra.mxu0 %v5118
    %v5140 = vpop.f32.mrf.mxu0
    %v5141 = vadd.f32 %v5115, %v5140
    %5142 = vmatmul.f32.gmra.mxu0 %v5121
    %v5143 = vpop.f32.mrf.mxu0
    %v5144 = vadd.f32 %v5115, %v5143
    %5145 = vdwg.mxu0
    %s5146 = scalar_lea.vmem [#allocation8], 128
    %v5147 = vld [vmem:[%s5146] sm:$0xff]
    %v5148 = vld [vmem:[%s5146 + $0x8] sm:$0xff]
    %v5149 = vld [vmem:[%s5146 + $0x10] sm:$0xff]
    %v5150 = vld [vmem:[%s5146 + $0x18] sm:$0xff]
    %v5152 = vsel %vm1055, %v5141, 0
    %v5155 = vsel %vm1055, %v5144, 0
    %5157 = vmatpush.msra.mxu0 0.0
    %5158 = vmatpush.msra.mxu0 0.0
    %5159 = vmatpush.msra.mxu0 0.0
    %5160 = vmatpush.msra.mxu0 0.0
    %5161 = vmatpush.msra.mxu0 0.0
    %5162 = vmatpush.msra.mxu0 0.0
    %5163 = vmatpush.msra.mxu0 0.0
    %5164 = vmatpush.msra.mxu0 0.0
    %5165 = vmatpush.msra.mxu0 0.0
    %5166 = vmatpush.msra.mxu0 0.0
    %5167 = vmatpush.msra.mxu0 0.0
    %5168 = vmatpush.msra.mxu0 0.0
    %5169 = vmatpush.msra.mxu0 %v5150
    %5170 = vmatpush.msra.mxu0 %v5149
    %5171 = vmatpush.msra.mxu0 %v5148
    %5172 = vmatpush.msra.mxu0 %v5147
    %5173 = vmatmul.f32.gmra.mxu0 %v5152
    %v5174 = vpop.f32.mrf.mxu0
    %v5175 = vadd.f32 0.0, %v5174
    %5176 = vmatmul.f32.gmra.mxu0 %v5155
    %v5177 = vpop.f32.mrf.mxu0
    %v5178 = vadd.f32 0.0, %v5177
    %5179 = vdwg.mxu0
    %s5180 = scalar_lea.vmem %s57, 4
    %v5181 = vld [vmem:[%s5180] sm:$0x1]
    %v5183 = vperm.slane %v5181, 0
    %v5185 = vmul.f32 %v5175, %v5183
    %v5186 = vmul.f32 %v5178, %v5183
    %v5187 = vsel %vm1055, %v5185, 0.0
    %5188 = vadd.xlane.f32.xlu0 %v5187
    %v5189 = vpop.xlane.xlu0 %5188
    %v5190 = vsel %vm1055, %v5186, 0.0
    %5191 = vadd.xlane.f32.xlu0 %v5190
    %v5192 = vpop.xlane.xlu0 %5191
    %s5193 = scalar_lea.vmem %s55, 4
    %v5194 = vld [vmem:[%s5193] sm:$0x1]
    %v5196 = vsel %vm1055, %v5194, 0
    %v5199 = vsel %vm1055, %v5175, 0
    %v5202 = vsel %vm1055, %v5178, 0
    %5204 = vmatpush.xpose.msra.mxu0 0.0
    %5205 = vmatpush.xpose.msra.mxu0 0.0
    %5206 = vmatpush.xpose.msra.mxu0 0.0
    %5207 = vmatpush.xpose.msra.mxu0 0.0
    %5208 = vmatpush.xpose.msra.mxu0 0.0
    %5209 = vmatpush.xpose.msra.mxu0 0.0
    %5210 = vmatpush.xpose.msra.mxu0 0.0
    %5211 = vmatpush.xpose.msra.mxu0 0.0
    %5212 = vmatpush.xpose.msra.mxu0 0.0
    %5213 = vmatpush.xpose.msra.mxu0 0.0
    %5214 = vmatpush.xpose.msra.mxu0 0.0
    %5215 = vmatpush.xpose.msra.mxu0 0.0
    %5216 = vmatpush.xpose.msra.mxu0 0.0
    %5217 = vmatpush.xpose.msra.mxu0 0.0
    %5218 = vmatpush.xpose.msra.mxu0 %v5202
    %5219 = vmatpush.xpose.msra.mxu0 %v5199
    %5220 = vmatmul.f32.gmra.mxu0 %v5196
    %v5221 = vpop.f32.mrf.mxu0
    %v5222 = vadd.f32 0.0, %v5221
    %5223 = vdwg.mxu0
    %v5224 = vperm.slane %v5222, 0
    %v5225 = vadd.f32 %v5189, %v5224
    %v5226 = vadd.f32 %v5192, %v5224
    %vm5227 = vcmp.gt.f32.partialorder %v5225, 0.0
    %vm5228 = vcmp.gt.f32.partialorder %v5226, 0.0
    %v5229 = vmul.f32 %v5225, 0.2
    %v5230 = vmul.f32 %v5226, 0.2
    %v5231 = vsel %vm5227, %v5225, %v5229
    %v5232 = vsel %vm5228, %v5226, %v5230
    %vm5233 = vcmp.gt.f32.partialorder %v4417, 0.0
    %vm5234 = vcmp.gt.f32.partialorder %v4418, 0.0
    %v5235 = vsel %vm5233, %v5231, -1e+30
    %v5236 = vsel %vm5234, %v5232, -1e+30
    %v5237 = vsel %vm379, %v5235, -inf
    %5238 = vmax.xlane.f32.xlu0 %v5237
    %v5239 = vpop.xlane.xlu0 %5238
    %v5240 = vsel %vm379, %v5236, -inf
    %5241 = vmax.xlane.f32.xlu0 %v5240
    %v5242 = vpop.xlane.xlu0 %5241
    %v5243 = vsub.f32 %v5235, %v5239
    %v5244 = vsub.f32 %v5236, %v5242
    %v5245 = vmul.f32 %v5243, 1.442695
    %v5246 = vpow.pop %v5245
    %v5247 = vmul.f32 %v5244, 1.442695
    %v5248 = vpow.pop %v5247
    %v5249 = vsel %vm379, %v5246, 0.0
    %5250 = vadd.xlane.f32.xlu0 %v5249
    %v5251 = vpop.xlane.xlu0 %5250
    %v5252 = vsel %vm379, %v5248, 0.0
    %5253 = vadd.xlane.f32.xlu0 %v5252
    %v5254 = vpop.xlane.xlu0 %5253
    %v5255 = vrcp.pop %v5251
    %v5256 = vrcp.pop %v5254
    %v5257 = vmul.f32 %v5246, %v5255
    %v5258 = vmul.f32 %v5248, %v5256
    %s5259 = scalar_lea.vmem %s59, 4
    %v5260 = vld [vmem:[%s5259] sm:$0x1]
    %v5262 = vperm.slane %v5260, 0
    %v5265 = vsel %vm379, %v5257, 0
    %v5268 = vsel %vm379, %v5258, 0
    %5270 = vmatpush.msra.mxu0 0.0
    %5271 = vmatpush.msra.mxu0 0.0
    %5272 = vmatpush.msra.mxu0 0.0
    %5273 = vmatpush.msra.mxu0 0.0
    %5274 = vmatpush.msra.mxu0 0.0
    %5275 = vmatpush.msra.mxu0 0.0
    %5276 = vmatpush.msra.mxu0 0.0
    %5277 = vmatpush.msra.mxu0 0.0
    %5278 = vmatpush.msra.mxu0 0.0
    %5279 = vmatpush.msra.mxu0 0.0
    %5280 = vmatpush.msra.mxu0 0.0
    %5281 = vmatpush.msra.mxu0 0.0
    %5282 = vmatpush.msra.mxu0 0.0
    %5283 = vmatpush.msra.mxu0 0.0
    %5284 = vmatpush.msra.mxu0 %v5178
    %5285 = vmatpush.msra.mxu0 %v5175
    %5286 = vmatmul.f32.gmra.mxu0 %v5265
    %v5287 = vpop.f32.mrf.mxu0
    %v5288 = vadd.f32 %v5262, %v5287
    %5289 = vmatmul.f32.gmra.mxu0 %v5268
    %v5290 = vpop.f32.mrf.mxu0
    %v5291 = vadd.f32 %v5262, %v5290
    %5292 = vdwg.mxu0
    %s5293 = scalar_lea.vmem [#allocation10], 128
    %v5294 = vld [vmem:[%s5293] sm:$0xff]
    %v5295 = vld [vmem:[%s5293 + $0x8] sm:$0xff]
    %v5296 = vld [vmem:[%s5293 + $0x10] sm:$0xff]
    %v5297 = vld [vmem:[%s5293 + $0x18] sm:$0xff]
    %v5299 = vsel %vm1055, %v5288, 0
    %v5302 = vsel %vm1055, %v5291, 0
    %5304 = vmatpush.msra.mxu0 0.0
    %5305 = vmatpush.msra.mxu0 0.0
    %5306 = vmatpush.msra.mxu0 0.0
    %5307 = vmatpush.msra.mxu0 0.0
    %5308 = vmatpush.msra.mxu0 0.0
    %5309 = vmatpush.msra.mxu0 0.0
    %5310 = vmatpush.msra.mxu0 0.0
    %5311 = vmatpush.msra.mxu0 0.0
    %5312 = vmatpush.msra.mxu0 0.0
    %5313 = vmatpush.msra.mxu0 0.0
    %5314 = vmatpush.msra.mxu0 0.0
    %5315 = vmatpush.msra.mxu0 0.0
    %5316 = vmatpush.msra.mxu0 %v5297
    %5317 = vmatpush.msra.mxu0 %v5296
    %5318 = vmatpush.msra.mxu0 %v5295
    %5319 = vmatpush.msra.mxu0 %v5294
    %5320 = vmatmul.f32.gmra.mxu0 %v5299
    %v5321 = vpop.f32.mrf.mxu0
    %v5322 = vadd.f32 0.0, %v5321
    %5323 = vmatmul.f32.gmra.mxu0 %v5302
    %v5324 = vpop.f32.mrf.mxu0
    %v5325 = vadd.f32 0.0, %v5324
    %5326 = vdwg.mxu0
    %s5327 = scalar_lea.vmem %s63, 4
    %v5328 = vld [vmem:[%s5327] sm:$0x1]
    %v5330 = vperm.slane %v5328, 0
    %v5333 = vsel %vm379, %v4414, 0
    %v5336 = vsel %vm379, %v4415, 0
    %5338 = vmatpush.msra.mxu0 0.0
    %5339 = vmatpush.msra.mxu0 0.0
    %5340 = vmatpush.msra.mxu0 0.0
    %5341 = vmatpush.msra.mxu0 0.0
    %5342 = vmatpush.msra.mxu0 0.0
    %5343 = vmatpush.msra.mxu0 0.0
    %5344 = vmatpush.msra.mxu0 0.0
    %5345 = vmatpush.msra.mxu0 0.0
    %5346 = vmatpush.msra.mxu0 0.0
    %5347 = vmatpush.msra.mxu0 0.0
    %5348 = vmatpush.msra.mxu0 0.0
    %5349 = vmatpush.msra.mxu0 0.0
    %5350 = vmatpush.msra.mxu0 0.0
    %5351 = vmatpush.msra.mxu0 0.0
    %5352 = vmatpush.msra.mxu0 %v5325
    %5353 = vmatpush.msra.mxu0 %v5322
    %5354 = vmatmul.f32.gmra.mxu0 %v5333
    %v5355 = vpop.f32.mrf.mxu0
    %v5356 = vadd.f32 %v5330, %v5355
    %5357 = vmatmul.f32.gmra.mxu0 %v5336
    %v5358 = vpop.f32.mrf.mxu0
    %v5359 = vadd.f32 %v5330, %v5358
    %5360 = vdwg.mxu0
    %s5361 = scalar_lea.vmem [#allocation11], 128
    %v5362 = vld [vmem:[%s5361] sm:$0xff]
    %v5363 = vld [vmem:[%s5361 + $0x8] sm:$0xff]
    %v5364 = vld [vmem:[%s5361 + $0x10] sm:$0xff]
    %v5365 = vld [vmem:[%s5361 + $0x18] sm:$0xff]
    %5366 = vmatpush.msra.mxu0 0.0
    %5367 = vmatpush.msra.mxu0 0.0
    %5368 = vmatpush.msra.mxu0 0.0
    %5369 = vmatpush.msra.mxu0 0.0
    %5370 = vmatpush.msra.mxu0 0.0
    %5371 = vmatpush.msra.mxu0 0.0
    %5372 = vmatpush.msra.mxu0 0.0
    %5373 = vmatpush.msra.mxu0 0.0
    %5374 = vmatpush.msra.mxu0 0.0
    %5375 = vmatpush.msra.mxu0 0.0
    %5376 = vmatpush.msra.mxu0 0.0
    %5377 = vmatpush.msra.mxu0 0.0
    %5378 = vmatpush.msra.mxu0 %v5365
    %5379 = vmatpush.msra.mxu0 %v5364
    %5380 = vmatpush.msra.mxu0 %v5363
    %5381 = vmatpush.msra.mxu0 %v5362
    %5382 = vmatmul.f32.gmra.mxu0 %v5299
    %v5383 = vpop.f32.mrf.mxu0
    %v5384 = vadd.f32 0.0, %v5383
    %5385 = vmatmul.f32.gmra.mxu0 %v5302
    %v5386 = vpop.f32.mrf.mxu0
    %v5387 = vadd.f32 0.0, %v5386
    %5388 = vdwg.mxu0
    %s5389 = scalar_lea.vmem %s67, 4
    %v5390 = vld [vmem:[%s5389] sm:$0x1]
    %v5392 = vperm.slane %v5390, 0
    %5394 = vmatpush.msra.mxu0 0.0
    %5395 = vmatpush.msra.mxu0 0.0
    %5396 = vmatpush.msra.mxu0 0.0
    %5397 = vmatpush.msra.mxu0 0.0
    %5398 = vmatpush.msra.mxu0 0.0
    %5399 = vmatpush.msra.mxu0 0.0
    %5400 = vmatpush.msra.mxu0 0.0
    %5401 = vmatpush.msra.mxu0 0.0
    %5402 = vmatpush.msra.mxu0 0.0
    %5403 = vmatpush.msra.mxu0 0.0
    %5404 = vmatpush.msra.mxu0 0.0
    %5405 = vmatpush.msra.mxu0 0.0
    %5406 = vmatpush.msra.mxu0 0.0
    %5407 = vmatpush.msra.mxu0 0.0
    %5408 = vmatpush.msra.mxu0 %v5387
    %5409 = vmatpush.msra.mxu0 %v5384
    %5410 = vmatmul.f32.gmra.mxu0 %v4460
    %v5411 = vpop.f32.mrf.mxu0
    %v5412 = vadd.f32 %v5392, %v5411
    %5413 = vmatmul.f32.gmra.mxu0 %v4463
    %v5414 = vpop.f32.mrf.mxu0
    %v5415 = vadd.f32 %v5392, %v5414
    %5416 = vdwg.mxu0
    %v5417 = vadd.f32 %v5412, %v5356
    %v5418 = vadd.f32 %v5415, %v5359
    %s5419 = scalar_lea.vmem %s69, 4
    %v5420 = vld [vmem:[%s5419] sm:$0x1]
    %v5422 = vperm.slane %v5420, 0
    %v5424 = vmul.f32 %v5417, %v5422
    %v5425 = vmul.f32 %v5418, %v5422
    %s5426 = scalar_lea.vmem %s71, 4
    %v5427 = vld [vmem:[%s5426] sm:$0x1]
    %v5429 = vperm.slane %v5427, 0
    %v5431 = vadd.f32 %v5424, %v5429
    %v5432 = vadd.f32 %v5425, %v5429
    %s5433 = scalar_lea.vmem %s1, 80
    %v5434 = vld [vmem:[%s5433] sm:$0xff]
    %v5435 = vld [vmem:[%s5433 + $0x8] sm:$0xff]
    %s5436 = scalar_lea.vmem %s5, 80
    %v5437 = vld [vmem:[%s5436] sm:$0xff]
    %v5438 = vld [vmem:[%s5436 + $0x8] sm:$0xff]
    %s5439 = scalar_lea.vmem [#allocation2], 80
    %v5440 = vld [vmem:[%s5439] sm:$0xff]
    %v5441 = vld [vmem:[%s5439 + $0x8] sm:$0xff]
    %s5442 = scalar_lea.vmem [#allocation5], 80
    %v5443 = vld [vmem:[%s5442] sm:$0xff]
    %v5444 = vld [vmem:[%s5442 + $0x8] sm:$0xff]
    %s5445 = scalar_lea.vmem %s15, 200
    %v5446 = vld [vmem:[%s5445] sm:$0xff]
    %v5447 = vld [vmem:[%s5445 + $0x8] sm:$0xff]
    %v5448 = vld [vmem:[%s5445 + $0x10] sm:$0xff]
    %v5449 = vld [vmem:[%s5445 + $0x18] sm:$0xff]
    %v5450 = vld [vmem:[%s5445 + $0x20] sm:$0xff]
    %v5452 = vsel %vm345, %v5434, 0
    %v5455 = vsel %vm345, %v5435, 0
    %5457 = vmatpush.msra.mxu0 0.0
    %5458 = vmatpush.msra.mxu0 0.0
    %5459 = vmatpush.msra.mxu0 0.0
    %5460 = vmatpush.msra.mxu0 0.0
    %5461 = vmatpush.msra.mxu0 0.0
    %5462 = vmatpush.msra.mxu0 0.0
    %5463 = vmatpush.msra.mxu0 0.0
    %5464 = vmatpush.msra.mxu0 0.0
    %5465 = vmatpush.msra.mxu0 0.0
    %5466 = vmatpush.msra.mxu0 0.0
    %5467 = vmatpush.msra.mxu0 0.0
    %5468 = vmatpush.msra.mxu0 %v5450
    %5469 = vmatpush.msra.mxu0 %v5449
    %5470 = vmatpush.msra.mxu0 %v5448
    %5471 = vmatpush.msra.mxu0 %v5447
    %5472 = vmatpush.msra.mxu0 %v5446
    %5473 = vmatmul.f32.gmra.mxu0 %v5452
    %v5474 = vpop.f32.mrf.mxu0
    %v5475 = vadd.f32 0.0, %v5474
    %5476 = vmatmul.f32.gmra.mxu0 %v5455
    %v5477 = vpop.f32.mrf.mxu0
    %v5478 = vadd.f32 0.0, %v5477
    %5479 = vdwg.mxu0
    %s5480 = scalar_lea.vmem %s17, 5
    %v5481 = vld [vmem:[%s5480] sm:$0x1]
    %v5483 = vperm.slane %v5481, 0
    %v5486 = vsel %vm379, %v5437, 0
    %v5489 = vsel %vm379, %v5438, 0
    %5491 = vmatpush.msra.mxu0 0.0
    %5492 = vmatpush.msra.mxu0 0.0
    %5493 = vmatpush.msra.mxu0 0.0
    %5494 = vmatpush.msra.mxu0 0.0
    %5495 = vmatpush.msra.mxu0 0.0
    %5496 = vmatpush.msra.mxu0 0.0
    %5497 = vmatpush.msra.mxu0 0.0
    %5498 = vmatpush.msra.mxu0 0.0
    %5499 = vmatpush.msra.mxu0 0.0
    %5500 = vmatpush.msra.mxu0 0.0
    %5501 = vmatpush.msra.mxu0 0.0
    %5502 = vmatpush.msra.mxu0 0.0
    %5503 = vmatpush.msra.mxu0 0.0
    %5504 = vmatpush.msra.mxu0 0.0
    %5505 = vmatpush.msra.mxu0 %v5478
    %5506 = vmatpush.msra.mxu0 %v5475
    %5507 = vmatmul.f32.gmra.mxu0 %v5486
    %v5508 = vpop.f32.mrf.mxu0
    %v5509 = vadd.f32 %v5483, %v5508
    %5510 = vmatmul.f32.gmra.mxu0 %v5489
    %v5511 = vpop.f32.mrf.mxu0
    %v5512 = vadd.f32 %v5483, %v5511
    %5513 = vdwg.mxu0
    %v5514 = vadd.f32 %v5509, %v5434
    %v5515 = vadd.f32 %v5512, %v5435
    %s5516 = scalar_lea.vmem %s29, 5
    %v5517 = vld [vmem:[%s5516] sm:$0x1]
    %v5519 = vperm.slane %v5517, 0
    %v5521 = vmul.f32 %v5514, %v5519
    %v5522 = vmul.f32 %v5515, %v5519
    %s5523 = scalar_lea.vmem %s31, 5
    %v5524 = vld [vmem:[%s5523] sm:$0x1]
    %v5526 = vperm.slane %v5524, 0
    %v5528 = vadd.f32 %v5521, %v5526
    %v5529 = vadd.f32 %v5522, %v5526
    %s5530 = scalar_lea.vmem %s19, 200
    %v5531 = vld [vmem:[%s5530] sm:$0xff]
    %v5532 = vld [vmem:[%s5530 + $0x8] sm:$0xff]
    %v5533 = vld [vmem:[%s5530 + $0x10] sm:$0xff]
    %v5534 = vld [vmem:[%s5530 + $0x18] sm:$0xff]
    %v5535 = vld [vmem:[%s5530 + $0x20] sm:$0xff]
    %5536 = vmatpush.msra.mxu0 0.0
    %5537 = vmatpush.msra.mxu0 0.0
    %5538 = vmatpush.msra.mxu0 0.0
    %5539 = vmatpush.msra.mxu0 0.0
    %5540 = vmatpush.msra.mxu0 0.0
    %5541 = vmatpush.msra.mxu0 0.0
    %5542 = vmatpush.msra.mxu0 0.0
    %5543 = vmatpush.msra.mxu0 0.0
    %5544 = vmatpush.msra.mxu0 0.0
    %5545 = vmatpush.msra.mxu0 0.0
    %5546 = vmatpush.msra.mxu0 0.0
    %5547 = vmatpush.msra.mxu0 %v5535
    %5548 = vmatpush.msra.mxu0 %v5534
    %5549 = vmatpush.msra.mxu0 %v5533
    %5550 = vmatpush.msra.mxu0 %v5532
    %5551 = vmatpush.msra.mxu0 %v5531
    %5552 = vmatmul.f32.gmra.mxu0 %v5452
    %v5553 = vpop.f32.mrf.mxu0
    %v5554 = vadd.f32 0.0, %v5553
    %5555 = vmatmul.f32.gmra.mxu0 %v5455
    %v5556 = vpop.f32.mrf.mxu0
    %v5557 = vadd.f32 0.0, %v5556
    %5558 = vdwg.mxu0
    %s5559 = scalar_lea.vmem %s21, 200
    %v5560 = vld [vmem:[%s5559] sm:$0xff]
    %v5561 = vld [vmem:[%s5559 + $0x8] sm:$0xff]
    %v5562 = vld [vmem:[%s5559 + $0x10] sm:$0xff]
    %v5563 = vld [vmem:[%s5559 + $0x18] sm:$0xff]
    %v5564 = vld [vmem:[%s5559 + $0x20] sm:$0xff]
    %5565 = vmatpush.msra.mxu0 0.0
    %5566 = vmatpush.msra.mxu0 0.0
    %5567 = vmatpush.msra.mxu0 0.0
    %5568 = vmatpush.msra.mxu0 0.0
    %5569 = vmatpush.msra.mxu0 0.0
    %5570 = vmatpush.msra.mxu0 0.0
    %5571 = vmatpush.msra.mxu0 0.0
    %5572 = vmatpush.msra.mxu0 0.0
    %5573 = vmatpush.msra.mxu0 0.0
    %5574 = vmatpush.msra.mxu0 0.0
    %5575 = vmatpush.msra.mxu0 0.0
    %5576 = vmatpush.msra.mxu0 %v5564
    %5577 = vmatpush.msra.mxu0 %v5563
    %5578 = vmatpush.msra.mxu0 %v5562
    %5579 = vmatpush.msra.mxu0 %v5561
    %5580 = vmatpush.msra.mxu0 %v5560
    %5581 = vmatmul.f32.gmra.mxu0 %v5452
    %v5582 = vpop.f32.mrf.mxu0
    %v5583 = vadd.f32 0.0, %v5582
    %5584 = vmatmul.f32.gmra.mxu0 %v5455
    %v5585 = vpop.f32.mrf.mxu0
    %v5586 = vadd.f32 0.0, %v5585
    %5587 = vdwg.mxu0
    %s5588 = scalar_lea.vmem %s23, 200
    %v5589 = vld [vmem:[%s5588] sm:$0xff]
    %v5590 = vld [vmem:[%s5588 + $0x8] sm:$0xff]
    %v5591 = vld [vmem:[%s5588 + $0x10] sm:$0xff]
    %v5592 = vld [vmem:[%s5588 + $0x18] sm:$0xff]
    %v5593 = vld [vmem:[%s5588 + $0x20] sm:$0xff]
    %5594 = vmatpush.msra.mxu0 0.0
    %5595 = vmatpush.msra.mxu0 0.0
    %5596 = vmatpush.msra.mxu0 0.0
    %5597 = vmatpush.msra.mxu0 0.0
    %5598 = vmatpush.msra.mxu0 0.0
    %5599 = vmatpush.msra.mxu0 0.0
    %5600 = vmatpush.msra.mxu0 0.0
    %5601 = vmatpush.msra.mxu0 0.0
    %5602 = vmatpush.msra.mxu0 0.0
    %5603 = vmatpush.msra.mxu0 0.0
    %5604 = vmatpush.msra.mxu0 0.0
    %5605 = vmatpush.msra.mxu0 %v5593
    %5606 = vmatpush.msra.mxu0 %v5592
    %5607 = vmatpush.msra.mxu0 %v5591
    %5608 = vmatpush.msra.mxu0 %v5590
    %5609 = vmatpush.msra.mxu0 %v5589
    %5610 = vmatmul.f32.gmra.mxu0 %v5452
    %v5611 = vpop.f32.mrf.mxu0
    %v5612 = vadd.f32 0.0, %v5611
    %5613 = vmatmul.f32.gmra.mxu0 %v5455
    %v5614 = vpop.f32.mrf.mxu0
    %v5615 = vadd.f32 0.0, %v5614
    %5616 = vdwg.mxu0
    %v5617 = vmul.f32 %v5554, %v314
    %v5618 = vmul.f32 %v5557, %v314
    %v5620 = vsel %vm345, %v5617, 0
    %v5623 = vsel %vm345, %v5618, 0
    %v5626 = vsel %vm345, %v5583, 0
    %v5629 = vsel %vm345, %v5586, 0
    %5631 = vmatpush.xpose.msra.mxu0 0.0
    %5632 = vmatpush.xpose.msra.mxu0 0.0
    %5633 = vmatpush.xpose.msra.mxu0 0.0
    %5634 = vmatpush.xpose.msra.mxu0 0.0
    %5635 = vmatpush.xpose.msra.mxu0 0.0
    %5636 = vmatpush.xpose.msra.mxu0 0.0
    %5637 = vmatpush.xpose.msra.mxu0 0.0
    %5638 = vmatpush.xpose.msra.mxu0 0.0
    %5639 = vmatpush.xpose.msra.mxu0 0.0
    %5640 = vmatpush.xpose.msra.mxu0 0.0
    %5641 = vmatpush.xpose.msra.mxu0 0.0
    %5642 = vmatpush.xpose.msra.mxu0 0.0
    %5643 = vmatpush.xpose.msra.mxu0 0.0
    %5644 = vmatpush.xpose.msra.mxu0 0.0
    %5645 = vmatpush.xpose.msra.mxu0 %v5629
    %5646 = vmatpush.xpose.msra.mxu0 %v5626
    %5647 = vmatmul.f32.gmra.mxu0 %v5620
    %v5648 = vpop.f32.mrf.mxu0
    %v5649 = vadd.f32 0.0, %v5648
    %5650 = vmatmul.f32.gmra.mxu0 %v5623
    %v5651 = vpop.f32.mrf.mxu0
    %v5652 = vadd.f32 0.0, %v5651
    %5653 = vdwg.mxu0
    %v5654 = vmul.f32 %v5649, 0.31622776
    %v5655 = vmul.f32 %v5652, 0.31622776
    %v5656 = vsel %vm379, %v5654, -inf
    %5657 = vmax.xlane.f32.xlu0 %v5656
    %v5658 = vpop.xlane.xlu0 %5657
    %v5659 = vsel %vm379, %v5655, -inf
    %5660 = vmax.xlane.f32.xlu0 %v5659
    %v5661 = vpop.xlane.xlu0 %5660
    %v5662 = vsub.f32 %v5654, %v5658
    %v5663 = vsub.f32 %v5655, %v5661
    %v5664 = vmul.f32 %v5662, 1.442695
    %v5665 = vpow.pop %v5664
    %v5666 = vmul.f32 %v5663, 1.442695
    %v5667 = vpow.pop %v5666
    %v5668 = vsel %vm379, %v5665, 0.0
    %5669 = vadd.xlane.f32.xlu0 %v5668
    %v5670 = vpop.xlane.xlu0 %5669
    %v5671 = vsel %vm379, %v5667, 0.0
    %5672 = vadd.xlane.f32.xlu0 %v5671
    %v5673 = vpop.xlane.xlu0 %5672
    %v5674 = vrcp.pop %v5670
    %v5675 = vrcp.pop %v5673
    %v5676 = vmul.f32 %v5665, %v5674
    %v5677 = vmul.f32 %v5667, %v5675
    %v5678 = vmul.f32 %v5612, %v314
    %v5679 = vmul.f32 %v5615, %v314
    %v5680 = vmul.f32 %v5554, %v319
    %v5681 = vmul.f32 %v5557, %v319
    %v5683 = vsel %vm345, %v5680, 0
    %v5686 = vsel %vm345, %v5681, 0
    %5688 = vmatpush.xpose.msra.mxu0 0.0
    %5689 = vmatpush.xpose.msra.mxu0 0.0
    %5690 = vmatpush.xpose.msra.mxu0 0.0
    %5691 = vmatpush.xpose.msra.mxu0 0.0
    %5692 = vmatpush.xpose.msra.mxu0 0.0
    %5693 = vmatpush.xpose.msra.mxu0 0.0
    %5694 = vmatpush.xpose.msra.mxu0 0.0
    %5695 = vmatpush.xpose.msra.mxu0 0.0
    %5696 = vmatpush.xpose.msra.mxu0 0.0
    %5697 = vmatpush.xpose.msra.mxu0 0.0
    %5698 = vmatpush.xpose.msra.mxu0 0.0
    %5699 = vmatpush.xpose.msra.mxu0 0.0
    %5700 = vmatpush.xpose.msra.mxu0 0.0
    %5701 = vmatpush.xpose.msra.mxu0 0.0
    %5702 = vmatpush.xpose.msra.mxu0 %v5629
    %5703 = vmatpush.xpose.msra.mxu0 %v5626
    %5704 = vmatmul.f32.gmra.mxu0 %v5683
    %v5705 = vpop.f32.mrf.mxu0
    %v5706 = vadd.f32 0.0, %v5705
    %5707 = vmatmul.f32.gmra.mxu0 %v5686
    %v5708 = vpop.f32.mrf.mxu0
    %v5709 = vadd.f32 0.0, %v5708
    %5710 = vdwg.mxu0
    %v5711 = vmul.f32 %v5706, 0.31622776
    %v5712 = vmul.f32 %v5709, 0.31622776
    %v5713 = vsel %vm379, %v5711, -inf
    %5714 = vmax.xlane.f32.xlu0 %v5713
    %v5715 = vpop.xlane.xlu0 %5714
    %v5716 = vsel %vm379, %v5712, -inf
    %5717 = vmax.xlane.f32.xlu0 %v5716
    %v5718 = vpop.xlane.xlu0 %5717
    %v5719 = vsub.f32 %v5711, %v5715
    %v5720 = vsub.f32 %v5712, %v5718
    %v5721 = vmul.f32 %v5719, 1.442695
    %v5722 = vpow.pop %v5721
    %v5723 = vmul.f32 %v5720, 1.442695
    %v5724 = vpow.pop %v5723
    %v5725 = vsel %vm379, %v5722, 0.0
    %5726 = vadd.xlane.f32.xlu0 %v5725
    %v5727 = vpop.xlane.xlu0 %5726
    %v5728 = vsel %vm379, %v5724, 0.0
    %5729 = vadd.xlane.f32.xlu0 %v5728
    %v5730 = vpop.xlane.xlu0 %5729
    %v5731 = vrcp.pop %v5727
    %v5732 = vrcp.pop %v5730
    %v5733 = vmul.f32 %v5722, %v5731
    %v5734 = vmul.f32 %v5724, %v5732
    %v5735 = vmul.f32 %v5612, %v319
    %v5736 = vmul.f32 %v5615, %v319
    %v5738 = vsel %vm379, %v5733, 0
    %v5741 = vsel %vm379, %v5734, 0
    %5743 = vmatpush.msra.mxu0 0.0
    %5744 = vmatpush.msra.mxu0 0.0
    %5745 = vmatpush.msra.mxu0 0.0
    %5746 = vmatpush.msra.mxu0 0.0
    %5747 = vmatpush.msra.mxu0 0.0
    %5748 = vmatpush.msra.mxu0 0.0
    %5749 = vmatpush.msra.mxu0 0.0
    %5750 = vmatpush.msra.mxu0 0.0
    %5751 = vmatpush.msra.mxu0 0.0
    %5752 = vmatpush.msra.mxu0 0.0
    %5753 = vmatpush.msra.mxu0 0.0
    %5754 = vmatpush.msra.mxu0 0.0
    %5755 = vmatpush.msra.mxu0 0.0
    %5756 = vmatpush.msra.mxu0 0.0
    %5757 = vmatpush.msra.mxu0 %v5736
    %5758 = vmatpush.msra.mxu0 %v5735
    %5759 = vmatmul.f32.gmra.mxu0 %v5738
    %v5760 = vpop.f32.mrf.mxu0
    %v5761 = vadd.f32 0.0, %v5760
    %5762 = vmatmul.f32.gmra.mxu0 %v5741
    %v5763 = vpop.f32.mrf.mxu0
    %v5764 = vadd.f32 0.0, %v5763
    %5765 = vdwg.mxu0
    %v5767 = vsel %vm379, %v5676, 0
    %v5770 = vsel %vm379, %v5677, 0
    %5772 = vmatpush.msra.mxu0 0.0
    %5773 = vmatpush.msra.mxu0 0.0
    %5774 = vmatpush.msra.mxu0 0.0
    %5775 = vmatpush.msra.mxu0 0.0
    %5776 = vmatpush.msra.mxu0 0.0
    %5777 = vmatpush.msra.mxu0 0.0
    %5778 = vmatpush.msra.mxu0 0.0
    %5779 = vmatpush.msra.mxu0 0.0
    %5780 = vmatpush.msra.mxu0 0.0
    %5781 = vmatpush.msra.mxu0 0.0
    %5782 = vmatpush.msra.mxu0 0.0
    %5783 = vmatpush.msra.mxu0 0.0
    %5784 = vmatpush.msra.mxu0 0.0
    %5785 = vmatpush.msra.mxu0 0.0
    %5786 = vmatpush.msra.mxu0 %v5679
    %5787 = vmatpush.msra.mxu0 %v5678
    %5788 = vmatmul.f32.gmra.mxu0 %v5767
    %v5789 = vpop.f32.mrf.mxu0
    %v5790 = vadd.f32 %v5761, %v5789
    %5791 = vmatmul.f32.gmra.mxu0 %v5770
    %v5792 = vpop.f32.mrf.mxu0
    %v5793 = vadd.f32 %v5764, %v5792
    %5794 = vdwg.mxu0
    %v5795 = vmul.f32 %v5554, %v324
    %v5796 = vmul.f32 %v5557, %v324
    %v5798 = vsel %vm345, %v5795, 0
    %v5801 = vsel %vm345, %v5796, 0
    %5803 = vmatpush.xpose.msra.mxu0 0.0
    %5804 = vmatpush.xpose.msra.mxu0 0.0
    %5805 = vmatpush.xpose.msra.mxu0 0.0
    %5806 = vmatpush.xpose.msra.mxu0 0.0
    %5807 = vmatpush.xpose.msra.mxu0 0.0
    %5808 = vmatpush.xpose.msra.mxu0 0.0
    %5809 = vmatpush.xpose.msra.mxu0 0.0
    %5810 = vmatpush.xpose.msra.mxu0 0.0
    %5811 = vmatpush.xpose.msra.mxu0 0.0
    %5812 = vmatpush.xpose.msra.mxu0 0.0
    %5813 = vmatpush.xpose.msra.mxu0 0.0
    %5814 = vmatpush.xpose.msra.mxu0 0.0
    %5815 = vmatpush.xpose.msra.mxu0 0.0
    %5816 = vmatpush.xpose.msra.mxu0 0.0
    %5817 = vmatpush.xpose.msra.mxu0 %v5629
    %5818 = vmatpush.xpose.msra.mxu0 %v5626
    %5819 = vmatmul.f32.gmra.mxu0 %v5798
    %v5820 = vpop.f32.mrf.mxu0
    %v5821 = vadd.f32 0.0, %v5820
    %5822 = vmatmul.f32.gmra.mxu0 %v5801
    %v5823 = vpop.f32.mrf.mxu0
    %v5824 = vadd.f32 0.0, %v5823
    %5825 = vdwg.mxu0
    %v5826 = vmul.f32 %v5821, 0.31622776
    %v5827 = vmul.f32 %v5824, 0.31622776
    %v5828 = vsel %vm379, %v5826, -inf
    %5829 = vmax.xlane.f32.xlu0 %v5828
    %v5830 = vpop.xlane.xlu0 %5829
    %v5831 = vsel %vm379, %v5827, -inf
    %5832 = vmax.xlane.f32.xlu0 %v5831
    %v5833 = vpop.xlane.xlu0 %5832
    %v5834 = vsub.f32 %v5826, %v5830
    %v5835 = vsub.f32 %v5827, %v5833
    %v5836 = vmul.f32 %v5834, 1.442695
    %v5837 = vpow.pop %v5836
    %v5838 = vmul.f32 %v5835, 1.442695
    %v5839 = vpow.pop %v5838
    %v5840 = vsel %vm379, %v5837, 0.0
    %5841 = vadd.xlane.f32.xlu0 %v5840
    %v5842 = vpop.xlane.xlu0 %5841
    %v5843 = vsel %vm379, %v5839, 0.0
    %5844 = vadd.xlane.f32.xlu0 %v5843
    %v5845 = vpop.xlane.xlu0 %5844
    %v5846 = vrcp.pop %v5842
    %v5847 = vrcp.pop %v5845
    %v5848 = vmul.f32 %v5837, %v5846
    %v5849 = vmul.f32 %v5839, %v5847
    %v5850 = vmul.f32 %v5612, %v324
    %v5851 = vmul.f32 %v5615, %v324
    %v5853 = vsel %vm379, %v5848, 0
    %v5856 = vsel %vm379, %v5849, 0
    %5858 = vmatpush.msra.mxu0 0.0
    %5859 = vmatpush.msra.mxu0 0.0
    %5860 = vmatpush.msra.mxu0 0.0
    %5861 = vmatpush.msra.mxu0 0.0
    %5862 = vmatpush.msra.mxu0 0.0
    %5863 = vmatpush.msra.mxu0 0.0
    %5864 = vmatpush.msra.mxu0 0.0
    %5865 = vmatpush.msra.mxu0 0.0
    %5866 = vmatpush.msra.mxu0 0.0
    %5867 = vmatpush.msra.mxu0 0.0
    %5868 = vmatpush.msra.mxu0 0.0
    %5869 = vmatpush.msra.mxu0 0.0
    %5870 = vmatpush.msra.mxu0 0.0
    %5871 = vmatpush.msra.mxu0 0.0
    %5872 = vmatpush.msra.mxu0 %v5851
    %5873 = vmatpush.msra.mxu0 %v5850
    %5874 = vmatmul.f32.gmra.mxu0 %v5853
    %v5875 = vpop.f32.mrf.mxu0
    %v5876 = vadd.f32 0.0, %v5875
    %5877 = vmatmul.f32.gmra.mxu0 %v5856
    %v5878 = vpop.f32.mrf.mxu0
    %v5879 = vadd.f32 0.0, %v5878
    %5880 = vdwg.mxu0
    %v5881 = vadd.f32 %v5790, %v5876
    %v5882 = vadd.f32 %v5793, %v5879
    %v5883 = vmul.f32 %v5554, %v329
    %v5884 = vmul.f32 %v5557, %v329
    %v5886 = vsel %vm345, %v5883, 0
    %v5889 = vsel %vm345, %v5884, 0
    %5891 = vmatpush.xpose.msra.mxu0 0.0
    %5892 = vmatpush.xpose.msra.mxu0 0.0
    %5893 = vmatpush.xpose.msra.mxu0 0.0
    %5894 = vmatpush.xpose.msra.mxu0 0.0
    %5895 = vmatpush.xpose.msra.mxu0 0.0
    %5896 = vmatpush.xpose.msra.mxu0 0.0
    %5897 = vmatpush.xpose.msra.mxu0 0.0
    %5898 = vmatpush.xpose.msra.mxu0 0.0
    %5899 = vmatpush.xpose.msra.mxu0 0.0
    %5900 = vmatpush.xpose.msra.mxu0 0.0
    %5901 = vmatpush.xpose.msra.mxu0 0.0
    %5902 = vmatpush.xpose.msra.mxu0 0.0
    %5903 = vmatpush.xpose.msra.mxu0 0.0
    %5904 = vmatpush.xpose.msra.mxu0 0.0
    %5905 = vmatpush.xpose.msra.mxu0 %v5629
    %5906 = vmatpush.xpose.msra.mxu0 %v5626
    %5907 = vmatmul.f32.gmra.mxu0 %v5886
    %v5908 = vpop.f32.mrf.mxu0
    %v5909 = vadd.f32 0.0, %v5908
    %5910 = vmatmul.f32.gmra.mxu0 %v5889
    %v5911 = vpop.f32.mrf.mxu0
    %v5912 = vadd.f32 0.0, %v5911
    %5913 = vdwg.mxu0
    %v5914 = vmul.f32 %v5909, 0.31622776
    %v5915 = vmul.f32 %v5912, 0.31622776
    %v5916 = vsel %vm379, %v5914, -inf
    %5917 = vmax.xlane.f32.xlu0 %v5916
    %v5918 = vpop.xlane.xlu0 %5917
    %v5919 = vsel %vm379, %v5915, -inf
    %5920 = vmax.xlane.f32.xlu0 %v5919
    %v5921 = vpop.xlane.xlu0 %5920
    %v5922 = vsub.f32 %v5914, %v5918
    %v5923 = vsub.f32 %v5915, %v5921
    %v5924 = vmul.f32 %v5922, 1.442695
    %v5925 = vpow.pop %v5924
    %v5926 = vmul.f32 %v5923, 1.442695
    %v5927 = vpow.pop %v5926
    %v5928 = vsel %vm379, %v5925, 0.0
    %5929 = vadd.xlane.f32.xlu0 %v5928
    %v5930 = vpop.xlane.xlu0 %5929
    %v5931 = vsel %vm379, %v5927, 0.0
    %5932 = vadd.xlane.f32.xlu0 %v5931
    %v5933 = vpop.xlane.xlu0 %5932
    %v5934 = vrcp.pop %v5930
    %v5935 = vrcp.pop %v5933
    %v5936 = vmul.f32 %v5925, %v5934
    %v5937 = vmul.f32 %v5927, %v5935
    %v5938 = vmul.f32 %v5612, %v329
    %v5939 = vmul.f32 %v5615, %v329
    %v5941 = vsel %vm379, %v5936, 0
    %v5944 = vsel %vm379, %v5937, 0
    %5946 = vmatpush.msra.mxu0 0.0
    %5947 = vmatpush.msra.mxu0 0.0
    %5948 = vmatpush.msra.mxu0 0.0
    %5949 = vmatpush.msra.mxu0 0.0
    %5950 = vmatpush.msra.mxu0 0.0
    %5951 = vmatpush.msra.mxu0 0.0
    %5952 = vmatpush.msra.mxu0 0.0
    %5953 = vmatpush.msra.mxu0 0.0
    %5954 = vmatpush.msra.mxu0 0.0
    %5955 = vmatpush.msra.mxu0 0.0
    %5956 = vmatpush.msra.mxu0 0.0
    %5957 = vmatpush.msra.mxu0 0.0
    %5958 = vmatpush.msra.mxu0 0.0
    %5959 = vmatpush.msra.mxu0 0.0
    %5960 = vmatpush.msra.mxu0 %v5939
    %5961 = vmatpush.msra.mxu0 %v5938
    %5962 = vmatmul.f32.gmra.mxu0 %v5941
    %v5963 = vpop.f32.mrf.mxu0
    %v5964 = vadd.f32 0.0, %v5963
    %5965 = vmatmul.f32.gmra.mxu0 %v5944
    %v5966 = vpop.f32.mrf.mxu0
    %v5967 = vadd.f32 0.0, %v5966
    %5968 = vdwg.mxu0
    %v5969 = vadd.f32 %v5881, %v5964
    %v5970 = vadd.f32 %v5882, %v5967
    %s5971 = scalar_lea.vmem %s25, 200
    %v5972 = vld [vmem:[%s5971] sm:$0xff]
    %v5973 = vld [vmem:[%s5971 + $0x8] sm:$0xff]
    %v5974 = vld [vmem:[%s5971 + $0x10] sm:$0xff]
    %v5975 = vld [vmem:[%s5971 + $0x18] sm:$0xff]
    %v5976 = vld [vmem:[%s5971 + $0x20] sm:$0xff]
    %s5977 = scalar_lea.vmem %s27, 5
    %v5978 = vld [vmem:[%s5977] sm:$0x1]
    %v5980 = vperm.slane %v5978, 0
    %v5983 = vsel %vm345, %v5969, 0
    %v5986 = vsel %vm345, %v5970, 0
    %5988 = vmatpush.msra.mxu0 0.0
    %5989 = vmatpush.msra.mxu0 0.0
    %5990 = vmatpush.msra.mxu0 0.0
    %5991 = vmatpush.msra.mxu0 0.0
    %5992 = vmatpush.msra.mxu0 0.0
    %5993 = vmatpush.msra.mxu0 0.0
    %5994 = vmatpush.msra.mxu0 0.0
    %5995 = vmatpush.msra.mxu0 0.0
    %5996 = vmatpush.msra.mxu0 0.0
    %5997 = vmatpush.msra.mxu0 0.0
    %5998 = vmatpush.msra.mxu0 0.0
    %5999 = vmatpush.msra.mxu0 %v5976
    %6000 = vmatpush.msra.mxu0 %v5975
    %6001 = vmatpush.msra.mxu0 %v5974
    %6002 = vmatpush.msra.mxu0 %v5973
    %6003 = vmatpush.msra.mxu0 %v5972
    %6004 = vmatmul.f32.gmra.mxu0 %v5983
    %v6005 = vpop.f32.mrf.mxu0
    %v6006 = vadd.f32 %v5980, %v6005
    %6007 = vmatmul.f32.gmra.mxu0 %v5986
    %v6008 = vpop.f32.mrf.mxu0
    %v6009 = vadd.f32 %v5980, %v6008
    %6010 = vdwg.mxu0
    %v6011 = vadd.f32 %v6006, %v5434
    %v6012 = vadd.f32 %v6009, %v5435
    %s6013 = scalar_lea.vmem %s33, 5
    %v6014 = vld [vmem:[%s6013] sm:$0x1]
    %v6016 = vperm.slane %v6014, 0
    %v6018 = vmul.f32 %v6011, %v6016
    %v6019 = vmul.f32 %v6012, %v6016
    %s6020 = scalar_lea.vmem %s35, 5
    %v6021 = vld [vmem:[%s6020] sm:$0x1]
    %v6023 = vperm.slane %v6021, 0
    %v6025 = vadd.f32 %v6018, %v6023
    %v6026 = vadd.f32 %v6019, %v6023
    %v6027 = vadd.f32 %v5528, %v6025
    %v6028 = vadd.f32 %v5529, %v6026
    %s6029 = scalar_lea.vmem [#allocation7], 200
    %v6030 = vld [vmem:[%s6029] sm:$0xff]
    %v6031 = vld [vmem:[%s6029 + $0x8] sm:$0xff]
    %v6032 = vld [vmem:[%s6029 + $0x10] sm:$0xff]
    %v6033 = vld [vmem:[%s6029 + $0x18] sm:$0xff]
    %v6034 = vld [vmem:[%s6029 + $0x20] sm:$0xff]
    %s6035 = scalar_lea.vmem %s43, 5
    %v6036 = vld [vmem:[%s6035] sm:$0x1]
    %v6038 = vperm.slane %v6036, 0
    %v6041 = vsel %vm345, %v6027, 0
    %v6044 = vsel %vm345, %v6028, 0
    %6046 = vmatpush.msra.mxu0 0.0
    %6047 = vmatpush.msra.mxu0 0.0
    %6048 = vmatpush.msra.mxu0 0.0
    %6049 = vmatpush.msra.mxu0 0.0
    %6050 = vmatpush.msra.mxu0 0.0
    %6051 = vmatpush.msra.mxu0 0.0
    %6052 = vmatpush.msra.mxu0 0.0
    %6053 = vmatpush.msra.mxu0 0.0
    %6054 = vmatpush.msra.mxu0 0.0
    %6055 = vmatpush.msra.mxu0 0.0
    %6056 = vmatpush.msra.mxu0 0.0
    %6057 = vmatpush.msra.mxu0 %v6034
    %6058 = vmatpush.msra.mxu0 %v6033
    %6059 = vmatpush.msra.mxu0 %v6032
    %6060 = vmatpush.msra.mxu0 %v6031
    %6061 = vmatpush.msra.mxu0 %v6030
    %6062 = vmatmul.f32.gmra.mxu0 %v6041
    %v6063 = vpop.f32.mrf.mxu0
    %v6064 = vadd.f32 %v6038, %v6063
    %6065 = vmatmul.f32.gmra.mxu0 %v6044
    %v6066 = vpop.f32.mrf.mxu0
    %v6067 = vadd.f32 %v6038, %v6066
    %6068 = vdwg.mxu0
    %v6069 = vmax.f32 %v6064, 0.0
    %v6070 = vmax.f32 %v6067, 0.0
    %s6071 = scalar_lea.vmem %s45, 400
    %v6072 = vld [vmem:[%s6071] sm:$0xff]
    %v6073 = vld [vmem:[%s6071 + $0x8] sm:$0xff]
    %v6074 = vld [vmem:[%s6071 + $0x10] sm:$0xff]
    %v6075 = vld [vmem:[%s6071 + $0x18] sm:$0xff]
    %v6076 = vld [vmem:[%s6071 + $0x20] sm:$0xff]
    %v6077 = vld [vmem:[%s6071 + $0x28] sm:$0xff]
    %v6078 = vld [vmem:[%s6071 + $0x30] sm:$0xff]
    %v6079 = vld [vmem:[%s6071 + $0x38] sm:$0xff]
    %v6080 = vld [vmem:[%s6071 + $0x40] sm:$0xff]
    %v6081 = vld [vmem:[%s6071 + $0x48] sm:$0xff]
    %s6082 = scalar_lea.vmem %s47, 5
    %v6083 = vld [vmem:[%s6082] sm:$0x1]
    %v6085 = vperm.slane %v6083, 0
    %v6088 = vsel %vm969, %v6069, 0
    %v6091 = vsel %vm969, %v6070, 0
    %6093 = vmatpush.msra.mxu0 0.0
    %6094 = vmatpush.msra.mxu0 0.0
    %6095 = vmatpush.msra.mxu0 0.0
    %6096 = vmatpush.msra.mxu0 0.0
    %6097 = vmatpush.msra.mxu0 0.0
    %6098 = vmatpush.msra.mxu0 0.0
    %6099 = vmatpush.msra.mxu0 %v6081
    %6100 = vmatpush.msra.mxu0 %v6080
    %6101 = vmatpush.msra.mxu0 %v6079
    %6102 = vmatpush.msra.mxu0 %v6078
    %6103 = vmatpush.msra.mxu0 %v6077
    %6104 = vmatpush.msra.mxu0 %v6076
    %6105 = vmatpush.msra.mxu0 %v6075
    %6106 = vmatpush.msra.mxu0 %v6074
    %6107 = vmatpush.msra.mxu0 %v6073
    %6108 = vmatpush.msra.mxu0 %v6072
    %6109 = vmatmul.f32.gmra.mxu0 %v6088
    %v6110 = vpop.f32.mrf.mxu0
    %v6111 = vadd.f32 %v6085, %v6110
    %6112 = vmatmul.f32.gmra.mxu0 %v6091
    %v6113 = vpop.f32.mrf.mxu0
    %v6114 = vadd.f32 %v6085, %v6113
    %6115 = vdwg.mxu0
    %v6116 = vadd.f32 %v6027, %v6111
    %v6117 = vadd.f32 %v6028, %v6114
    %s6118 = scalar_lea.vmem %s37, 5
    %v6119 = vld [vmem:[%s6118] sm:$0x1]
    %v6121 = vperm.slane %v6119, 0
    %v6123 = vmul.f32 %v6116, %v6121
    %v6124 = vmul.f32 %v6117, %v6121
    %s6125 = scalar_lea.vmem %s39, 5
    %v6126 = vld [vmem:[%s6125] sm:$0x1]
    %v6128 = vperm.slane %v6126, 0
    %v6130 = vadd.f32 %v6123, %v6128
    %v6131 = vadd.f32 %v6124, %v6128
    %s6132 = scalar_lea.vmem %s49, 200
    %v6133 = vld [vmem:[%s6132] sm:$0xff]
    %v6134 = vld [vmem:[%s6132 + $0x8] sm:$0xff]
    %v6135 = vld [vmem:[%s6132 + $0x10] sm:$0xff]
    %v6136 = vld [vmem:[%s6132 + $0x18] sm:$0xff]
    %v6137 = vld [vmem:[%s6132 + $0x20] sm:$0xff]
    %s6138 = scalar_lea.vmem %s51, 5
    %v6139 = vld [vmem:[%s6138] sm:$0x1]
    %v6141 = vperm.slane %v6139, 0
    %v6144 = vsel %vm345, %v6130, 0
    %v6147 = vsel %vm345, %v6131, 0
    %6149 = vmatpush.msra.mxu0 0.0
    %6150 = vmatpush.msra.mxu0 0.0
    %6151 = vmatpush.msra.mxu0 0.0
    %6152 = vmatpush.msra.mxu0 0.0
    %6153 = vmatpush.msra.mxu0 0.0
    %6154 = vmatpush.msra.mxu0 0.0
    %6155 = vmatpush.msra.mxu0 0.0
    %6156 = vmatpush.msra.mxu0 0.0
    %6157 = vmatpush.msra.mxu0 0.0
    %6158 = vmatpush.msra.mxu0 0.0
    %6159 = vmatpush.msra.mxu0 0.0
    %6160 = vmatpush.msra.mxu0 %v6137
    %6161 = vmatpush.msra.mxu0 %v6136
    %6162 = vmatpush.msra.mxu0 %v6135
    %6163 = vmatpush.msra.mxu0 %v6134
    %6164 = vmatpush.msra.mxu0 %v6133
    %6165 = vmatmul.f32.gmra.mxu0 %v6144
    %v6166 = vpop.f32.mrf.mxu0
    %v6167 = vadd.f32 %v6141, %v6166
    %6168 = vmatmul.f32.gmra.mxu0 %v6147
    %v6169 = vpop.f32.mrf.mxu0
    %v6170 = vadd.f32 %v6141, %v6169
    %6171 = vdwg.mxu0
    %s6172 = scalar_lea.vmem [#allocation8], 160
    %v6173 = vld [vmem:[%s6172] sm:$0xff]
    %v6174 = vld [vmem:[%s6172 + $0x8] sm:$0xff]
    %v6175 = vld [vmem:[%s6172 + $0x10] sm:$0xff]
    %v6176 = vld [vmem:[%s6172 + $0x18] sm:$0xff]
    %v6178 = vsel %vm1055, %v6167, 0
    %v6181 = vsel %vm1055, %v6170, 0
    %6183 = vmatpush.msra.mxu0 0.0
    %6184 = vmatpush.msra.mxu0 0.0
    %6185 = vmatpush.msra.mxu0 0.0
    %6186 = vmatpush.msra.mxu0 0.0
    %6187 = vmatpush.msra.mxu0 0.0
    %6188 = vmatpush.msra.mxu0 0.0
    %6189 = vmatpush.msra.mxu0 0.0
    %6190 = vmatpush.msra.mxu0 0.0
    %6191 = vmatpush.msra.mxu0 0.0
    %6192 = vmatpush.msra.mxu0 0.0
    %6193 = vmatpush.msra.mxu0 0.0
    %6194 = vmatpush.msra.mxu0 0.0
    %6195 = vmatpush.msra.mxu0 %v6176
    %6196 = vmatpush.msra.mxu0 %v6175
    %6197 = vmatpush.msra.mxu0 %v6174
    %6198 = vmatpush.msra.mxu0 %v6173
    %6199 = vmatmul.f32.gmra.mxu0 %v6178
    %v6200 = vpop.f32.mrf.mxu0
    %v6201 = vadd.f32 0.0, %v6200
    %6202 = vmatmul.f32.gmra.mxu0 %v6181
    %v6203 = vpop.f32.mrf.mxu0
    %v6204 = vadd.f32 0.0, %v6203
    %6205 = vdwg.mxu0
    %s6206 = scalar_lea.vmem %s57, 5
    %v6207 = vld [vmem:[%s6206] sm:$0x1]
    %v6209 = vperm.slane %v6207, 0
    %v6211 = vmul.f32 %v6201, %v6209
    %v6212 = vmul.f32 %v6204, %v6209
    %v6213 = vsel %vm1055, %v6211, 0.0
    %6214 = vadd.xlane.f32.xlu0 %v6213
    %v6215 = vpop.xlane.xlu0 %6214
    %v6216 = vsel %vm1055, %v6212, 0.0
    %6217 = vadd.xlane.f32.xlu0 %v6216
    %v6218 = vpop.xlane.xlu0 %6217
    %s6219 = scalar_lea.vmem %s55, 5
    %v6220 = vld [vmem:[%s6219] sm:$0x1]
    %v6222 = vsel %vm1055, %v6220, 0
    %v6225 = vsel %vm1055, %v6201, 0
    %v6228 = vsel %vm1055, %v6204, 0
    %6230 = vmatpush.xpose.msra.mxu0 0.0
    %6231 = vmatpush.xpose.msra.mxu0 0.0
    %6232 = vmatpush.xpose.msra.mxu0 0.0
    %6233 = vmatpush.xpose.msra.mxu0 0.0
    %6234 = vmatpush.xpose.msra.mxu0 0.0
    %6235 = vmatpush.xpose.msra.mxu0 0.0
    %6236 = vmatpush.xpose.msra.mxu0 0.0
    %6237 = vmatpush.xpose.msra.mxu0 0.0
    %6238 = vmatpush.xpose.msra.mxu0 0.0
    %6239 = vmatpush.xpose.msra.mxu0 0.0
    %6240 = vmatpush.xpose.msra.mxu0 0.0
    %6241 = vmatpush.xpose.msra.mxu0 0.0
    %6242 = vmatpush.xpose.msra.mxu0 0.0
    %6243 = vmatpush.xpose.msra.mxu0 0.0
    %6244 = vmatpush.xpose.msra.mxu0 %v6228
    %6245 = vmatpush.xpose.msra.mxu0 %v6225
    %6246 = vmatmul.f32.gmra.mxu0 %v6222
    %v6247 = vpop.f32.mrf.mxu0
    %v6248 = vadd.f32 0.0, %v6247
    %6249 = vdwg.mxu0
    %v6250 = vperm.slane %v6248, 0
    %v6251 = vadd.f32 %v6215, %v6250
    %v6252 = vadd.f32 %v6218, %v6250
    %vm6253 = vcmp.gt.f32.partialorder %v6251, 0.0
    %vm6254 = vcmp.gt.f32.partialorder %v6252, 0.0
    %v6255 = vmul.f32 %v6251, 0.2
    %v6256 = vmul.f32 %v6252, 0.2
    %v6257 = vsel %vm6253, %v6251, %v6255
    %v6258 = vsel %vm6254, %v6252, %v6256
    %vm6259 = vcmp.gt.f32.partialorder %v5443, 0.0
    %vm6260 = vcmp.gt.f32.partialorder %v5444, 0.0
    %v6261 = vsel %vm6259, %v6257, -1e+30
    %v6262 = vsel %vm6260, %v6258, -1e+30
    %v6263 = vsel %vm379, %v6261, -inf
    %6264 = vmax.xlane.f32.xlu0 %v6263
    %v6265 = vpop.xlane.xlu0 %6264
    %v6266 = vsel %vm379, %v6262, -inf
    %6267 = vmax.xlane.f32.xlu0 %v6266
    %v6268 = vpop.xlane.xlu0 %6267
    %v6269 = vsub.f32 %v6261, %v6265
    %v6270 = vsub.f32 %v6262, %v6268
    %v6271 = vmul.f32 %v6269, 1.442695
    %v6272 = vpow.pop %v6271
    %v6273 = vmul.f32 %v6270, 1.442695
    %v6274 = vpow.pop %v6273
    %v6275 = vsel %vm379, %v6272, 0.0
    %6276 = vadd.xlane.f32.xlu0 %v6275
    %v6277 = vpop.xlane.xlu0 %6276
    %v6278 = vsel %vm379, %v6274, 0.0
    %6279 = vadd.xlane.f32.xlu0 %v6278
    %v6280 = vpop.xlane.xlu0 %6279
    %v6281 = vrcp.pop %v6277
    %v6282 = vrcp.pop %v6280
    %v6283 = vmul.f32 %v6272, %v6281
    %v6284 = vmul.f32 %v6274, %v6282
    %s6285 = scalar_lea.vmem %s59, 5
    %v6286 = vld [vmem:[%s6285] sm:$0x1]
    %v6288 = vperm.slane %v6286, 0
    %v6291 = vsel %vm379, %v6283, 0
    %v6294 = vsel %vm379, %v6284, 0
    %6296 = vmatpush.msra.mxu0 0.0
    %6297 = vmatpush.msra.mxu0 0.0
    %6298 = vmatpush.msra.mxu0 0.0
    %6299 = vmatpush.msra.mxu0 0.0
    %6300 = vmatpush.msra.mxu0 0.0
    %6301 = vmatpush.msra.mxu0 0.0
    %6302 = vmatpush.msra.mxu0 0.0
    %6303 = vmatpush.msra.mxu0 0.0
    %6304 = vmatpush.msra.mxu0 0.0
    %6305 = vmatpush.msra.mxu0 0.0
    %6306 = vmatpush.msra.mxu0 0.0
    %6307 = vmatpush.msra.mxu0 0.0
    %6308 = vmatpush.msra.mxu0 0.0
    %6309 = vmatpush.msra.mxu0 0.0
    %6310 = vmatpush.msra.mxu0 %v6204
    %6311 = vmatpush.msra.mxu0 %v6201
    %6312 = vmatmul.f32.gmra.mxu0 %v6291
    %v6313 = vpop.f32.mrf.mxu0
    %v6314 = vadd.f32 %v6288, %v6313
    %6315 = vmatmul.f32.gmra.mxu0 %v6294
    %v6316 = vpop.f32.mrf.mxu0
    %v6317 = vadd.f32 %v6288, %v6316
    %6318 = vdwg.mxu0
    %s6319 = scalar_lea.vmem [#allocation10], 160
    %v6320 = vld [vmem:[%s6319] sm:$0xff]
    %v6321 = vld [vmem:[%s6319 + $0x8] sm:$0xff]
    %v6322 = vld [vmem:[%s6319 + $0x10] sm:$0xff]
    %v6323 = vld [vmem:[%s6319 + $0x18] sm:$0xff]
    %v6325 = vsel %vm1055, %v6314, 0
    %v6328 = vsel %vm1055, %v6317, 0
    %6330 = vmatpush.msra.mxu0 0.0
    %6331 = vmatpush.msra.mxu0 0.0
    %6332 = vmatpush.msra.mxu0 0.0
    %6333 = vmatpush.msra.mxu0 0.0
    %6334 = vmatpush.msra.mxu0 0.0
    %6335 = vmatpush.msra.mxu0 0.0
    %6336 = vmatpush.msra.mxu0 0.0
    %6337 = vmatpush.msra.mxu0 0.0
    %6338 = vmatpush.msra.mxu0 0.0
    %6339 = vmatpush.msra.mxu0 0.0
    %6340 = vmatpush.msra.mxu0 0.0
    %6341 = vmatpush.msra.mxu0 0.0
    %6342 = vmatpush.msra.mxu0 %v6323
    %6343 = vmatpush.msra.mxu0 %v6322
    %6344 = vmatpush.msra.mxu0 %v6321
    %6345 = vmatpush.msra.mxu0 %v6320
    %6346 = vmatmul.f32.gmra.mxu0 %v6325
    %v6347 = vpop.f32.mrf.mxu0
    %v6348 = vadd.f32 0.0, %v6347
    %6349 = vmatmul.f32.gmra.mxu0 %v6328
    %v6350 = vpop.f32.mrf.mxu0
    %v6351 = vadd.f32 0.0, %v6350
    %6352 = vdwg.mxu0
    %s6353 = scalar_lea.vmem %s63, 5
    %v6354 = vld [vmem:[%s6353] sm:$0x1]
    %v6356 = vperm.slane %v6354, 0
    %v6359 = vsel %vm379, %v5440, 0
    %v6362 = vsel %vm379, %v5441, 0
    %6364 = vmatpush.msra.mxu0 0.0
    %6365 = vmatpush.msra.mxu0 0.0
    %6366 = vmatpush.msra.mxu0 0.0
    %6367 = vmatpush.msra.mxu0 0.0
    %6368 = vmatpush.msra.mxu0 0.0
    %6369 = vmatpush.msra.mxu0 0.0
    %6370 = vmatpush.msra.mxu0 0.0
    %6371 = vmatpush.msra.mxu0 0.0
    %6372 = vmatpush.msra.mxu0 0.0
    %6373 = vmatpush.msra.mxu0 0.0
    %6374 = vmatpush.msra.mxu0 0.0
    %6375 = vmatpush.msra.mxu0 0.0
    %6376 = vmatpush.msra.mxu0 0.0
    %6377 = vmatpush.msra.mxu0 0.0
    %6378 = vmatpush.msra.mxu0 %v6351
    %6379 = vmatpush.msra.mxu0 %v6348
    %6380 = vmatmul.f32.gmra.mxu0 %v6359
    %v6381 = vpop.f32.mrf.mxu0
    %v6382 = vadd.f32 %v6356, %v6381
    %6383 = vmatmul.f32.gmra.mxu0 %v6362
    %v6384 = vpop.f32.mrf.mxu0
    %v6385 = vadd.f32 %v6356, %v6384
    %6386 = vdwg.mxu0
    %s6387 = scalar_lea.vmem [#allocation11], 160
    %v6388 = vld [vmem:[%s6387] sm:$0xff]
    %v6389 = vld [vmem:[%s6387 + $0x8] sm:$0xff]
    %v6390 = vld [vmem:[%s6387 + $0x10] sm:$0xff]
    %v6391 = vld [vmem:[%s6387 + $0x18] sm:$0xff]
    %6392 = vmatpush.msra.mxu0 0.0
    %6393 = vmatpush.msra.mxu0 0.0
    %6394 = vmatpush.msra.mxu0 0.0
    %6395 = vmatpush.msra.mxu0 0.0
    %6396 = vmatpush.msra.mxu0 0.0
    %6397 = vmatpush.msra.mxu0 0.0
    %6398 = vmatpush.msra.mxu0 0.0
    %6399 = vmatpush.msra.mxu0 0.0
    %6400 = vmatpush.msra.mxu0 0.0
    %6401 = vmatpush.msra.mxu0 0.0
    %6402 = vmatpush.msra.mxu0 0.0
    %6403 = vmatpush.msra.mxu0 0.0
    %6404 = vmatpush.msra.mxu0 %v6391
    %6405 = vmatpush.msra.mxu0 %v6390
    %6406 = vmatpush.msra.mxu0 %v6389
    %6407 = vmatpush.msra.mxu0 %v6388
    %6408 = vmatmul.f32.gmra.mxu0 %v6325
    %v6409 = vpop.f32.mrf.mxu0
    %v6410 = vadd.f32 0.0, %v6409
    %6411 = vmatmul.f32.gmra.mxu0 %v6328
    %v6412 = vpop.f32.mrf.mxu0
    %v6413 = vadd.f32 0.0, %v6412
    %6414 = vdwg.mxu0
    %s6415 = scalar_lea.vmem %s67, 5
    %v6416 = vld [vmem:[%s6415] sm:$0x1]
    %v6418 = vperm.slane %v6416, 0
    %6420 = vmatpush.msra.mxu0 0.0
    %6421 = vmatpush.msra.mxu0 0.0
    %6422 = vmatpush.msra.mxu0 0.0
    %6423 = vmatpush.msra.mxu0 0.0
    %6424 = vmatpush.msra.mxu0 0.0
    %6425 = vmatpush.msra.mxu0 0.0
    %6426 = vmatpush.msra.mxu0 0.0
    %6427 = vmatpush.msra.mxu0 0.0
    %6428 = vmatpush.msra.mxu0 0.0
    %6429 = vmatpush.msra.mxu0 0.0
    %6430 = vmatpush.msra.mxu0 0.0
    %6431 = vmatpush.msra.mxu0 0.0
    %6432 = vmatpush.msra.mxu0 0.0
    %6433 = vmatpush.msra.mxu0 0.0
    %6434 = vmatpush.msra.mxu0 %v6413
    %6435 = vmatpush.msra.mxu0 %v6410
    %6436 = vmatmul.f32.gmra.mxu0 %v5486
    %v6437 = vpop.f32.mrf.mxu0
    %v6438 = vadd.f32 %v6418, %v6437
    %6439 = vmatmul.f32.gmra.mxu0 %v5489
    %v6440 = vpop.f32.mrf.mxu0
    %v6441 = vadd.f32 %v6418, %v6440
    %6442 = vdwg.mxu0
    %v6443 = vadd.f32 %v6438, %v6382
    %v6444 = vadd.f32 %v6441, %v6385
    %s6445 = scalar_lea.vmem %s69, 5
    %v6446 = vld [vmem:[%s6445] sm:$0x1]
    %v6448 = vperm.slane %v6446, 0
    %v6450 = vmul.f32 %v6443, %v6448
    %v6451 = vmul.f32 %v6444, %v6448
    %s6452 = scalar_lea.vmem %s71, 5
    %v6453 = vld [vmem:[%s6452] sm:$0x1]
    %v6455 = vperm.slane %v6453, 0
    %v6457 = vadd.f32 %v6450, %v6455
    %v6458 = vadd.f32 %v6451, %v6455
    %s6459 = scalar_lea.vmem %s1, 96
    %v6460 = vld [vmem:[%s6459] sm:$0xff]
    %v6461 = vld [vmem:[%s6459 + $0x8] sm:$0xff]
    %s6462 = scalar_lea.vmem %s5, 96
    %v6463 = vld [vmem:[%s6462] sm:$0xff]
    %v6464 = vld [vmem:[%s6462 + $0x8] sm:$0xff]
    %s6465 = scalar_lea.vmem [#allocation2], 96
    %v6466 = vld [vmem:[%s6465] sm:$0xff]
    %v6467 = vld [vmem:[%s6465 + $0x8] sm:$0xff]
    %s6468 = scalar_lea.vmem [#allocation5], 96
    %v6469 = vld [vmem:[%s6468] sm:$0xff]
    %v6470 = vld [vmem:[%s6468 + $0x8] sm:$0xff]
    %s6471 = scalar_lea.vmem %s15, 240
    %v6472 = vld [vmem:[%s6471] sm:$0xff]
    %v6473 = vld [vmem:[%s6471 + $0x8] sm:$0xff]
    %v6474 = vld [vmem:[%s6471 + $0x10] sm:$0xff]
    %v6475 = vld [vmem:[%s6471 + $0x18] sm:$0xff]
    %v6476 = vld [vmem:[%s6471 + $0x20] sm:$0xff]
    %v6478 = vsel %vm345, %v6460, 0
    %v6481 = vsel %vm345, %v6461, 0
    %6483 = vmatpush.msra.mxu0 0.0
    %6484 = vmatpush.msra.mxu0 0.0
    %6485 = vmatpush.msra.mxu0 0.0
    %6486 = vmatpush.msra.mxu0 0.0
    %6487 = vmatpush.msra.mxu0 0.0
    %6488 = vmatpush.msra.mxu0 0.0
    %6489 = vmatpush.msra.mxu0 0.0
    %6490 = vmatpush.msra.mxu0 0.0
    %6491 = vmatpush.msra.mxu0 0.0
    %6492 = vmatpush.msra.mxu0 0.0
    %6493 = vmatpush.msra.mxu0 0.0
    %6494 = vmatpush.msra.mxu0 %v6476
    %6495 = vmatpush.msra.mxu0 %v6475
    %6496 = vmatpush.msra.mxu0 %v6474
    %6497 = vmatpush.msra.mxu0 %v6473
    %6498 = vmatpush.msra.mxu0 %v6472
    %6499 = vmatmul.f32.gmra.mxu0 %v6478
    %v6500 = vpop.f32.mrf.mxu0
    %v6501 = vadd.f32 0.0, %v6500
    %6502 = vmatmul.f32.gmra.mxu0 %v6481
    %v6503 = vpop.f32.mrf.mxu0
    %v6504 = vadd.f32 0.0, %v6503
    %6505 = vdwg.mxu0
    %s6506 = scalar_lea.vmem %s17, 6
    %v6507 = vld [vmem:[%s6506] sm:$0x1]
    %v6509 = vperm.slane %v6507, 0
    %v6512 = vsel %vm379, %v6463, 0
    %v6515 = vsel %vm379, %v6464, 0
    %6517 = vmatpush.msra.mxu0 0.0
    %6518 = vmatpush.msra.mxu0 0.0
    %6519 = vmatpush.msra.mxu0 0.0
    %6520 = vmatpush.msra.mxu0 0.0
    %6521 = vmatpush.msra.mxu0 0.0
    %6522 = vmatpush.msra.mxu0 0.0
    %6523 = vmatpush.msra.mxu0 0.0
    %6524 = vmatpush.msra.mxu0 0.0
    %6525 = vmatpush.msra.mxu0 0.0
    %6526 = vmatpush.msra.mxu0 0.0
    %6527 = vmatpush.msra.mxu0 0.0
    %6528 = vmatpush.msra.mxu0 0.0
    %6529 = vmatpush.msra.mxu0 0.0
    %6530 = vmatpush.msra.mxu0 0.0
    %6531 = vmatpush.msra.mxu0 %v6504
    %6532 = vmatpush.msra.mxu0 %v6501
    %6533 = vmatmul.f32.gmra.mxu0 %v6512
    %v6534 = vpop.f32.mrf.mxu0
    %v6535 = vadd.f32 %v6509, %v6534
    %6536 = vmatmul.f32.gmra.mxu0 %v6515
    %v6537 = vpop.f32.mrf.mxu0
    %v6538 = vadd.f32 %v6509, %v6537
    %6539 = vdwg.mxu0
    %v6540 = vadd.f32 %v6535, %v6460
    %v6541 = vadd.f32 %v6538, %v6461
    %s6542 = scalar_lea.vmem %s29, 6
    %v6543 = vld [vmem:[%s6542] sm:$0x1]
    %v6545 = vperm.slane %v6543, 0
    %v6547 = vmul.f32 %v6540, %v6545
    %v6548 = vmul.f32 %v6541, %v6545
    %s6549 = scalar_lea.vmem %s31, 6
    %v6550 = vld [vmem:[%s6549] sm:$0x1]
    %v6552 = vperm.slane %v6550, 0
    %v6554 = vadd.f32 %v6547, %v6552
    %v6555 = vadd.f32 %v6548, %v6552
    %s6556 = scalar_lea.vmem %s19, 240
    %v6557 = vld [vmem:[%s6556] sm:$0xff]
    %v6558 = vld [vmem:[%s6556 + $0x8] sm:$0xff]
    %v6559 = vld [vmem:[%s6556 + $0x10] sm:$0xff]
    %v6560 = vld [vmem:[%s6556 + $0x18] sm:$0xff]
    %v6561 = vld [vmem:[%s6556 + $0x20] sm:$0xff]
    %6562 = vmatpush.msra.mxu0 0.0
    %6563 = vmatpush.msra.mxu0 0.0
    %6564 = vmatpush.msra.mxu0 0.0
    %6565 = vmatpush.msra.mxu0 0.0
    %6566 = vmatpush.msra.mxu0 0.0
    %6567 = vmatpush.msra.mxu0 0.0
    %6568 = vmatpush.msra.mxu0 0.0
    %6569 = vmatpush.msra.mxu0 0.0
    %6570 = vmatpush.msra.mxu0 0.0
    %6571 = vmatpush.msra.mxu0 0.0
    %6572 = vmatpush.msra.mxu0 0.0
    %6573 = vmatpush.msra.mxu0 %v6561
    %6574 = vmatpush.msra.mxu0 %v6560
    %6575 = vmatpush.msra.mxu0 %v6559
    %6576 = vmatpush.msra.mxu0 %v6558
    %6577 = vmatpush.msra.mxu0 %v6557
    %6578 = vmatmul.f32.gmra.mxu0 %v6478
    %v6579 = vpop.f32.mrf.mxu0
    %v6580 = vadd.f32 0.0, %v6579
    %6581 = vmatmul.f32.gmra.mxu0 %v6481
    %v6582 = vpop.f32.mrf.mxu0
    %v6583 = vadd.f32 0.0, %v6582
    %6584 = vdwg.mxu0
    %s6585 = scalar_lea.vmem %s21, 240
    %v6586 = vld [vmem:[%s6585] sm:$0xff]
    %v6587 = vld [vmem:[%s6585 + $0x8] sm:$0xff]
    %v6588 = vld [vmem:[%s6585 + $0x10] sm:$0xff]
    %v6589 = vld [vmem:[%s6585 + $0x18] sm:$0xff]
    %v6590 = vld [vmem:[%s6585 + $0x20] sm:$0xff]
    %6591 = vmatpush.msra.mxu0 0.0
    %6592 = vmatpush.msra.mxu0 0.0
    %6593 = vmatpush.msra.mxu0 0.0
    %6594 = vmatpush.msra.mxu0 0.0
    %6595 = vmatpush.msra.mxu0 0.0
    %6596 = vmatpush.msra.mxu0 0.0
    %6597 = vmatpush.msra.mxu0 0.0
    %6598 = vmatpush.msra.mxu0 0.0
    %6599 = vmatpush.msra.mxu0 0.0
    %6600 = vmatpush.msra.mxu0 0.0
    %6601 = vmatpush.msra.mxu0 0.0
    %6602 = vmatpush.msra.mxu0 %v6590
    %6603 = vmatpush.msra.mxu0 %v6589
    %6604 = vmatpush.msra.mxu0 %v6588
    %6605 = vmatpush.msra.mxu0 %v6587
    %6606 = vmatpush.msra.mxu0 %v6586
    %6607 = vmatmul.f32.gmra.mxu0 %v6478
    %v6608 = vpop.f32.mrf.mxu0
    %v6609 = vadd.f32 0.0, %v6608
    %6610 = vmatmul.f32.gmra.mxu0 %v6481
    %v6611 = vpop.f32.mrf.mxu0
    %v6612 = vadd.f32 0.0, %v6611
    %6613 = vdwg.mxu0
    %s6614 = scalar_lea.vmem %s23, 240
    %v6615 = vld [vmem:[%s6614] sm:$0xff]
    %v6616 = vld [vmem:[%s6614 + $0x8] sm:$0xff]
    %v6617 = vld [vmem:[%s6614 + $0x10] sm:$0xff]
    %v6618 = vld [vmem:[%s6614 + $0x18] sm:$0xff]
    %v6619 = vld [vmem:[%s6614 + $0x20] sm:$0xff]
    %6620 = vmatpush.msra.mxu0 0.0
    %6621 = vmatpush.msra.mxu0 0.0
    %6622 = vmatpush.msra.mxu0 0.0
    %6623 = vmatpush.msra.mxu0 0.0
    %6624 = vmatpush.msra.mxu0 0.0
    %6625 = vmatpush.msra.mxu0 0.0
    %6626 = vmatpush.msra.mxu0 0.0
    %6627 = vmatpush.msra.mxu0 0.0
    %6628 = vmatpush.msra.mxu0 0.0
    %6629 = vmatpush.msra.mxu0 0.0
    %6630 = vmatpush.msra.mxu0 0.0
    %6631 = vmatpush.msra.mxu0 %v6619
    %6632 = vmatpush.msra.mxu0 %v6618
    %6633 = vmatpush.msra.mxu0 %v6617
    %6634 = vmatpush.msra.mxu0 %v6616
    %6635 = vmatpush.msra.mxu0 %v6615
    %6636 = vmatmul.f32.gmra.mxu0 %v6478
    %v6637 = vpop.f32.mrf.mxu0
    %v6638 = vadd.f32 0.0, %v6637
    %6639 = vmatmul.f32.gmra.mxu0 %v6481
    %v6640 = vpop.f32.mrf.mxu0
    %v6641 = vadd.f32 0.0, %v6640
    %6642 = vdwg.mxu0
    %v6643 = vmul.f32 %v6580, %v314
    %v6644 = vmul.f32 %v6583, %v314
    %v6646 = vsel %vm345, %v6643, 0
    %v6649 = vsel %vm345, %v6644, 0
    %v6652 = vsel %vm345, %v6609, 0
    %v6655 = vsel %vm345, %v6612, 0
    %6657 = vmatpush.xpose.msra.mxu0 0.0
    %6658 = vmatpush.xpose.msra.mxu0 0.0
    %6659 = vmatpush.xpose.msra.mxu0 0.0
    %6660 = vmatpush.xpose.msra.mxu0 0.0
    %6661 = vmatpush.xpose.msra.mxu0 0.0
    %6662 = vmatpush.xpose.msra.mxu0 0.0
    %6663 = vmatpush.xpose.msra.mxu0 0.0
    %6664 = vmatpush.xpose.msra.mxu0 0.0
    %6665 = vmatpush.xpose.msra.mxu0 0.0
    %6666 = vmatpush.xpose.msra.mxu0 0.0
    %6667 = vmatpush.xpose.msra.mxu0 0.0
    %6668 = vmatpush.xpose.msra.mxu0 0.0
    %6669 = vmatpush.xpose.msra.mxu0 0.0
    %6670 = vmatpush.xpose.msra.mxu0 0.0
    %6671 = vmatpush.xpose.msra.mxu0 %v6655
    %6672 = vmatpush.xpose.msra.mxu0 %v6652
    %6673 = vmatmul.f32.gmra.mxu0 %v6646
    %v6674 = vpop.f32.mrf.mxu0
    %v6675 = vadd.f32 0.0, %v6674
    %6676 = vmatmul.f32.gmra.mxu0 %v6649
    %v6677 = vpop.f32.mrf.mxu0
    %v6678 = vadd.f32 0.0, %v6677
    %6679 = vdwg.mxu0
    %v6680 = vmul.f32 %v6675, 0.31622776
    %v6681 = vmul.f32 %v6678, 0.31622776
    %v6682 = vsel %vm379, %v6680, -inf
    %6683 = vmax.xlane.f32.xlu0 %v6682
    %v6684 = vpop.xlane.xlu0 %6683
    %v6685 = vsel %vm379, %v6681, -inf
    %6686 = vmax.xlane.f32.xlu0 %v6685
    %v6687 = vpop.xlane.xlu0 %6686
    %v6688 = vsub.f32 %v6680, %v6684
    %v6689 = vsub.f32 %v6681, %v6687
    %v6690 = vmul.f32 %v6688, 1.442695
    %v6691 = vpow.pop %v6690
    %v6692 = vmul.f32 %v6689, 1.442695
    %v6693 = vpow.pop %v6692
    %v6694 = vsel %vm379, %v6691, 0.0
    %6695 = vadd.xlane.f32.xlu0 %v6694
    %v6696 = vpop.xlane.xlu0 %6695
    %v6697 = vsel %vm379, %v6693, 0.0
    %6698 = vadd.xlane.f32.xlu0 %v6697
    %v6699 = vpop.xlane.xlu0 %6698
    %v6700 = vrcp.pop %v6696
    %v6701 = vrcp.pop %v6699
    %v6702 = vmul.f32 %v6691, %v6700
    %v6703 = vmul.f32 %v6693, %v6701
    %v6704 = vmul.f32 %v6638, %v314
    %v6705 = vmul.f32 %v6641, %v314
    %v6706 = vmul.f32 %v6580, %v319
    %v6707 = vmul.f32 %v6583, %v319
    %v6709 = vsel %vm345, %v6706, 0
    %v6712 = vsel %vm345, %v6707, 0
    %6714 = vmatpush.xpose.msra.mxu0 0.0
    %6715 = vmatpush.xpose.msra.mxu0 0.0
    %6716 = vmatpush.xpose.msra.mxu0 0.0
    %6717 = vmatpush.xpose.msra.mxu0 0.0
    %6718 = vmatpush.xpose.msra.mxu0 0.0
    %6719 = vmatpush.xpose.msra.mxu0 0.0
    %6720 = vmatpush.xpose.msra.mxu0 0.0
    %6721 = vmatpush.xpose.msra.mxu0 0.0
    %6722 = vmatpush.xpose.msra.mxu0 0.0
    %6723 = vmatpush.xpose.msra.mxu0 0.0
    %6724 = vmatpush.xpose.msra.mxu0 0.0
    %6725 = vmatpush.xpose.msra.mxu0 0.0
    %6726 = vmatpush.xpose.msra.mxu0 0.0
    %6727 = vmatpush.xpose.msra.mxu0 0.0
    %6728 = vmatpush.xpose.msra.mxu0 %v6655
    %6729 = vmatpush.xpose.msra.mxu0 %v6652
    %6730 = vmatmul.f32.gmra.mxu0 %v6709
    %v6731 = vpop.f32.mrf.mxu0
    %v6732 = vadd.f32 0.0, %v6731
    %6733 = vmatmul.f32.gmra.mxu0 %v6712
    %v6734 = vpop.f32.mrf.mxu0
    %v6735 = vadd.f32 0.0, %v6734
    %6736 = vdwg.mxu0
    %v6737 = vmul.f32 %v6732, 0.31622776
    %v6738 = vmul.f32 %v6735, 0.31622776
    %v6739 = vsel %vm379, %v6737, -inf
    %6740 = vmax.xlane.f32.xlu0 %v6739
    %v6741 = vpop.xlane.xlu0 %6740
    %v6742 = vsel %vm379, %v6738, -inf
    %6743 = vmax.xlane.f32.xlu0 %v6742
    %v6744 = vpop.xlane.xlu0 %6743
    %v6745 = vsub.f32 %v6737, %v6741
    %v6746 = vsub.f32 %v6738, %v6744
    %v6747 = vmul.f32 %v6745, 1.442695
    %v6748 = vpow.pop %v6747
    %v6749 = vmul.f32 %v6746, 1.442695
    %v6750 = vpow.pop %v6749
    %v6751 = vsel %vm379, %v6748, 0.0
    %6752 = vadd.xlane.f32.xlu0 %v6751
    %v6753 = vpop.xlane.xlu0 %6752
    %v6754 = vsel %vm379, %v6750, 0.0
    %6755 = vadd.xlane.f32.xlu0 %v6754
    %v6756 = vpop.xlane.xlu0 %6755
    %v6757 = vrcp.pop %v6753
    %v6758 = vrcp.pop %v6756
    %v6759 = vmul.f32 %v6748, %v6757
    %v6760 = vmul.f32 %v6750, %v6758
    %v6761 = vmul.f32 %v6638, %v319
    %v6762 = vmul.f32 %v6641, %v319
    %v6764 = vsel %vm379, %v6759, 0
    %v6767 = vsel %vm379, %v6760, 0
    %6769 = vmatpush.msra.mxu0 0.0
    %6770 = vmatpush.msra.mxu0 0.0
    %6771 = vmatpush.msra.mxu0 0.0
    %6772 = vmatpush.msra.mxu0 0.0
    %6773 = vmatpush.msra.mxu0 0.0
    %6774 = vmatpush.msra.mxu0 0.0
    %6775 = vmatpush.msra.mxu0 0.0
    %6776 = vmatpush.msra.mxu0 0.0
    %6777 = vmatpush.msra.mxu0 0.0
    %6778 = vmatpush.msra.mxu0 0.0
    %6779 = vmatpush.msra.mxu0 0.0
    %6780 = vmatpush.msra.mxu0 0.0
    %6781 = vmatpush.msra.mxu0 0.0
    %6782 = vmatpush.msra.mxu0 0.0
    %6783 = vmatpush.msra.mxu0 %v6762
    %6784 = vmatpush.msra.mxu0 %v6761
    %6785 = vmatmul.f32.gmra.mxu0 %v6764
    %v6786 = vpop.f32.mrf.mxu0
    %v6787 = vadd.f32 0.0, %v6786
    %6788 = vmatmul.f32.gmra.mxu0 %v6767
    %v6789 = vpop.f32.mrf.mxu0
    %v6790 = vadd.f32 0.0, %v6789
    %6791 = vdwg.mxu0
    %v6793 = vsel %vm379, %v6702, 0
    %v6796 = vsel %vm379, %v6703, 0
    %6798 = vmatpush.msra.mxu0 0.0
    %6799 = vmatpush.msra.mxu0 0.0
    %6800 = vmatpush.msra.mxu0 0.0
    %6801 = vmatpush.msra.mxu0 0.0
    %6802 = vmatpush.msra.mxu0 0.0
    %6803 = vmatpush.msra.mxu0 0.0
    %6804 = vmatpush.msra.mxu0 0.0
    %6805 = vmatpush.msra.mxu0 0.0
    %6806 = vmatpush.msra.mxu0 0.0
    %6807 = vmatpush.msra.mxu0 0.0
    %6808 = vmatpush.msra.mxu0 0.0
    %6809 = vmatpush.msra.mxu0 0.0
    %6810 = vmatpush.msra.mxu0 0.0
    %6811 = vmatpush.msra.mxu0 0.0
    %6812 = vmatpush.msra.mxu0 %v6705
    %6813 = vmatpush.msra.mxu0 %v6704
    %6814 = vmatmul.f32.gmra.mxu0 %v6793
    %v6815 = vpop.f32.mrf.mxu0
    %v6816 = vadd.f32 %v6787, %v6815
    %6817 = vmatmul.f32.gmra.mxu0 %v6796
    %v6818 = vpop.f32.mrf.mxu0
    %v6819 = vadd.f32 %v6790, %v6818
    %6820 = vdwg.mxu0
    %v6821 = vmul.f32 %v6580, %v324
    %v6822 = vmul.f32 %v6583, %v324
    %v6824 = vsel %vm345, %v6821, 0
    %v6827 = vsel %vm345, %v6822, 0
    %6829 = vmatpush.xpose.msra.mxu0 0.0
    %6830 = vmatpush.xpose.msra.mxu0 0.0
    %6831 = vmatpush.xpose.msra.mxu0 0.0
    %6832 = vmatpush.xpose.msra.mxu0 0.0
    %6833 = vmatpush.xpose.msra.mxu0 0.0
    %6834 = vmatpush.xpose.msra.mxu0 0.0
    %6835 = vmatpush.xpose.msra.mxu0 0.0
    %6836 = vmatpush.xpose.msra.mxu0 0.0
    %6837 = vmatpush.xpose.msra.mxu0 0.0
    %6838 = vmatpush.xpose.msra.mxu0 0.0
    %6839 = vmatpush.xpose.msra.mxu0 0.0
    %6840 = vmatpush.xpose.msra.mxu0 0.0
    %6841 = vmatpush.xpose.msra.mxu0 0.0
    %6842 = vmatpush.xpose.msra.mxu0 0.0
    %6843 = vmatpush.xpose.msra.mxu0 %v6655
    %6844 = vmatpush.xpose.msra.mxu0 %v6652
    %6845 = vmatmul.f32.gmra.mxu0 %v6824
    %v6846 = vpop.f32.mrf.mxu0
    %v6847 = vadd.f32 0.0, %v6846
    %6848 = vmatmul.f32.gmra.mxu0 %v6827
    %v6849 = vpop.f32.mrf.mxu0
    %v6850 = vadd.f32 0.0, %v6849
    %6851 = vdwg.mxu0
    %v6852 = vmul.f32 %v6847, 0.31622776
    %v6853 = vmul.f32 %v6850, 0.31622776
    %v6854 = vsel %vm379, %v6852, -inf
    %6855 = vmax.xlane.f32.xlu0 %v6854
    %v6856 = vpop.xlane.xlu0 %6855
    %v6857 = vsel %vm379, %v6853, -inf
    %6858 = vmax.xlane.f32.xlu0 %v6857
    %v6859 = vpop.xlane.xlu0 %6858
    %v6860 = vsub.f32 %v6852, %v6856
    %v6861 = vsub.f32 %v6853, %v6859
    %v6862 = vmul.f32 %v6860, 1.442695
    %v6863 = vpow.pop %v6862
    %v6864 = vmul.f32 %v6861, 1.442695
    %v6865 = vpow.pop %v6864
    %v6866 = vsel %vm379, %v6863, 0.0
    %6867 = vadd.xlane.f32.xlu0 %v6866
    %v6868 = vpop.xlane.xlu0 %6867
    %v6869 = vsel %vm379, %v6865, 0.0
    %6870 = vadd.xlane.f32.xlu0 %v6869
    %v6871 = vpop.xlane.xlu0 %6870
    %v6872 = vrcp.pop %v6868
    %v6873 = vrcp.pop %v6871
    %v6874 = vmul.f32 %v6863, %v6872
    %v6875 = vmul.f32 %v6865, %v6873
    %v6876 = vmul.f32 %v6638, %v324
    %v6877 = vmul.f32 %v6641, %v324
    %v6879 = vsel %vm379, %v6874, 0
    %v6882 = vsel %vm379, %v6875, 0
    %6884 = vmatpush.msra.mxu0 0.0
    %6885 = vmatpush.msra.mxu0 0.0
    %6886 = vmatpush.msra.mxu0 0.0
    %6887 = vmatpush.msra.mxu0 0.0
    %6888 = vmatpush.msra.mxu0 0.0
    %6889 = vmatpush.msra.mxu0 0.0
    %6890 = vmatpush.msra.mxu0 0.0
    %6891 = vmatpush.msra.mxu0 0.0
    %6892 = vmatpush.msra.mxu0 0.0
    %6893 = vmatpush.msra.mxu0 0.0
    %6894 = vmatpush.msra.mxu0 0.0
    %6895 = vmatpush.msra.mxu0 0.0
    %6896 = vmatpush.msra.mxu0 0.0
    %6897 = vmatpush.msra.mxu0 0.0
    %6898 = vmatpush.msra.mxu0 %v6877
    %6899 = vmatpush.msra.mxu0 %v6876
    %6900 = vmatmul.f32.gmra.mxu0 %v6879
    %v6901 = vpop.f32.mrf.mxu0
    %v6902 = vadd.f32 0.0, %v6901
    %6903 = vmatmul.f32.gmra.mxu0 %v6882
    %v6904 = vpop.f32.mrf.mxu0
    %v6905 = vadd.f32 0.0, %v6904
    %6906 = vdwg.mxu0
    %v6907 = vadd.f32 %v6816, %v6902
    %v6908 = vadd.f32 %v6819, %v6905
    %v6909 = vmul.f32 %v6580, %v329
    %v6910 = vmul.f32 %v6583, %v329
    %v6912 = vsel %vm345, %v6909, 0
    %v6915 = vsel %vm345, %v6910, 0
    %6917 = vmatpush.xpose.msra.mxu0 0.0
    %6918 = vmatpush.xpose.msra.mxu0 0.0
    %6919 = vmatpush.xpose.msra.mxu0 0.0
    %6920 = vmatpush.xpose.msra.mxu0 0.0
    %6921 = vmatpush.xpose.msra.mxu0 0.0
    %6922 = vmatpush.xpose.msra.mxu0 0.0
    %6923 = vmatpush.xpose.msra.mxu0 0.0
    %6924 = vmatpush.xpose.msra.mxu0 0.0
    %6925 = vmatpush.xpose.msra.mxu0 0.0
    %6926 = vmatpush.xpose.msra.mxu0 0.0
    %6927 = vmatpush.xpose.msra.mxu0 0.0
    %6928 = vmatpush.xpose.msra.mxu0 0.0
    %6929 = vmatpush.xpose.msra.mxu0 0.0
    %6930 = vmatpush.xpose.msra.mxu0 0.0
    %6931 = vmatpush.xpose.msra.mxu0 %v6655
    %6932 = vmatpush.xpose.msra.mxu0 %v6652
    %6933 = vmatmul.f32.gmra.mxu0 %v6912
    %v6934 = vpop.f32.mrf.mxu0
    %v6935 = vadd.f32 0.0, %v6934
    %6936 = vmatmul.f32.gmra.mxu0 %v6915
    %v6937 = vpop.f32.mrf.mxu0
    %v6938 = vadd.f32 0.0, %v6937
    %6939 = vdwg.mxu0
    %v6940 = vmul.f32 %v6935, 0.31622776
    %v6941 = vmul.f32 %v6938, 0.31622776
    %v6942 = vsel %vm379, %v6940, -inf
    %6943 = vmax.xlane.f32.xlu0 %v6942
    %v6944 = vpop.xlane.xlu0 %6943
    %v6945 = vsel %vm379, %v6941, -inf
    %6946 = vmax.xlane.f32.xlu0 %v6945
    %v6947 = vpop.xlane.xlu0 %6946
    %v6948 = vsub.f32 %v6940, %v6944
    %v6949 = vsub.f32 %v6941, %v6947
    %v6950 = vmul.f32 %v6948, 1.442695
    %v6951 = vpow.pop %v6950
    %v6952 = vmul.f32 %v6949, 1.442695
    %v6953 = vpow.pop %v6952
    %v6954 = vsel %vm379, %v6951, 0.0
    %6955 = vadd.xlane.f32.xlu0 %v6954
    %v6956 = vpop.xlane.xlu0 %6955
    %v6957 = vsel %vm379, %v6953, 0.0
    %6958 = vadd.xlane.f32.xlu0 %v6957
    %v6959 = vpop.xlane.xlu0 %6958
    %v6960 = vrcp.pop %v6956
    %v6961 = vrcp.pop %v6959
    %v6962 = vmul.f32 %v6951, %v6960
    %v6963 = vmul.f32 %v6953, %v6961
    %v6964 = vmul.f32 %v6638, %v329
    %v6965 = vmul.f32 %v6641, %v329
    %v6967 = vsel %vm379, %v6962, 0
    %v6970 = vsel %vm379, %v6963, 0
    %6972 = vmatpush.msra.mxu0 0.0
    %6973 = vmatpush.msra.mxu0 0.0
    %6974 = vmatpush.msra.mxu0 0.0
    %6975 = vmatpush.msra.mxu0 0.0
    %6976 = vmatpush.msra.mxu0 0.0
    %6977 = vmatpush.msra.mxu0 0.0
    %6978 = vmatpush.msra.mxu0 0.0
    %6979 = vmatpush.msra.mxu0 0.0
    %6980 = vmatpush.msra.mxu0 0.0
    %6981 = vmatpush.msra.mxu0 0.0
    %6982 = vmatpush.msra.mxu0 0.0
    %6983 = vmatpush.msra.mxu0 0.0
    %6984 = vmatpush.msra.mxu0 0.0
    %6985 = vmatpush.msra.mxu0 0.0
    %6986 = vmatpush.msra.mxu0 %v6965
    %6987 = vmatpush.msra.mxu0 %v6964
    %6988 = vmatmul.f32.gmra.mxu0 %v6967
    %v6989 = vpop.f32.mrf.mxu0
    %v6990 = vadd.f32 0.0, %v6989
    %6991 = vmatmul.f32.gmra.mxu0 %v6970
    %v6992 = vpop.f32.mrf.mxu0
    %v6993 = vadd.f32 0.0, %v6992
    %6994 = vdwg.mxu0
    %v6995 = vadd.f32 %v6907, %v6990
    %v6996 = vadd.f32 %v6908, %v6993
    %s6997 = scalar_lea.vmem %s25, 240
    %v6998 = vld [vmem:[%s6997] sm:$0xff]
    %v6999 = vld [vmem:[%s6997 + $0x8] sm:$0xff]
    %v7000 = vld [vmem:[%s6997 + $0x10] sm:$0xff]
    %v7001 = vld [vmem:[%s6997 + $0x18] sm:$0xff]
    %v7002 = vld [vmem:[%s6997 + $0x20] sm:$0xff]
    %s7003 = scalar_lea.vmem %s27, 6
    %v7004 = vld [vmem:[%s7003] sm:$0x1]
    %v7006 = vperm.slane %v7004, 0
    %v7009 = vsel %vm345, %v6995, 0
    %v7012 = vsel %vm345, %v6996, 0
    %7014 = vmatpush.msra.mxu0 0.0
    %7015 = vmatpush.msra.mxu0 0.0
    %7016 = vmatpush.msra.mxu0 0.0
    %7017 = vmatpush.msra.mxu0 0.0
    %7018 = vmatpush.msra.mxu0 0.0
    %7019 = vmatpush.msra.mxu0 0.0
    %7020 = vmatpush.msra.mxu0 0.0
    %7021 = vmatpush.msra.mxu0 0.0
    %7022 = vmatpush.msra.mxu0 0.0
    %7023 = vmatpush.msra.mxu0 0.0
    %7024 = vmatpush.msra.mxu0 0.0
    %7025 = vmatpush.msra.mxu0 %v7002
    %7026 = vmatpush.msra.mxu0 %v7001
    %7027 = vmatpush.msra.mxu0 %v7000
    %7028 = vmatpush.msra.mxu0 %v6999
    %7029 = vmatpush.msra.mxu0 %v6998
    %7030 = vmatmul.f32.gmra.mxu0 %v7009
    %v7031 = vpop.f32.mrf.mxu0
    %v7032 = vadd.f32 %v7006, %v7031
    %7033 = vmatmul.f32.gmra.mxu0 %v7012
    %v7034 = vpop.f32.mrf.mxu0
    %v7035 = vadd.f32 %v7006, %v7034
    %7036 = vdwg.mxu0
    %v7037 = vadd.f32 %v7032, %v6460
    %v7038 = vadd.f32 %v7035, %v6461
    %s7039 = scalar_lea.vmem %s33, 6
    %v7040 = vld [vmem:[%s7039] sm:$0x1]
    %v7042 = vperm.slane %v7040, 0
    %v7044 = vmul.f32 %v7037, %v7042
    %v7045 = vmul.f32 %v7038, %v7042
    %s7046 = scalar_lea.vmem %s35, 6
    %v7047 = vld [vmem:[%s7046] sm:$0x1]
    %v7049 = vperm.slane %v7047, 0
    %v7051 = vadd.f32 %v7044, %v7049
    %v7052 = vadd.f32 %v7045, %v7049
    %v7053 = vadd.f32 %v6554, %v7051
    %v7054 = vadd.f32 %v6555, %v7052
    %s7055 = scalar_lea.vmem [#allocation7], 240
    %v7056 = vld [vmem:[%s7055] sm:$0xff]
    %v7057 = vld [vmem:[%s7055 + $0x8] sm:$0xff]
    %v7058 = vld [vmem:[%s7055 + $0x10] sm:$0xff]
    %v7059 = vld [vmem:[%s7055 + $0x18] sm:$0xff]
    %v7060 = vld [vmem:[%s7055 + $0x20] sm:$0xff]
    %s7061 = scalar_lea.vmem %s43, 6
    %v7062 = vld [vmem:[%s7061] sm:$0x1]
    %v7064 = vperm.slane %v7062, 0
    %v7067 = vsel %vm345, %v7053, 0
    %v7070 = vsel %vm345, %v7054, 0
    %7072 = vmatpush.msra.mxu0 0.0
    %7073 = vmatpush.msra.mxu0 0.0
    %7074 = vmatpush.msra.mxu0 0.0
    %7075 = vmatpush.msra.mxu0 0.0
    %7076 = vmatpush.msra.mxu0 0.0
    %7077 = vmatpush.msra.mxu0 0.0
    %7078 = vmatpush.msra.mxu0 0.0
    %7079 = vmatpush.msra.mxu0 0.0
    %7080 = vmatpush.msra.mxu0 0.0
    %7081 = vmatpush.msra.mxu0 0.0
    %7082 = vmatpush.msra.mxu0 0.0
    %7083 = vmatpush.msra.mxu0 %v7060
    %7084 = vmatpush.msra.mxu0 %v7059
    %7085 = vmatpush.msra.mxu0 %v7058
    %7086 = vmatpush.msra.mxu0 %v7057
    %7087 = vmatpush.msra.mxu0 %v7056
    %7088 = vmatmul.f32.gmra.mxu0 %v7067
    %v7089 = vpop.f32.mrf.mxu0
    %v7090 = vadd.f32 %v7064, %v7089
    %7091 = vmatmul.f32.gmra.mxu0 %v7070
    %v7092 = vpop.f32.mrf.mxu0
    %v7093 = vadd.f32 %v7064, %v7092
    %7094 = vdwg.mxu0
    %v7095 = vmax.f32 %v7090, 0.0
    %v7096 = vmax.f32 %v7093, 0.0
    %s7097 = scalar_lea.vmem %s45, 480
    %v7098 = vld [vmem:[%s7097] sm:$0xff]
    %v7099 = vld [vmem:[%s7097 + $0x8] sm:$0xff]
    %v7100 = vld [vmem:[%s7097 + $0x10] sm:$0xff]
    %v7101 = vld [vmem:[%s7097 + $0x18] sm:$0xff]
    %v7102 = vld [vmem:[%s7097 + $0x20] sm:$0xff]
    %v7103 = vld [vmem:[%s7097 + $0x28] sm:$0xff]
    %v7104 = vld [vmem:[%s7097 + $0x30] sm:$0xff]
    %v7105 = vld [vmem:[%s7097 + $0x38] sm:$0xff]
    %v7106 = vld [vmem:[%s7097 + $0x40] sm:$0xff]
    %v7107 = vld [vmem:[%s7097 + $0x48] sm:$0xff]
    %s7108 = scalar_lea.vmem %s47, 6
    %v7109 = vld [vmem:[%s7108] sm:$0x1]
    %v7111 = vperm.slane %v7109, 0
    %v7114 = vsel %vm969, %v7095, 0
    %v7117 = vsel %vm969, %v7096, 0
    %7119 = vmatpush.msra.mxu0 0.0
    %7120 = vmatpush.msra.mxu0 0.0
    %7121 = vmatpush.msra.mxu0 0.0
    %7122 = vmatpush.msra.mxu0 0.0
    %7123 = vmatpush.msra.mxu0 0.0
    %7124 = vmatpush.msra.mxu0 0.0
    %7125 = vmatpush.msra.mxu0 %v7107
    %7126 = vmatpush.msra.mxu0 %v7106
    %7127 = vmatpush.msra.mxu0 %v7105
    %7128 = vmatpush.msra.mxu0 %v7104
    %7129 = vmatpush.msra.mxu0 %v7103
    %7130 = vmatpush.msra.mxu0 %v7102
    %7131 = vmatpush.msra.mxu0 %v7101
    %7132 = vmatpush.msra.mxu0 %v7100
    %7133 = vmatpush.msra.mxu0 %v7099
    %7134 = vmatpush.msra.mxu0 %v7098
    %7135 = vmatmul.f32.gmra.mxu0 %v7114
    %v7136 = vpop.f32.mrf.mxu0
    %v7137 = vadd.f32 %v7111, %v7136
    %7138 = vmatmul.f32.gmra.mxu0 %v7117
    %v7139 = vpop.f32.mrf.mxu0
    %v7140 = vadd.f32 %v7111, %v7139
    %7141 = vdwg.mxu0
    %v7142 = vadd.f32 %v7053, %v7137
    %v7143 = vadd.f32 %v7054, %v7140
    %s7144 = scalar_lea.vmem %s37, 6
    %v7145 = vld [vmem:[%s7144] sm:$0x1]
    %v7147 = vperm.slane %v7145, 0
    %v7149 = vmul.f32 %v7142, %v7147
    %v7150 = vmul.f32 %v7143, %v7147
    %s7151 = scalar_lea.vmem %s39, 6
    %v7152 = vld [vmem:[%s7151] sm:$0x1]
    %v7154 = vperm.slane %v7152, 0
    %v7156 = vadd.f32 %v7149, %v7154
    %v7157 = vadd.f32 %v7150, %v7154
    %s7158 = scalar_lea.vmem %s49, 240
    %v7159 = vld [vmem:[%s7158] sm:$0xff]
    %v7160 = vld [vmem:[%s7158 + $0x8] sm:$0xff]
    %v7161 = vld [vmem:[%s7158 + $0x10] sm:$0xff]
    %v7162 = vld [vmem:[%s7158 + $0x18] sm:$0xff]
    %v7163 = vld [vmem:[%s7158 + $0x20] sm:$0xff]
    %s7164 = scalar_lea.vmem %s51, 6
    %v7165 = vld [vmem:[%s7164] sm:$0x1]
    %v7167 = vperm.slane %v7165, 0
    %v7170 = vsel %vm345, %v7156, 0
    %v7173 = vsel %vm345, %v7157, 0
    %7175 = vmatpush.msra.mxu0 0.0
    %7176 = vmatpush.msra.mxu0 0.0
    %7177 = vmatpush.msra.mxu0 0.0
    %7178 = vmatpush.msra.mxu0 0.0
    %7179 = vmatpush.msra.mxu0 0.0
    %7180 = vmatpush.msra.mxu0 0.0
    %7181 = vmatpush.msra.mxu0 0.0
    %7182 = vmatpush.msra.mxu0 0.0
    %7183 = vmatpush.msra.mxu0 0.0
    %7184 = vmatpush.msra.mxu0 0.0
    %7185 = vmatpush.msra.mxu0 0.0
    %7186 = vmatpush.msra.mxu0 %v7163
    %7187 = vmatpush.msra.mxu0 %v7162
    %7188 = vmatpush.msra.mxu0 %v7161
    %7189 = vmatpush.msra.mxu0 %v7160
    %7190 = vmatpush.msra.mxu0 %v7159
    %7191 = vmatmul.f32.gmra.mxu0 %v7170
    %v7192 = vpop.f32.mrf.mxu0
    %v7193 = vadd.f32 %v7167, %v7192
    %7194 = vmatmul.f32.gmra.mxu0 %v7173
    %v7195 = vpop.f32.mrf.mxu0
    %v7196 = vadd.f32 %v7167, %v7195
    %7197 = vdwg.mxu0
    %s7198 = scalar_lea.vmem [#allocation8], 192
    %v7199 = vld [vmem:[%s7198] sm:$0xff]
    %v7200 = vld [vmem:[%s7198 + $0x8] sm:$0xff]
    %v7201 = vld [vmem:[%s7198 + $0x10] sm:$0xff]
    %v7202 = vld [vmem:[%s7198 + $0x18] sm:$0xff]
    %v7204 = vsel %vm1055, %v7193, 0
    %v7207 = vsel %vm1055, %v7196, 0
    %7209 = vmatpush.msra.mxu0 0.0
    %7210 = vmatpush.msra.mxu0 0.0
    %7211 = vmatpush.msra.mxu0 0.0
    %7212 = vmatpush.msra.mxu0 0.0
    %7213 = vmatpush.msra.mxu0 0.0
    %7214 = vmatpush.msra.mxu0 0.0
    %7215 = vmatpush.msra.mxu0 0.0
    %7216 = vmatpush.msra.mxu0 0.0
    %7217 = vmatpush.msra.mxu0 0.0
    %7218 = vmatpush.msra.mxu0 0.0
    %7219 = vmatpush.msra.mxu0 0.0
    %7220 = vmatpush.msra.mxu0 0.0
    %7221 = vmatpush.msra.mxu0 %v7202
    %7222 = vmatpush.msra.mxu0 %v7201
    %7223 = vmatpush.msra.mxu0 %v7200
    %7224 = vmatpush.msra.mxu0 %v7199
    %7225 = vmatmul.f32.gmra.mxu0 %v7204
    %v7226 = vpop.f32.mrf.mxu0
    %v7227 = vadd.f32 0.0, %v7226
    %7228 = vmatmul.f32.gmra.mxu0 %v7207
    %v7229 = vpop.f32.mrf.mxu0
    %v7230 = vadd.f32 0.0, %v7229
    %7231 = vdwg.mxu0
    %s7232 = scalar_lea.vmem %s57, 6
    %v7233 = vld [vmem:[%s7232] sm:$0x1]
    %v7235 = vperm.slane %v7233, 0
    %v7237 = vmul.f32 %v7227, %v7235
    %v7238 = vmul.f32 %v7230, %v7235
    %v7239 = vsel %vm1055, %v7237, 0.0
    %7240 = vadd.xlane.f32.xlu0 %v7239
    %v7241 = vpop.xlane.xlu0 %7240
    %v7242 = vsel %vm1055, %v7238, 0.0
    %7243 = vadd.xlane.f32.xlu0 %v7242
    %v7244 = vpop.xlane.xlu0 %7243
    %s7245 = scalar_lea.vmem %s55, 6
    %v7246 = vld [vmem:[%s7245] sm:$0x1]
    %v7248 = vsel %vm1055, %v7246, 0
    %v7251 = vsel %vm1055, %v7227, 0
    %v7254 = vsel %vm1055, %v7230, 0
    %7256 = vmatpush.xpose.msra.mxu0 0.0
    %7257 = vmatpush.xpose.msra.mxu0 0.0
    %7258 = vmatpush.xpose.msra.mxu0 0.0
    %7259 = vmatpush.xpose.msra.mxu0 0.0
    %7260 = vmatpush.xpose.msra.mxu0 0.0
    %7261 = vmatpush.xpose.msra.mxu0 0.0
    %7262 = vmatpush.xpose.msra.mxu0 0.0
    %7263 = vmatpush.xpose.msra.mxu0 0.0
    %7264 = vmatpush.xpose.msra.mxu0 0.0
    %7265 = vmatpush.xpose.msra.mxu0 0.0
    %7266 = vmatpush.xpose.msra.mxu0 0.0
    %7267 = vmatpush.xpose.msra.mxu0 0.0
    %7268 = vmatpush.xpose.msra.mxu0 0.0
    %7269 = vmatpush.xpose.msra.mxu0 0.0
    %7270 = vmatpush.xpose.msra.mxu0 %v7254
    %7271 = vmatpush.xpose.msra.mxu0 %v7251
    %7272 = vmatmul.f32.gmra.mxu0 %v7248
    %v7273 = vpop.f32.mrf.mxu0
    %v7274 = vadd.f32 0.0, %v7273
    %7275 = vdwg.mxu0
    %v7276 = vperm.slane %v7274, 0
    %v7277 = vadd.f32 %v7241, %v7276
    %v7278 = vadd.f32 %v7244, %v7276
    %vm7279 = vcmp.gt.f32.partialorder %v7277, 0.0
    %vm7280 = vcmp.gt.f32.partialorder %v7278, 0.0
    %v7281 = vmul.f32 %v7277, 0.2
    %v7282 = vmul.f32 %v7278, 0.2
    %v7283 = vsel %vm7279, %v7277, %v7281
    %v7284 = vsel %vm7280, %v7278, %v7282
    %vm7285 = vcmp.gt.f32.partialorder %v6469, 0.0
    %vm7286 = vcmp.gt.f32.partialorder %v6470, 0.0
    %v7287 = vsel %vm7285, %v7283, -1e+30
    %v7288 = vsel %vm7286, %v7284, -1e+30
    %v7289 = vsel %vm379, %v7287, -inf
    %7290 = vmax.xlane.f32.xlu0 %v7289
    %v7291 = vpop.xlane.xlu0 %7290
    %v7292 = vsel %vm379, %v7288, -inf
    %7293 = vmax.xlane.f32.xlu0 %v7292
    %v7294 = vpop.xlane.xlu0 %7293
    %v7295 = vsub.f32 %v7287, %v7291
    %v7296 = vsub.f32 %v7288, %v7294
    %v7297 = vmul.f32 %v7295, 1.442695
    %v7298 = vpow.pop %v7297
    %v7299 = vmul.f32 %v7296, 1.442695
    %v7300 = vpow.pop %v7299
    %v7301 = vsel %vm379, %v7298, 0.0
    %7302 = vadd.xlane.f32.xlu0 %v7301
    %v7303 = vpop.xlane.xlu0 %7302
    %v7304 = vsel %vm379, %v7300, 0.0
    %7305 = vadd.xlane.f32.xlu0 %v7304
    %v7306 = vpop.xlane.xlu0 %7305
    %v7307 = vrcp.pop %v7303
    %v7308 = vrcp.pop %v7306
    %v7309 = vmul.f32 %v7298, %v7307
    %v7310 = vmul.f32 %v7300, %v7308
    %s7311 = scalar_lea.vmem %s59, 6
    %v7312 = vld [vmem:[%s7311] sm:$0x1]
    %v7314 = vperm.slane %v7312, 0
    %v7317 = vsel %vm379, %v7309, 0
    %v7320 = vsel %vm379, %v7310, 0
    %7322 = vmatpush.msra.mxu0 0.0
    %7323 = vmatpush.msra.mxu0 0.0
    %7324 = vmatpush.msra.mxu0 0.0
    %7325 = vmatpush.msra.mxu0 0.0
    %7326 = vmatpush.msra.mxu0 0.0
    %7327 = vmatpush.msra.mxu0 0.0
    %7328 = vmatpush.msra.mxu0 0.0
    %7329 = vmatpush.msra.mxu0 0.0
    %7330 = vmatpush.msra.mxu0 0.0
    %7331 = vmatpush.msra.mxu0 0.0
    %7332 = vmatpush.msra.mxu0 0.0
    %7333 = vmatpush.msra.mxu0 0.0
    %7334 = vmatpush.msra.mxu0 0.0
    %7335 = vmatpush.msra.mxu0 0.0
    %7336 = vmatpush.msra.mxu0 %v7230
    %7337 = vmatpush.msra.mxu0 %v7227
    %7338 = vmatmul.f32.gmra.mxu0 %v7317
    %v7339 = vpop.f32.mrf.mxu0
    %v7340 = vadd.f32 %v7314, %v7339
    %7341 = vmatmul.f32.gmra.mxu0 %v7320
    %v7342 = vpop.f32.mrf.mxu0
    %v7343 = vadd.f32 %v7314, %v7342
    %7344 = vdwg.mxu0
    %s7345 = scalar_lea.vmem [#allocation10], 192
    %v7346 = vld [vmem:[%s7345] sm:$0xff]
    %v7347 = vld [vmem:[%s7345 + $0x8] sm:$0xff]
    %v7348 = vld [vmem:[%s7345 + $0x10] sm:$0xff]
    %v7349 = vld [vmem:[%s7345 + $0x18] sm:$0xff]
    %v7351 = vsel %vm1055, %v7340, 0
    %v7354 = vsel %vm1055, %v7343, 0
    %7356 = vmatpush.msra.mxu0 0.0
    %7357 = vmatpush.msra.mxu0 0.0
    %7358 = vmatpush.msra.mxu0 0.0
    %7359 = vmatpush.msra.mxu0 0.0
    %7360 = vmatpush.msra.mxu0 0.0
    %7361 = vmatpush.msra.mxu0 0.0
    %7362 = vmatpush.msra.mxu0 0.0
    %7363 = vmatpush.msra.mxu0 0.0
    %7364 = vmatpush.msra.mxu0 0.0
    %7365 = vmatpush.msra.mxu0 0.0
    %7366 = vmatpush.msra.mxu0 0.0
    %7367 = vmatpush.msra.mxu0 0.0
    %7368 = vmatpush.msra.mxu0 %v7349
    %7369 = vmatpush.msra.mxu0 %v7348
    %7370 = vmatpush.msra.mxu0 %v7347
    %7371 = vmatpush.msra.mxu0 %v7346
    %7372 = vmatmul.f32.gmra.mxu0 %v7351
    %v7373 = vpop.f32.mrf.mxu0
    %v7374 = vadd.f32 0.0, %v7373
    %7375 = vmatmul.f32.gmra.mxu0 %v7354
    %v7376 = vpop.f32.mrf.mxu0
    %v7377 = vadd.f32 0.0, %v7376
    %7378 = vdwg.mxu0
    %s7379 = scalar_lea.vmem %s63, 6
    %v7380 = vld [vmem:[%s7379] sm:$0x1]
    %v7382 = vperm.slane %v7380, 0
    %v7385 = vsel %vm379, %v6466, 0
    %v7388 = vsel %vm379, %v6467, 0
    %7390 = vmatpush.msra.mxu0 0.0
    %7391 = vmatpush.msra.mxu0 0.0
    %7392 = vmatpush.msra.mxu0 0.0
    %7393 = vmatpush.msra.mxu0 0.0
    %7394 = vmatpush.msra.mxu0 0.0
    %7395 = vmatpush.msra.mxu0 0.0
    %7396 = vmatpush.msra.mxu0 0.0
    %7397 = vmatpush.msra.mxu0 0.0
    %7398 = vmatpush.msra.mxu0 0.0
    %7399 = vmatpush.msra.mxu0 0.0
    %7400 = vmatpush.msra.mxu0 0.0
    %7401 = vmatpush.msra.mxu0 0.0
    %7402 = vmatpush.msra.mxu0 0.0
    %7403 = vmatpush.msra.mxu0 0.0
    %7404 = vmatpush.msra.mxu0 %v7377
    %7405 = vmatpush.msra.mxu0 %v7374
    %7406 = vmatmul.f32.gmra.mxu0 %v7385
    %v7407 = vpop.f32.mrf.mxu0
    %v7408 = vadd.f32 %v7382, %v7407
    %7409 = vmatmul.f32.gmra.mxu0 %v7388
    %v7410 = vpop.f32.mrf.mxu0
    %v7411 = vadd.f32 %v7382, %v7410
    %7412 = vdwg.mxu0
    %s7413 = scalar_lea.vmem [#allocation11], 192
    %v7414 = vld [vmem:[%s7413] sm:$0xff]
    %v7415 = vld [vmem:[%s7413 + $0x8] sm:$0xff]
    %v7416 = vld [vmem:[%s7413 + $0x10] sm:$0xff]
    %v7417 = vld [vmem:[%s7413 + $0x18] sm:$0xff]
    %7418 = vmatpush.msra.mxu0 0.0
    %7419 = vmatpush.msra.mxu0 0.0
    %7420 = vmatpush.msra.mxu0 0.0
    %7421 = vmatpush.msra.mxu0 0.0
    %7422 = vmatpush.msra.mxu0 0.0
    %7423 = vmatpush.msra.mxu0 0.0
    %7424 = vmatpush.msra.mxu0 0.0
    %7425 = vmatpush.msra.mxu0 0.0
    %7426 = vmatpush.msra.mxu0 0.0
    %7427 = vmatpush.msra.mxu0 0.0
    %7428 = vmatpush.msra.mxu0 0.0
    %7429 = vmatpush.msra.mxu0 0.0
    %7430 = vmatpush.msra.mxu0 %v7417
    %7431 = vmatpush.msra.mxu0 %v7416
    %7432 = vmatpush.msra.mxu0 %v7415
    %7433 = vmatpush.msra.mxu0 %v7414
    %7434 = vmatmul.f32.gmra.mxu0 %v7351
    %v7435 = vpop.f32.mrf.mxu0
    %v7436 = vadd.f32 0.0, %v7435
    %7437 = vmatmul.f32.gmra.mxu0 %v7354
    %v7438 = vpop.f32.mrf.mxu0
    %v7439 = vadd.f32 0.0, %v7438
    %7440 = vdwg.mxu0
    %s7441 = scalar_lea.vmem %s67, 6
    %v7442 = vld [vmem:[%s7441] sm:$0x1]
    %v7444 = vperm.slane %v7442, 0
    %7446 = vmatpush.msra.mxu0 0.0
    %7447 = vmatpush.msra.mxu0 0.0
    %7448 = vmatpush.msra.mxu0 0.0
    %7449 = vmatpush.msra.mxu0 0.0
    %7450 = vmatpush.msra.mxu0 0.0
    %7451 = vmatpush.msra.mxu0 0.0
    %7452 = vmatpush.msra.mxu0 0.0
    %7453 = vmatpush.msra.mxu0 0.0
    %7454 = vmatpush.msra.mxu0 0.0
    %7455 = vmatpush.msra.mxu0 0.0
    %7456 = vmatpush.msra.mxu0 0.0
    %7457 = vmatpush.msra.mxu0 0.0
    %7458 = vmatpush.msra.mxu0 0.0
    %7459 = vmatpush.msra.mxu0 0.0
    %7460 = vmatpush.msra.mxu0 %v7439
    %7461 = vmatpush.msra.mxu0 %v7436
    %7462 = vmatmul.f32.gmra.mxu0 %v6512
    %v7463 = vpop.f32.mrf.mxu0
    %v7464 = vadd.f32 %v7444, %v7463
    %7465 = vmatmul.f32.gmra.mxu0 %v6515
    %v7466 = vpop.f32.mrf.mxu0
    %v7467 = vadd.f32 %v7444, %v7466
    %7468 = vdwg.mxu0
    %v7469 = vadd.f32 %v7464, %v7408
    %v7470 = vadd.f32 %v7467, %v7411
    %s7471 = scalar_lea.vmem %s69, 6
    %v7472 = vld [vmem:[%s7471] sm:$0x1]
    %v7474 = vperm.slane %v7472, 0
    %v7476 = vmul.f32 %v7469, %v7474
    %v7477 = vmul.f32 %v7470, %v7474
    %s7478 = scalar_lea.vmem %s71, 6
    %v7479 = vld [vmem:[%s7478] sm:$0x1]
    %v7481 = vperm.slane %v7479, 0
    %v7483 = vadd.f32 %v7476, %v7481
    %v7484 = vadd.f32 %v7477, %v7481
    %7487 = vrot.lane.b32.xlu0 %v1327, 32
    %v7488 = vpop.permute.xlu0 %7487
    %7489 = vrot.lane.b32.xlu0 %v1328, 32
    %v7490 = vpop.permute.xlu0 %7489
    %7495 = vrot.lane.b32.xlu0 %v2353, 64
    %v7496 = vpop.permute.xlu0 %7495
    %7497 = vrot.lane.b32.xlu0 %v2354, 64
    %v7498 = vpop.permute.xlu0 %7497
    %7503 = vrot.lane.b32.xlu0 %v3379, 96
    %v7504 = vpop.permute.xlu0 %7503
    %7505 = vrot.lane.b32.xlu0 %v3380, 96
    %v7506 = vpop.permute.xlu0 %7505
    %7511 = vrot.lane.b32.xlu0 %v5431, 32
    %v7512 = vpop.permute.xlu0 %7511
    %7513 = vrot.lane.b32.xlu0 %v5432, 32
    %v7514 = vpop.permute.xlu0 %7513
    %7519 = vrot.lane.b32.xlu0 %v6457, 64
    %v7520 = vpop.permute.xlu0 %7519
    %7521 = vrot.lane.b32.xlu0 %v6458, 64
    %v7522 = vpop.permute.xlu0 %7521
    %7527 = vrot.lane.b32.xlu0 %v7483, 96
    %v7528 = vpop.permute.xlu0 %7527
    %7529 = vrot.lane.b32.xlu0 %v7484, 96
    %v7530 = vpop.permute.xlu0 %7529
    %v7533 = vsel %vm1055, %v330, %v7488
    %v7534 = vsel %vm1055, %v331, %v7490
    %vm7535 = vcmask 523264
    %v7536 = vsel %vm7535, %v7533, %v7496
    %v7537 = vsel %vm7535, %v7534, %v7498
    %vm7538 = vcmask 785408
    %v7539 = vsel %vm7538, %v7536, %v7504
    %v7540 = vsel %vm7538, %v7537, %v7506
    %v7541 = vsel %vm1055, %v4405, %v7512
    %v7542 = vsel %vm1055, %v4406, %v7514
    %v7543 = vsel %vm7535, %v7541, %v7520
    %v7544 = vsel %vm7535, %v7542, %v7522
    %v7545 = vsel %vm7538, %v7543, %v7528
    %v7546 = vsel %vm7538, %v7544, %v7530
    %v7547 = vld [vmem:[%s11] sm:$0xff]
    %v7549 = vsel %vm379, %v7547, 0
    %7551 = vmatpush.msra.mxu0 0.0
    %7552 = vmatpush.msra.mxu0 0.0
    %7553 = vmatpush.msra.mxu0 0.0
    %7554 = vmatpush.msra.mxu0 0.0
    %7555 = vmatpush.msra.mxu0 0.0
    %7556 = vmatpush.msra.mxu0 0.0
    %7557 = vmatpush.msra.mxu0 0.0
    %7558 = vmatpush.msra.mxu0 0.0
    %7559 = vmatpush.msra.mxu0 0.0
    %7560 = vmatpush.msra.mxu0 0.0
    %7561 = vmatpush.msra.mxu0 0.0
    %7562 = vmatpush.msra.mxu0 0.0
    %7563 = vmatpush.msra.mxu0 0.0
    %7564 = vmatpush.msra.mxu0 0.0
    %7565 = vmatpush.msra.mxu0 %v7540
    %7566 = vmatpush.msra.mxu0 %v7539
    %7567 = vmatmul.f32.gmra.mxu0 %v7549
    %v7568 = vpop.f32.mrf.mxu0
    %v7569 = vadd.f32 0.0, %v7568
    %7570 = vdwg.mxu0
    %7571 = vmatpush.msra.mxu0 0.0
    %7572 = vmatpush.msra.mxu0 0.0
    %7573 = vmatpush.msra.mxu0 0.0
    %7574 = vmatpush.msra.mxu0 0.0
    %7575 = vmatpush.msra.mxu0 0.0
    %7576 = vmatpush.msra.mxu0 0.0
    %7577 = vmatpush.msra.mxu0 0.0
    %7578 = vmatpush.msra.mxu0 0.0
    %7579 = vmatpush.msra.mxu0 0.0
    %7580 = vmatpush.msra.mxu0 0.0
    %7581 = vmatpush.msra.mxu0 0.0
    %7582 = vmatpush.msra.mxu0 0.0
    %7583 = vmatpush.msra.mxu0 0.0
    %7584 = vmatpush.msra.mxu0 0.0
    %7585 = vmatpush.msra.mxu0 %v7546
    %7586 = vmatpush.msra.mxu0 %v7545
    %7587 = vmatmul.f32.gmra.mxu0 %v7549
    %v7588 = vpop.f32.mrf.mxu0
    %v7589 = vadd.f32 0.0, %v7588
    %7590 = vdwg.mxu0
    %v7591 = vld [vmem:[%s13] sm:$0xff]
    %v7593 = vsel %vm379, %v7591, 0
    %7595 = vmatpush.msra.mxu0 0.0
    %7596 = vmatpush.msra.mxu0 0.0
    %7597 = vmatpush.msra.mxu0 0.0
    %7598 = vmatpush.msra.mxu0 0.0
    %7599 = vmatpush.msra.mxu0 0.0
    %7600 = vmatpush.msra.mxu0 0.0
    %7601 = vmatpush.msra.mxu0 0.0
    %7602 = vmatpush.msra.mxu0 0.0
    %7603 = vmatpush.msra.mxu0 0.0
    %7604 = vmatpush.msra.mxu0 0.0
    %7605 = vmatpush.msra.mxu0 0.0
    %7606 = vmatpush.msra.mxu0 0.0
    %7607 = vmatpush.msra.mxu0 0.0
    %7608 = vmatpush.msra.mxu0 0.0
    %7609 = vmatpush.msra.mxu0 %v7540
    %7610 = vmatpush.msra.mxu0 %v7539
    %7611 = vmatmul.f32.gmra.mxu0 %v7593
    %v7612 = vpop.f32.mrf.mxu0
    %v7613 = vadd.f32 0.0, %v7612
    %7614 = vdwg.mxu0
    %7615 = vmatpush.msra.mxu0 0.0
    %7616 = vmatpush.msra.mxu0 0.0
    %7617 = vmatpush.msra.mxu0 0.0
    %7618 = vmatpush.msra.mxu0 0.0
    %7619 = vmatpush.msra.mxu0 0.0
    %7620 = vmatpush.msra.mxu0 0.0
    %7621 = vmatpush.msra.mxu0 0.0
    %7622 = vmatpush.msra.mxu0 0.0
    %7623 = vmatpush.msra.mxu0 0.0
    %7624 = vmatpush.msra.mxu0 0.0
    %7625 = vmatpush.msra.mxu0 0.0
    %7626 = vmatpush.msra.mxu0 0.0
    %7627 = vmatpush.msra.mxu0 0.0
    %7628 = vmatpush.msra.mxu0 0.0
    %7629 = vmatpush.msra.mxu0 %v7546
    %7630 = vmatpush.msra.mxu0 %v7545
    %7631 = vmatmul.f32.gmra.mxu0 %v7593
    %v7632 = vpop.f32.mrf.mxu0
    %v7633 = vadd.f32 0.0, %v7632
    %7634 = vdwg.mxu0
    %v7635 = vmul.f32 %v7569, %v7613
    %v7636 = vmul.f32 %v7589, %v7633
    %v7637 = vld [vmem:[#allocation13] sm:$0xff]
    %v7638 = vld [vmem:[#allocation13 + $0x8] sm:$0xff]
    %v7639 = vld [vmem:[#allocation13 + $0x10] sm:$0xff]
    %v7640 = vld [vmem:[#allocation13 + $0x18] sm:$0xff]
    %v7641 = vld [vmem:[#allocation13 + $0x20] sm:$0xff]
    %v7642 = vld [vmem:[#allocation13 + $0x28] sm:$0xff]
    %v7643 = vld [vmem:[#allocation13 + $0x30] sm:$0xff]
    %v7644 = vld [vmem:[#allocation13 + $0x38] sm:$0xff]
    %v7645 = vld [vmem:[#allocation13 + $0x40] sm:$0xff]
    %v7646 = vld [vmem:[#allocation13 + $0x48] sm:$0xff]
    %v7647 = vld [vmem:[#allocation13 + $0x50] sm:$0xff]
    %v7648 = vld [vmem:[#allocation13 + $0x58] sm:$0xff]
    %v7649 = vld [vmem:[#allocation13 + $0x60] sm:$0xff]
    %v7650 = vld [vmem:[#allocation13 + $0x68] sm:$0xff]
    %v7651 = vld [vmem:[#allocation13 + $0x70] sm:$0xff]
    %v7652 = vld [vmem:[#allocation13 + $0x78] sm:$0xff]
    %v7653 = vld [vmem:[#allocation13 + $0x80] sm:$0xff]
    %v7654 = vld [vmem:[#allocation13 + $0x88] sm:$0xff]
    %v7655 = vld [vmem:[#allocation13 + $0x90] sm:$0xff]
    %v7656 = vld [vmem:[#allocation13 + $0x98] sm:$0xff]
    %v7657 = vld [vmem:[#allocation13 + $0xa0] sm:$0xff]
    %v7658 = vld [vmem:[#allocation13 + $0xa8] sm:$0xff]
    %v7659 = vld [vmem:[#allocation13 + $0xb0] sm:$0xff]
    %v7660 = vld [vmem:[#allocation13 + $0xb8] sm:$0xff]
    %v7661 = vld [vmem:[#allocation13 + $0xc0] sm:$0xff]
    %v7662 = vld [vmem:[#allocation13 + $0xc8] sm:$0xff]
    %v7663 = vld [vmem:[#allocation13 + $0xd0] sm:$0xff]
    %v7664 = vld [vmem:[#allocation13 + $0xd8] sm:$0xff]
    %v7665 = vld [vmem:[#allocation13 + $0xe0] sm:$0xff]
    %v7666 = vld [vmem:[#allocation13 + $0xe8] sm:$0xff]
    %v7667 = vld [vmem:[#allocation13 + $0xf0] sm:$0xff]
    %v7668 = vld [vmem:[#allocation13 + $0xf8] sm:$0xff]
    %v7669 = vld [vmem:[%s75] sm:$0x1]
    %v7671 = vperm.slane %v7669, 0
    %7673 = vmatpush.msra.mxu0 %v7652
    %7674 = vmatpush.msra.mxu0 %v7651
    %7675 = vmatpush.msra.mxu0 %v7650
    %7676 = vmatpush.msra.mxu0 %v7649
    %7677 = vmatpush.msra.mxu0 %v7648
    %7678 = vmatpush.msra.mxu0 %v7647
    %7679 = vmatpush.msra.mxu0 %v7646
    %7680 = vmatpush.msra.mxu0 %v7645
    %7681 = vmatpush.msra.mxu0 %v7644
    %7682 = vmatpush.msra.mxu0 %v7643
    %7683 = vmatpush.msra.mxu0 %v7642
    %7684 = vmatpush.msra.mxu0 %v7641
    %7685 = vmatpush.msra.mxu0 %v7640
    %7686 = vmatpush.msra.mxu0 %v7639
    %7687 = vmatpush.msra.mxu0 %v7638
    %7688 = vmatpush.msra.mxu0 %v7637
    %7689 = vmatmul.f32.gmra.mxu0 %v7635
    %v7690 = vpop.f32.mrf.mxu0
    %v7691 = vadd.f32 %v7671, %v7690
    %7692 = vdwg.mxu0
    %7693 = vmatpush.msra.mxu0 %v7668
    %7694 = vmatpush.msra.mxu0 %v7667
    %7695 = vmatpush.msra.mxu0 %v7666
    %7696 = vmatpush.msra.mxu0 %v7665
    %7697 = vmatpush.msra.mxu0 %v7664
    %7698 = vmatpush.msra.mxu0 %v7663
    %7699 = vmatpush.msra.mxu0 %v7662
    %7700 = vmatpush.msra.mxu0 %v7661
    %7701 = vmatpush.msra.mxu0 %v7660
    %7702 = vmatpush.msra.mxu0 %v7659
    %7703 = vmatpush.msra.mxu0 %v7658
    %7704 = vmatpush.msra.mxu0 %v7657
    %7705 = vmatpush.msra.mxu0 %v7656
    %7706 = vmatpush.msra.mxu0 %v7655
    %7707 = vmatpush.msra.mxu0 %v7654
    %7708 = vmatpush.msra.mxu0 %v7653
    %7709 = vmatmul.f32.gmra.mxu0 %v7636
    %v7710 = vpop.f32.mrf.mxu0
    %v7711 = vadd.f32 %v7691, %v7710
    %7712 = vdwg.mxu0
    %v7713 = vld [vmem:[%s77] sm:$0xff]
    %v7714 = vld [vmem:[%s77 + $0x8] sm:$0xff]
    %v7715 = vld [vmem:[%s77 + $0x10] sm:$0xff]
    %v7716 = vld [vmem:[%s77 + $0x18] sm:$0xff]
    %v7717 = vld [vmem:[%s77 + $0x20] sm:$0xff]
    %v7718 = vld [vmem:[%s77 + $0x28] sm:$0xff]
    %v7719 = vld [vmem:[%s77 + $0x30] sm:$0xff]
    %v7720 = vld [vmem:[%s77 + $0x38] sm:$0xff]
    %v7721 = vld [vmem:[%s77 + $0x40] sm:$0xff]
    %v7722 = vld [vmem:[%s77 + $0x48] sm:$0xff]
    %v7723 = vld [vmem:[%s77 + $0x50] sm:$0xff]
    %v7724 = vld [vmem:[%s77 + $0x58] sm:$0xff]
    %v7725 = vld [vmem:[%s77 + $0x60] sm:$0xff]
    %v7726 = vld [vmem:[%s77 + $0x68] sm:$0xff]
    %v7727 = vld [vmem:[%s77 + $0x70] sm:$0xff]
    %v7728 = vld [vmem:[%s77 + $0x78] sm:$0xff]
    %v7729 = vld [vmem:[%s79] sm:$0x1]
    %v7731 = vperm.slane %v7729, 0
    %7733 = vmatpush.msra.mxu0 %v7728
    %7734 = vmatpush.msra.mxu0 %v7727
    %7735 = vmatpush.msra.mxu0 %v7726
    %7736 = vmatpush.msra.mxu0 %v7725
    %7737 = vmatpush.msra.mxu0 %v7724
    %7738 = vmatpush.msra.mxu0 %v7723
    %7739 = vmatpush.msra.mxu0 %v7722
    %7740 = vmatpush.msra.mxu0 %v7721
    %7741 = vmatpush.msra.mxu0 %v7720
    %7742 = vmatpush.msra.mxu0 %v7719
    %7743 = vmatpush.msra.mxu0 %v7718
    %7744 = vmatpush.msra.mxu0 %v7717
    %7745 = vmatpush.msra.mxu0 %v7716
    %7746 = vmatpush.msra.mxu0 %v7715
    %7747 = vmatpush.msra.mxu0 %v7714
    %7748 = vmatpush.msra.mxu0 %v7713
    %7749 = vmatmul.f32.gmra.mxu0 %v7711
    %v7750 = vpop.f32.mrf.mxu0
    %v7751 = vadd.f32 %v7731, %v7750
    %7752 = vdwg.mxu0
    %v7753 = vld [vmem:[%s81] sm:$0xff]
    %v7754 = vld [vmem:[%s81 + $0x8] sm:$0xff]
    %v7755 = vld [vmem:[%s81 + $0x10] sm:$0xff]
    %v7756 = vld [vmem:[%s81 + $0x18] sm:$0xff]
    %v7757 = vld [vmem:[%s81 + $0x20] sm:$0xff]
    %v7758 = vld [vmem:[%s81 + $0x28] sm:$0xff]
    %v7759 = vld [vmem:[%s81 + $0x30] sm:$0xff]
    %v7760 = vld [vmem:[%s81 + $0x38] sm:$0xff]
    %v7761 = vld [vmem:[%s83] sm:$0x1]
    %v7763 = vperm.slane %v7761, 0
    %v7766 = vsel %vm7535, %v7751, 0
    %7768 = vmatpush.msra.mxu0 0.0
    %7769 = vmatpush.msra.mxu0 0.0
    %7770 = vmatpush.msra.mxu0 0.0
    %7771 = vmatpush.msra.mxu0 0.0
    %7772 = vmatpush.msra.mxu0 0.0
    %7773 = vmatpush.msra.mxu0 0.0
    %7774 = vmatpush.msra.mxu0 0.0
    %7775 = vmatpush.msra.mxu0 0.0
    %7776 = vmatpush.msra.mxu0 %v7760
    %7777 = vmatpush.msra.mxu0 %v7759
    %7778 = vmatpush.msra.mxu0 %v7758
    %7779 = vmatpush.msra.mxu0 %v7757
    %7780 = vmatpush.msra.mxu0 %v7756
    %7781 = vmatpush.msra.mxu0 %v7755
    %7782 = vmatpush.msra.mxu0 %v7754
    %7783 = vmatpush.msra.mxu0 %v7753
    %7784 = vmatmul.f32.gmra.mxu0 %v7766
    %v7785 = vpop.f32.mrf.mxu0
    %v7786 = vadd.f32 %v7763, %v7785
    %7787 = vdwg.mxu0
    %v7788 = vld [vmem:[%s85] sm:$0xff]
    %v7789 = vld [vmem:[%s85 + $0x8] sm:$0xff]
    %v7790 = vld [vmem:[%s85 + $0x10] sm:$0xff]
    %v7791 = vld [vmem:[%s85 + $0x18] sm:$0xff]
    %v7792 = vld [vmem:[%s87] sm:$0x1]
    %v7794 = vperm.slane %v7792, 0
    %v7797 = vsel %vm1055, %v7786, 0
    %7799 = vmatpush.msra.mxu0 0.0
    %7800 = vmatpush.msra.mxu0 0.0
    %7801 = vmatpush.msra.mxu0 0.0
    %7802 = vmatpush.msra.mxu0 0.0
    %7803 = vmatpush.msra.mxu0 0.0
    %7804 = vmatpush.msra.mxu0 0.0
    %7805 = vmatpush.msra.mxu0 0.0
    %7806 = vmatpush.msra.mxu0 0.0
    %7807 = vmatpush.msra.mxu0 0.0
    %7808 = vmatpush.msra.mxu0 0.0
    %7809 = vmatpush.msra.mxu0 0.0
    %7810 = vmatpush.msra.mxu0 0.0
    %7811 = vmatpush.msra.mxu0 %v7791
    %7812 = vmatpush.msra.mxu0 %v7790
    %7813 = vmatpush.msra.mxu0 %v7789
    %7814 = vmatpush.msra.mxu0 %v7788
    %7815 = vmatmul.f32.gmra.mxu0 %v7797
    %v7816 = vpop.f32.mrf.mxu0
    %v7817 = vadd.f32 %v7794, %v7816
    %7818 = vdwg.mxu0
    %v7819 = vld [vmem:[%s89] sm:$0xff]
    %v7820 = vld [vmem:[%s89 + $0x8] sm:$0xff]
    %v7821 = vld [vmem:[%s91] sm:$0x1]
    %v7823 = vperm.slane %v7821, 0
    %v7826 = vsel %vm379, %v7817, 0
    %7828 = vmatpush.msra.mxu0 0.0
    %7829 = vmatpush.msra.mxu0 0.0
    %7830 = vmatpush.msra.mxu0 0.0
    %7831 = vmatpush.msra.mxu0 0.0
    %7832 = vmatpush.msra.mxu0 0.0
    %7833 = vmatpush.msra.mxu0 0.0
    %7834 = vmatpush.msra.mxu0 0.0
    %7835 = vmatpush.msra.mxu0 0.0
    %7836 = vmatpush.msra.mxu0 0.0
    %7837 = vmatpush.msra.mxu0 0.0
    %7838 = vmatpush.msra.mxu0 0.0
    %7839 = vmatpush.msra.mxu0 0.0
    %7840 = vmatpush.msra.mxu0 0.0
    %7841 = vmatpush.msra.mxu0 0.0
    %7842 = vmatpush.msra.mxu0 %v7820
    %7843 = vmatpush.msra.mxu0 %v7819
    %7844 = vmatmul.f32.gmra.mxu0 %v7826
    %v7845 = vpop.f32.mrf.mxu0
    %v7846 = vadd.f32 %v7823, %v7845
    %7847 = vdwg.mxu0
    %v7848 = vld [vmem:[%s93] sm:$0xff]
    %v7849 = vld [vmem:[%s95] sm:$0x1]
    %v7851 = vperm.slane %v7849, 0
    %vm7853 = vcmask 64512
    %v7855 = vsel %vm7853, %v7846, 0
    %7857 = vmatpush.msra.mxu0 0.0
    %7858 = vmatpush.msra.mxu0 0.0
    %7859 = vmatpush.msra.mxu0 0.0
    %7860 = vmatpush.msra.mxu0 0.0
    %7861 = vmatpush.msra.mxu0 0.0
    %7862 = vmatpush.msra.mxu0 0.0
    %7863 = vmatpush.msra.mxu0 0.0
    %7864 = vmatpush.msra.mxu0 0.0
    %7865 = vmatpush.msra.mxu0 0.0
    %7866 = vmatpush.msra.mxu0 0.0
    %7867 = vmatpush.msra.mxu0 0.0
    %7868 = vmatpush.msra.mxu0 0.0
    %7869 = vmatpush.msra.mxu0 0.0
    %7870 = vmatpush.msra.mxu0 0.0
    %7871 = vmatpush.msra.mxu0 0.0
    %7872 = vmatpush.msra.mxu0 %v7848
    %7873 = vmatmul.f32.gmra.mxu0 %v7855
    %v7874 = vpop.f32.mrf.mxu0
    %v7875 = vadd.f32 %v7851, %v7874
    %7876 = vdwg.mxu0
    %vm7877 = vcmask 56320
    %7878 = vst.msk [vmem:[#allocation14] sm:$0xff] %vm7877, %v7875
    // Predicated region
    $region222: #{mesm_forward.1} parent=1 // pred_check
      _
    $region223: #{mesm_forward.1} parent=1 // pred_check_branch
      %7880 = sbr.rel (0) target = $region225
    $region224: #{mesm_forward.1} parent=1 // pred_region
      %7882 = vsyncadd [#allocation4], 0
      %s7884 = sshll.u32 [#allocation14], 4
      %s7885 = int_to_ptr.vmem [resolvable:$true] %s7884
      %s7886 = sshll.u32 %s97, 4
      %s7887 = int_to_ptr.hbm [resolvable:$true] %s7886
      %7889 = dma.vmem_to_hbm [thread:$0]  %s7885, 128, %s7887, [#allocation4]
    $region225: #{mesm_forward.1} parent=1 // pred_fallthru
      _
    // Predicated region
    $region226: #{mesm_forward.1} parent=1 // pred_check
      _
    $region227: #{mesm_forward.1} parent=1 // pred_check_branch
      %7891 = sbr.rel (0) target = $region229
    $region228: #{mesm_forward.1} parent=1 // pred_region
      %7893 = dma.done [#allocation4], 128
    $region229: #{mesm_forward.1} parent=1 // pred_fallthru
      _
    %7894 = vsyncpa [#allocation3], 1
    %7895 = vsyncpa [#allocation6], 1
    %7896 = vsyncpa [#allocation9], 1
    %7897 = vsyncpa [#allocation12], 1
    %7898 = vsyncpa [#allocation4], 1

</llo_original>
